<compile_context>
chip_gen: v5e
topology: v5e:2x2
jax: 0.10.0
libtpu: 0.0.40
codegen_flags: <defaults>
</compile_context>

<pallas_src>
import functools

import jax
import jax.numpy as jnp
from jax.experimental import pallas as pl
from jax.experimental.pallas import tpu as pltpu

EPS = 1e-5
CPAD = 128          # channel padding -> lane-dense (128-wide) Pallas stores


# ----------------------------- Pallas kernels -------------------------------

def _mm_bn_kernel(a_ref, b_ref, scale_ref, shift_ref, *rest, relu, has_identity):
    """Fused:  (A @ B) * scale + shift  [+ identity]  [-> ReLU]."""
    if has_identity:
        id_ref, o_ref = rest
    else:
        (o_ref,) = rest
    acc = jnp.dot(a_ref[...], b_ref[...], preferred_element_type=jnp.float32)
    y = acc * scale_ref[...] + shift_ref[...]
    if has_identity:
        y = y + id_ref[...].astype(jnp.float32)
    if relu:
        y = jnp.maximum(y, 0.0)
    o_ref[...] = y.astype(o_ref.dtype)


def _head_kernel(x_ref, site_ref, w1_ref, s1_ref, sh1_ref, w2_ref, s2_ref,
                 sh2_ref, wf_ref, wm_ref, bf_ref, w3_ref, b3_ref, o_ref):
    """AdaptiveAvgPool2d((1,1)) + flatten + meta MLP + cat + fc + fc2, fused."""
    feat = jnp.mean(x_ref[...].astype(jnp.float32), axis=1)        # (n, CPAD)
    # meta: Linear -> BN1d -> ReLU -> Linear -> BN1d -> ReLU -> Dropout(eval=id)
    m = jnp.dot(site_ref[...], w1_ref[...], preferred_element_type=jnp.float32)
    m = jnp.maximum(m * s1_ref[...] + sh1_ref[...], 0.0)
    m = jnp.dot(m, w2_ref[...], preferred_element_type=jnp.float32)
    m = jnp.maximum(m * s2_ref[...] + sh2_ref[...], 0.0)
    # fc over torch.cat((feat, meta), 1) as a split matmul (no in-kernel concat)
    h = (jnp.dot(feat, wf_ref[...], preferred_element_type=jnp.float32)
         + jnp.dot(m, wm_ref[...], preferred_element_type=jnp.float32)
         + bf_ref[...])
    o_ref[...] = (jnp.dot(h, w3_ref[...], preferred_element_type=jnp.float32)
                  + b3_ref[...]).astype(o_ref.dtype)


# ----------------------------- Pallas wrappers -------------------------------

def _pick_tm(m):
    # Full-M block whenever it fits (single grid step); otherwise an 8-aligned
    # divisor.  At this config M <= 512 always -> one grid step per call.
    if m <= 512:
        return m
    for t in (512, 256, 128, 64, 32, 16, 8):
        if m % t == 0:
            return t
    return m


def matmul_bn(a, b, scale, shift, identity=None, relu=False,
              out_dtype=jnp.bfloat16):
    """(M,K)@(K,N)*scale+shift [+identity] [ReLU] fused in one pallas_call."""
    m, k = a.shape
    k2, n = b.shape
    assert k == k2
    tm = _pick_tm(m)
    in_specs = [
        pl.BlockSpec((tm, k), lambda i: (i, 0)),
        pl.BlockSpec((k, n), lambda i: (0, 0)),
        pl.BlockSpec((1, n), lambda i: (0, 0)),
        pl.BlockSpec((1, n), lambda i: (0, 0)),
    ]
    args = [a.astype(jnp.bfloat16), b.astype(jnp.bfloat16),
            scale.reshape(1, n).astype(jnp.float32),
            shift.reshape(1, n).astype(jnp.float32)]
    if identity is not None:
        in_specs.append(pl.BlockSpec((tm, n), lambda i: (i, 0)))
        args.append(identity.astype(jnp.bfloat16))
    return pl.pallas_call(
        functools.partial(_mm_bn_kernel, relu=relu,
                          has_identity=identity is not None),
        out_shape=jax.ShapeDtypeStruct((m, n), out_dtype),
        grid=(pl.cdiv(m, tm),),
        in_specs=in_specs,
        out_specs=pl.BlockSpec((tm, n), lambda i: (i, 0)),
        compiler_params=pltpu.CompilerParams(
            dimension_semantics=("parallel",)),
    )(*args)


def head(x4, site, hp, num_classes):
    """Fused avgpool + meta-MLP + fc + fc2 (all tiny; whole arrays in VMEM)."""
    n = x4.shape[0]
    return pl.pallas_call(
        _head_kernel,
        out_shape=jax.ShapeDtypeStruct((n, num_classes), jnp.float32),
    )(x4.astype(jnp.bfloat16), site.astype(jnp.float32),
      hp['w1'], hp['s1'], hp['sh1'], hp['w2'], hp['s2'], hp['sh2'],
      hp['wf'], hp['wm'], hp['bf'], hp['w3'], hp['b3'])


# ----------------------------- conv / pool glue (fused under jit) -------------

def _im2col(x, kh, kw, stride, pad):
    n, h, w, c = x.shape
    xp = jnp.pad(x, ((0, 0), (pad, pad), (pad, pad), (0, 0)))
    oh = (h + 2 * pad - kh) // stride + 1
    ow = (w + 2 * pad - kw) // stride + 1
    cols = []
    for i in range(kh):
        for j in range(kw):
            cols.append(xp[:, i:i + stride * (oh - 1) + 1:stride,
                           j:j + stride * (ow - 1) + 1:stride, :])
    p = jnp.stack(cols, axis=3)                       # (n, oh, ow, kh*kw, c)
    return p.reshape(n * oh * ow, kh * kw * c), oh, ow


def conv_bn(x, wmat, scale, shift, kh, kw, stride, pad, relu, identity=None):
    """Conv2d(no bias)+BN(eval) [+residual] [+ReLU] via im2col + fused matmul."""
    n = x.shape[0]
    a, oh, ow = _im2col(x, kh, kw, stride, pad)
    ident = None if identity is None else identity.reshape(n * oh * ow, -1)
    y = matmul_bn(a, wmat, scale, shift, identity=ident, relu=relu)
    return y.reshape(n, oh, ow, -1)


def maxpool2d(x, k, stride, pad):
    # Shifted-window max tree (lane-dense VPU work, fused by XLA under jit);
    # avoids materializing a kh*kw patch tensor in HBM.
    n, h, w, c = x.shape
    xp = jnp.pad(x, ((0, 0), (pad, pad), (pad, pad), (0, 0)),
                 constant_values=-jnp.inf)
    oh = (h + 2 * pad - k) // stride + 1
    ow = (w + 2 * pad - k) // stride + 1
    y = None
    for i in range(k):
        for j in range(k):
            s = xp[:, i:i + stride * (oh - 1) + 1:stride,
                   j:j + stride * (ow - 1) + 1:stride, :]
            y = s if y is None else jnp.maximum(y, s)
    return y


def basic_block(x, bp, meta):
    stride, ks = meta
    out = conv_bn(x, bp['w1'], bp['s1'], bp['sh1'], ks, ks, stride, ks // 2,
                  relu=True)
    if 'wd' in bp:
        identity = conv_bn(x, bp['wd'], bp['sd'], bp['shd'], 1, 1, stride, 0,
                           relu=False)
    else:
        identity = x
    # conv2 + BN + residual add + ReLU fused into ONE pallas_call
    out = conv_bn(out, bp['w2'], bp['s2'], bp['sh2'], ks, ks, 1, ks // 2,
                  relu=True, identity=identity)
    return out


# ----------------------------- parameters -------------------------------

def make_params(key, cfg):
    """Build PyTorch-style weights, then fold BN and pad to kernel layout."""
    inplanes = cfg['inplanes']
    ks = cfg['kernel_size']
    stride = cfg['stride']
    mi = cfg['meta_inplanes']
    mh = mi // 2
    ncls = cfg['num_classes']
    expansion = 1                       # BasicBlock

    keys = iter(jax.random.split(key, 1024))

    def conv_w(cout, cin, k):
        fan = cin * k * k
        return (jax.random.normal(next(keys), (cout, cin, k, k), jnp.float32)
                / jnp.sqrt(fan))

    def bn(c):
        g = 1.0 + 0.1 * jax.random.normal(next(keys), (c,), jnp.float32)
        b = 0.1 * jax.random.normal(next(keys), (c,), jnp.float32)
        mean = jnp.zeros((c,), jnp.float32)     # fresh running stats
        var = jnp.ones((c,), jnp.float32)
        return g, b, mean, var

    def lin(cin, cout):
        w = (jax.random.normal(next(keys), (cin, cout), jnp.float32)
             / jnp.sqrt(cin))
        b = 0.1 * jax.random.normal(next(keys), (cout,), jnp.float32)
        return w, b

    def fold_conv(w, g, beta, mean, var, cin_pad, cout_pad):
        # eval-mode BN fold: scale = g/sqrt(var+eps), shift = beta - mean*scale
        cout, cin, kh, kw = w.shape
        scale = g / jnp.sqrt(var + EPS)
        shift = beta - mean * scale
        wmat = jnp.transpose(w, (2, 3, 1, 0))          # (kh, kw, cin, cout)
        wmat = jnp.pad(wmat, ((0, 0), (0, 0),
                              (0, cin_pad - cin), (0, cout_pad - cout)))
        wmat = wmat.reshape(kh * kw * cin_pad, cout_pad)
        scale = jnp.pad(scale, (0, cout_pad - cout))
        shift = jnp.pad(shift, (0, cout_pad - cout))
        return wmat, scale, shift

    params = {}
    params['conv1_w'], params['conv1_s'], params['conv1_sh'] = fold_conv(
        conv_w(inplanes, 3, 7), *bn(inplanes), cin_pad=3, cout_pad=CPAD)

    inplanes_args = [inplanes, inplanes, inplanes * 2, inplanes * 4]
    layer_strides = [1, stride, stride, stride]
    cur = inplanes
    layers = []
    block_meta = []
    for blk_id in range(4):
        outp = inplanes_args[blk_id] * (2 if blk_id > 0 else 1)
        blocks, metas = [], []
        for b_idx in range(cfg['num_blocks_list'][blk_id]):
            st = layer_strides[blk_id] if b_idx == 0 else 1
            bp = {}
            bp['w1'], bp['s1'], bp['sh1'] = fold_conv(
                conv_w(outp, cur, ks), *bn(outp), cin_pad=CPAD, cout_pad=CPAD)
            bp['w2'], bp['s2'], bp['sh2'] = fold_conv(
                conv_w(outp, outp, ks), *bn(outp), cin_pad=CPAD, cout_pad=CPAD)
            if b_idx == 0:   # module always builds downsample (conv1x1 + BN)
                bp['wd'], bp['sd'], bp['shd'] = fold_conv(
                    conv_w(outp * expansion, cur, 1), *bn(outp * expansion),
                    cin_pad=CPAD, cout_pad=CPAD)
            blocks.append(bp)
            metas.append((st, ks))
            cur = outp * expansion
        layers.append(blocks)
        block_meta.append(tuple(metas))
    params['layers'] = layers

    # head: meta MLP (BN folded) + fc split into feat / meta halves + fc2
    w1, b1 = lin(4, mi)
    g1, be1, m1, v1 = bn(mi)
    w2, b2 = lin(mi, mh)
    g2, be2, m2, v2 = bn(mh)
    s1 = g1 / jnp.sqrt(v1 + EPS)
    sh1 = (b1 - m1) * s1 + be1
    s2 = g2 / jnp.sqrt(v2 + EPS)
    sh2 = (b2 - m2) * s2 + be2
    feat = inplanes * 8 * expansion
    wfc, bfc = lin(feat + mh, 512)
    wfc2, bfc2 = lin(512, ncls)
    params['head'] = {
        'w1': w1, 's1': s1.reshape(1, -1), 'sh1': sh1.reshape(1, -1),
        'w2': w2, 's2': s2.reshape(1, -1), 'sh2': sh2.reshape(1, -1),
        'wf': jnp.pad(wfc[:feat], ((0, CPAD - feat), (0, 0))),
        'wm': wfc[feat:],
        'bf': bfc.reshape(1, -1),
        'w3': wfc2, 'b3': bfc2.reshape(1, -1),
    }
    return params, tuple(block_meta)


# ----------------------------- forward -------------------------------

def forward(kp, x_nchw, site, cfg):
    # NCHW (PyTorch) -> NHWC (kernel layout)
    x = jnp.transpose(x_nchw, (0, 2, 3, 1)).astype(jnp.float32)
    # aux = torch.flatten(x, 1) is computed in the reference but never used.
    s = cfg['stride']

    x = conv_bn(x, kp['conv1_w'], kp['conv1_s'], kp['conv1_sh'],
                7, 7, s, 3, relu=True)                 # conv1 + bn1 + relu
    x = maxpool2d(x, 3, s, 1)                          # MaxPool2d(3, stride, 1)

    for blocks, metas in zip(kp['layers'], cfg['block_meta']):
        for bp, meta in zip(blocks, metas):
            x = basic_block(x, bp, meta)

    n, h, w, c = x.shape
    return head(x.reshape(n, h * w, c), site, kp['head'], cfg['num_classes'])


# ----------------------------- main -------------------------------

if __name__ == "__main__":
    cfg = dict(inplanes=8, kernel_size=3, stride=2, num_classes=2,
               num_blocks_list=(1, 1, 1, 1), meta_inplanes=8)

    key = jax.random.PRNGKey(0)
    kparam, kx, ksite = jax.random.split(key, 3)

    params, block_meta = make_params(kparam, cfg)
    cfg['block_meta'] = block_meta

    x = jax.random.normal(kx, (2, 3, 32, 32), jnp.float32)   # NCHW image input
    site = jax.random.normal(ksite, (2, 4), jnp.float32)     # meta "site" input

    fwd = jax.jit(functools.partial(forward, cfg=cfg))
    out = jax.block_until_ready(fwd(params, x, site))
    assert out.shape == (2, cfg['num_classes']) and out.dtype == jnp.float32
    print("KERNEL_OK")
</pallas_src>

<mosaic_0001>
module attributes {stable_mosaic.version = 11 : i64} {
  func.func @_mm_bn_kernel(%arg0: i32, %arg1: memref<512x147xbf16, #tpu.memory_space<vmem>>, %arg2: memref<147x128xbf16, #tpu.memory_space<vmem>>, %arg3: memref<1x128xf32, #tpu.memory_space<vmem>>, %arg4: memref<1x128xf32, #tpu.memory_space<vmem>>, %arg5: memref<512x128xbf16, #tpu.memory_space<vmem>>) attributes {dimension_semantics = [#tpu.dimension_semantics<parallel>], iteration_bounds = array<i64: 1>, scalar_prefetch = 0 : i64, scratch_operands = 0 : i64, tpu.core_type = #tpu.core_type<tc>, window_params = [{transform_indices = @transform_0, window_bounds = array<i64: 512, 147>}, {pipeline_mode = #tpu.pipeline_mode<synchronous>, transform_indices = @transform_1, window_bounds = array<i64: 147, 128>}, {pipeline_mode = #tpu.pipeline_mode<synchronous>, transform_indices = @transform_2, window_bounds = array<i64: 1, 128>}, {pipeline_mode = #tpu.pipeline_mode<synchronous>, transform_indices = @transform_3, window_bounds = array<i64: 1, 128>}, {transform_indices = @transform_4, window_bounds = array<i64: 512, 128>}]} {
    %c0 = arith.constant 0 : index
    %c0_0 = arith.constant 0 : index
    %0 = vector.load %arg1[%c0, %c0_0] : memref<512x147xbf16, #tpu.memory_space<vmem>>, vector<512x147xbf16>
    %c0_1 = arith.constant 0 : index
    %c0_2 = arith.constant 0 : index
    %1 = vector.load %arg2[%c0_1, %c0_2] : memref<147x128xbf16, #tpu.memory_space<vmem>>, vector<147x128xbf16>
    %cst = arith.constant dense<0.000000e+00> : vector<512x128xf32>
    %2 = tpu.matmul %0, %1, %cst {dimension_numbers = #tpu.dot_dimension_numbers<[1], [0], [0], [1], [0, 0, 1, 1], [], []>} : vector<512x147xbf16>, vector<147x128xbf16>, vector<512x128xf32> -> vector<512x128xf32>
    %c0_3 = arith.constant 0 : index
    %c0_4 = arith.constant 0 : index
    %3 = vector.load %arg3[%c0_3, %c0_4] : memref<1x128xf32, #tpu.memory_space<vmem>>, vector<1x128xf32>
    %4 = vector.broadcast %3 : vector<1x128xf32> to vector<512x128xf32>
    %5 = arith.mulf %2, %4 : vector<512x128xf32>
    %c0_5 = arith.constant 0 : index
    %c0_6 = arith.constant 0 : index
    %6 = vector.load %arg4[%c0_5, %c0_6] : memref<1x128xf32, #tpu.memory_space<vmem>>, vector<1x128xf32>
    %7 = vector.broadcast %6 : vector<1x128xf32> to vector<512x128xf32>
    %8 = arith.addf %5, %7 : vector<512x128xf32>
    %cst_7 = arith.constant 0.000000e+00 : f32
    %9 = vector.broadcast %cst_7 : f32 to vector<512x128xf32>
    %10 = arith.maximumf %8, %9 : vector<512x128xf32>
    %11 = arith.truncf %10 : vector<512x128xf32> to vector<512x128xbf16>
    %c0_8 = arith.constant 0 : index
    %c0_9 = arith.constant 0 : index
    %12 = vector.load %arg5[%c0_8, %c0_9] : memref<512x128xbf16, #tpu.memory_space<vmem>>, vector<512x128xbf16>
    tpu.vector_store %arg5[%c0_8, %c0_9], %11 {strides = array<i32>} : memref<512x128xbf16, #tpu.memory_space<vmem>>, vector<512x128xbf16>,
    return
  }
  func.func @transform_0(%arg0: i32) -> (i32, i32) {
    %c0_i32 = arith.constant 0 : i32
    %c0_i32_0 = arith.constant 0 : i32
    return %arg0, %c0_i32 : i32, i32
  }
  func.func @transform_1(%arg0: i32) -> (i32, i32) {
    %c0_i32 = arith.constant 0 : i32
    %c0_i32_0 = arith.constant 0 : i32
    %c0_i32_1 = arith.constant 0 : i32
    return %c0_i32, %c0_i32_0 : i32, i32
  }
  func.func @transform_2(%arg0: i32) -> (i32, i32) {
    %c0_i32 = arith.constant 0 : i32
    %c0_i32_0 = arith.constant 0 : i32
    %c0_i32_1 = arith.constant 0 : i32
    return %c0_i32, %c0_i32_0 : i32, i32
  }
  func.func @transform_3(%arg0: i32) -> (i32, i32) {
    %c0_i32 = arith.constant 0 : i32
    %c0_i32_0 = arith.constant 0 : i32
    %c0_i32_1 = arith.constant 0 : i32
    return %c0_i32, %c0_i32_0 : i32, i32
  }
  func.func @transform_4(%arg0: i32) -> (i32, i32) {
    %c0_i32 = arith.constant 0 : i32
    %c0_i32_0 = arith.constant 0 : i32
    return %arg0, %c0_i32 : i32, i32
  }
}

module attributes {stable_mosaic.version = 11 : i64} {
  func.func @_mm_bn_kernel(%arg0: i32, %arg1: memref<128x1152xbf16, #tpu.memory_space<vmem>>, %arg2: memref<1152x128xbf16, #tpu.memory_space<vmem>>, %arg3: memref<1x128xf32, #tpu.memory_space<vmem>>, %arg4: memref<1x128xf32, #tpu.memory_space<vmem>>, %arg5: memref<128x128xbf16, #tpu.memory_space<vmem>>) attributes {dimension_semantics = [#tpu.dimension_semantics<parallel>], iteration_bounds = array<i64: 1>, scalar_prefetch = 0 : i64, scratch_operands = 0 : i64, tpu.core_type = #tpu.core_type<tc>, window_params = [{transform_indices = @transform_0, window_bounds = array<i64: 128, 1152>}, {pipeline_mode = #tpu.pipeline_mode<synchronous>, transform_indices = @transform_1, window_bounds = array<i64: 1152, 128>}, {pipeline_mode = #tpu.pipeline_mode<synchronous>, transform_indices = @transform_2, window_bounds = array<i64: 1, 128>}, {pipeline_mode = #tpu.pipeline_mode<synchronous>, transform_indices = @transform_3, window_bounds = array<i64: 1, 128>}, {transform_indices = @transform_4, window_bounds = array<i64: 128, 128>}]} {
    %c0 = arith.constant 0 : index
    %c0_0 = arith.constant 0 : index
    %0 = vector.load %arg1[%c0, %c0_0] : memref<128x1152xbf16, #tpu.memory_space<vmem>>, vector<128x1152xbf16>
    %c0_1 = arith.constant 0 : index
    %c0_2 = arith.constant 0 : index
    %1 = vector.load %arg2[%c0_1, %c0_2] : memref<1152x128xbf16, #tpu.memory_space<vmem>>, vector<1152x128xbf16>
    %cst = arith.constant dense<0.000000e+00> : vector<128x128xf32>
    %2 = tpu.matmul %0, %1, %cst {dimension_numbers = #tpu.dot_dimension_numbers<[1], [0], [0], [1], [0, 0, 1, 1], [], []>} : vector<128x1152xbf16>, vector<1152x128xbf16>, vector<128x128xf32> -> vector<128x128xf32>
    %c0_3 = arith.constant 0 : index
    %c0_4 = arith.constant 0 : index
    %3 = vector.load %arg3[%c0_3, %c0_4] : memref<1x128xf32, #tpu.memory_space<vmem>>, vector<1x128xf32>
    %4 = vector.broadcast %3 : vector<1x128xf32> to vector<128x128xf32>
    %5 = arith.mulf %2, %4 : vector<128x128xf32>
    %c0_5 = arith.constant 0 : index
    %c0_6 = arith.constant 0 : index
    %6 = vector.load %arg4[%c0_5, %c0_6] : memref<1x128xf32, #tpu.memory_space<vmem>>, vector<1x128xf32>
    %7 = vector.broadcast %6 : vector<1x128xf32> to vector<128x128xf32>
    %8 = arith.addf %5, %7 : vector<128x128xf32>
    %cst_7 = arith.constant 0.000000e+00 : f32
    %9 = vector.broadcast %cst_7 : f32 to vector<128x128xf32>
    %10 = arith.maximumf %8, %9 : vector<128x128xf32>
    %11 = arith.truncf %10 : vector<128x128xf32> to vector<128x128xbf16>
    %c0_8 = arith.constant 0 : index
    %c0_9 = arith.constant 0 : index
    %12 = vector.load %arg5[%c0_8, %c0_9] : memref<128x128xbf16, #tpu.memory_space<vmem>>, vector<128x128xbf16>
    tpu.vector_store %arg5[%c0_8, %c0_9], %11 {strides = array<i32>} : memref<128x128xbf16, #tpu.memory_space<vmem>>, vector<128x128xbf16>,
    return
  }
  func.func @transform_0(%arg0: i32) -> (i32, i32) {
    %c0_i32 = arith.constant 0 : i32
    %c0_i32_0 = arith.constant 0 : i32
    return %arg0, %c0_i32 : i32, i32
  }
  func.func @transform_1(%arg0: i32) -> (i32, i32) {
    %c0_i32 = arith.constant 0 : i32
    %c0_i32_0 = arith.constant 0 : i32
    %c0_i32_1 = arith.constant 0 : i32
    return %c0_i32, %c0_i32_0 : i32, i32
  }
  func.func @transform_2(%arg0: i32) -> (i32, i32) {
    %c0_i32 = arith.constant 0 : i32
    %c0_i32_0 = arith.constant 0 : i32
    %c0_i32_1 = arith.constant 0 : i32
    return %c0_i32, %c0_i32_0 : i32, i32
  }
  func.func @transform_3(%arg0: i32) -> (i32, i32) {
    %c0_i32 = arith.constant 0 : i32
    %c0_i32_0 = arith.constant 0 : i32
    %c0_i32_1 = arith.constant 0 : i32
    return %c0_i32, %c0_i32_0 : i32, i32
  }
  func.func @transform_4(%arg0: i32) -> (i32, i32) {
    %c0_i32 = arith.constant 0 : i32
    %c0_i32_0 = arith.constant 0 : i32
    return %arg0, %c0_i32 : i32, i32
  }
}

module attributes {stable_mosaic.version = 11 : i64} {
  func.func @_mm_bn_kernel(%arg0: i32, %arg1: memref<128x128xbf16, #tpu.memory_space<vmem>>, %arg2: memref<128x128xbf16, #tpu.memory_space<vmem>>, %arg3: memref<1x128xf32, #tpu.memory_space<vmem>>, %arg4: memref<1x128xf32, #tpu.memory_space<vmem>>, %arg5: memref<128x128xbf16, #tpu.memory_space<vmem>>) attributes {dimension_semantics = [#tpu.dimension_semantics<parallel>], iteration_bounds = array<i64: 1>, scalar_prefetch = 0 : i64, scratch_operands = 0 : i64, tpu.core_type = #tpu.core_type<tc>, window_params = [{transform_indices = @transform_0, window_bounds = array<i64: 128, 128>}, {pipeline_mode = #tpu.pipeline_mode<synchronous>, transform_indices = @transform_1, window_bounds = array<i64: 128, 128>}, {pipeline_mode = #tpu.pipeline_mode<synchronous>, transform_indices = @transform_2, window_bounds = array<i64: 1, 128>}, {pipeline_mode = #tpu.pipeline_mode<synchronous>, transform_indices = @transform_3, window_bounds = array<i64: 1, 128>}, {transform_indices = @transform_4, window_bounds = array<i64: 128, 128>}]} {
    %c0 = arith.constant 0 : index
    %c0_0 = arith.constant 0 : index
    %0 = vector.load %arg1[%c0, %c0_0] : memref<128x128xbf16, #tpu.memory_space<vmem>>, vector<128x128xbf16>
    %c0_1 = arith.constant 0 : index
    %c0_2 = arith.constant 0 : index
    %1 = vector.load %arg2[%c0_1, %c0_2] : memref<128x128xbf16, #tpu.memory_space<vmem>>, vector<128x128xbf16>
    %cst = arith.constant dense<0.000000e+00> : vector<128x128xf32>
    %2 = tpu.matmul %0, %1, %cst {dimension_numbers = #tpu.dot_dimension_numbers<[1], [0], [0], [1], [0, 0, 1, 1], [], []>} : vector<128x128xbf16>, vector<128x128xbf16>, vector<128x128xf32> -> vector<128x128xf32>
    %c0_3 = arith.constant 0 : index
    %c0_4 = arith.constant 0 : index
    %3 = vector.load %arg3[%c0_3, %c0_4] : memref<1x128xf32, #tpu.memory_space<vmem>>, vector<1x128xf32>
    %4 = vector.broadcast %3 : vector<1x128xf32> to vector<128x128xf32>
    %5 = arith.mulf %2, %4 : vector<128x128xf32>
    %c0_5 = arith.constant 0 : index
    %c0_6 = arith.constant 0 : index
    %6 = vector.load %arg4[%c0_5, %c0_6] : memref<1x128xf32, #tpu.memory_space<vmem>>, vector<1x128xf32>
    %7 = vector.broadcast %6 : vector<1x128xf32> to vector<128x128xf32>
    %8 = arith.addf %5, %7 : vector<128x128xf32>
    %9 = arith.truncf %8 : vector<128x128xf32> to vector<128x128xbf16>
    %c0_7 = arith.constant 0 : index
    %c0_8 = arith.constant 0 : index
    %10 = vector.load %arg5[%c0_7, %c0_8] : memref<128x128xbf16, #tpu.memory_space<vmem>>, vector<128x128xbf16>
    tpu.vector_store %arg5[%c0_7, %c0_8], %9 {strides = array<i32>} : memref<128x128xbf16, #tpu.memory_space<vmem>>, vector<128x128xbf16>,
    return
  }
  func.func @transform_0(%arg0: i32) -> (i32, i32) {
    %c0_i32 = arith.constant 0 : i32
    %c0_i32_0 = arith.constant 0 : i32
    return %arg0, %c0_i32 : i32, i32
  }
  func.func @transform_1(%arg0: i32) -> (i32, i32) {
    %c0_i32 = arith.constant 0 : i32
    %c0_i32_0 = arith.constant 0 : i32
    %c0_i32_1 = arith.constant 0 : i32
    return %c0_i32, %c0_i32_0 : i32, i32
  }
  func.func @transform_2(%arg0: i32) -> (i32, i32) {
    %c0_i32 = arith.constant 0 : i32
    %c0_i32_0 = arith.constant 0 : i32
    %c0_i32_1 = arith.constant 0 : i32
    return %c0_i32, %c0_i32_0 : i32, i32
  }
  func.func @transform_3(%arg0: i32) -> (i32, i32) {
    %c0_i32 = arith.constant 0 : i32
    %c0_i32_0 = arith.constant 0 : i32
    %c0_i32_1 = arith.constant 0 : i32
    return %c0_i32, %c0_i32_0 : i32, i32
  }
  func.func @transform_4(%arg0: i32) -> (i32, i32) {
    %c0_i32 = arith.constant 0 : i32
    %c0_i32_0 = arith.constant 0 : i32
    return %arg0, %c0_i32 : i32, i32
  }
}

module attributes {stable_mosaic.version = 11 : i64} {
  func.func @_mm_bn_kernel(%arg0: i32, %arg1: memref<128x1152xbf16, #tpu.memory_space<vmem>>, %arg2: memref<1152x128xbf16, #tpu.memory_space<vmem>>, %arg3: memref<1x128xf32, #tpu.memory_space<vmem>>, %arg4: memref<1x128xf32, #tpu.memory_space<vmem>>, %arg5: memref<128x128xbf16, #tpu.memory_space<vmem>>, %arg6: memref<128x128xbf16, #tpu.memory_space<vmem>>) attributes {dimension_semantics = [#tpu.dimension_semantics<parallel>], iteration_bounds = array<i64: 1>, scalar_prefetch = 0 : i64, scratch_operands = 0 : i64, tpu.core_type = #tpu.core_type<tc>, window_params = [{transform_indices = @transform_0, window_bounds = array<i64: 128, 1152>}, {pipeline_mode = #tpu.pipeline_mode<synchronous>, transform_indices = @transform_1, window_bounds = array<i64: 1152, 128>}, {pipeline_mode = #tpu.pipeline_mode<synchronous>, transform_indices = @transform_2, window_bounds = array<i64: 1, 128>}, {pipeline_mode = #tpu.pipeline_mode<synchronous>, transform_indices = @transform_3, window_bounds = array<i64: 1, 128>}, {transform_indices = @transform_4, window_bounds = array<i64: 128, 128>}, {transform_indices = @transform_5, window_bounds = array<i64: 128, 128>}]} {
    %c0 = arith.constant 0 : index
    %c0_0 = arith.constant 0 : index
    %0 = vector.load %arg1[%c0, %c0_0] : memref<128x1152xbf16, #tpu.memory_space<vmem>>, vector<128x1152xbf16>
    %c0_1 = arith.constant 0 : index
    %c0_2 = arith.constant 0 : index
    %1 = vector.load %arg2[%c0_1, %c0_2] : memref<1152x128xbf16, #tpu.memory_space<vmem>>, vector<1152x128xbf16>
    %cst = arith.constant dense<0.000000e+00> : vector<128x128xf32>
    %2 = tpu.matmul %0, %1, %cst {dimension_numbers = #tpu.dot_dimension_numbers<[1], [0], [0], [1], [0, 0, 1, 1], [], []>} : vector<128x1152xbf16>, vector<1152x128xbf16>, vector<128x128xf32> -> vector<128x128xf32>
    %c0_3 = arith.constant 0 : index
    %c0_4 = arith.constant 0 : index
    %3 = vector.load %arg3[%c0_3, %c0_4] : memref<1x128xf32, #tpu.memory_space<vmem>>, vector<1x128xf32>
    %4 = vector.broadcast %3 : vector<1x128xf32> to vector<128x128xf32>
    %5 = arith.mulf %2, %4 : vector<128x128xf32>
    %c0_5 = arith.constant 0 : index
    %c0_6 = arith.constant 0 : index
    %6 = vector.load %arg4[%c0_5, %c0_6] : memref<1x128xf32, #tpu.memory_space<vmem>>, vector<1x128xf32>
    %7 = vector.broadcast %6 : vector<1x128xf32> to vector<128x128xf32>
    %8 = arith.addf %5, %7 : vector<128x128xf32>
    %c0_7 = arith.constant 0 : index
    %c0_8 = arith.constant 0 : index
    %9 = vector.load %arg5[%c0_7, %c0_8] : memref<128x128xbf16, #tpu.memory_space<vmem>>, vector<128x128xbf16>
    %10 = arith.extf %9 : vector<128x128xbf16> to vector<128x128xf32>
    %11 = arith.addf %8, %10 : vector<128x128xf32>
    %cst_9 = arith.constant 0.000000e+00 : f32
    %12 = vector.broadcast %cst_9 : f32 to vector<128x128xf32>
    %13 = arith.maximumf %11, %12 : vector<128x128xf32>
    %14 = arith.truncf %13 : vector<128x128xf32> to vector<128x128xbf16>
    %c0_10 = arith.constant 0 : index
    %c0_11 = arith.constant 0 : index
    %15 = vector.load %arg6[%c0_10, %c0_11] : memref<128x128xbf16, #tpu.memory_space<vmem>>, vector<128x128xbf16>
    tpu.vector_store %arg6[%c0_10, %c0_11], %14 {strides = array<i32>} : memref<128x128xbf16, #tpu.memory_space<vmem>>, vector<128x128xbf16>,
    return
  }
  func.func @transform_0(%arg0: i32) -> (i32, i32) {
    %c0_i32 = arith.constant 0 : i32
    %c0_i32_0 = arith.constant 0 : i32
    return %arg0, %c0_i32 : i32, i32
  }
  func.func @transform_1(%arg0: i32) -> (i32, i32) {
    %c0_i32 = arith.constant 0 : i32
    %c0_i32_0 = arith.constant 0 : i32
    %c0_i32_1 = arith.constant 0 : i32
    return %c0_i32, %c0_i32_0 : i32, i32
  }
  func.func @transform_2(%arg0: i32) -> (i32, i32) {
    %c0_i32 = arith.constant 0 : i32
    %c0_i32_0 = arith.constant 0 : i32
    %c0_i32_1 = arith.constant 0 : i32
    return %c0_i32, %c0_i32_0 : i32, i32
  }
  func.func @transform_3(%arg0: i32) -> (i32, i32) {
    %c0_i32 = arith.constant 0 : i32
    %c0_i32_0 = arith.constant 0 : i32
    %c0_i32_1 = arith.constant 0 : i32
    return %c0_i32, %c0_i32_0 : i32, i32
  }
  func.func @transform_4(%arg0: i32) -> (i32, i32) {
    %c0_i32 = arith.constant 0 : i32
    %c0_i32_0 = arith.constant 0 : i32
    return %arg0, %c0_i32 : i32, i32
  }
  func.func @transform_5(%arg0: i32) -> (i32, i32) {
    %c0_i32 = arith.constant 0 : i32
    %c0_i32_0 = arith.constant 0 : i32
    return %arg0, %c0_i32 : i32, i32
  }
}

module attributes {stable_mosaic.version = 11 : i64} {
  func.func @_mm_bn_kernel(%arg0: i32, %arg1: memref<32x1152xbf16, #tpu.memory_space<vmem>>, %arg2: memref<1152x128xbf16, #tpu.memory_space<vmem>>, %arg3: memref<1x128xf32, #tpu.memory_space<vmem>>, %arg4: memref<1x128xf32, #tpu.memory_space<vmem>>, %arg5: memref<32x128xbf16, #tpu.memory_space<vmem>>) attributes {dimension_semantics = [#tpu.dimension_semantics<parallel>], iteration_bounds = array<i64: 1>, scalar_prefetch = 0 : i64, scratch_operands = 0 : i64, tpu.core_type = #tpu.core_type<tc>, window_params = [{transform_indices = @transform_0, window_bounds = array<i64: 32, 1152>}, {pipeline_mode = #tpu.pipeline_mode<synchronous>, transform_indices = @transform_1, window_bounds = array<i64: 1152, 128>}, {pipeline_mode = #tpu.pipeline_mode<synchronous>, transform_indices = @transform_2, window_bounds = array<i64: 1, 128>}, {pipeline_mode = #tpu.pipeline_mode<synchronous>, transform_indices = @transform_3, window_bounds = array<i64: 1, 128>}, {transform_indices = @transform_4, window_bounds = array<i64: 32, 128>}]} {
    %c0 = arith.constant 0 : index
    %c0_0 = arith.constant 0 : index
    %0 = vector.load %arg1[%c0, %c0_0] : memref<32x1152xbf16, #tpu.memory_space<vmem>>, vector<32x1152xbf16>
    %c0_1 = arith.constant 0 : index
    %c0_2 = arith.constant 0 : index
    %1 = vector.load %arg2[%c0_1, %c0_2] : memref<1152x128xbf16, #tpu.memory_space<vmem>>, vector<1152x128xbf16>
    %cst = arith.constant dense<0.000000e+00> : vector<32x128xf32>
    %2 = tpu.matmul %0, %1, %cst {dimension_numbers = #tpu.dot_dimension_numbers<[1], [0], [0], [1], [0, 0, 1, 1], [], []>} : vector<32x1152xbf16>, vector<1152x128xbf16>, vector<32x128xf32> -> vector<32x128xf32>
    %c0_3 = arith.constant 0 : index
    %c0_4 = arith.constant 0 : index
    %3 = vector.load %arg3[%c0_3, %c0_4] : memref<1x128xf32, #tpu.memory_space<vmem>>, vector<1x128xf32>
    %4 = vector.broadcast %3 : vector<1x128xf32> to vector<32x128xf32>
    %5 = arith.mulf %2, %4 : vector<32x128xf32>
    %c0_5 = arith.constant 0 : index
    %c0_6 = arith.constant 0 : index
    %6 = vector.load %arg4[%c0_5, %c0_6] : memref<1x128xf32, #tpu.memory_space<vmem>>, vector<1x128xf32>
    %7 = vector.broadcast %6 : vector<1x128xf32> to vector<32x128xf32>
    %8 = arith.addf %5, %7 : vector<32x128xf32>
    %cst_7 = arith.constant 0.000000e+00 : f32
    %9 = vector.broadcast %cst_7 : f32 to vector<32x128xf32>
    %10 = arith.maximumf %8, %9 : vector<32x128xf32>
    %11 = arith.truncf %10 : vector<32x128xf32> to vector<32x128xbf16>
    %c0_8 = arith.constant 0 : index
    %c0_9 = arith.constant 0 : index
    %12 = vector.load %arg5[%c0_8, %c0_9] : memref<32x128xbf16, #tpu.memory_space<vmem>>, vector<32x128xbf16>
    tpu.vector_store %arg5[%c0_8, %c0_9], %11 {strides = array<i32>} : memref<32x128xbf16, #tpu.memory_space<vmem>>, vector<32x128xbf16>,
    return
  }
  func.func @transform_0(%arg0: i32) -> (i32, i32) {
    %c0_i32 = arith.constant 0 : i32
    %c0_i32_0 = arith.constant 0 : i32
    return %arg0, %c0_i32 : i32, i32
  }
  func.func @transform_1(%arg0: i32) -> (i32, i32) {
    %c0_i32 = arith.constant 0 : i32
    %c0_i32_0 = arith.constant 0 : i32
    %c0_i32_1 = arith.constant 0 : i32
    return %c0_i32, %c0_i32_0 : i32, i32
  }
  func.func @transform_2(%arg0: i32) -> (i32, i32) {
    %c0_i32 = arith.constant 0 : i32
    %c0_i32_0 = arith.constant 0 : i32
    %c0_i32_1 = arith.constant 0 : i32
    return %c0_i32, %c0_i32_0 : i32, i32
  }
  func.func @transform_3(%arg0: i32) -> (i32, i32) {
    %c0_i32 = arith.constant 0 : i32
    %c0_i32_0 = arith.constant 0 : i32
    %c0_i32_1 = arith.constant 0 : i32
    return %c0_i32, %c0_i32_0 : i32, i32
  }
  func.func @transform_4(%arg0: i32) -> (i32, i32) {
    %c0_i32 = arith.constant 0 : i32
    %c0_i32_0 = arith.constant 0 : i32
    return %arg0, %c0_i32 : i32, i32
  }
}

module attributes {stable_mosaic.version = 11 : i64} {
  func.func @_mm_bn_kernel(%arg0: i32, %arg1: memref<32x128xbf16, #tpu.memory_space<vmem>>, %arg2: memref<128x128xbf16, #tpu.memory_space<vmem>>, %arg3: memref<1x128xf32, #tpu.memory_space<vmem>>, %arg4: memref<1x128xf32, #tpu.memory_space<vmem>>, %arg5: memref<32x128xbf16, #tpu.memory_space<vmem>>) attributes {dimension_semantics = [#tpu.dimension_semantics<parallel>], iteration_bounds = array<i64: 1>, scalar_prefetch = 0 : i64, scratch_operands = 0 : i64, tpu.core_type = #tpu.core_type<tc>, window_params = [{transform_indices = @transform_0, window_bounds = array<i64: 32, 128>}, {pipeline_mode = #tpu.pipeline_mode<synchronous>, transform_indices = @transform_1, window_bounds = array<i64: 128, 128>}, {pipeline_mode = #tpu.pipeline_mode<synchronous>, transform_indices = @transform_2, window_bounds = array<i64: 1, 128>}, {pipeline_mode = #tpu.pipeline_mode<synchronous>, transform_indices = @transform_3, window_bounds = array<i64: 1, 128>}, {transform_indices = @transform_4, window_bounds = array<i64: 32, 128>}]} {
    %c0 = arith.constant 0 : index
    %c0_0 = arith.constant 0 : index
    %0 = vector.load %arg1[%c0, %c0_0] : memref<32x128xbf16, #tpu.memory_space<vmem>>, vector<32x128xbf16>
    %c0_1 = arith.constant 0 : index
    %c0_2 = arith.constant 0 : index
    %1 = vector.load %arg2[%c0_1, %c0_2] : memref<128x128xbf16, #tpu.memory_space<vmem>>, vector<128x128xbf16>
    %cst = arith.constant dense<0.000000e+00> : vector<32x128xf32>
    %2 = tpu.matmul %0, %1, %cst {dimension_numbers = #tpu.dot_dimension_numbers<[1], [0], [0], [1], [0, 0, 1, 1], [], []>} : vector<32x128xbf16>, vector<128x128xbf16>, vector<32x128xf32> -> vector<32x128xf32>
    %c0_3 = arith.constant 0 : index
    %c0_4 = arith.constant 0 : index
    %3 = vector.load %arg3[%c0_3, %c0_4] : memref<1x128xf32, #tpu.memory_space<vmem>>, vector<1x128xf32>
    %4 = vector.broadcast %3 : vector<1x128xf32> to vector<32x128xf32>
    %5 = arith.mulf %2, %4 : vector<32x128xf32>
    %c0_5 = arith.constant 0 : index
    %c0_6 = arith.constant 0 : index
    %6 = vector.load %arg4[%c0_5, %c0_6] : memref<1x128xf32, #tpu.memory_space<vmem>>, vector<1x128xf32>
    %7 = vector.broadcast %6 : vector<1x128xf32> to vector<32x128xf32>
    %8 = arith.addf %5, %7 : vector<32x128xf32>
    %9 = arith.truncf %8 : vector<32x128xf32> to vector<32x128xbf16>
    %c0_7 = arith.constant 0 : index
    %c0_8 = arith.constant 0 : index
    %10 = vector.load %arg5[%c0_7, %c0_8] : memref<32x128xbf16, #tpu.memory_space<vmem>>, vector<32x128xbf16>
    tpu.vector_store %arg5[%c0_7, %c0_8], %9 {strides = array<i32>} : memref<32x128xbf16, #tpu.memory_space<vmem>>, vector<32x128xbf16>,
    return
  }
  func.func @transform_0(%arg0: i32) -> (i32, i32) {
    %c0_i32 = arith.constant 0 : i32
    %c0_i32_0 = arith.constant 0 : i32
    return %arg0, %c0_i32 : i32, i32
  }
  func.func @transform_1(%arg0: i32) -> (i32, i32) {
    %c0_i32 = arith.constant 0 : i32
    %c0_i32_0 = arith.constant 0 : i32
    %c0_i32_1 = arith.constant 0 : i32
    return %c0_i32, %c0_i32_0 : i32, i32
  }
  func.func @transform_2(%arg0: i32) -> (i32, i32) {
    %c0_i32 = arith.constant 0 : i32
    %c0_i32_0 = arith.constant 0 : i32
    %c0_i32_1 = arith.constant 0 : i32
    return %c0_i32, %c0_i32_0 : i32, i32
  }
  func.func @transform_3(%arg0: i32) -> (i32, i32) {
    %c0_i32 = arith.constant 0 : i32
    %c0_i32_0 = arith.constant 0 : i32
    %c0_i32_1 = arith.constant 0 : i32
    return %c0_i32, %c0_i32_0 : i32, i32
  }
  func.func @transform_4(%arg0: i32) -> (i32, i32) {
    %c0_i32 = arith.constant 0 : i32
    %c0_i32_0 = arith.constant 0 : i32
    return %arg0, %c0_i32 : i32, i32
  }
}

module attributes {stable_mosaic.version = 11 : i64} {
  func.func @_mm_bn_kernel(%arg0: i32, %arg1: memref<32x1152xbf16, #tpu.memory_space<vmem>>, %arg2: memref<1152x128xbf16, #tpu.memory_space<vmem>>, %arg3: memref<1x128xf32, #tpu.memory_space<vmem>>, %arg4: memref<1x128xf32, #tpu.memory_space<vmem>>, %arg5: memref<32x128xbf16, #tpu.memory_space<vmem>>, %arg6: memref<32x128xbf16, #tpu.memory_space<vmem>>) attributes {dimension_semantics = [#tpu.dimension_semantics<parallel>], iteration_bounds = array<i64: 1>, scalar_prefetch = 0 : i64, scratch_operands = 0 : i64, tpu.core_type = #tpu.core_type<tc>, window_params = [{transform_indices = @transform_0, window_bounds = array<i64: 32, 1152>}, {pipeline_mode = #tpu.pipeline_mode<synchronous>, transform_indices = @transform_1, window_bounds = array<i64: 1152, 128>}, {pipeline_mode = #tpu.pipeline_mode<synchronous>, transform_indices = @transform_2, window_bounds = array<i64: 1, 128>}, {pipeline_mode = #tpu.pipeline_mode<synchronous>, transform_indices = @transform_3, window_bounds = array<i64: 1, 128>}, {transform_indices = @transform_4, window_bounds = array<i64: 32, 128>}, {transform_indices = @transform_5, window_bounds = array<i64: 32, 128>}]} {
    %c0 = arith.constant 0 : index
    %c0_0 = arith.constant 0 : index
    %0 = vector.load %arg1[%c0, %c0_0] : memref<32x1152xbf16, #tpu.memory_space<vmem>>, vector<32x1152xbf16>
    %c0_1 = arith.constant 0 : index
    %c0_2 = arith.constant 0 : index
    %1 = vector.load %arg2[%c0_1, %c0_2] : memref<1152x128xbf16, #tpu.memory_space<vmem>>, vector<1152x128xbf16>
    %cst = arith.constant dense<0.000000e+00> : vector<32x128xf32>
    %2 = tpu.matmul %0, %1, %cst {dimension_numbers = #tpu.dot_dimension_numbers<[1], [0], [0], [1], [0, 0, 1, 1], [], []>} : vector<32x1152xbf16>, vector<1152x128xbf16>, vector<32x128xf32> -> vector<32x128xf32>
    %c0_3 = arith.constant 0 : index
    %c0_4 = arith.constant 0 : index
    %3 = vector.load %arg3[%c0_3, %c0_4] : memref<1x128xf32, #tpu.memory_space<vmem>>, vector<1x128xf32>
    %4 = vector.broadcast %3 : vector<1x128xf32> to vector<32x128xf32>
    %5 = arith.mulf %2, %4 : vector<32x128xf32>
    %c0_5 = arith.constant 0 : index
    %c0_6 = arith.constant 0 : index
    %6 = vector.load %arg4[%c0_5, %c0_6] : memref<1x128xf32, #tpu.memory_space<vmem>>, vector<1x128xf32>
    %7 = vector.broadcast %6 : vector<1x128xf32> to vector<32x128xf32>
    %8 = arith.addf %5, %7 : vector<32x128xf32>
    %c0_7 = arith.constant 0 : index
    %c0_8 = arith.constant 0 : index
    %9 = vector.load %arg5[%c0_7, %c0_8] : memref<32x128xbf16, #tpu.memory_space<vmem>>, vector<32x128xbf16>
    %10 = arith.extf %9 : vector<32x128xbf16> to vector<32x128xf32>
    %11 = arith.addf %8, %10 : vector<32x128xf32>
    %cst_9 = arith.constant 0.000000e+00 : f32
    %12 = vector.broadcast %cst_9 : f32 to vector<32x128xf32>
    %13 = arith.maximumf %11, %12 : vector<32x128xf32>
    %14 = arith.truncf %13 : vector<32x128xf32> to vector<32x128xbf16>
    %c0_10 = arith.constant 0 : index
    %c0_11 = arith.constant 0 : index
    %15 = vector.load %arg6[%c0_10, %c0_11] : memref<32x128xbf16, #tpu.memory_space<vmem>>, vector<32x128xbf16>
    tpu.vector_store %arg6[%c0_10, %c0_11], %14 {strides = array<i32>} : memref<32x128xbf16, #tpu.memory_space<vmem>>, vector<32x128xbf16>,
    return
  }
  func.func @transform_0(%arg0: i32) -> (i32, i32) {
    %c0_i32 = arith.constant 0 : i32
    %c0_i32_0 = arith.constant 0 : i32
    return %arg0, %c0_i32 : i32, i32
  }
  func.func @transform_1(%arg0: i32) -> (i32, i32) {
    %c0_i32 = arith.constant 0 : i32
    %c0_i32_0 = arith.constant 0 : i32
    %c0_i32_1 = arith.constant 0 : i32
    return %c0_i32, %c0_i32_0 : i32, i32
  }
  func.func @transform_2(%arg0: i32) -> (i32, i32) {
    %c0_i32 = arith.constant 0 : i32
    %c0_i32_0 = arith.constant 0 : i32
    %c0_i32_1 = arith.constant 0 : i32
    return %c0_i32, %c0_i32_0 : i32, i32
  }
  func.func @transform_3(%arg0: i32) -> (i32, i32) {
    %c0_i32 = arith.constant 0 : i32
    %c0_i32_0 = arith.constant 0 : i32
    %c0_i32_1 = arith.constant 0 : i32
    return %c0_i32, %c0_i32_0 : i32, i32
  }
  func.func @transform_4(%arg0: i32) -> (i32, i32) {
    %c0_i32 = arith.constant 0 : i32
    %c0_i32_0 = arith.constant 0 : i32
    return %arg0, %c0_i32 : i32, i32
  }
  func.func @transform_5(%arg0: i32) -> (i32, i32) {
    %c0_i32 = arith.constant 0 : i32
    %c0_i32_0 = arith.constant 0 : i32
    return %arg0, %c0_i32 : i32, i32
  }
}

module attributes {stable_mosaic.version = 11 : i64} {
  func.func @_mm_bn_kernel(%arg0: i32, %arg1: memref<8x1152xbf16, #tpu.memory_space<vmem>>, %arg2: memref<1152x128xbf16, #tpu.memory_space<vmem>>, %arg3: memref<1x128xf32, #tpu.memory_space<vmem>>, %arg4: memref<1x128xf32, #tpu.memory_space<vmem>>, %arg5: memref<8x128xbf16, #tpu.memory_space<vmem>>) attributes {dimension_semantics = [#tpu.dimension_semantics<parallel>], iteration_bounds = array<i64: 1>, scalar_prefetch = 0 : i64, scratch_operands = 0 : i64, tpu.core_type = #tpu.core_type<tc>, window_params = [{transform_indices = @transform_0, window_bounds = array<i64: 8, 1152>}, {pipeline_mode = #tpu.pipeline_mode<synchronous>, transform_indices = @transform_1, window_bounds = array<i64: 1152, 128>}, {pipeline_mode = #tpu.pipeline_mode<synchronous>, transform_indices = @transform_2, window_bounds = array<i64: 1, 128>}, {pipeline_mode = #tpu.pipeline_mode<synchronous>, transform_indices = @transform_3, window_bounds = array<i64: 1, 128>}, {transform_indices = @transform_4, window_bounds = array<i64: 8, 128>}]} {
    %c0 = arith.constant 0 : index
    %c0_0 = arith.constant 0 : index
    %0 = vector.load %arg1[%c0, %c0_0] : memref<8x1152xbf16, #tpu.memory_space<vmem>>, vector<8x1152xbf16>
    %c0_1 = arith.constant 0 : index
    %c0_2 = arith.constant 0 : index
    %1 = vector.load %arg2[%c0_1, %c0_2] : memref<1152x128xbf16, #tpu.memory_space<vmem>>, vector<1152x128xbf16>
    %cst = arith.constant dense<0.000000e+00> : vector<8x128xf32>
    %2 = tpu.matmul %0, %1, %cst {dimension_numbers = #tpu.dot_dimension_numbers<[1], [0], [0], [1], [0, 0, 1, 1], [], []>} : vector<8x1152xbf16>, vector<1152x128xbf16>, vector<8x128xf32> -> vector<8x128xf32>
    %c0_3 = arith.constant 0 : index
    %c0_4 = arith.constant 0 : index
    %3 = vector.load %arg3[%c0_3, %c0_4] : memref<1x128xf32, #tpu.memory_space<vmem>>, vector<1x128xf32>
    %4 = vector.broadcast %3 : vector<1x128xf32> to vector<8x128xf32>
    %5 = arith.mulf %2, %4 : vector<8x128xf32>
    %c0_5 = arith.constant 0 : index
    %c0_6 = arith.constant 0 : index
    %6 = vector.load %arg4[%c0_5, %c0_6] : memref<1x128xf32, #tpu.memory_space<vmem>>, vector<1x128xf32>
    %7 = vector.broadcast %6 : vector<1x128xf32> to vector<8x128xf32>
    %8 = arith.addf %5, %7 : vector<8x128xf32>
    %cst_7 = arith.constant 0.000000e+00 : f32
    %9 = vector.broadcast %cst_7 : f32 to vector<8x128xf32>
    %10 = arith.maximumf %8, %9 : vector<8x128xf32>
    %11 = arith.truncf %10 : vector<8x128xf32> to vector<8x128xbf16>
    %c0_8 = arith.constant 0 : index
    %c0_9 = arith.constant 0 : index
    %12 = vector.load %arg5[%c0_8, %c0_9] : memref<8x128xbf16, #tpu.memory_space<vmem>>, vector<8x128xbf16>
    tpu.vector_store %arg5[%c0_8, %c0_9], %11 {strides = array<i32>} : memref<8x128xbf16, #tpu.memory_space<vmem>>, vector<8x128xbf16>,
    return
  }
  func.func @transform_0(%arg0: i32) -> (i32, i32) {
    %c0_i32 = arith.constant 0 : i32
    %c0_i32_0 = arith.constant 0 : i32
    return %arg0, %c0_i32 : i32, i32
  }
  func.func @transform_1(%arg0: i32) -> (i32, i32) {
    %c0_i32 = arith.constant 0 : i32
    %c0_i32_0 = arith.constant 0 : i32
    %c0_i32_1 = arith.constant 0 : i32
    return %c0_i32, %c0_i32_0 : i32, i32
  }
  func.func @transform_2(%arg0: i32) -> (i32, i32) {
    %c0_i32 = arith.constant 0 : i32
    %c0_i32_0 = arith.constant 0 : i32
    %c0_i32_1 = arith.constant 0 : i32
    return %c0_i32, %c0_i32_0 : i32, i32
  }
  func.func @transform_3(%arg0: i32) -> (i32, i32) {
    %c0_i32 = arith.constant 0 : i32
    %c0_i32_0 = arith.constant 0 : i32
    %c0_i32_1 = arith.constant 0 : i32
    return %c0_i32, %c0_i32_0 : i32, i32
  }
  func.func @transform_4(%arg0: i32) -> (i32, i32) {
    %c0_i32 = arith.constant 0 : i32
    %c0_i32_0 = arith.constant 0 : i32
    return %arg0, %c0_i32 : i32, i32
  }
}

module attributes {stable_mosaic.version = 11 : i64} {
  func.func @_mm_bn_kernel(%arg0: i32, %arg1: memref<8x128xbf16, #tpu.memory_space<vmem>>, %arg2: memref<128x128xbf16, #tpu.memory_space<vmem>>, %arg3: memref<1x128xf32, #tpu.memory_space<vmem>>, %arg4: memref<1x128xf32, #tpu.memory_space<vmem>>, %arg5: memref<8x128xbf16, #tpu.memory_space<vmem>>) attributes {dimension_semantics = [#tpu.dimension_semantics<parallel>], iteration_bounds = array<i64: 1>, scalar_prefetch = 0 : i64, scratch_operands = 0 : i64, tpu.core_type = #tpu.core_type<tc>, window_params = [{transform_indices = @transform_0, window_bounds = array<i64: 8, 128>}, {pipeline_mode = #tpu.pipeline_mode<synchronous>, transform_indices = @transform_1, window_bounds = array<i64: 128, 128>}, {pipeline_mode = #tpu.pipeline_mode<synchronous>, transform_indices = @transform_2, window_bounds = array<i64: 1, 128>}, {pipeline_mode = #tpu.pipeline_mode<synchronous>, transform_indices = @transform_3, window_bounds = array<i64: 1, 128>}, {transform_indices = @transform_4, window_bounds = array<i64: 8, 128>}]} {
    %c0 = arith.constant 0 : index
    %c0_0 = arith.constant 0 : index
    %0 = vector.load %arg1[%c0, %c0_0] : memref<8x128xbf16, #tpu.memory_space<vmem>>, vector<8x128xbf16>
    %c0_1 = arith.constant 0 : index
    %c0_2 = arith.constant 0 : index
    %1 = vector.load %arg2[%c0_1, %c0_2] : memref<128x128xbf16, #tpu.memory_space<vmem>>, vector<128x128xbf16>
    %cst = arith.constant dense<0.000000e+00> : vector<8x128xf32>
    %2 = tpu.matmul %0, %1, %cst {dimension_numbers = #tpu.dot_dimension_numbers<[1], [0], [0], [1], [0, 0, 1, 1], [], []>} : vector<8x128xbf16>, vector<128x128xbf16>, vector<8x128xf32> -> vector<8x128xf32>
    %c0_3 = arith.constant 0 : index
    %c0_4 = arith.constant 0 : index
    %3 = vector.load %arg3[%c0_3, %c0_4] : memref<1x128xf32, #tpu.memory_space<vmem>>, vector<1x128xf32>
    %4 = vector.broadcast %3 : vector<1x128xf32> to vector<8x128xf32>
    %5 = arith.mulf %2, %4 : vector<8x128xf32>
    %c0_5 = arith.constant 0 : index
    %c0_6 = arith.constant 0 : index
    %6 = vector.load %arg4[%c0_5, %c0_6] : memref<1x128xf32, #tpu.memory_space<vmem>>, vector<1x128xf32>
    %7 = vector.broadcast %6 : vector<1x128xf32> to vector<8x128xf32>
    %8 = arith.addf %5, %7 : vector<8x128xf32>
    %9 = arith.truncf %8 : vector<8x128xf32> to vector<8x128xbf16>
    %c0_7 = arith.constant 0 : index
    %c0_8 = arith.constant 0 : index
    %10 = vector.load %arg5[%c0_7, %c0_8] : memref<8x128xbf16, #tpu.memory_space<vmem>>, vector<8x128xbf16>
    tpu.vector_store %arg5[%c0_7, %c0_8], %9 {strides = array<i32>} : memref<8x128xbf16, #tpu.memory_space<vmem>>, vector<8x128xbf16>,
    return
  }
  func.func @transform_0(%arg0: i32) -> (i32, i32) {
    %c0_i32 = arith.constant 0 : i32
    %c0_i32_0 = arith.constant 0 : i32
    return %arg0, %c0_i32 : i32, i32
  }
  func.func @transform_1(%arg0: i32) -> (i32, i32) {
    %c0_i32 = arith.constant 0 : i32
    %c0_i32_0 = arith.constant 0 : i32
    %c0_i32_1 = arith.constant 0 : i32
    return %c0_i32, %c0_i32_0 : i32, i32
  }
  func.func @transform_2(%arg0: i32) -> (i32, i32) {
    %c0_i32 = arith.constant 0 : i32
    %c0_i32_0 = arith.constant 0 : i32
    %c0_i32_1 = arith.constant 0 : i32
    return %c0_i32, %c0_i32_0 : i32, i32
  }
  func.func @transform_3(%arg0: i32) -> (i32, i32) {
    %c0_i32 = arith.constant 0 : i32
    %c0_i32_0 = arith.constant 0 : i32
    %c0_i32_1 = arith.constant 0 : i32
    return %c0_i32, %c0_i32_0 : i32, i32
  }
  func.func @transform_4(%arg0: i32) -> (i32, i32) {
    %c0_i32 = arith.constant 0 : i32
    %c0_i32_0 = arith.constant 0 : i32
    return %arg0, %c0_i32 : i32, i32
  }
}

module attributes {stable_mosaic.version = 11 : i64} {
  func.func @_mm_bn_kernel(%arg0: i32, %arg1: memref<8x1152xbf16, #tpu.memory_space<vmem>>, %arg2: memref<1152x128xbf16, #tpu.memory_space<vmem>>, %arg3: memref<1x128xf32, #tpu.memory_space<vmem>>, %arg4: memref<1x128xf32, #tpu.memory_space<vmem>>, %arg5: memref<8x128xbf16, #tpu.memory_space<vmem>>, %arg6: memref<8x128xbf16, #tpu.memory_space<vmem>>) attributes {dimension_semantics = [#tpu.dimension_semantics<parallel>], iteration_bounds = array<i64: 1>, scalar_prefetch = 0 : i64, scratch_operands = 0 : i64, tpu.core_type = #tpu.core_type<tc>, window_params = [{transform_indices = @transform_0, window_bounds = array<i64: 8, 1152>}, {pipeline_mode = #tpu.pipeline_mode<synchronous>, transform_indices = @transform_1, window_bounds = array<i64: 1152, 128>}, {pipeline_mode = #tpu.pipeline_mode<synchronous>, transform_indices = @transform_2, window_bounds = array<i64: 1, 128>}, {pipeline_mode = #tpu.pipeline_mode<synchronous>, transform_indices = @transform_3, window_bounds = array<i64: 1, 128>}, {transform_indices = @transform_4, window_bounds = array<i64: 8, 128>}, {transform_indices = @transform_5, window_bounds = array<i64: 8, 128>}]} {
    %c0 = arith.constant 0 : index
    %c0_0 = arith.constant 0 : index
    %0 = vector.load %arg1[%c0, %c0_0] : memref<8x1152xbf16, #tpu.memory_space<vmem>>, vector<8x1152xbf16>
    %c0_1 = arith.constant 0 : index
    %c0_2 = arith.constant 0 : index
    %1 = vector.load %arg2[%c0_1, %c0_2] : memref<1152x128xbf16, #tpu.memory_space<vmem>>, vector<1152x128xbf16>
    %cst = arith.constant dense<0.000000e+00> : vector<8x128xf32>
    %2 = tpu.matmul %0, %1, %cst {dimension_numbers = #tpu.dot_dimension_numbers<[1], [0], [0], [1], [0, 0, 1, 1], [], []>} : vector<8x1152xbf16>, vector<1152x128xbf16>, vector<8x128xf32> -> vector<8x128xf32>
    %c0_3 = arith.constant 0 : index
    %c0_4 = arith.constant 0 : index
    %3 = vector.load %arg3[%c0_3, %c0_4] : memref<1x128xf32, #tpu.memory_space<vmem>>, vector<1x128xf32>
    %4 = vector.broadcast %3 : vector<1x128xf32> to vector<8x128xf32>
    %5 = arith.mulf %2, %4 : vector<8x128xf32>
    %c0_5 = arith.constant 0 : index
    %c0_6 = arith.constant 0 : index
    %6 = vector.load %arg4[%c0_5, %c0_6] : memref<1x128xf32, #tpu.memory_space<vmem>>, vector<1x128xf32>
    %7 = vector.broadcast %6 : vector<1x128xf32> to vector<8x128xf32>
    %8 = arith.addf %5, %7 : vector<8x128xf32>
    %c0_7 = arith.constant 0 : index
    %c0_8 = arith.constant 0 : index
    %9 = vector.load %arg5[%c0_7, %c0_8] : memref<8x128xbf16, #tpu.memory_space<vmem>>, vector<8x128xbf16>
    %10 = arith.extf %9 : vector<8x128xbf16> to vector<8x128xf32>
    %11 = arith.addf %8, %10 : vector<8x128xf32>
    %cst_9 = arith.constant 0.000000e+00 : f32
    %12 = vector.broadcast %cst_9 : f32 to vector<8x128xf32>
    %13 = arith.maximumf %11, %12 : vector<8x128xf32>
    %14 = arith.truncf %13 : vector<8x128xf32> to vector<8x128xbf16>
    %c0_10 = arith.constant 0 : index
    %c0_11 = arith.constant 0 : index
    %15 = vector.load %arg6[%c0_10, %c0_11] : memref<8x128xbf16, #tpu.memory_space<vmem>>, vector<8x128xbf16>
    tpu.vector_store %arg6[%c0_10, %c0_11], %14 {strides = array<i32>} : memref<8x128xbf16, #tpu.memory_space<vmem>>, vector<8x128xbf16>,
    return
  }
  func.func @transform_0(%arg0: i32) -> (i32, i32) {
    %c0_i32 = arith.constant 0 : i32
    %c0_i32_0 = arith.constant 0 : i32
    return %arg0, %c0_i32 : i32, i32
  }
  func.func @transform_1(%arg0: i32) -> (i32, i32) {
    %c0_i32 = arith.constant 0 : i32
    %c0_i32_0 = arith.constant 0 : i32
    %c0_i32_1 = arith.constant 0 : i32
    return %c0_i32, %c0_i32_0 : i32, i32
  }
  func.func @transform_2(%arg0: i32) -> (i32, i32) {
    %c0_i32 = arith.constant 0 : i32
    %c0_i32_0 = arith.constant 0 : i32
    %c0_i32_1 = arith.constant 0 : i32
    return %c0_i32, %c0_i32_0 : i32, i32
  }
  func.func @transform_3(%arg0: i32) -> (i32, i32) {
    %c0_i32 = arith.constant 0 : i32
    %c0_i32_0 = arith.constant 0 : i32
    %c0_i32_1 = arith.constant 0 : i32
    return %c0_i32, %c0_i32_0 : i32, i32
  }
  func.func @transform_4(%arg0: i32) -> (i32, i32) {
    %c0_i32 = arith.constant 0 : i32
    %c0_i32_0 = arith.constant 0 : i32
    return %arg0, %c0_i32 : i32, i32
  }
  func.func @transform_5(%arg0: i32) -> (i32, i32) {
    %c0_i32 = arith.constant 0 : i32
    %c0_i32_0 = arith.constant 0 : i32
    return %arg0, %c0_i32 : i32, i32
  }
}

module attributes {stable_mosaic.version = 11 : i64} {
  func.func @_mm_bn_kernel(%arg0: i32, %arg1: memref<2x1152xbf16, #tpu.memory_space<vmem>>, %arg2: memref<1152x128xbf16, #tpu.memory_space<vmem>>, %arg3: memref<1x128xf32, #tpu.memory_space<vmem>>, %arg4: memref<1x128xf32, #tpu.memory_space<vmem>>, %arg5: memref<2x128xbf16, #tpu.memory_space<vmem>>) attributes {dimension_semantics = [#tpu.dimension_semantics<parallel>], iteration_bounds = array<i64: 1>, scalar_prefetch = 0 : i64, scratch_operands = 0 : i64, tpu.core_type = #tpu.core_type<tc>, window_params = [{transform_indices = @transform_0, window_bounds = array<i64: 2, 1152>}, {pipeline_mode = #tpu.pipeline_mode<synchronous>, transform_indices = @transform_1, window_bounds = array<i64: 1152, 128>}, {pipeline_mode = #tpu.pipeline_mode<synchronous>, transform_indices = @transform_2, window_bounds = array<i64: 1, 128>}, {pipeline_mode = #tpu.pipeline_mode<synchronous>, transform_indices = @transform_3, window_bounds = array<i64: 1, 128>}, {transform_indices = @transform_4, window_bounds = array<i64: 2, 128>}]} {
    %c0 = arith.constant 0 : index
    %c0_0 = arith.constant 0 : index
    %0 = vector.load %arg1[%c0, %c0_0] : memref<2x1152xbf16, #tpu.memory_space<vmem>>, vector<2x1152xbf16>
    %c0_1 = arith.constant 0 : index
    %c0_2 = arith.constant 0 : index
    %1 = vector.load %arg2[%c0_1, %c0_2] : memref<1152x128xbf16, #tpu.memory_space<vmem>>, vector<1152x128xbf16>
    %cst = arith.constant dense<0.000000e+00> : vector<2x128xf32>
    %2 = tpu.matmul %0, %1, %cst {dimension_numbers = #tpu.dot_dimension_numbers<[1], [0], [0], [1], [0, 0, 1, 1], [], []>} : vector<2x1152xbf16>, vector<1152x128xbf16>, vector<2x128xf32> -> vector<2x128xf32>
    %c0_3 = arith.constant 0 : index
    %c0_4 = arith.constant 0 : index
    %3 = vector.load %arg3[%c0_3, %c0_4] : memref<1x128xf32, #tpu.memory_space<vmem>>, vector<1x128xf32>
    %4 = vector.broadcast %3 : vector<1x128xf32> to vector<2x128xf32>
    %5 = arith.mulf %2, %4 : vector<2x128xf32>
    %c0_5 = arith.constant 0 : index
    %c0_6 = arith.constant 0 : index
    %6 = vector.load %arg4[%c0_5, %c0_6] : memref<1x128xf32, #tpu.memory_space<vmem>>, vector<1x128xf32>
    %7 = vector.broadcast %6 : vector<1x128xf32> to vector<2x128xf32>
    %8 = arith.addf %5, %7 : vector<2x128xf32>
    %cst_7 = arith.constant 0.000000e+00 : f32
    %9 = vector.broadcast %cst_7 : f32 to vector<2x128xf32>
    %10 = arith.maximumf %8, %9 : vector<2x128xf32>
    %11 = arith.truncf %10 : vector<2x128xf32> to vector<2x128xbf16>
    %c0_8 = arith.constant 0 : index
    %c0_9 = arith.constant 0 : index
    %12 = vector.load %arg5[%c0_8, %c0_9] : memref<2x128xbf16, #tpu.memory_space<vmem>>, vector<2x128xbf16>
    tpu.vector_store %arg5[%c0_8, %c0_9], %11 {strides = array<i32>} : memref<2x128xbf16, #tpu.memory_space<vmem>>, vector<2x128xbf16>,
    return
  }
  func.func @transform_0(%arg0: i32) -> (i32, i32) {
    %c0_i32 = arith.constant 0 : i32
    %c0_i32_0 = arith.constant 0 : i32
    return %arg0, %c0_i32 : i32, i32
  }
  func.func @transform_1(%arg0: i32) -> (i32, i32) {
    %c0_i32 = arith.constant 0 : i32
    %c0_i32_0 = arith.constant 0 : i32
    %c0_i32_1 = arith.constant 0 : i32
    return %c0_i32, %c0_i32_0 : i32, i32
  }
  func.func @transform_2(%arg0: i32) -> (i32, i32) {
    %c0_i32 = arith.constant 0 : i32
    %c0_i32_0 = arith.constant 0 : i32
    %c0_i32_1 = arith.constant 0 : i32
    return %c0_i32, %c0_i32_0 : i32, i32
  }
  func.func @transform_3(%arg0: i32) -> (i32, i32) {
    %c0_i32 = arith.constant 0 : i32
    %c0_i32_0 = arith.constant 0 : i32
    %c0_i32_1 = arith.constant 0 : i32
    return %c0_i32, %c0_i32_0 : i32, i32
  }
  func.func @transform_4(%arg0: i32) -> (i32, i32) {
    %c0_i32 = arith.constant 0 : i32
    %c0_i32_0 = arith.constant 0 : i32
    return %arg0, %c0_i32 : i32, i32
  }
}

module attributes {stable_mosaic.version = 11 : i64} {
  func.func @_mm_bn_kernel(%arg0: i32, %arg1: memref<2x128xbf16, #tpu.memory_space<vmem>>, %arg2: memref<128x128xbf16, #tpu.memory_space<vmem>>, %arg3: memref<1x128xf32, #tpu.memory_space<vmem>>, %arg4: memref<1x128xf32, #tpu.memory_space<vmem>>, %arg5: memref<2x128xbf16, #tpu.memory_space<vmem>>) attributes {dimension_semantics = [#tpu.dimension_semantics<parallel>], iteration_bounds = array<i64: 1>, scalar_prefetch = 0 : i64, scratch_operands = 0 : i64, tpu.core_type = #tpu.core_type<tc>, window_params = [{transform_indices = @transform_0, window_bounds = array<i64: 2, 128>}, {pipeline_mode = #tpu.pipeline_mode<synchronous>, transform_indices = @transform_1, window_bounds = array<i64: 128, 128>}, {pipeline_mode = #tpu.pipeline_mode<synchronous>, transform_indices = @transform_2, window_bounds = array<i64: 1, 128>}, {pipeline_mode = #tpu.pipeline_mode<synchronous>, transform_indices = @transform_3, window_bounds = array<i64: 1, 128>}, {transform_indices = @transform_4, window_bounds = array<i64: 2, 128>}]} {
    %c0 = arith.constant 0 : index
    %c0_0 = arith.constant 0 : index
    %0 = vector.load %arg1[%c0, %c0_0] : memref<2x128xbf16, #tpu.memory_space<vmem>>, vector<2x128xbf16>
    %c0_1 = arith.constant 0 : index
    %c0_2 = arith.constant 0 : index
    %1 = vector.load %arg2[%c0_1, %c0_2] : memref<128x128xbf16, #tpu.memory_space<vmem>>, vector<128x128xbf16>
    %cst = arith.constant dense<0.000000e+00> : vector<2x128xf32>
    %2 = tpu.matmul %0, %1, %cst {dimension_numbers = #tpu.dot_dimension_numbers<[1], [0], [0], [1], [0, 0, 1, 1], [], []>} : vector<2x128xbf16>, vector<128x128xbf16>, vector<2x128xf32> -> vector<2x128xf32>
    %c0_3 = arith.constant 0 : index
    %c0_4 = arith.constant 0 : index
    %3 = vector.load %arg3[%c0_3, %c0_4] : memref<1x128xf32, #tpu.memory_space<vmem>>, vector<1x128xf32>
    %4 = vector.broadcast %3 : vector<1x128xf32> to vector<2x128xf32>
    %5 = arith.mulf %2, %4 : vector<2x128xf32>
    %c0_5 = arith.constant 0 : index
    %c0_6 = arith.constant 0 : index
    %6 = vector.load %arg4[%c0_5, %c0_6] : memref<1x128xf32, #tpu.memory_space<vmem>>, vector<1x128xf32>
    %7 = vector.broadcast %6 : vector<1x128xf32> to vector<2x128xf32>
    %8 = arith.addf %5, %7 : vector<2x128xf32>
    %9 = arith.truncf %8 : vector<2x128xf32> to vector<2x128xbf16>
    %c0_7 = arith.constant 0 : index
    %c0_8 = arith.constant 0 : index
    %10 = vector.load %arg5[%c0_7, %c0_8] : memref<2x128xbf16, #tpu.memory_space<vmem>>, vector<2x128xbf16>
    tpu.vector_store %arg5[%c0_7, %c0_8], %9 {strides = array<i32>} : memref<2x128xbf16, #tpu.memory_space<vmem>>, vector<2x128xbf16>,
    return
  }
  func.func @transform_0(%arg0: i32) -> (i32, i32) {
    %c0_i32 = arith.constant 0 : i32
    %c0_i32_0 = arith.constant 0 : i32
    return %arg0, %c0_i32 : i32, i32
  }
  func.func @transform_1(%arg0: i32) -> (i32, i32) {
    %c0_i32 = arith.constant 0 : i32
    %c0_i32_0 = arith.constant 0 : i32
    %c0_i32_1 = arith.constant 0 : i32
    return %c0_i32, %c0_i32_0 : i32, i32
  }
  func.func @transform_2(%arg0: i32) -> (i32, i32) {
    %c0_i32 = arith.constant 0 : i32
    %c0_i32_0 = arith.constant 0 : i32
    %c0_i32_1 = arith.constant 0 : i32
    return %c0_i32, %c0_i32_0 : i32, i32
  }
  func.func @transform_3(%arg0: i32) -> (i32, i32) {
    %c0_i32 = arith.constant 0 : i32
    %c0_i32_0 = arith.constant 0 : i32
    %c0_i32_1 = arith.constant 0 : i32
    return %c0_i32, %c0_i32_0 : i32, i32
  }
  func.func @transform_4(%arg0: i32) -> (i32, i32) {
    %c0_i32 = arith.constant 0 : i32
    %c0_i32_0 = arith.constant 0 : i32
    return %arg0, %c0_i32 : i32, i32
  }
}

module attributes {stable_mosaic.version = 11 : i64} {
  func.func @_mm_bn_kernel(%arg0: i32, %arg1: memref<2x1152xbf16, #tpu.memory_space<vmem>>, %arg2: memref<1152x128xbf16, #tpu.memory_space<vmem>>, %arg3: memref<1x128xf32, #tpu.memory_space<vmem>>, %arg4: memref<1x128xf32, #tpu.memory_space<vmem>>, %arg5: memref<2x128xbf16, #tpu.memory_space<vmem>>, %arg6: memref<2x128xbf16, #tpu.memory_space<vmem>>) attributes {dimension_semantics = [#tpu.dimension_semantics<parallel>], iteration_bounds = array<i64: 1>, scalar_prefetch = 0 : i64, scratch_operands = 0 : i64, tpu.core_type = #tpu.core_type<tc>, window_params = [{transform_indices = @transform_0, window_bounds = array<i64: 2, 1152>}, {pipeline_mode = #tpu.pipeline_mode<synchronous>, transform_indices = @transform_1, window_bounds = array<i64: 1152, 128>}, {pipeline_mode = #tpu.pipeline_mode<synchronous>, transform_indices = @transform_2, window_bounds = array<i64: 1, 128>}, {pipeline_mode = #tpu.pipeline_mode<synchronous>, transform_indices = @transform_3, window_bounds = array<i64: 1, 128>}, {transform_indices = @transform_4, window_bounds = array<i64: 2, 128>}, {transform_indices = @transform_5, window_bounds = array<i64: 2, 128>}]} {
    %c0 = arith.constant 0 : index
    %c0_0 = arith.constant 0 : index
    %0 = vector.load %arg1[%c0, %c0_0] : memref<2x1152xbf16, #tpu.memory_space<vmem>>, vector<2x1152xbf16>
    %c0_1 = arith.constant 0 : index
    %c0_2 = arith.constant 0 : index
    %1 = vector.load %arg2[%c0_1, %c0_2] : memref<1152x128xbf16, #tpu.memory_space<vmem>>, vector<1152x128xbf16>
    %cst = arith.constant dense<0.000000e+00> : vector<2x128xf32>
    %2 = tpu.matmul %0, %1, %cst {dimension_numbers = #tpu.dot_dimension_numbers<[1], [0], [0], [1], [0, 0, 1, 1], [], []>} : vector<2x1152xbf16>, vector<1152x128xbf16>, vector<2x128xf32> -> vector<2x128xf32>
    %c0_3 = arith.constant 0 : index
    %c0_4 = arith.constant 0 : index
    %3 = vector.load %arg3[%c0_3, %c0_4] : memref<1x128xf32, #tpu.memory_space<vmem>>, vector<1x128xf32>
    %4 = vector.broadcast %3 : vector<1x128xf32> to vector<2x128xf32>
    %5 = arith.mulf %2, %4 : vector<2x128xf32>
    %c0_5 = arith.constant 0 : index
    %c0_6 = arith.constant 0 : index
    %6 = vector.load %arg4[%c0_5, %c0_6] : memref<1x128xf32, #tpu.memory_space<vmem>>, vector<1x128xf32>
    %7 = vector.broadcast %6 : vector<1x128xf32> to vector<2x128xf32>
    %8 = arith.addf %5, %7 : vector<2x128xf32>
    %c0_7 = arith.constant 0 : index
    %c0_8 = arith.constant 0 : index
    %9 = vector.load %arg5[%c0_7, %c0_8] : memref<2x128xbf16, #tpu.memory_space<vmem>>, vector<2x128xbf16>
    %10 = arith.extf %9 : vector<2x128xbf16> to vector<2x128xf32>
    %11 = arith.addf %8, %10 : vector<2x128xf32>
    %cst_9 = arith.constant 0.000000e+00 : f32
    %12 = vector.broadcast %cst_9 : f32 to vector<2x128xf32>
    %13 = arith.maximumf %11, %12 : vector<2x128xf32>
    %14 = arith.truncf %13 : vector<2x128xf32> to vector<2x128xbf16>
    %c0_10 = arith.constant 0 : index
    %c0_11 = arith.constant 0 : index
    %15 = vector.load %arg6[%c0_10, %c0_11] : memref<2x128xbf16, #tpu.memory_space<vmem>>, vector<2x128xbf16>
    tpu.vector_store %arg6[%c0_10, %c0_11], %14 {strides = array<i32>} : memref<2x128xbf16, #tpu.memory_space<vmem>>, vector<2x128xbf16>,
    return
  }
  func.func @transform_0(%arg0: i32) -> (i32, i32) {
    %c0_i32 = arith.constant 0 : i32
    %c0_i32_0 = arith.constant 0 : i32
    return %arg0, %c0_i32 : i32, i32
  }
  func.func @transform_1(%arg0: i32) -> (i32, i32) {
    %c0_i32 = arith.constant 0 : i32
    %c0_i32_0 = arith.constant 0 : i32
    %c0_i32_1 = arith.constant 0 : i32
    return %c0_i32, %c0_i32_0 : i32, i32
  }
  func.func @transform_2(%arg0: i32) -> (i32, i32) {
    %c0_i32 = arith.constant 0 : i32
    %c0_i32_0 = arith.constant 0 : i32
    %c0_i32_1 = arith.constant 0 : i32
    return %c0_i32, %c0_i32_0 : i32, i32
  }
  func.func @transform_3(%arg0: i32) -> (i32, i32) {
    %c0_i32 = arith.constant 0 : i32
    %c0_i32_0 = arith.constant 0 : i32
    %c0_i32_1 = arith.constant 0 : i32
    return %c0_i32, %c0_i32_0 : i32, i32
  }
  func.func @transform_4(%arg0: i32) -> (i32, i32) {
    %c0_i32 = arith.constant 0 : i32
    %c0_i32_0 = arith.constant 0 : i32
    return %arg0, %c0_i32 : i32, i32
  }
  func.func @transform_5(%arg0: i32) -> (i32, i32) {
    %c0_i32 = arith.constant 0 : i32
    %c0_i32_0 = arith.constant 0 : i32
    return %arg0, %c0_i32 : i32, i32
  }
}

module attributes {stable_mosaic.version = 11 : i64} {
  func.func @_head_kernel(%arg0: memref<2x1x128xbf16, #tpu.memory_space<vmem>>, %arg1: memref<2x4xf32, #tpu.memory_space<vmem>>, %arg2: memref<4x8xf32, #tpu.memory_space<vmem>>, %arg3: memref<1x8xf32, #tpu.memory_space<vmem>>, %arg4: memref<1x8xf32, #tpu.memory_space<vmem>>, %arg5: memref<8x4xf32, #tpu.memory_space<vmem>>, %arg6: memref<1x4xf32, #tpu.memory_space<vmem>>, %arg7: memref<1x4xf32, #tpu.memory_space<vmem>>, %arg8: memref<128x512xf32, #tpu.memory_space<vmem>>, %arg9: memref<4x512xf32, #tpu.memory_space<vmem>>, %arg10: memref<1x512xf32, #tpu.memory_space<vmem>>, %arg11: memref<512x2xf32, #tpu.memory_space<vmem>>, %arg12: memref<1x2xf32, #tpu.memory_space<vmem>>, %arg13: memref<2x2xf32, #tpu.memory_space<vmem>>) attributes {dimension_semantics = [], scalar_prefetch = 0 : i64, scratch_operands = 0 : i64, tpu.core_type = #tpu.core_type<tc>} {
    %c0 = arith.constant 0 : index
    %c0_0 = arith.constant 0 : index
    %c0_1 = arith.constant 0 : index
    %0 = vector.load %arg0[%c0, %c0_0, %c0_1] : memref<2x1x128xbf16, #tpu.memory_space<vmem>>, vector<2x1x128xbf16>
    %1 = arith.extf %0 : vector<2x1x128xbf16> to vector<2x1x128xf32>
    %cst = arith.constant dense<0.000000e+00> : vector<2x128xf32>
    %2 = vector.multi_reduction <add>, %1, %cst [1] : vector<2x1x128xf32> to vector<2x128xf32>
    %cst_2 = arith.constant 1.000000e+00 : f32
    %3 = vector.broadcast %cst_2 : f32 to vector<2x128xf32>
    %4 = arith.divf %2, %3 : vector<2x128xf32>
    %c0_3 = arith.constant 0 : index
    %c0_4 = arith.constant 0 : index
    %5 = vector.load %arg1[%c0_3, %c0_4] : memref<2x4xf32, #tpu.memory_space<vmem>>, vector<2x4xf32>
    %c0_5 = arith.constant 0 : index
    %c0_6 = arith.constant 0 : index
    %6 = vector.load %arg2[%c0_5, %c0_6] : memref<4x8xf32, #tpu.memory_space<vmem>>, vector<4x8xf32>
    %cst_7 = arith.constant dense<0.000000e+00> : vector<2x8xf32>
    %7 = tpu.matmul %5, %6, %cst_7 {dimension_numbers = #tpu.dot_dimension_numbers<[1], [0], [0], [1], [0, 0, 1, 1], [], []>} : vector<2x4xf32>, vector<4x8xf32>, vector<2x8xf32> -> vector<2x8xf32>
    %c0_8 = arith.constant 0 : index
    %c0_9 = arith.constant 0 : index
    %8 = vector.load %arg3[%c0_8, %c0_9] : memref<1x8xf32, #tpu.memory_space<vmem>>, vector<1x8xf32>
    %9 = vector.broadcast %8 : vector<1x8xf32> to vector<2x8xf32>
    %10 = arith.mulf %7, %9 : vector<2x8xf32>
    %c0_10 = arith.constant 0 : index
    %c0_11 = arith.constant 0 : index
    %11 = vector.load %arg4[%c0_10, %c0_11] : memref<1x8xf32, #tpu.memory_space<vmem>>, vector<1x8xf32>
    %12 = vector.broadcast %11 : vector<1x8xf32> to vector<2x8xf32>
    %13 = arith.addf %10, %12 : vector<2x8xf32>
    %cst_12 = arith.constant 0.000000e+00 : f32
    %14 = vector.broadcast %cst_12 : f32 to vector<2x8xf32>
    %15 = arith.maximumf %13, %14 : vector<2x8xf32>
    %c0_13 = arith.constant 0 : index
    %c0_14 = arith.constant 0 : index
    %16 = vector.load %arg5[%c0_13, %c0_14] : memref<8x4xf32, #tpu.memory_space<vmem>>, vector<8x4xf32>
    %cst_15 = arith.constant dense<0.000000e+00> : vector<2x4xf32>
    %17 = tpu.matmul %15, %16, %cst_15 {dimension_numbers = #tpu.dot_dimension_numbers<[1], [0], [0], [1], [0, 0, 1, 1], [], []>} : vector<2x8xf32>, vector<8x4xf32>, vector<2x4xf32> -> vector<2x4xf32>
    %c0_16 = arith.constant 0 : index
    %c0_17 = arith.constant 0 : index
    %18 = vector.load %arg6[%c0_16, %c0_17] : memref<1x4xf32, #tpu.memory_space<vmem>>, vector<1x4xf32>
    %19 = vector.broadcast %18 : vector<1x4xf32> to vector<2x4xf32>
    %20 = arith.mulf %17, %19 : vector<2x4xf32>
    %c0_18 = arith.constant 0 : index
    %c0_19 = arith.constant 0 : index
    %21 = vector.load %arg7[%c0_18, %c0_19] : memref<1x4xf32, #tpu.memory_space<vmem>>, vector<1x4xf32>
    %22 = vector.broadcast %21 : vector<1x4xf32> to vector<2x4xf32>
    %23 = arith.addf %20, %22 : vector<2x4xf32>
    %cst_20 = arith.constant 0.000000e+00 : f32
    %24 = vector.broadcast %cst_20 : f32 to vector<2x4xf32>
    %25 = arith.maximumf %23, %24 : vector<2x4xf32>
    %c0_21 = arith.constant 0 : index
    %c0_22 = arith.constant 0 : index
    %26 = vector.load %arg8[%c0_21, %c0_22] : memref<128x512xf32, #tpu.memory_space<vmem>>, vector<128x512xf32>
    %cst_23 = arith.constant dense<0.000000e+00> : vector<2x512xf32>
    %27 = tpu.matmul %4, %26, %cst_23 {dimension_numbers = #tpu.dot_dimension_numbers<[1], [0], [0], [1], [0, 0, 1, 1], [], []>} : vector<2x128xf32>, vector<128x512xf32>, vector<2x512xf32> -> vector<2x512xf32>
    %c0_24 = arith.constant 0 : index
    %c0_25 = arith.constant 0 : index
    %28 = vector.load %arg9[%c0_24, %c0_25] : memref<4x512xf32, #tpu.memory_space<vmem>>, vector<4x512xf32>
    %cst_26 = arith.constant dense<0.000000e+00> : vector<2x512xf32>
    %29 = tpu.matmul %25, %28, %cst_26 {dimension_numbers = #tpu.dot_dimension_numbers<[1], [0], [0], [1], [0, 0, 1, 1], [], []>} : vector<2x4xf32>, vector<4x512xf32>, vector<2x512xf32> -> vector<2x512xf32>
    %30 = arith.addf %27, %29 : vector<2x512xf32>
    %c0_27 = arith.constant 0 : index
    %c0_28 = arith.constant 0 : index
    %31 = vector.load %arg10[%c0_27, %c0_28] : memref<1x512xf32, #tpu.memory_space<vmem>>, vector<1x512xf32>
    %32 = vector.broadcast %31 : vector<1x512xf32> to vector<2x512xf32>
    %33 = arith.addf %30, %32 : vector<2x512xf32>
    %c0_29 = arith.constant 0 : index
    %c0_30 = arith.constant 0 : index
    %34 = vector.load %arg11[%c0_29, %c0_30] : memref<512x2xf32, #tpu.memory_space<vmem>>, vector<512x2xf32>
    %cst_31 = arith.constant dense<0.000000e+00> : vector<2x2xf32>
    %35 = tpu.matmul %33, %34, %cst_31 {dimension_numbers = #tpu.dot_dimension_numbers<[1], [0], [0], [1], [0, 0, 1, 1], [], []>} : vector<2x512xf32>, vector<512x2xf32>, vector<2x2xf32> -> vector<2x2xf32>
    %c0_32 = arith.constant 0 : index
    %c0_33 = arith.constant 0 : index
    %36 = vector.load %arg12[%c0_32, %c0_33] : memref<1x2xf32, #tpu.memory_space<vmem>>, vector<1x2xf32>
    %37 = vector.broadcast %36 : vector<1x2xf32> to vector<2x2xf32>
    %38 = arith.addf %35, %37 : vector<2x2xf32>
    %c0_34 = arith.constant 0 : index
    %c0_35 = arith.constant 0 : index
    %39 = vector.load %arg13[%c0_34, %c0_35] : memref<2x2xf32, #tpu.memory_space<vmem>>, vector<2x2xf32>
    tpu.vector_store %arg13[%c0_34, %c0_35], %38 {strides = array<i32>} : memref<2x2xf32, #tpu.memory_space<vmem>>, vector<2x2xf32>,
    return
  }
}

</mosaic_0001>

<llo_original>
// kernel: forward.15
$region0: #{forward.15}
  #allocation0 [shape = 'u32[]', space=smem, size = 0x4, offset = 0x4, fixed_abs, tag = 'smem constant byte address 0x4 - core index']
  #allocation1 [shape = 'u32[72,128]{1,0:T(1,128)}', space=vmem, size = 0x9000, scoped, tag = 'internal scratch']
  %s0 = inlined_call_operand.vmem [shape: bf16[512,147], index: 0, kind: input, shape index: {}]
  %s1 = inlined_call_operand.vmem [shape: bf16[147,128], index: 1, kind: input, shape index: {}]
  %s2 = inlined_call_operand.vmem [shape: f32[1,128], index: 2, kind: input, shape index: {}]
  %s3 = inlined_call_operand.vmem [shape: f32[1,128], index: 3, kind: input, shape index: {}]
  %s4 = inlined_call_operand.vmem [shape: bf16[512,128], index: 4, kind: output, shape index: {}]
  %s5 = sld [smem:[#allocation0]]
  $region26: #{forward.15} parent=0
    _
  %s7 = ssub.s32 1, %s5
  %s8 = scalar_select 0, %s7, %s5
  // Predicated region
  $region2: #{forward.15} parent=0 // pred_check
    _
  $region3: #{forward.15} parent=0 // pred_check_branch
    %10 = sbr.rel (0) target = $region5
  $region4: #{forward.15} parent=0 // pred_region
    _
  $region5: #{forward.15} parent=0 // pred_fallthru
    _
  // Predicated region
  $region6: #{forward.15} parent=0 // pred_check
    _
  $region7: #{forward.15} parent=0 // pred_check_branch
    %12 = sbr.rel (0) target = $region9
  $region8: #{forward.15} parent=0 // pred_region
    _
  $region9: #{forward.15} parent=0 // pred_fallthru
    _
  // Predicated region
  $region10: #{forward.15} parent=0 // pred_check
    _
  $region11: #{forward.15} parent=0 // pred_check_branch
    %14 = sbr.rel (0) target = $region13
  $region12: #{forward.15} parent=0 // pred_region
    _
  $region13: #{forward.15} parent=0 // pred_fallthru
    _
  // Predicated region
  $region14: #{forward.15} parent=0 // pred_check
    _
  $region15: #{forward.15} parent=0 // pred_check_branch
    %16 = sbr.rel (0) target = $region17
  $region16: #{forward.15} parent=0 // pred_region
    _
  $region17: #{forward.15} parent=0 // pred_fallthru
    _
  %v18 = vld [vmem:[%s0] sm:$0xff]
  %v19 = vld [vmem:[%s0 + $0x8] sm:$0xff]
  %v20 = vld [vmem:[%s0 + $0x10] sm:$0xff]
  %v21 = vld [vmem:[%s0 + $0x18] sm:$0xff]
  %v22 = vld [vmem:[%s0 + $0x20] sm:$0xff]
  %v23 = vld [vmem:[%s0 + $0x28] sm:$0xff]
  %v24 = vld [vmem:[%s0 + $0x30] sm:$0xff]
  %v25 = vld [vmem:[%s0 + $0x38] sm:$0xff]
  %v26 = vld [vmem:[%s0 + $0x40] sm:$0xff]
  %v27 = vld [vmem:[%s0 + $0x48] sm:$0xff]
  %v28 = vld [vmem:[%s0 + $0x50] sm:$0xff]
  %v29 = vld [vmem:[%s0 + $0x58] sm:$0xff]
  %v30 = vld [vmem:[%s0 + $0x60] sm:$0xff]
  %v31 = vld [vmem:[%s0 + $0x68] sm:$0xff]
  %v32 = vld [vmem:[%s0 + $0x70] sm:$0xff]
  %v33 = vld [vmem:[%s0 + $0x78] sm:$0xff]
  %v34 = vld [vmem:[%s0 + $0x80] sm:$0xff]
  %v35 = vld [vmem:[%s0 + $0x88] sm:$0xff]
  %v36 = vld [vmem:[%s0 + $0x90] sm:$0xff]
  %v37 = vld [vmem:[%s0 + $0x98] sm:$0xff]
  %v38 = vld [vmem:[%s0 + $0xa0] sm:$0xff]
  %v39 = vld [vmem:[%s0 + $0xa8] sm:$0xff]
  %v40 = vld [vmem:[%s0 + $0xb0] sm:$0xff]
  %v41 = vld [vmem:[%s0 + $0xb8] sm:$0xff]
  %v42 = vld [vmem:[%s0 + $0xc0] sm:$0xff]
  %v43 = vld [vmem:[%s0 + $0xc8] sm:$0xff]
  %v44 = vld [vmem:[%s0 + $0xd0] sm:$0xff]
  %v45 = vld [vmem:[%s0 + $0xd8] sm:$0xff]
  %v46 = vld [vmem:[%s0 + $0xe0] sm:$0xff]
  %v47 = vld [vmem:[%s0 + $0xe8] sm:$0xff]
  %v48 = vld [vmem:[%s0 + $0xf0] sm:$0xff]
  %v49 = vld [vmem:[%s0 + $0xf8] sm:$0xff]
  %v50 = vld [vmem:[%s0 + $0x100] sm:$0xff]
  %v51 = vld [vmem:[%s0 + $0x108] sm:$0xff]
  %v52 = vld [vmem:[%s0 + $0x110] sm:$0xff]
  %v53 = vld [vmem:[%s0 + $0x118] sm:$0xff]
  %v54 = vld [vmem:[%s0 + $0x120] sm:$0xff]
  %v55 = vld [vmem:[%s0 + $0x128] sm:$0xff]
  %v56 = vld [vmem:[%s0 + $0x130] sm:$0xff]
  %v57 = vld [vmem:[%s0 + $0x138] sm:$0xff]
  %v58 = vld [vmem:[%s0 + $0x140] sm:$0xff]
  %v59 = vld [vmem:[%s0 + $0x148] sm:$0xff]
  %v60 = vld [vmem:[%s0 + $0x150] sm:$0xff]
  %v61 = vld [vmem:[%s0 + $0x158] sm:$0xff]
  %v62 = vld [vmem:[%s0 + $0x160] sm:$0xff]
  %v63 = vld [vmem:[%s0 + $0x168] sm:$0xff]
  %v64 = vld [vmem:[%s0 + $0x170] sm:$0xff]
  %v65 = vld [vmem:[%s0 + $0x178] sm:$0xff]
  %v66 = vld [vmem:[%s0 + $0x180] sm:$0xff]
  %v67 = vld [vmem:[%s0 + $0x188] sm:$0xff]
  %v68 = vld [vmem:[%s0 + $0x190] sm:$0xff]
  %v69 = vld [vmem:[%s0 + $0x198] sm:$0xff]
  %v70 = vld [vmem:[%s0 + $0x1a0] sm:$0xff]
  %v71 = vld [vmem:[%s0 + $0x1a8] sm:$0xff]
  %v72 = vld [vmem:[%s0 + $0x1b0] sm:$0xff]
  %v73 = vld [vmem:[%s0 + $0x1b8] sm:$0xff]
  %v74 = vld [vmem:[%s0 + $0x1c0] sm:$0xff]
  %v75 = vld [vmem:[%s0 + $0x1c8] sm:$0xff]
  %v76 = vld [vmem:[%s0 + $0x1d0] sm:$0xff]
  %v77 = vld [vmem:[%s0 + $0x1d8] sm:$0xff]
  %v78 = vld [vmem:[%s0 + $0x1e0] sm:$0xff]
  %v79 = vld [vmem:[%s0 + $0x1e8] sm:$0xff]
  %v80 = vld [vmem:[%s0 + $0x1f0] sm:$0xff]
  %v81 = vld [vmem:[%s0 + $0x1f8] sm:$0xff]
  %v82 = vld [vmem:[%s1] sm:$0xf]
  %v83 = vld [vmem:[%s1 + $0x4] sm:$0xf]
  %v84 = vld [vmem:[%s1 + $0x8] sm:$0xf]
  %v85 = vld [vmem:[%s1 + $0xc] sm:$0xf]
  %v86 = vld [vmem:[%s1 + $0x10] sm:$0xf]
  %v87 = vld [vmem:[%s1 + $0x14] sm:$0xf]
  %v88 = vld [vmem:[%s1 + $0x18] sm:$0xf]
  %v89 = vld [vmem:[%s1 + $0x1c] sm:$0xf]
  %v90 = vld [vmem:[%s1 + $0x20] sm:$0xf]
  %v91 = vld [vmem:[%s1 + $0x24] sm:$0xf]
  %v92 = vld [vmem:[%s1 + $0x28] sm:$0xf]
  %v93 = vld [vmem:[%s1 + $0x2c] sm:$0xf]
  %v94 = vld [vmem:[%s1 + $0x30] sm:$0xf]
  %v95 = vld [vmem:[%s1 + $0x34] sm:$0xf]
  %v96 = vld [vmem:[%s1 + $0x38] sm:$0xf]
  %v97 = vld [vmem:[%s1 + $0x3c] sm:$0xf]
  %v98 = vld [vmem:[%s1 + $0x40] sm:$0xf]
  %v99 = vld [vmem:[%s1 + $0x44] sm:$0xf]
  %v100 = vld [vmem:[%s1 + $0x48] sm:$0x3]
  %v165 = vunpack.c.l.b16 %v18
  %v166 = vunpack.c.h.b16 %v18
  %v167 = vunpack.c.l.b16 %v19
  %v168 = vunpack.c.h.b16 %v19
  %v169 = vunpack.c.l.b16 %v20
  %v170 = vunpack.c.h.b16 %v20
  %v171 = vunpack.c.l.b16 %v21
  %v172 = vunpack.c.h.b16 %v21
  %v173 = vunpack.c.l.b16 %v22
  %v174 = vunpack.c.h.b16 %v22
  %v175 = vunpack.c.l.b16 %v23
  %v176 = vunpack.c.h.b16 %v23
  %v177 = vunpack.c.l.b16 %v24
  %v178 = vunpack.c.h.b16 %v24
  %v179 = vunpack.c.l.b16 %v25
  %v180 = vunpack.c.h.b16 %v25
  %v181 = vunpack.c.l.b16 %v26
  %v182 = vunpack.c.h.b16 %v26
  %v183 = vunpack.c.l.b16 %v27
  %v184 = vunpack.c.h.b16 %v27
  %v185 = vunpack.c.l.b16 %v28
  %v186 = vunpack.c.h.b16 %v28
  %v187 = vunpack.c.l.b16 %v29
  %v188 = vunpack.c.h.b16 %v29
  %v189 = vunpack.c.l.b16 %v30
  %v190 = vunpack.c.h.b16 %v30
  %v191 = vunpack.c.l.b16 %v31
  %v192 = vunpack.c.h.b16 %v31
  %v193 = vunpack.c.l.b16 %v32
  %v194 = vunpack.c.h.b16 %v32
  %v195 = vunpack.c.l.b16 %v33
  %v196 = vunpack.c.h.b16 %v33
  %v197 = vunpack.c.l.b16 %v34
  %v198 = vunpack.c.h.b16 %v34
  %v199 = vunpack.c.l.b16 %v35
  %v200 = vunpack.c.h.b16 %v35
  %v201 = vunpack.c.l.b16 %v36
  %v202 = vunpack.c.h.b16 %v36
  %v203 = vunpack.c.l.b16 %v37
  %v204 = vunpack.c.h.b16 %v37
  %v205 = vunpack.c.l.b16 %v38
  %v206 = vunpack.c.h.b16 %v38
  %v207 = vunpack.c.l.b16 %v39
  %v208 = vunpack.c.h.b16 %v39
  %v209 = vunpack.c.l.b16 %v40
  %v210 = vunpack.c.h.b16 %v40
  %v211 = vunpack.c.l.b16 %v41
  %v212 = vunpack.c.h.b16 %v41
  %v213 = vunpack.c.l.b16 %v42
  %v214 = vunpack.c.h.b16 %v42
  %v215 = vunpack.c.l.b16 %v43
  %v216 = vunpack.c.h.b16 %v43
  %v217 = vunpack.c.l.b16 %v44
  %v218 = vunpack.c.h.b16 %v44
  %v219 = vunpack.c.l.b16 %v45
  %v220 = vunpack.c.h.b16 %v45
  %v221 = vunpack.c.l.b16 %v46
  %v222 = vunpack.c.h.b16 %v46
  %v223 = vunpack.c.l.b16 %v47
  %v224 = vunpack.c.h.b16 %v47
  %v225 = vunpack.c.l.b16 %v48
  %v226 = vunpack.c.h.b16 %v48
  %v227 = vunpack.c.l.b16 %v49
  %v228 = vunpack.c.h.b16 %v49
  %v229 = vunpack.c.l.b16 %v50
  %v230 = vunpack.c.h.b16 %v50
  %v231 = vunpack.c.l.b16 %v51
  %v232 = vunpack.c.h.b16 %v51
  %v233 = vunpack.c.l.b16 %v52
  %v234 = vunpack.c.h.b16 %v52
  %v235 = vunpack.c.l.b16 %v53
  %v236 = vunpack.c.h.b16 %v53
  %v237 = vunpack.c.l.b16 %v54
  %v238 = vunpack.c.h.b16 %v54
  %v239 = vunpack.c.l.b16 %v55
  %v240 = vunpack.c.h.b16 %v55
  %v241 = vunpack.c.l.b16 %v56
  %v242 = vunpack.c.h.b16 %v56
  %v243 = vunpack.c.l.b16 %v57
  %v244 = vunpack.c.h.b16 %v57
  %v245 = vunpack.c.l.b16 %v58
  %v246 = vunpack.c.h.b16 %v58
  %v247 = vunpack.c.l.b16 %v59
  %v248 = vunpack.c.h.b16 %v59
  %v249 = vunpack.c.l.b16 %v60
  %v250 = vunpack.c.h.b16 %v60
  %v251 = vunpack.c.l.b16 %v61
  %v252 = vunpack.c.h.b16 %v61
  %v253 = vunpack.c.l.b16 %v62
  %v254 = vunpack.c.h.b16 %v62
  %v255 = vunpack.c.l.b16 %v63
  %v256 = vunpack.c.h.b16 %v63
  %v257 = vunpack.c.l.b16 %v64
  %v258 = vunpack.c.h.b16 %v64
  %v259 = vunpack.c.l.b16 %v65
  %v260 = vunpack.c.h.b16 %v65
  %v261 = vunpack.c.l.b16 %v66
  %v262 = vunpack.c.h.b16 %v66
  %v263 = vunpack.c.l.b16 %v67
  %v264 = vunpack.c.h.b16 %v67
  %v265 = vunpack.c.l.b16 %v68
  %v266 = vunpack.c.h.b16 %v68
  %v267 = vunpack.c.l.b16 %v69
  %v268 = vunpack.c.h.b16 %v69
  %v269 = vunpack.c.l.b16 %v70
  %v270 = vunpack.c.h.b16 %v70
  %v271 = vunpack.c.l.b16 %v71
  %v272 = vunpack.c.h.b16 %v71
  %v273 = vunpack.c.l.b16 %v72
  %v274 = vunpack.c.h.b16 %v72
  %v275 = vunpack.c.l.b16 %v73
  %v276 = vunpack.c.h.b16 %v73
  %v277 = vunpack.c.l.b16 %v74
  %v278 = vunpack.c.h.b16 %v74
  %v279 = vunpack.c.l.b16 %v75
  %v280 = vunpack.c.h.b16 %v75
  %v281 = vunpack.c.l.b16 %v76
  %v282 = vunpack.c.h.b16 %v76
  %v283 = vunpack.c.l.b16 %v77
  %v284 = vunpack.c.h.b16 %v77
  %v285 = vunpack.c.l.b16 %v78
  %v286 = vunpack.c.h.b16 %v78
  %v287 = vunpack.c.l.b16 %v79
  %v288 = vunpack.c.h.b16 %v79
  %v289 = vunpack.c.l.b16 %v80
  %v290 = vunpack.c.h.b16 %v80
  %v291 = vunpack.c.l.b16 %v81
  %v292 = vunpack.c.h.b16 %v81
  %v293 = vpack.c.b16 %v167, %v165
  %v294 = vpack.c.b16 %v168, %v166
  %v295 = vpack.c.b16 %v171, %v169
  %v296 = vpack.c.b16 %v172, %v170
  %v297 = vpack.c.b16 %v175, %v173
  %v298 = vpack.c.b16 %v176, %v174
  %v299 = vpack.c.b16 %v179, %v177
  %v300 = vpack.c.b16 %v180, %v178
  %v301 = vpack.c.b16 %v183, %v181
  %v302 = vpack.c.b16 %v184, %v182
  %v303 = vpack.c.b16 %v187, %v185
  %v304 = vpack.c.b16 %v188, %v186
  %v305 = vpack.c.b16 %v191, %v189
  %v306 = vpack.c.b16 %v192, %v190
  %v307 = vpack.c.b16 %v195, %v193
  %v308 = vpack.c.b16 %v196, %v194
  %v309 = vpack.c.b16 %v199, %v197
  %v310 = vpack.c.b16 %v200, %v198
  %v311 = vpack.c.b16 %v203, %v201
  %v312 = vpack.c.b16 %v204, %v202
  %v313 = vpack.c.b16 %v207, %v205
  %v314 = vpack.c.b16 %v208, %v206
  %v315 = vpack.c.b16 %v211, %v209
  %v316 = vpack.c.b16 %v212, %v210
  %v317 = vpack.c.b16 %v215, %v213
  %v318 = vpack.c.b16 %v216, %v214
  %v319 = vpack.c.b16 %v219, %v217
  %v320 = vpack.c.b16 %v220, %v218
  %v321 = vpack.c.b16 %v223, %v221
  %v322 = vpack.c.b16 %v224, %v222
  %v323 = vpack.c.b16 %v227, %v225
  %v324 = vpack.c.b16 %v228, %v226
  %v325 = vpack.c.b16 %v231, %v229
  %v326 = vpack.c.b16 %v232, %v230
  %v327 = vpack.c.b16 %v235, %v233
  %v328 = vpack.c.b16 %v236, %v234
  %v329 = vpack.c.b16 %v239, %v237
  %v330 = vpack.c.b16 %v240, %v238
  %v331 = vpack.c.b16 %v243, %v241
  %v332 = vpack.c.b16 %v244, %v242
  %v333 = vpack.c.b16 %v247, %v245
  %v334 = vpack.c.b16 %v248, %v246
  %v335 = vpack.c.b16 %v251, %v249
  %v336 = vpack.c.b16 %v252, %v250
  %v337 = vpack.c.b16 %v255, %v253
  %v338 = vpack.c.b16 %v256, %v254
  %v339 = vpack.c.b16 %v259, %v257
  %v340 = vpack.c.b16 %v260, %v258
  %v341 = vpack.c.b16 %v263, %v261
  %v342 = vpack.c.b16 %v264, %v262
  %v343 = vpack.c.b16 %v267, %v265
  %v344 = vpack.c.b16 %v268, %v266
  %v345 = vpack.c.b16 %v271, %v269
  %v346 = vpack.c.b16 %v272, %v270
  %v347 = vpack.c.b16 %v275, %v273
  %v348 = vpack.c.b16 %v276, %v274
  %v349 = vpack.c.b16 %v279, %v277
  %v350 = vpack.c.b16 %v280, %v278
  %v351 = vpack.c.b16 %v283, %v281
  %v352 = vpack.c.b16 %v284, %v282
  %v353 = vpack.c.b16 %v287, %v285
  %v354 = vpack.c.b16 %v288, %v286
  %v355 = vpack.c.b16 %v291, %v289
  %v356 = vpack.c.b16 %v292, %v290
  %v408 = vunpack.c.l.b16 %v82
  %v409 = vunpack.c.l.b16 %v83
  %v410 = vunpack.c.l.b16 %v84
  %v411 = vunpack.c.l.b16 %v85
  %v412 = vunpack.c.l.b16 %v86
  %v413 = vunpack.c.l.b16 %v87
  %v414 = vunpack.c.l.b16 %v88
  %v415 = vunpack.c.l.b16 %v89
  %v416 = vunpack.c.l.b16 %v90
  %v417 = vunpack.c.l.b16 %v91
  %v418 = vunpack.c.l.b16 %v92
  %v419 = vunpack.c.l.b16 %v93
  %v420 = vunpack.c.l.b16 %v94
  %v421 = vunpack.c.l.b16 %v95
  %v422 = vunpack.c.l.b16 %v96
  %v423 = vunpack.c.l.b16 %v97
  %v424 = vunpack.c.l.b16 %v98
  %v425 = vunpack.c.l.b16 %v99
  %v426 = vunpack.c.l.b16 %v100
  %v427 = vpack.c.b16 %v409, %v408
  %v428 = vpack.c.b16 %v411, %v410
  %v429 = vpack.c.b16 %v413, %v412
  %v430 = vpack.c.b16 %v415, %v414
  %v431 = vpack.c.b16 %v417, %v416
  %v432 = vpack.c.b16 %v419, %v418
  %v433 = vpack.c.b16 %v421, %v420
  %v434 = vpack.c.b16 %v423, %v422
  %v435 = vpack.c.b16 %v425, %v424
  %v436 = vpack.c.b16 %v426, %v426
  %vm446 = vcmask 154624
  %v448 = vsel %vm446, %v294, 0
  %v451 = vsel %vm446, %v296, 0
  %v454 = vsel %vm446, %v298, 0
  %v457 = vsel %vm446, %v300, 0
  %v460 = vsel %vm446, %v302, 0
  %v463 = vsel %vm446, %v304, 0
  %v466 = vsel %vm446, %v306, 0
  %v469 = vsel %vm446, %v308, 0
  %v472 = vsel %vm446, %v310, 0
  %v475 = vsel %vm446, %v312, 0
  %v478 = vsel %vm446, %v314, 0
  %v481 = vsel %vm446, %v316, 0
  %v484 = vsel %vm446, %v318, 0
  %v487 = vsel %vm446, %v320, 0
  %v490 = vsel %vm446, %v322, 0
  %v493 = vsel %vm446, %v324, 0
  %v496 = vsel %vm446, %v326, 0
  %v499 = vsel %vm446, %v328, 0
  %v502 = vsel %vm446, %v330, 0
  %v505 = vsel %vm446, %v332, 0
  %v508 = vsel %vm446, %v334, 0
  %v511 = vsel %vm446, %v336, 0
  %v514 = vsel %vm446, %v338, 0
  %v517 = vsel %vm446, %v340, 0
  %v520 = vsel %vm446, %v342, 0
  %v523 = vsel %vm446, %v344, 0
  %v526 = vsel %vm446, %v346, 0
  %v529 = vsel %vm446, %v348, 0
  %v532 = vsel %vm446, %v350, 0
  %v535 = vsel %vm446, %v352, 0
  %v538 = vsel %vm446, %v354, 0
  %v541 = vsel %vm446, %v356, 0
  %vm543 = vcmask 1040384
  %vm544 = vcmask 1041408
  %v545 = vsel %vm543, 4294967295, 65535
  %v546 = vsel %vm544, %v545, 0
  %v548 = vand.u32 %v436, %v546
  %550 = vmatpush.bf16.msra.mxu0 %v434
  %551 = vmatpush.bf16.msra.mxu0 %v433
  %552 = vmatpush.bf16.msra.mxu0 %v432
  %553 = vmatpush.bf16.msra.mxu0 %v431
  %554 = vmatpush.bf16.msra.mxu0 %v430
  %555 = vmatpush.bf16.msra.mxu0 %v429
  %556 = vmatpush.bf16.msra.mxu0 %v428
  %557 = vmatpush.bf16.msra.mxu0 %v427
  %558 = vmatmul.bf16.gmra.mxu0 %v293
  %v559 = vpop.f32.mrf.mxu0
  %v560 = vadd.f32 0.0, %v559
  %v561 = vpop.f32.mrf.mxu0
  %v562 = vadd.f32 0.0, %v561
  %563 = vmatmul.bf16.gmra.mxu0 %v295
  %v564 = vpop.f32.mrf.mxu0
  %v565 = vadd.f32 0.0, %v564
  %v566 = vpop.f32.mrf.mxu0
  %v567 = vadd.f32 0.0, %v566
  %568 = vmatmul.bf16.gmra.mxu0 %v297
  %v569 = vpop.f32.mrf.mxu0
  %v570 = vadd.f32 0.0, %v569
  %v571 = vpop.f32.mrf.mxu0
  %v572 = vadd.f32 0.0, %v571
  %573 = vmatmul.bf16.gmra.mxu0 %v299
  %v574 = vpop.f32.mrf.mxu0
  %v575 = vadd.f32 0.0, %v574
  %v576 = vpop.f32.mrf.mxu0
  %v577 = vadd.f32 0.0, %v576
  %578 = vmatmul.bf16.gmra.mxu0 %v301
  %v579 = vpop.f32.mrf.mxu0
  %v580 = vadd.f32 0.0, %v579
  %v581 = vpop.f32.mrf.mxu0
  %v582 = vadd.f32 0.0, %v581
  %583 = vmatmul.bf16.gmra.mxu0 %v303
  %v584 = vpop.f32.mrf.mxu0
  %v585 = vadd.f32 0.0, %v584
  %v586 = vpop.f32.mrf.mxu0
  %v587 = vadd.f32 0.0, %v586
  %588 = vmatmul.bf16.gmra.mxu0 %v305
  %v589 = vpop.f32.mrf.mxu0
  %v590 = vadd.f32 0.0, %v589
  %v591 = vpop.f32.mrf.mxu0
  %v592 = vadd.f32 0.0, %v591
  %593 = vmatmul.bf16.gmra.mxu0 %v307
  %v594 = vpop.f32.mrf.mxu0
  %v595 = vadd.f32 0.0, %v594
  %v596 = vpop.f32.mrf.mxu0
  %v597 = vadd.f32 0.0, %v596
  %598 = vmatmul.bf16.gmra.mxu0 %v309
  %v599 = vpop.f32.mrf.mxu0
  %v600 = vadd.f32 0.0, %v599
  %v601 = vpop.f32.mrf.mxu0
  %v602 = vadd.f32 0.0, %v601
  %603 = vmatmul.bf16.gmra.mxu0 %v311
  %v604 = vpop.f32.mrf.mxu0
  %v605 = vadd.f32 0.0, %v604
  %v606 = vpop.f32.mrf.mxu0
  %v607 = vadd.f32 0.0, %v606
  %608 = vmatmul.bf16.gmra.mxu0 %v313
  %v609 = vpop.f32.mrf.mxu0
  %v610 = vadd.f32 0.0, %v609
  %v611 = vpop.f32.mrf.mxu0
  %v612 = vadd.f32 0.0, %v611
  %613 = vmatmul.bf16.gmra.mxu0 %v315
  %v614 = vpop.f32.mrf.mxu0
  %v615 = vadd.f32 0.0, %v614
  %v616 = vpop.f32.mrf.mxu0
  %v617 = vadd.f32 0.0, %v616
  %618 = vmatmul.bf16.gmra.mxu0 %v317
  %v619 = vpop.f32.mrf.mxu0
  %v620 = vadd.f32 0.0, %v619
  %v621 = vpop.f32.mrf.mxu0
  %v622 = vadd.f32 0.0, %v621
  %623 = vmatmul.bf16.gmra.mxu0 %v319
  %v624 = vpop.f32.mrf.mxu0
  %v625 = vadd.f32 0.0, %v624
  %v626 = vpop.f32.mrf.mxu0
  %v627 = vadd.f32 0.0, %v626
  %628 = vmatmul.bf16.gmra.mxu0 %v321
  %v629 = vpop.f32.mrf.mxu0
  %v630 = vadd.f32 0.0, %v629
  %v631 = vpop.f32.mrf.mxu0
  %v632 = vadd.f32 0.0, %v631
  %633 = vmatmul.bf16.gmra.mxu0 %v323
  %v634 = vpop.f32.mrf.mxu0
  %v635 = vadd.f32 0.0, %v634
  %v636 = vpop.f32.mrf.mxu0
  %v637 = vadd.f32 0.0, %v636
  %638 = vmatmul.bf16.gmra.mxu0 %v325
  %v639 = vpop.f32.mrf.mxu0
  %v640 = vadd.f32 0.0, %v639
  %v641 = vpop.f32.mrf.mxu0
  %v642 = vadd.f32 0.0, %v641
  %643 = vmatmul.bf16.gmra.mxu0 %v327
  %v644 = vpop.f32.mrf.mxu0
  %v645 = vadd.f32 0.0, %v644
  %v646 = vpop.f32.mrf.mxu0
  %v647 = vadd.f32 0.0, %v646
  %648 = vmatmul.bf16.gmra.mxu0 %v329
  %v649 = vpop.f32.mrf.mxu0
  %v650 = vadd.f32 0.0, %v649
  %v651 = vpop.f32.mrf.mxu0
  %v652 = vadd.f32 0.0, %v651
  %653 = vmatmul.bf16.gmra.mxu0 %v331
  %v654 = vpop.f32.mrf.mxu0
  %v655 = vadd.f32 0.0, %v654
  %v656 = vpop.f32.mrf.mxu0
  %v657 = vadd.f32 0.0, %v656
  %658 = vmatmul.bf16.gmra.mxu0 %v333
  %v659 = vpop.f32.mrf.mxu0
  %v660 = vadd.f32 0.0, %v659
  %v661 = vpop.f32.mrf.mxu0
  %v662 = vadd.f32 0.0, %v661
  %663 = vmatmul.bf16.gmra.mxu0 %v335
  %v664 = vpop.f32.mrf.mxu0
  %v665 = vadd.f32 0.0, %v664
  %v666 = vpop.f32.mrf.mxu0
  %v667 = vadd.f32 0.0, %v666
  %668 = vmatmul.bf16.gmra.mxu0 %v337
  %v669 = vpop.f32.mrf.mxu0
  %v670 = vadd.f32 0.0, %v669
  %v671 = vpop.f32.mrf.mxu0
  %v672 = vadd.f32 0.0, %v671
  %673 = vmatmul.bf16.gmra.mxu0 %v339
  %v674 = vpop.f32.mrf.mxu0
  %v675 = vadd.f32 0.0, %v674
  %v676 = vpop.f32.mrf.mxu0
  %v677 = vadd.f32 0.0, %v676
  %678 = vmatmul.bf16.gmra.mxu0 %v341
  %v679 = vpop.f32.mrf.mxu0
  %v680 = vadd.f32 0.0, %v679
  %v681 = vpop.f32.mrf.mxu0
  %v682 = vadd.f32 0.0, %v681
  %683 = vmatmul.bf16.gmra.mxu0 %v343
  %v684 = vpop.f32.mrf.mxu0
  %v685 = vadd.f32 0.0, %v684
  %v686 = vpop.f32.mrf.mxu0
  %v687 = vadd.f32 0.0, %v686
  %688 = vmatmul.bf16.gmra.mxu0 %v345
  %v689 = vpop.f32.mrf.mxu0
  %v690 = vadd.f32 0.0, %v689
  %v691 = vpop.f32.mrf.mxu0
  %v692 = vadd.f32 0.0, %v691
  %693 = vmatmul.bf16.gmra.mxu0 %v347
  %v694 = vpop.f32.mrf.mxu0
  %v695 = vadd.f32 0.0, %v694
  %v696 = vpop.f32.mrf.mxu0
  %v697 = vadd.f32 0.0, %v696
  %698 = vmatmul.bf16.gmra.mxu0 %v349
  %v699 = vpop.f32.mrf.mxu0
  %v700 = vadd.f32 0.0, %v699
  %v701 = vpop.f32.mrf.mxu0
  %v702 = vadd.f32 0.0, %v701
  %703 = vmatmul.bf16.gmra.mxu0 %v351
  %v704 = vpop.f32.mrf.mxu0
  %v705 = vadd.f32 0.0, %v704
  %v706 = vpop.f32.mrf.mxu0
  %v707 = vadd.f32 0.0, %v706
  %708 = vmatmul.bf16.gmra.mxu0 %v353
  %v709 = vpop.f32.mrf.mxu0
  %v710 = vadd.f32 0.0, %v709
  %v711 = vpop.f32.mrf.mxu0
  %v712 = vadd.f32 0.0, %v711
  %713 = vmatmul.bf16.gmra.mxu0 %v355
  %v714 = vpop.f32.mrf.mxu0
  %v715 = vadd.f32 0.0, %v714
  %v716 = vpop.f32.mrf.mxu0
  %v717 = vadd.f32 0.0, %v716
  %718 = vdwg.mxu0
  %719 = vmatpush.bf16.msra.mxu0 0
  %720 = vmatpush.bf16.msra.mxu0 0
  %721 = vmatpush.bf16.msra.mxu0 0
  %722 = vmatpush.bf16.msra.mxu0 0
  %723 = vmatpush.bf16.msra.mxu0 0
  %724 = vmatpush.bf16.msra.mxu0 0
  %725 = vmatpush.bf16.msra.mxu0 %v548
  %726 = vmatpush.bf16.msra.mxu0 %v435
  %727 = vmatmul.bf16.gmra.mxu0 %v448
  %v728 = vpop.f32.mrf.mxu0
  %v729 = vadd.f32 %v560, %v728
  %v730 = vpop.f32.mrf.mxu0
  %v731 = vadd.f32 %v562, %v730
  %732 = vmatmul.bf16.gmra.mxu0 %v451
  %v733 = vpop.f32.mrf.mxu0
  %v734 = vadd.f32 %v565, %v733
  %v735 = vpop.f32.mrf.mxu0
  %v736 = vadd.f32 %v567, %v735
  %737 = vmatmul.bf16.gmra.mxu0 %v454
  %v738 = vpop.f32.mrf.mxu0
  %v739 = vadd.f32 %v570, %v738
  %v740 = vpop.f32.mrf.mxu0
  %v741 = vadd.f32 %v572, %v740
  %742 = vmatmul.bf16.gmra.mxu0 %v457
  %v743 = vpop.f32.mrf.mxu0
  %v744 = vadd.f32 %v575, %v743
  %v745 = vpop.f32.mrf.mxu0
  %v746 = vadd.f32 %v577, %v745
  %747 = vmatmul.bf16.gmra.mxu0 %v460
  %v748 = vpop.f32.mrf.mxu0
  %v749 = vadd.f32 %v580, %v748
  %v750 = vpop.f32.mrf.mxu0
  %v751 = vadd.f32 %v582, %v750
  %752 = vmatmul.bf16.gmra.mxu0 %v463
  %v753 = vpop.f32.mrf.mxu0
  %v754 = vadd.f32 %v585, %v753
  %v755 = vpop.f32.mrf.mxu0
  %v756 = vadd.f32 %v587, %v755
  %757 = vmatmul.bf16.gmra.mxu0 %v466
  %v758 = vpop.f32.mrf.mxu0
  %v759 = vadd.f32 %v590, %v758
  %v760 = vpop.f32.mrf.mxu0
  %v761 = vadd.f32 %v592, %v760
  %762 = vmatmul.bf16.gmra.mxu0 %v469
  %v763 = vpop.f32.mrf.mxu0
  %v764 = vadd.f32 %v595, %v763
  %v765 = vpop.f32.mrf.mxu0
  %v766 = vadd.f32 %v597, %v765
  %767 = vmatmul.bf16.gmra.mxu0 %v472
  %v768 = vpop.f32.mrf.mxu0
  %v769 = vadd.f32 %v600, %v768
  %v770 = vpop.f32.mrf.mxu0
  %v771 = vadd.f32 %v602, %v770
  %772 = vmatmul.bf16.gmra.mxu0 %v475
  %v773 = vpop.f32.mrf.mxu0
  %v774 = vadd.f32 %v605, %v773
  %v775 = vpop.f32.mrf.mxu0
  %v776 = vadd.f32 %v607, %v775
  %777 = vmatmul.bf16.gmra.mxu0 %v478
  %v778 = vpop.f32.mrf.mxu0
  %v779 = vadd.f32 %v610, %v778
  %v780 = vpop.f32.mrf.mxu0
  %v781 = vadd.f32 %v612, %v780
  %782 = vmatmul.bf16.gmra.mxu0 %v481
  %v783 = vpop.f32.mrf.mxu0
  %v784 = vadd.f32 %v615, %v783
  %v785 = vpop.f32.mrf.mxu0
  %v786 = vadd.f32 %v617, %v785
  %787 = vmatmul.bf16.gmra.mxu0 %v484
  %v788 = vpop.f32.mrf.mxu0
  %v789 = vadd.f32 %v620, %v788
  %v790 = vpop.f32.mrf.mxu0
  %v791 = vadd.f32 %v622, %v790
  %792 = vmatmul.bf16.gmra.mxu0 %v487
  %v793 = vpop.f32.mrf.mxu0
  %v794 = vadd.f32 %v625, %v793
  %v795 = vpop.f32.mrf.mxu0
  %v796 = vadd.f32 %v627, %v795
  %797 = vmatmul.bf16.gmra.mxu0 %v490
  %v798 = vpop.f32.mrf.mxu0
  %v799 = vadd.f32 %v630, %v798
  %v800 = vpop.f32.mrf.mxu0
  %v801 = vadd.f32 %v632, %v800
  %802 = vmatmul.bf16.gmra.mxu0 %v493
  %v803 = vpop.f32.mrf.mxu0
  %v804 = vadd.f32 %v635, %v803
  %v805 = vpop.f32.mrf.mxu0
  %v806 = vadd.f32 %v637, %v805
  %807 = vmatmul.bf16.gmra.mxu0 %v496
  %v808 = vpop.f32.mrf.mxu0
  %v809 = vadd.f32 %v640, %v808
  %v810 = vpop.f32.mrf.mxu0
  %v811 = vadd.f32 %v642, %v810
  %812 = vmatmul.bf16.gmra.mxu0 %v499
  %v813 = vpop.f32.mrf.mxu0
  %v814 = vadd.f32 %v645, %v813
  %v815 = vpop.f32.mrf.mxu0
  %v816 = vadd.f32 %v647, %v815
  %817 = vmatmul.bf16.gmra.mxu0 %v502
  %v818 = vpop.f32.mrf.mxu0
  %v819 = vadd.f32 %v650, %v818
  %v820 = vpop.f32.mrf.mxu0
  %v821 = vadd.f32 %v652, %v820
  %822 = vmatmul.bf16.gmra.mxu0 %v505
  %v823 = vpop.f32.mrf.mxu0
  %v824 = vadd.f32 %v655, %v823
  %v825 = vpop.f32.mrf.mxu0
  %v826 = vadd.f32 %v657, %v825
  %827 = vmatmul.bf16.gmra.mxu0 %v508
  %v828 = vpop.f32.mrf.mxu0
  %v829 = vadd.f32 %v660, %v828
  %v830 = vpop.f32.mrf.mxu0
  %v831 = vadd.f32 %v662, %v830
  %832 = vmatmul.bf16.gmra.mxu0 %v511
  %v833 = vpop.f32.mrf.mxu0
  %v834 = vadd.f32 %v665, %v833
  %v835 = vpop.f32.mrf.mxu0
  %v836 = vadd.f32 %v667, %v835
  %837 = vmatmul.bf16.gmra.mxu0 %v514
  %v838 = vpop.f32.mrf.mxu0
  %v839 = vadd.f32 %v670, %v838
  %v840 = vpop.f32.mrf.mxu0
  %v841 = vadd.f32 %v672, %v840
  %842 = vmatmul.bf16.gmra.mxu0 %v517
  %v843 = vpop.f32.mrf.mxu0
  %v844 = vadd.f32 %v675, %v843
  %v845 = vpop.f32.mrf.mxu0
  %v846 = vadd.f32 %v677, %v845
  %847 = vmatmul.bf16.gmra.mxu0 %v520
  %v848 = vpop.f32.mrf.mxu0
  %v849 = vadd.f32 %v680, %v848
  %v850 = vpop.f32.mrf.mxu0
  %v851 = vadd.f32 %v682, %v850
  %852 = vmatmul.bf16.gmra.mxu0 %v523
  %v853 = vpop.f32.mrf.mxu0
  %v854 = vadd.f32 %v685, %v853
  %v855 = vpop.f32.mrf.mxu0
  %v856 = vadd.f32 %v687, %v855
  %857 = vmatmul.bf16.gmra.mxu0 %v526
  %v858 = vpop.f32.mrf.mxu0
  %v859 = vadd.f32 %v690, %v858
  %v860 = vpop.f32.mrf.mxu0
  %v861 = vadd.f32 %v692, %v860
  %862 = vmatmul.bf16.gmra.mxu0 %v529
  %v863 = vpop.f32.mrf.mxu0
  %v864 = vadd.f32 %v695, %v863
  %v865 = vpop.f32.mrf.mxu0
  %v866 = vadd.f32 %v697, %v865
  %867 = vmatmul.bf16.gmra.mxu0 %v532
  %v868 = vpop.f32.mrf.mxu0
  %v869 = vadd.f32 %v700, %v868
  %v870 = vpop.f32.mrf.mxu0
  %v871 = vadd.f32 %v702, %v870
  %872 = vmatmul.bf16.gmra.mxu0 %v535
  %v873 = vpop.f32.mrf.mxu0
  %v874 = vadd.f32 %v705, %v873
  %v875 = vpop.f32.mrf.mxu0
  %v876 = vadd.f32 %v707, %v875
  %877 = vmatmul.bf16.gmra.mxu0 %v538
  %v878 = vpop.f32.mrf.mxu0
  %v879 = vadd.f32 %v710, %v878
  %v880 = vpop.f32.mrf.mxu0
  %v881 = vadd.f32 %v712, %v880
  %882 = vmatmul.bf16.gmra.mxu0 %v541
  %v883 = vpop.f32.mrf.mxu0
  %v884 = vadd.f32 %v715, %v883
  %v885 = vpop.f32.mrf.mxu0
  %v886 = vadd.f32 %v717, %v885
  %887 = vdwg.mxu0
  %v888 = vld [vmem:[%s2] sm:$0x1]
  %v890 = vperm.slane %v888, 0
  %v892 = vmul.f32 %v729, %v890
  %v893 = vmul.f32 %v731, %v890
  %v894 = vmul.f32 %v734, %v890
  %v895 = vmul.f32 %v736, %v890
  %v896 = vmul.f32 %v739, %v890
  %v897 = vmul.f32 %v741, %v890
  %v898 = vmul.f32 %v744, %v890
  %v899 = vmul.f32 %v746, %v890
  %v900 = vmul.f32 %v749, %v890
  %v901 = vmul.f32 %v751, %v890
  %v902 = vmul.f32 %v754, %v890
  %v903 = vmul.f32 %v756, %v890
  %v904 = vmul.f32 %v759, %v890
  %v905 = vmul.f32 %v761, %v890
  %v906 = vmul.f32 %v764, %v890
  %v907 = vmul.f32 %v766, %v890
  %v908 = vmul.f32 %v769, %v890
  %v909 = vmul.f32 %v771, %v890
  %v910 = vmul.f32 %v774, %v890
  %v911 = vmul.f32 %v776, %v890
  %v912 = vmul.f32 %v779, %v890
  %v913 = vmul.f32 %v781, %v890
  %v914 = vmul.f32 %v784, %v890
  %v915 = vmul.f32 %v786, %v890
  %v916 = vmul.f32 %v789, %v890
  %v917 = vmul.f32 %v791, %v890
  %v918 = vmul.f32 %v794, %v890
  %v919 = vmul.f32 %v796, %v890
  %v920 = vmul.f32 %v799, %v890
  %v921 = vmul.f32 %v801, %v890
  %v922 = vmul.f32 %v804, %v890
  %v923 = vmul.f32 %v806, %v890
  %v924 = vmul.f32 %v809, %v890
  %v925 = vmul.f32 %v811, %v890
  %v926 = vmul.f32 %v814, %v890
  %v927 = vmul.f32 %v816, %v890
  %v928 = vmul.f32 %v819, %v890
  %v929 = vmul.f32 %v821, %v890
  %v930 = vmul.f32 %v824, %v890
  %v931 = vmul.f32 %v826, %v890
  %v932 = vmul.f32 %v829, %v890
  %v933 = vmul.f32 %v831, %v890
  %v934 = vmul.f32 %v834, %v890
  %v935 = vmul.f32 %v836, %v890
  %v936 = vmul.f32 %v839, %v890
  %v937 = vmul.f32 %v841, %v890
  %v938 = vmul.f32 %v844, %v890
  %v939 = vmul.f32 %v846, %v890
  %v940 = vmul.f32 %v849, %v890
  %v941 = vmul.f32 %v851, %v890
  %v942 = vmul.f32 %v854, %v890
  %v943 = vmul.f32 %v856, %v890
  %v944 = vmul.f32 %v859, %v890
  %v945 = vmul.f32 %v861, %v890
  %v946 = vmul.f32 %v864, %v890
  %v947 = vmul.f32 %v866, %v890
  %v948 = vmul.f32 %v869, %v890
  %v949 = vmul.f32 %v871, %v890
  %v950 = vmul.f32 %v874, %v890
  %v951 = vmul.f32 %v876, %v890
  %v952 = vmul.f32 %v879, %v890
  %v953 = vmul.f32 %v881, %v890
  %v954 = vmul.f32 %v884, %v890
  %v955 = vmul.f32 %v886, %v890
  %v956 = vld [vmem:[%s3] sm:$0x1]
  %v958 = vperm.slane %v956, 0
  %v960 = vadd.f32 %v892, %v958
  %v961 = vadd.f32 %v893, %v958
  %v962 = vadd.f32 %v894, %v958
  %v963 = vadd.f32 %v895, %v958
  %v964 = vadd.f32 %v896, %v958
  %v965 = vadd.f32 %v897, %v958
  %v966 = vadd.f32 %v898, %v958
  %v967 = vadd.f32 %v899, %v958
  %v968 = vadd.f32 %v900, %v958
  %v969 = vadd.f32 %v901, %v958
  %v970 = vadd.f32 %v902, %v958
  %v971 = vadd.f32 %v903, %v958
  %v972 = vadd.f32 %v904, %v958
  %v973 = vadd.f32 %v905, %v958
  %v974 = vadd.f32 %v906, %v958
  %v975 = vadd.f32 %v907, %v958
  %v976 = vadd.f32 %v908, %v958
  %v977 = vadd.f32 %v909, %v958
  %v978 = vadd.f32 %v910, %v958
  %v979 = vadd.f32 %v911, %v958
  %v980 = vadd.f32 %v912, %v958
  %v981 = vadd.f32 %v913, %v958
  %v982 = vadd.f32 %v914, %v958
  %v983 = vadd.f32 %v915, %v958
  %v984 = vadd.f32 %v916, %v958
  %v985 = vadd.f32 %v917, %v958
  %v986 = vadd.f32 %v918, %v958
  %v987 = vadd.f32 %v919, %v958
  %v988 = vadd.f32 %v920, %v958
  %v989 = vadd.f32 %v921, %v958
  %v990 = vadd.f32 %v922, %v958
  %v991 = vadd.f32 %v923, %v958
  %v992 = vadd.f32 %v924, %v958
  %v993 = vadd.f32 %v925, %v958
  %v994 = vadd.f32 %v926, %v958
  %v995 = vadd.f32 %v927, %v958
  %v996 = vadd.f32 %v928, %v958
  %v997 = vadd.f32 %v929, %v958
  %v998 = vadd.f32 %v930, %v958
  %v999 = vadd.f32 %v931, %v958
  %v1000 = vadd.f32 %v932, %v958
  %v1001 = vadd.f32 %v933, %v958
  %v1002 = vadd.f32 %v934, %v958
  %v1003 = vadd.f32 %v935, %v958
  %v1004 = vadd.f32 %v936, %v958
  %v1005 = vadd.f32 %v937, %v958
  %v1006 = vadd.f32 %v938, %v958
  %v1007 = vadd.f32 %v939, %v958
  %v1008 = vadd.f32 %v940, %v958
  %v1009 = vadd.f32 %v941, %v958
  %v1010 = vadd.f32 %v942, %v958
  %v1011 = vadd.f32 %v943, %v958
  %v1012 = vadd.f32 %v944, %v958
  %v1013 = vadd.f32 %v945, %v958
  %v1014 = vadd.f32 %v946, %v958
  %v1015 = vadd.f32 %v947, %v958
  %v1016 = vadd.f32 %v948, %v958
  %v1017 = vadd.f32 %v949, %v958
  %v1018 = vadd.f32 %v950, %v958
  %v1019 = vadd.f32 %v951, %v958
  %v1020 = vadd.f32 %v952, %v958
  %v1021 = vadd.f32 %v953, %v958
  %v1022 = vadd.f32 %v954, %v958
  %v1023 = vadd.f32 %v955, %v958
  %v1024 = vmax.f32 %v960, 0.0
  %v1025 = vmax.f32 %v961, 0.0
  %v1026 = vmax.f32 %v962, 0.0
  %v1027 = vmax.f32 %v963, 0.0
  %v1028 = vmax.f32 %v964, 0.0
  %v1029 = vmax.f32 %v965, 0.0
  %v1030 = vmax.f32 %v966, 0.0
  %v1031 = vmax.f32 %v967, 0.0
  %v1032 = vmax.f32 %v968, 0.0
  %v1033 = vmax.f32 %v969, 0.0
  %v1034 = vmax.f32 %v970, 0.0
  %v1035 = vmax.f32 %v971, 0.0
  %v1036 = vmax.f32 %v972, 0.0
  %v1037 = vmax.f32 %v973, 0.0
  %v1038 = vmax.f32 %v974, 0.0
  %v1039 = vmax.f32 %v975, 0.0
  %v1040 = vmax.f32 %v976, 0.0
  %v1041 = vmax.f32 %v977, 0.0
  %v1042 = vmax.f32 %v978, 0.0
  %v1043 = vmax.f32 %v979, 0.0
  %v1044 = vmax.f32 %v980, 0.0
  %v1045 = vmax.f32 %v981, 0.0
  %v1046 = vmax.f32 %v982, 0.0
  %v1047 = vmax.f32 %v983, 0.0
  %v1048 = vmax.f32 %v984, 0.0
  %v1049 = vmax.f32 %v985, 0.0
  %v1050 = vmax.f32 %v986, 0.0
  %v1051 = vmax.f32 %v987, 0.0
  %v1052 = vmax.f32 %v988, 0.0
  %v1053 = vmax.f32 %v989, 0.0
  %v1054 = vmax.f32 %v990, 0.0
  %v1055 = vmax.f32 %v991, 0.0
  %v1056 = vmax.f32 %v992, 0.0
  %v1057 = vmax.f32 %v993, 0.0
  %v1058 = vmax.f32 %v994, 0.0
  %v1059 = vmax.f32 %v995, 0.0
  %v1060 = vmax.f32 %v996, 0.0
  %v1061 = vmax.f32 %v997, 0.0
  %v1062 = vmax.f32 %v998, 0.0
  %v1063 = vmax.f32 %v999, 0.0
  %v1064 = vmax.f32 %v1000, 0.0
  %v1065 = vmax.f32 %v1001, 0.0
  %v1066 = vmax.f32 %v1002, 0.0
  %v1067 = vmax.f32 %v1003, 0.0
  %v1068 = vmax.f32 %v1004, 0.0
  %v1069 = vmax.f32 %v1005, 0.0
  %v1070 = vmax.f32 %v1006, 0.0
  %v1071 = vmax.f32 %v1007, 0.0
  %v1072 = vmax.f32 %v1008, 0.0
  %v1073 = vmax.f32 %v1009, 0.0
  %v1074 = vmax.f32 %v1010, 0.0
  %v1075 = vmax.f32 %v1011, 0.0
  %v1076 = vmax.f32 %v1012, 0.0
  %v1077 = vmax.f32 %v1013, 0.0
  %v1078 = vmax.f32 %v1014, 0.0
  %v1079 = vmax.f32 %v1015, 0.0
  %v1080 = vmax.f32 %v1016, 0.0
  %v1081 = vmax.f32 %v1017, 0.0
  %v1082 = vmax.f32 %v1018, 0.0
  %v1083 = vmax.f32 %v1019, 0.0
  %v1084 = vmax.f32 %v1020, 0.0
  %v1085 = vmax.f32 %v1021, 0.0
  %v1086 = vmax.f32 %v1022, 0.0
  %v1087 = vmax.f32 %v1023, 0.0
  %v1088 = vpack.c.bf16 %v1024, %v1024
  %v1089 = vpack.c.bf16 %v1025, %v1025
  %v1090 = vpack.c.bf16 %v1026, %v1026
  %v1091 = vpack.c.bf16 %v1027, %v1027
  %v1092 = vpack.c.bf16 %v1028, %v1028
  %v1093 = vpack.c.bf16 %v1029, %v1029
  %v1094 = vpack.c.bf16 %v1030, %v1030
  %v1095 = vpack.c.bf16 %v1031, %v1031
  %v1096 = vpack.c.bf16 %v1032, %v1032
  %v1097 = vpack.c.bf16 %v1033, %v1033
  %v1098 = vpack.c.bf16 %v1034, %v1034
  %v1099 = vpack.c.bf16 %v1035, %v1035
  %v1100 = vpack.c.bf16 %v1036, %v1036
  %v1101 = vpack.c.bf16 %v1037, %v1037
  %v1102 = vpack.c.bf16 %v1038, %v1038
  %v1103 = vpack.c.bf16 %v1039, %v1039
  %v1104 = vpack.c.bf16 %v1040, %v1040
  %v1105 = vpack.c.bf16 %v1041, %v1041
  %v1106 = vpack.c.bf16 %v1042, %v1042
  %v1107 = vpack.c.bf16 %v1043, %v1043
  %v1108 = vpack.c.bf16 %v1044, %v1044
  %v1109 = vpack.c.bf16 %v1045, %v1045
  %v1110 = vpack.c.bf16 %v1046, %v1046
  %v1111 = vpack.c.bf16 %v1047, %v1047
  %v1112 = vpack.c.bf16 %v1048, %v1048
  %v1113 = vpack.c.bf16 %v1049, %v1049
  %v1114 = vpack.c.bf16 %v1050, %v1050
  %v1115 = vpack.c.bf16 %v1051, %v1051
  %v1116 = vpack.c.bf16 %v1052, %v1052
  %v1117 = vpack.c.bf16 %v1053, %v1053
  %v1118 = vpack.c.bf16 %v1054, %v1054
  %v1119 = vpack.c.bf16 %v1055, %v1055
  %v1120 = vpack.c.bf16 %v1056, %v1056
  %v1121 = vpack.c.bf16 %v1057, %v1057
  %v1122 = vpack.c.bf16 %v1058, %v1058
  %v1123 = vpack.c.bf16 %v1059, %v1059
  %v1124 = vpack.c.bf16 %v1060, %v1060
  %v1125 = vpack.c.bf16 %v1061, %v1061
  %v1126 = vpack.c.bf16 %v1062, %v1062
  %v1127 = vpack.c.bf16 %v1063, %v1063
  %v1128 = vpack.c.bf16 %v1064, %v1064
  %v1129 = vpack.c.bf16 %v1065, %v1065
  %v1130 = vpack.c.bf16 %v1066, %v1066
  %v1131 = vpack.c.bf16 %v1067, %v1067
  %v1132 = vpack.c.bf16 %v1068, %v1068
  %v1133 = vpack.c.bf16 %v1069, %v1069
  %v1134 = vpack.c.bf16 %v1070, %v1070
  %v1135 = vpack.c.bf16 %v1071, %v1071
  %v1136 = vpack.c.bf16 %v1072, %v1072
  %v1137 = vpack.c.bf16 %v1073, %v1073
  %v1138 = vpack.c.bf16 %v1074, %v1074
  %v1139 = vpack.c.bf16 %v1075, %v1075
  %v1140 = vpack.c.bf16 %v1076, %v1076
  %v1141 = vpack.c.bf16 %v1077, %v1077
  %v1142 = vpack.c.bf16 %v1078, %v1078
  %v1143 = vpack.c.bf16 %v1079, %v1079
  %v1144 = vpack.c.bf16 %v1080, %v1080
  %v1145 = vpack.c.bf16 %v1081, %v1081
  %v1146 = vpack.c.bf16 %v1082, %v1082
  %v1147 = vpack.c.bf16 %v1083, %v1083
  %v1148 = vpack.c.bf16 %v1084, %v1084
  %v1149 = vpack.c.bf16 %v1085, %v1085
  %v1150 = vpack.c.bf16 %v1086, %v1086
  %v1151 = vpack.c.bf16 %v1087, %v1087
  %1152 = vst [vmem:[%s4] sm:$0xf] %v1088
  %1153 = vst [vmem:[%s4 + $0x4] sm:$0xf] %v1089
  %1154 = vst [vmem:[%s4 + $0x8] sm:$0xf] %v1090
  %1155 = vst [vmem:[%s4 + $0xc] sm:$0xf] %v1091
  %1156 = vst [vmem:[%s4 + $0x10] sm:$0xf] %v1092
  %1157 = vst [vmem:[%s4 + $0x14] sm:$0xf] %v1093
  %1158 = vst [vmem:[%s4 + $0x18] sm:$0xf] %v1094
  %1159 = vst [vmem:[%s4 + $0x1c] sm:$0xf] %v1095
  %1160 = vst [vmem:[%s4 + $0x20] sm:$0xf] %v1096
  %1161 = vst [vmem:[%s4 + $0x24] sm:$0xf] %v1097
  %1162 = vst [vmem:[%s4 + $0x28] sm:$0xf] %v1098
  %1163 = vst [vmem:[%s4 + $0x2c] sm:$0xf] %v1099
  %1164 = vst [vmem:[%s4 + $0x30] sm:$0xf] %v1100
  %1165 = vst [vmem:[%s4 + $0x34] sm:$0xf] %v1101
  %1166 = vst [vmem:[%s4 + $0x38] sm:$0xf] %v1102
  %1167 = vst [vmem:[%s4 + $0x3c] sm:$0xf] %v1103
  %1168 = vst [vmem:[%s4 + $0x40] sm:$0xf] %v1104
  %1169 = vst [vmem:[%s4 + $0x44] sm:$0xf] %v1105
  %1170 = vst [vmem:[%s4 + $0x48] sm:$0xf] %v1106
  %1171 = vst [vmem:[%s4 + $0x4c] sm:$0xf] %v1107
  %1172 = vst [vmem:[%s4 + $0x50] sm:$0xf] %v1108
  %1173 = vst [vmem:[%s4 + $0x54] sm:$0xf] %v1109
  %1174 = vst [vmem:[%s4 + $0x58] sm:$0xf] %v1110
  %1175 = vst [vmem:[%s4 + $0x5c] sm:$0xf] %v1111
  %1176 = vst [vmem:[%s4 + $0x60] sm:$0xf] %v1112
  %1177 = vst [vmem:[%s4 + $0x64] sm:$0xf] %v1113
  %1178 = vst [vmem:[%s4 + $0x68] sm:$0xf] %v1114
  %1179 = vst [vmem:[%s4 + $0x6c] sm:$0xf] %v1115
  %1180 = vst [vmem:[%s4 + $0x70] sm:$0xf] %v1116
  %1181 = vst [vmem:[%s4 + $0x74] sm:$0xf] %v1117
  %1182 = vst [vmem:[%s4 + $0x78] sm:$0xf] %v1118
  %1183 = vst [vmem:[%s4 + $0x7c] sm:$0xf] %v1119
  %1184 = vst [vmem:[%s4 + $0x80] sm:$0xf] %v1120
  %1185 = vst [vmem:[%s4 + $0x84] sm:$0xf] %v1121
  %1186 = vst [vmem:[%s4 + $0x88] sm:$0xf] %v1122
  %1187 = vst [vmem:[%s4 + $0x8c] sm:$0xf] %v1123
  %1188 = vst [vmem:[%s4 + $0x90] sm:$0xf] %v1124
  %1189 = vst [vmem:[%s4 + $0x94] sm:$0xf] %v1125
  %1190 = vst [vmem:[%s4 + $0x98] sm:$0xf] %v1126
  %1191 = vst [vmem:[%s4 + $0x9c] sm:$0xf] %v1127
  %1192 = vst [vmem:[%s4 + $0xa0] sm:$0xf] %v1128
  %1193 = vst [vmem:[%s4 + $0xa4] sm:$0xf] %v1129
  %1194 = vst [vmem:[%s4 + $0xa8] sm:$0xf] %v1130
  %1195 = vst [vmem:[%s4 + $0xac] sm:$0xf] %v1131
  %1196 = vst [vmem:[%s4 + $0xb0] sm:$0xf] %v1132
  %1197 = vst [vmem:[%s4 + $0xb4] sm:$0xf] %v1133
  %1198 = vst [vmem:[%s4 + $0xb8] sm:$0xf] %v1134
  %1199 = vst [vmem:[%s4 + $0xbc] sm:$0xf] %v1135
  %1200 = vst [vmem:[%s4 + $0xc0] sm:$0xf] %v1136
  %1201 = vst [vmem:[%s4 + $0xc4] sm:$0xf] %v1137
  %1202 = vst [vmem:[%s4 + $0xc8] sm:$0xf] %v1138
  %1203 = vst [vmem:[%s4 + $0xcc] sm:$0xf] %v1139
  %1204 = vst [vmem:[%s4 + $0xd0] sm:$0xf] %v1140
  %1205 = vst [vmem:[%s4 + $0xd4] sm:$0xf] %v1141
  %1206 = vst [vmem:[%s4 + $0xd8] sm:$0xf] %v1142
  %1207 = vst [vmem:[%s4 + $0xdc] sm:$0xf] %v1143
  %1208 = vst [vmem:[%s4 + $0xe0] sm:$0xf] %v1144
  %1209 = vst [vmem:[%s4 + $0xe4] sm:$0xf] %v1145
  %1210 = vst [vmem:[%s4 + $0xe8] sm:$0xf] %v1146
  %1211 = vst [vmem:[%s4 + $0xec] sm:$0xf] %v1147
  %1212 = vst [vmem:[%s4 + $0xf0] sm:$0xf] %v1148
  %1213 = vst [vmem:[%s4 + $0xf4] sm:$0xf] %v1149
  %1214 = vst [vmem:[%s4 + $0xf8] sm:$0xf] %v1150
  %1215 = vst [vmem:[%s4 + $0xfc] sm:$0xf] %v1151
  // Predicated region
  $region18: #{forward.15} parent=0 // pred_check
    _
  $region19: #{forward.15} parent=0 // pred_check_branch
    %1217 = sbr.rel (0) target = $region21
  $region20: #{forward.15} parent=0 // pred_region
    _
  $region21: #{forward.15} parent=0 // pred_fallthru
    _
  // Predicated region
  $region22: #{forward.15} parent=0 // pred_check
    _
  $region23: #{forward.15} parent=0 // pred_check_branch
    %1219 = sbr.rel (0) target = $region25
  $region24: #{forward.15} parent=0 // pred_region
    _
  $region25: #{forward.15} parent=0 // pred_fallthru
    _

// kernel: forward.16
$region0: #{forward.16}
  #allocation0 [shape = 'u32[]', space=smem, size = 0x4, offset = 0x4, fixed_abs, tag = 'smem constant byte address 0x4 - core index']
  #allocation1 [shape = 'u32[72,128]{1,0:T(1,128)}', space=vmem, size = 0x9000, scoped, tag = 'internal scratch']
  %s0 = inlined_call_operand.vmem [shape: bf16[128,1152], index: 0, kind: input, shape index: {}]
  %s1 = inlined_call_operand.vmem [shape: bf16[1152,128], index: 1, kind: input, shape index: {}]
  %s2 = inlined_call_operand.vmem [shape: f32[1,128], index: 2, kind: input, shape index: {}]
  %s3 = inlined_call_operand.vmem [shape: f32[1,128], index: 3, kind: input, shape index: {}]
  %s4 = inlined_call_operand.vmem [shape: bf16[128,128], index: 4, kind: output, shape index: {}]
  %s5 = sld [smem:[#allocation0]]
  $region26: #{forward.16} parent=0
    _
  %s7 = ssub.s32 1, %s5
  %s8 = scalar_select 0, %s7, %s5
  // Predicated region
  $region2: #{forward.16} parent=0 // pred_check
    _
  $region3: #{forward.16} parent=0 // pred_check_branch
    %10 = sbr.rel (0) target = $region5
  $region4: #{forward.16} parent=0 // pred_region
    _
  $region5: #{forward.16} parent=0 // pred_fallthru
    _
  // Predicated region
  $region6: #{forward.16} parent=0 // pred_check
    _
  $region7: #{forward.16} parent=0 // pred_check_branch
    %12 = sbr.rel (0) target = $region9
  $region8: #{forward.16} parent=0 // pred_region
    _
  $region9: #{forward.16} parent=0 // pred_fallthru
    _
  // Predicated region
  $region10: #{forward.16} parent=0 // pred_check
    _
  $region11: #{forward.16} parent=0 // pred_check_branch
    %14 = sbr.rel (0) target = $region13
  $region12: #{forward.16} parent=0 // pred_region
    _
  $region13: #{forward.16} parent=0 // pred_fallthru
    _
  // Predicated region
  $region14: #{forward.16} parent=0 // pred_check
    _
  $region15: #{forward.16} parent=0 // pred_check_branch
    %16 = sbr.rel (0) target = $region17
  $region16: #{forward.16} parent=0 // pred_region
    _
  $region17: #{forward.16} parent=0 // pred_fallthru
    _
  %v17 = vld [vmem:[%s0] sm:$0xff]
  %v18 = vld [vmem:[%s0 + $0x8] sm:$0xff]
  %v19 = vld [vmem:[%s0 + $0x10] sm:$0xff]
  %v20 = vld [vmem:[%s0 + $0x18] sm:$0xff]
  %v21 = vld [vmem:[%s0 + $0x20] sm:$0xf]
  %v22 = vld [vmem:[%s0 + $0x24] sm:$0xff]
  %v23 = vld [vmem:[%s0 + $0x2c] sm:$0xff]
  %v24 = vld [vmem:[%s0 + $0x34] sm:$0xff]
  %v25 = vld [vmem:[%s0 + $0x3c] sm:$0xff]
  %v26 = vld [vmem:[%s0 + $0x44] sm:$0xf]
  %v27 = vld [vmem:[%s0 + $0x48] sm:$0xff]
  %v28 = vld [vmem:[%s0 + $0x50] sm:$0xff]
  %v29 = vld [vmem:[%s0 + $0x58] sm:$0xff]
  %v30 = vld [vmem:[%s0 + $0x60] sm:$0xff]
  %v31 = vld [vmem:[%s0 + $0x68] sm:$0xf]
  %v32 = vld [vmem:[%s0 + $0x6c] sm:$0xff]
  %v33 = vld [vmem:[%s0 + $0x74] sm:$0xff]
  %v34 = vld [vmem:[%s0 + $0x7c] sm:$0xff]
  %v35 = vld [vmem:[%s0 + $0x84] sm:$0xff]
  %v36 = vld [vmem:[%s0 + $0x8c] sm:$0xf]
  %v37 = vld [vmem:[%s0 + $0x90] sm:$0xff]
  %v38 = vld [vmem:[%s0 + $0x98] sm:$0xff]
  %v39 = vld [vmem:[%s0 + $0xa0] sm:$0xff]
  %v40 = vld [vmem:[%s0 + $0xa8] sm:$0xff]
  %v41 = vld [vmem:[%s0 + $0xb0] sm:$0xf]
  %v42 = vld [vmem:[%s0 + $0xb4] sm:$0xff]
  %v43 = vld [vmem:[%s0 + $0xbc] sm:$0xff]
  %v44 = vld [vmem:[%s0 + $0xc4] sm:$0xff]
  %v45 = vld [vmem:[%s0 + $0xcc] sm:$0xff]
  %v46 = vld [vmem:[%s0 + $0xd4] sm:$0xf]
  %v47 = vld [vmem:[%s0 + $0xd8] sm:$0xff]
  %v48 = vld [vmem:[%s0 + $0xe0] sm:$0xff]
  %v49 = vld [vmem:[%s0 + $0xe8] sm:$0xff]
  %v50 = vld [vmem:[%s0 + $0xf0] sm:$0xff]
  %v51 = vld [vmem:[%s0 + $0xf8] sm:$0xf]
  %v52 = vld [vmem:[%s0 + $0xfc] sm:$0xff]
  %v53 = vld [vmem:[%s0 + $0x104] sm:$0xff]
  %v54 = vld [vmem:[%s0 + $0x10c] sm:$0xff]
  %v55 = vld [vmem:[%s0 + $0x114] sm:$0xff]
  %v56 = vld [vmem:[%s0 + $0x11c] sm:$0xf]
  %v57 = vld [vmem:[%s0 + $0x120] sm:$0xff]
  %v58 = vld [vmem:[%s0 + $0x128] sm:$0xff]
  %v59 = vld [vmem:[%s0 + $0x130] sm:$0xff]
  %v60 = vld [vmem:[%s0 + $0x138] sm:$0xff]
  %v61 = vld [vmem:[%s0 + $0x140] sm:$0xf]
  %v62 = vld [vmem:[%s0 + $0x144] sm:$0xff]
  %v63 = vld [vmem:[%s0 + $0x14c] sm:$0xff]
  %v64 = vld [vmem:[%s0 + $0x154] sm:$0xff]
  %v65 = vld [vmem:[%s0 + $0x15c] sm:$0xff]
  %v66 = vld [vmem:[%s0 + $0x164] sm:$0xf]
  %v67 = vld [vmem:[%s0 + $0x168] sm:$0xff]
  %v68 = vld [vmem:[%s0 + $0x170] sm:$0xff]
  %v69 = vld [vmem:[%s0 + $0x178] sm:$0xff]
  %v70 = vld [vmem:[%s0 + $0x180] sm:$0xff]
  %v71 = vld [vmem:[%s0 + $0x188] sm:$0xf]
  %v72 = vld [vmem:[%s0 + $0x18c] sm:$0xff]
  %v73 = vld [vmem:[%s0 + $0x194] sm:$0xff]
  %v74 = vld [vmem:[%s0 + $0x19c] sm:$0xff]
  %v75 = vld [vmem:[%s0 + $0x1a4] sm:$0xff]
  %v76 = vld [vmem:[%s0 + $0x1ac] sm:$0xf]
  %v77 = vld [vmem:[%s0 + $0x1b0] sm:$0xff]
  %v78 = vld [vmem:[%s0 + $0x1b8] sm:$0xff]
  %v79 = vld [vmem:[%s0 + $0x1c0] sm:$0xff]
  %v80 = vld [vmem:[%s0 + $0x1c8] sm:$0xff]
  %v81 = vld [vmem:[%s0 + $0x1d0] sm:$0xf]
  %v82 = vld [vmem:[%s0 + $0x1d4] sm:$0xff]
  %v83 = vld [vmem:[%s0 + $0x1dc] sm:$0xff]
  %v84 = vld [vmem:[%s0 + $0x1e4] sm:$0xff]
  %v85 = vld [vmem:[%s0 + $0x1ec] sm:$0xff]
  %v86 = vld [vmem:[%s0 + $0x1f4] sm:$0xf]
  %v87 = vld [vmem:[%s0 + $0x1f8] sm:$0xff]
  %v88 = vld [vmem:[%s0 + $0x200] sm:$0xff]
  %v89 = vld [vmem:[%s0 + $0x208] sm:$0xff]
  %v90 = vld [vmem:[%s0 + $0x210] sm:$0xff]
  %v91 = vld [vmem:[%s0 + $0x218] sm:$0xf]
  %v92 = vld [vmem:[%s0 + $0x21c] sm:$0xff]
  %v93 = vld [vmem:[%s0 + $0x224] sm:$0xff]
  %v94 = vld [vmem:[%s0 + $0x22c] sm:$0xff]
  %v95 = vld [vmem:[%s0 + $0x234] sm:$0xff]
  %v96 = vld [vmem:[%s0 + $0x23c] sm:$0xf]
  %v97 = vld [vmem:[%s1] sm:$0xf]
  %v98 = vld [vmem:[%s1 + $0x4] sm:$0xf]
  %v99 = vld [vmem:[%s1 + $0x8] sm:$0xf]
  %v100 = vld [vmem:[%s1 + $0xc] sm:$0xf]
  %v101 = vld [vmem:[%s1 + $0x10] sm:$0xf]
  %v102 = vld [vmem:[%s1 + $0x14] sm:$0xf]
  %v103 = vld [vmem:[%s1 + $0x18] sm:$0xf]
  %v104 = vld [vmem:[%s1 + $0x1c] sm:$0xf]
  %v105 = vld [vmem:[%s1 + $0x20] sm:$0xf]
  %v106 = vld [vmem:[%s1 + $0x24] sm:$0xf]
  %v107 = vld [vmem:[%s1 + $0x28] sm:$0xf]
  %v108 = vld [vmem:[%s1 + $0x2c] sm:$0xf]
  %v109 = vld [vmem:[%s1 + $0x30] sm:$0xf]
  %v110 = vld [vmem:[%s1 + $0x34] sm:$0xf]
  %v111 = vld [vmem:[%s1 + $0x38] sm:$0xf]
  %v112 = vld [vmem:[%s1 + $0x3c] sm:$0xf]
  %v113 = vld [vmem:[%s1 + $0x40] sm:$0xf]
  %v114 = vld [vmem:[%s1 + $0x44] sm:$0xf]
  %v115 = vld [vmem:[%s1 + $0x48] sm:$0xf]
  %v116 = vld [vmem:[%s1 + $0x4c] sm:$0xf]
  %v117 = vld [vmem:[%s1 + $0x50] sm:$0xf]
  %v118 = vld [vmem:[%s1 + $0x54] sm:$0xf]
  %v119 = vld [vmem:[%s1 + $0x58] sm:$0xf]
  %v120 = vld [vmem:[%s1 + $0x5c] sm:$0xf]
  %v121 = vld [vmem:[%s1 + $0x60] sm:$0xf]
  %v122 = vld [vmem:[%s1 + $0x64] sm:$0xf]
  %v123 = vld [vmem:[%s1 + $0x68] sm:$0xf]
  %v124 = vld [vmem:[%s1 + $0x6c] sm:$0xf]
  %v125 = vld [vmem:[%s1 + $0x70] sm:$0xf]
  %v126 = vld [vmem:[%s1 + $0x74] sm:$0xf]
  %v127 = vld [vmem:[%s1 + $0x78] sm:$0xf]
  %v128 = vld [vmem:[%s1 + $0x7c] sm:$0xf]
  %v129 = vld [vmem:[%s1 + $0x80] sm:$0xf]
  %v130 = vld [vmem:[%s1 + $0x84] sm:$0xf]
  %v131 = vld [vmem:[%s1 + $0x88] sm:$0xf]
  %v132 = vld [vmem:[%s1 + $0x8c] sm:$0xf]
  %v133 = vld [vmem:[%s1 + $0x90] sm:$0xf]
  %v134 = vld [vmem:[%s1 + $0x94] sm:$0xf]
  %v135 = vld [vmem:[%s1 + $0x98] sm:$0xf]
  %v136 = vld [vmem:[%s1 + $0x9c] sm:$0xf]
  %v137 = vld [vmem:[%s1 + $0xa0] sm:$0xf]
  %v138 = vld [vmem:[%s1 + $0xa4] sm:$0xf]
  %v139 = vld [vmem:[%s1 + $0xa8] sm:$0xf]
  %v140 = vld [vmem:[%s1 + $0xac] sm:$0xf]
  %v141 = vld [vmem:[%s1 + $0xb0] sm:$0xf]
  %v142 = vld [vmem:[%s1 + $0xb4] sm:$0xf]
  %v143 = vld [vmem:[%s1 + $0xb8] sm:$0xf]
  %v144 = vld [vmem:[%s1 + $0xbc] sm:$0xf]
  %v145 = vld [vmem:[%s1 + $0xc0] sm:$0xf]
  %v146 = vld [vmem:[%s1 + $0xc4] sm:$0xf]
  %v147 = vld [vmem:[%s1 + $0xc8] sm:$0xf]
  %v148 = vld [vmem:[%s1 + $0xcc] sm:$0xf]
  %v149 = vld [vmem:[%s1 + $0xd0] sm:$0xf]
  %v150 = vld [vmem:[%s1 + $0xd4] sm:$0xf]
  %v151 = vld [vmem:[%s1 + $0xd8] sm:$0xf]
  %v152 = vld [vmem:[%s1 + $0xdc] sm:$0xf]
  %v153 = vld [vmem:[%s1 + $0xe0] sm:$0xf]
  %v154 = vld [vmem:[%s1 + $0xe4] sm:$0xf]
  %v155 = vld [vmem:[%s1 + $0xe8] sm:$0xf]
  %v156 = vld [vmem:[%s1 + $0xec] sm:$0xf]
  %v157 = vld [vmem:[%s1 + $0xf0] sm:$0xf]
  %v158 = vld [vmem:[%s1 + $0xf4] sm:$0xf]
  %v159 = vld [vmem:[%s1 + $0xf8] sm:$0xf]
  %v160 = vld [vmem:[%s1 + $0xfc] sm:$0xf]
  %v161 = vld [vmem:[%s1 + $0x100] sm:$0xf]
  %v162 = vld [vmem:[%s1 + $0x104] sm:$0xf]
  %v163 = vld [vmem:[%s1 + $0x108] sm:$0xf]
  %v164 = vld [vmem:[%s1 + $0x10c] sm:$0xf]
  %v165 = vld [vmem:[%s1 + $0x110] sm:$0xf]
  %v166 = vld [vmem:[%s1 + $0x114] sm:$0xf]
  %v167 = vld [vmem:[%s1 + $0x118] sm:$0xf]
  %v168 = vld [vmem:[%s1 + $0x11c] sm:$0xf]
  %v169 = vld [vmem:[%s1 + $0x120] sm:$0xf]
  %v170 = vld [vmem:[%s1 + $0x124] sm:$0xf]
  %v171 = vld [vmem:[%s1 + $0x128] sm:$0xf]
  %v172 = vld [vmem:[%s1 + $0x12c] sm:$0xf]
  %v173 = vld [vmem:[%s1 + $0x130] sm:$0xf]
  %v174 = vld [vmem:[%s1 + $0x134] sm:$0xf]
  %v175 = vld [vmem:[%s1 + $0x138] sm:$0xf]
  %v176 = vld [vmem:[%s1 + $0x13c] sm:$0xf]
  %v177 = vld [vmem:[%s1 + $0x140] sm:$0xf]
  %v178 = vld [vmem:[%s1 + $0x144] sm:$0xf]
  %v179 = vld [vmem:[%s1 + $0x148] sm:$0xf]
  %v180 = vld [vmem:[%s1 + $0x14c] sm:$0xf]
  %v181 = vld [vmem:[%s1 + $0x150] sm:$0xf]
  %v182 = vld [vmem:[%s1 + $0x154] sm:$0xf]
  %v183 = vld [vmem:[%s1 + $0x158] sm:$0xf]
  %v184 = vld [vmem:[%s1 + $0x15c] sm:$0xf]
  %v185 = vld [vmem:[%s1 + $0x160] sm:$0xf]
  %v186 = vld [vmem:[%s1 + $0x164] sm:$0xf]
  %v187 = vld [vmem:[%s1 + $0x168] sm:$0xf]
  %v188 = vld [vmem:[%s1 + $0x16c] sm:$0xf]
  %v189 = vld [vmem:[%s1 + $0x170] sm:$0xf]
  %v190 = vld [vmem:[%s1 + $0x174] sm:$0xf]
  %v191 = vld [vmem:[%s1 + $0x178] sm:$0xf]
  %v192 = vld [vmem:[%s1 + $0x17c] sm:$0xf]
  %v193 = vld [vmem:[%s1 + $0x180] sm:$0xf]
  %v194 = vld [vmem:[%s1 + $0x184] sm:$0xf]
  %v195 = vld [vmem:[%s1 + $0x188] sm:$0xf]
  %v196 = vld [vmem:[%s1 + $0x18c] sm:$0xf]
  %v197 = vld [vmem:[%s1 + $0x190] sm:$0xf]
  %v198 = vld [vmem:[%s1 + $0x194] sm:$0xf]
  %v199 = vld [vmem:[%s1 + $0x198] sm:$0xf]
  %v200 = vld [vmem:[%s1 + $0x19c] sm:$0xf]
  %v201 = vld [vmem:[%s1 + $0x1a0] sm:$0xf]
  %v202 = vld [vmem:[%s1 + $0x1a4] sm:$0xf]
  %v203 = vld [vmem:[%s1 + $0x1a8] sm:$0xf]
  %v204 = vld [vmem:[%s1 + $0x1ac] sm:$0xf]
  %v205 = vld [vmem:[%s1 + $0x1b0] sm:$0xf]
  %v206 = vld [vmem:[%s1 + $0x1b4] sm:$0xf]
  %v207 = vld [vmem:[%s1 + $0x1b8] sm:$0xf]
  %v208 = vld [vmem:[%s1 + $0x1bc] sm:$0xf]
  %v209 = vld [vmem:[%s1 + $0x1c0] sm:$0xf]
  %v210 = vld [vmem:[%s1 + $0x1c4] sm:$0xf]
  %v211 = vld [vmem:[%s1 + $0x1c8] sm:$0xf]
  %v212 = vld [vmem:[%s1 + $0x1cc] sm:$0xf]
  %v213 = vld [vmem:[%s1 + $0x1d0] sm:$0xf]
  %v214 = vld [vmem:[%s1 + $0x1d4] sm:$0xf]
  %v215 = vld [vmem:[%s1 + $0x1d8] sm:$0xf]
  %v216 = vld [vmem:[%s1 + $0x1dc] sm:$0xf]
  %v217 = vld [vmem:[%s1 + $0x1e0] sm:$0xf]
  %v218 = vld [vmem:[%s1 + $0x1e4] sm:$0xf]
  %v219 = vld [vmem:[%s1 + $0x1e8] sm:$0xf]
  %v220 = vld [vmem:[%s1 + $0x1ec] sm:$0xf]
  %v221 = vld [vmem:[%s1 + $0x1f0] sm:$0xf]
  %v222 = vld [vmem:[%s1 + $0x1f4] sm:$0xf]
  %v223 = vld [vmem:[%s1 + $0x1f8] sm:$0xf]
  %v224 = vld [vmem:[%s1 + $0x1fc] sm:$0xf]
  %v225 = vld [vmem:[%s1 + $0x200] sm:$0xf]
  %v226 = vld [vmem:[%s1 + $0x204] sm:$0xf]
  %v227 = vld [vmem:[%s1 + $0x208] sm:$0xf]
  %v228 = vld [vmem:[%s1 + $0x20c] sm:$0xf]
  %v229 = vld [vmem:[%s1 + $0x210] sm:$0xf]
  %v230 = vld [vmem:[%s1 + $0x214] sm:$0xf]
  %v231 = vld [vmem:[%s1 + $0x218] sm:$0xf]
  %v232 = vld [vmem:[%s1 + $0x21c] sm:$0xf]
  %v233 = vld [vmem:[%s1 + $0x220] sm:$0xf]
  %v234 = vld [vmem:[%s1 + $0x224] sm:$0xf]
  %v235 = vld [vmem:[%s1 + $0x228] sm:$0xf]
  %v236 = vld [vmem:[%s1 + $0x22c] sm:$0xf]
  %v237 = vld [vmem:[%s1 + $0x230] sm:$0xf]
  %v238 = vld [vmem:[%s1 + $0x234] sm:$0xf]
  %v239 = vld [vmem:[%s1 + $0x238] sm:$0xf]
  %v240 = vld [vmem:[%s1 + $0x23c] sm:$0xf]
  %v321 = vunpack.c.l.b16 %v17
  %v322 = vunpack.c.h.b16 %v17
  %v323 = vunpack.c.l.b16 %v18
  %v324 = vunpack.c.h.b16 %v18
  %v325 = vunpack.c.l.b16 %v19
  %v326 = vunpack.c.h.b16 %v19
  %v327 = vunpack.c.l.b16 %v20
  %v328 = vunpack.c.h.b16 %v20
  %v329 = vunpack.c.l.b16 %v21
  %v330 = vunpack.c.l.b16 %v22
  %v331 = vunpack.c.h.b16 %v22
  %v332 = vunpack.c.l.b16 %v23
  %v333 = vunpack.c.h.b16 %v23
  %v334 = vunpack.c.l.b16 %v24
  %v335 = vunpack.c.h.b16 %v24
  %v336 = vunpack.c.l.b16 %v25
  %v337 = vunpack.c.h.b16 %v25
  %v338 = vunpack.c.l.b16 %v26
  %v339 = vunpack.c.l.b16 %v27
  %v340 = vunpack.c.h.b16 %v27
  %v341 = vunpack.c.l.b16 %v28
  %v342 = vunpack.c.h.b16 %v28
  %v343 = vunpack.c.l.b16 %v29
  %v344 = vunpack.c.h.b16 %v29
  %v345 = vunpack.c.l.b16 %v30
  %v346 = vunpack.c.h.b16 %v30
  %v347 = vunpack.c.l.b16 %v31
  %v348 = vunpack.c.l.b16 %v32
  %v349 = vunpack.c.h.b16 %v32
  %v350 = vunpack.c.l.b16 %v33
  %v351 = vunpack.c.h.b16 %v33
  %v352 = vunpack.c.l.b16 %v34
  %v353 = vunpack.c.h.b16 %v34
  %v354 = vunpack.c.l.b16 %v35
  %v355 = vunpack.c.h.b16 %v35
  %v356 = vunpack.c.l.b16 %v36
  %v357 = vunpack.c.l.b16 %v37
  %v358 = vunpack.c.h.b16 %v37
  %v359 = vunpack.c.l.b16 %v38
  %v360 = vunpack.c.h.b16 %v38
  %v361 = vunpack.c.l.b16 %v39
  %v362 = vunpack.c.h.b16 %v39
  %v363 = vunpack.c.l.b16 %v40
  %v364 = vunpack.c.h.b16 %v40
  %v365 = vunpack.c.l.b16 %v41
  %v366 = vunpack.c.l.b16 %v42
  %v367 = vunpack.c.h.b16 %v42
  %v368 = vunpack.c.l.b16 %v43
  %v369 = vunpack.c.h.b16 %v43
  %v370 = vunpack.c.l.b16 %v44
  %v371 = vunpack.c.h.b16 %v44
  %v372 = vunpack.c.l.b16 %v45
  %v373 = vunpack.c.h.b16 %v45
  %v374 = vunpack.c.l.b16 %v46
  %v375 = vunpack.c.l.b16 %v47
  %v376 = vunpack.c.h.b16 %v47
  %v377 = vunpack.c.l.b16 %v48
  %v378 = vunpack.c.h.b16 %v48
  %v379 = vunpack.c.l.b16 %v49
  %v380 = vunpack.c.h.b16 %v49
  %v381 = vunpack.c.l.b16 %v50
  %v382 = vunpack.c.h.b16 %v50
  %v383 = vunpack.c.l.b16 %v51
  %v384 = vunpack.c.l.b16 %v52
  %v385 = vunpack.c.h.b16 %v52
  %v386 = vunpack.c.l.b16 %v53
  %v387 = vunpack.c.h.b16 %v53
  %v388 = vunpack.c.l.b16 %v54
  %v389 = vunpack.c.h.b16 %v54
  %v390 = vunpack.c.l.b16 %v55
  %v391 = vunpack.c.h.b16 %v55
  %v392 = vunpack.c.l.b16 %v56
  %v393 = vunpack.c.l.b16 %v57
  %v394 = vunpack.c.h.b16 %v57
  %v395 = vunpack.c.l.b16 %v58
  %v396 = vunpack.c.h.b16 %v58
  %v397 = vunpack.c.l.b16 %v59
  %v398 = vunpack.c.h.b16 %v59
  %v399 = vunpack.c.l.b16 %v60
  %v400 = vunpack.c.h.b16 %v60
  %v401 = vunpack.c.l.b16 %v61
  %v402 = vunpack.c.l.b16 %v62
  %v403 = vunpack.c.h.b16 %v62
  %v404 = vunpack.c.l.b16 %v63
  %v405 = vunpack.c.h.b16 %v63
  %v406 = vunpack.c.l.b16 %v64
  %v407 = vunpack.c.h.b16 %v64
  %v408 = vunpack.c.l.b16 %v65
  %v409 = vunpack.c.h.b16 %v65
  %v410 = vunpack.c.l.b16 %v66
  %v411 = vunpack.c.l.b16 %v67
  %v412 = vunpack.c.h.b16 %v67
  %v413 = vunpack.c.l.b16 %v68
  %v414 = vunpack.c.h.b16 %v68
  %v415 = vunpack.c.l.b16 %v69
  %v416 = vunpack.c.h.b16 %v69
  %v417 = vunpack.c.l.b16 %v70
  %v418 = vunpack.c.h.b16 %v70
  %v419 = vunpack.c.l.b16 %v71
  %v420 = vunpack.c.l.b16 %v72
  %v421 = vunpack.c.h.b16 %v72
  %v422 = vunpack.c.l.b16 %v73
  %v423 = vunpack.c.h.b16 %v73
  %v424 = vunpack.c.l.b16 %v74
  %v425 = vunpack.c.h.b16 %v74
  %v426 = vunpack.c.l.b16 %v75
  %v427 = vunpack.c.h.b16 %v75
  %v428 = vunpack.c.l.b16 %v76
  %v429 = vunpack.c.l.b16 %v77
  %v430 = vunpack.c.h.b16 %v77
  %v431 = vunpack.c.l.b16 %v78
  %v432 = vunpack.c.h.b16 %v78
  %v433 = vunpack.c.l.b16 %v79
  %v434 = vunpack.c.h.b16 %v79
  %v435 = vunpack.c.l.b16 %v80
  %v436 = vunpack.c.h.b16 %v80
  %v437 = vunpack.c.l.b16 %v81
  %v438 = vunpack.c.l.b16 %v82
  %v439 = vunpack.c.h.b16 %v82
  %v440 = vunpack.c.l.b16 %v83
  %v441 = vunpack.c.h.b16 %v83
  %v442 = vunpack.c.l.b16 %v84
  %v443 = vunpack.c.h.b16 %v84
  %v444 = vunpack.c.l.b16 %v85
  %v445 = vunpack.c.h.b16 %v85
  %v446 = vunpack.c.l.b16 %v86
  %v447 = vunpack.c.l.b16 %v87
  %v448 = vunpack.c.h.b16 %v87
  %v449 = vunpack.c.l.b16 %v88
  %v450 = vunpack.c.h.b16 %v88
  %v451 = vunpack.c.l.b16 %v89
  %v452 = vunpack.c.h.b16 %v89
  %v453 = vunpack.c.l.b16 %v90
  %v454 = vunpack.c.h.b16 %v90
  %v455 = vunpack.c.l.b16 %v91
  %v456 = vunpack.c.l.b16 %v92
  %v457 = vunpack.c.h.b16 %v92
  %v458 = vunpack.c.l.b16 %v93
  %v459 = vunpack.c.h.b16 %v93
  %v460 = vunpack.c.l.b16 %v94
  %v461 = vunpack.c.h.b16 %v94
  %v462 = vunpack.c.l.b16 %v95
  %v463 = vunpack.c.h.b16 %v95
  %v464 = vunpack.c.l.b16 %v96
  %v465 = vpack.c.b16 %v330, %v321
  %v466 = vpack.c.b16 %v331, %v322
  %v467 = vpack.c.b16 %v332, %v323
  %v468 = vpack.c.b16 %v333, %v324
  %v469 = vpack.c.b16 %v334, %v325
  %v470 = vpack.c.b16 %v335, %v326
  %v471 = vpack.c.b16 %v336, %v327
  %v472 = vpack.c.b16 %v337, %v328
  %v473 = vpack.c.b16 %v338, %v329
  %v474 = vpack.c.b16 %v348, %v339
  %v475 = vpack.c.b16 %v349, %v340
  %v476 = vpack.c.b16 %v350, %v341
  %v477 = vpack.c.b16 %v351, %v342
  %v478 = vpack.c.b16 %v352, %v343
  %v479 = vpack.c.b16 %v353, %v344
  %v480 = vpack.c.b16 %v354, %v345
  %v481 = vpack.c.b16 %v355, %v346
  %v482 = vpack.c.b16 %v356, %v347
  %v483 = vpack.c.b16 %v366, %v357
  %v484 = vpack.c.b16 %v367, %v358
  %v485 = vpack.c.b16 %v368, %v359
  %v486 = vpack.c.b16 %v369, %v360
  %v487 = vpack.c.b16 %v370, %v361
  %v488 = vpack.c.b16 %v371, %v362
  %v489 = vpack.c.b16 %v372, %v363
  %v490 = vpack.c.b16 %v373, %v364
  %v491 = vpack.c.b16 %v374, %v365
  %v492 = vpack.c.b16 %v384, %v375
  %v493 = vpack.c.b16 %v385, %v376
  %v494 = vpack.c.b16 %v386, %v377
  %v495 = vpack.c.b16 %v387, %v378
  %v496 = vpack.c.b16 %v388, %v379
  %v497 = vpack.c.b16 %v389, %v380
  %v498 = vpack.c.b16 %v390, %v381
  %v499 = vpack.c.b16 %v391, %v382
  %v500 = vpack.c.b16 %v392, %v383
  %v501 = vpack.c.b16 %v402, %v393
  %v502 = vpack.c.b16 %v403, %v394
  %v503 = vpack.c.b16 %v404, %v395
  %v504 = vpack.c.b16 %v405, %v396
  %v505 = vpack.c.b16 %v406, %v397
  %v506 = vpack.c.b16 %v407, %v398
  %v507 = vpack.c.b16 %v408, %v399
  %v508 = vpack.c.b16 %v409, %v400
  %v509 = vpack.c.b16 %v410, %v401
  %v510 = vpack.c.b16 %v420, %v411
  %v511 = vpack.c.b16 %v421, %v412
  %v512 = vpack.c.b16 %v422, %v413
  %v513 = vpack.c.b16 %v423, %v414
  %v514 = vpack.c.b16 %v424, %v415
  %v515 = vpack.c.b16 %v425, %v416
  %v516 = vpack.c.b16 %v426, %v417
  %v517 = vpack.c.b16 %v427, %v418
  %v518 = vpack.c.b16 %v428, %v419
  %v519 = vpack.c.b16 %v438, %v429
  %v520 = vpack.c.b16 %v439, %v430
  %v521 = vpack.c.b16 %v440, %v431
  %v522 = vpack.c.b16 %v441, %v432
  %v523 = vpack.c.b16 %v442, %v433
  %v524 = vpack.c.b16 %v443, %v434
  %v525 = vpack.c.b16 %v444, %v435
  %v526 = vpack.c.b16 %v445, %v436
  %v527 = vpack.c.b16 %v446, %v437
  %v528 = vpack.c.b16 %v456, %v447
  %v529 = vpack.c.b16 %v457, %v448
  %v530 = vpack.c.b16 %v458, %v449
  %v531 = vpack.c.b16 %v459, %v450
  %v532 = vpack.c.b16 %v460, %v451
  %v533 = vpack.c.b16 %v461, %v452
  %v534 = vpack.c.b16 %v462, %v453
  %v535 = vpack.c.b16 %v463, %v454
  %v536 = vpack.c.b16 %v464, %v455
  %v753 = vunpack.c.l.b16 %v97
  %v754 = vunpack.c.l.b16 %v98
  %v755 = vunpack.c.l.b16 %v99
  %v756 = vunpack.c.l.b16 %v100
  %v757 = vunpack.c.l.b16 %v101
  %v758 = vunpack.c.l.b16 %v102
  %v759 = vunpack.c.l.b16 %v103
  %v760 = vunpack.c.l.b16 %v104
  %v761 = vunpack.c.l.b16 %v105
  %v762 = vunpack.c.l.b16 %v106
  %v763 = vunpack.c.l.b16 %v107
  %v764 = vunpack.c.l.b16 %v108
  %v765 = vunpack.c.l.b16 %v109
  %v766 = vunpack.c.l.b16 %v110
  %v767 = vunpack.c.l.b16 %v111
  %v768 = vunpack.c.l.b16 %v112
  %v769 = vunpack.c.l.b16 %v113
  %v770 = vunpack.c.l.b16 %v114
  %v771 = vunpack.c.l.b16 %v115
  %v772 = vunpack.c.l.b16 %v116
  %v773 = vunpack.c.l.b16 %v117
  %v774 = vunpack.c.l.b16 %v118
  %v775 = vunpack.c.l.b16 %v119
  %v776 = vunpack.c.l.b16 %v120
  %v777 = vunpack.c.l.b16 %v121
  %v778 = vunpack.c.l.b16 %v122
  %v779 = vunpack.c.l.b16 %v123
  %v780 = vunpack.c.l.b16 %v124
  %v781 = vunpack.c.l.b16 %v125
  %v782 = vunpack.c.l.b16 %v126
  %v783 = vunpack.c.l.b16 %v127
  %v784 = vunpack.c.l.b16 %v128
  %v785 = vunpack.c.l.b16 %v129
  %v786 = vunpack.c.l.b16 %v130
  %v787 = vunpack.c.l.b16 %v131
  %v788 = vunpack.c.l.b16 %v132
  %v789 = vunpack.c.l.b16 %v133
  %v790 = vunpack.c.l.b16 %v134
  %v791 = vunpack.c.l.b16 %v135
  %v792 = vunpack.c.l.b16 %v136
  %v793 = vunpack.c.l.b16 %v137
  %v794 = vunpack.c.l.b16 %v138
  %v795 = vunpack.c.l.b16 %v139
  %v796 = vunpack.c.l.b16 %v140
  %v797 = vunpack.c.l.b16 %v141
  %v798 = vunpack.c.l.b16 %v142
  %v799 = vunpack.c.l.b16 %v143
  %v800 = vunpack.c.l.b16 %v144
  %v801 = vunpack.c.l.b16 %v145
  %v802 = vunpack.c.l.b16 %v146
  %v803 = vunpack.c.l.b16 %v147
  %v804 = vunpack.c.l.b16 %v148
  %v805 = vunpack.c.l.b16 %v149
  %v806 = vunpack.c.l.b16 %v150
  %v807 = vunpack.c.l.b16 %v151
  %v808 = vunpack.c.l.b16 %v152
  %v809 = vunpack.c.l.b16 %v153
  %v810 = vunpack.c.l.b16 %v154
  %v811 = vunpack.c.l.b16 %v155
  %v812 = vunpack.c.l.b16 %v156
  %v813 = vunpack.c.l.b16 %v157
  %v814 = vunpack.c.l.b16 %v158
  %v815 = vunpack.c.l.b16 %v159
  %v816 = vunpack.c.l.b16 %v160
  %v817 = vunpack.c.l.b16 %v161
  %v818 = vunpack.c.l.b16 %v162
  %v819 = vunpack.c.l.b16 %v163
  %v820 = vunpack.c.l.b16 %v164
  %v821 = vunpack.c.l.b16 %v165
  %v822 = vunpack.c.l.b16 %v166
  %v823 = vunpack.c.l.b16 %v167
  %v824 = vunpack.c.l.b16 %v168
  %v825 = vunpack.c.l.b16 %v169
  %v826 = vunpack.c.l.b16 %v170
  %v827 = vunpack.c.l.b16 %v171
  %v828 = vunpack.c.l.b16 %v172
  %v829 = vunpack.c.l.b16 %v173
  %v830 = vunpack.c.l.b16 %v174
  %v831 = vunpack.c.l.b16 %v175
  %v832 = vunpack.c.l.b16 %v176
  %v833 = vunpack.c.l.b16 %v177
  %v834 = vunpack.c.l.b16 %v178
  %v835 = vunpack.c.l.b16 %v179
  %v836 = vunpack.c.l.b16 %v180
  %v837 = vunpack.c.l.b16 %v181
  %v838 = vunpack.c.l.b16 %v182
  %v839 = vunpack.c.l.b16 %v183
  %v840 = vunpack.c.l.b16 %v184
  %v841 = vunpack.c.l.b16 %v185
  %v842 = vunpack.c.l.b16 %v186
  %v843 = vunpack.c.l.b16 %v187
  %v844 = vunpack.c.l.b16 %v188
  %v845 = vunpack.c.l.b16 %v189
  %v846 = vunpack.c.l.b16 %v190
  %v847 = vunpack.c.l.b16 %v191
  %v848 = vunpack.c.l.b16 %v192
  %v849 = vunpack.c.l.b16 %v193
  %v850 = vunpack.c.l.b16 %v194
  %v851 = vunpack.c.l.b16 %v195
  %v852 = vunpack.c.l.b16 %v196
  %v853 = vunpack.c.l.b16 %v197
  %v854 = vunpack.c.l.b16 %v198
  %v855 = vunpack.c.l.b16 %v199
  %v856 = vunpack.c.l.b16 %v200
  %v857 = vunpack.c.l.b16 %v201
  %v858 = vunpack.c.l.b16 %v202
  %v859 = vunpack.c.l.b16 %v203
  %v860 = vunpack.c.l.b16 %v204
  %v861 = vunpack.c.l.b16 %v205
  %v862 = vunpack.c.l.b16 %v206
  %v863 = vunpack.c.l.b16 %v207
  %v864 = vunpack.c.l.b16 %v208
  %v865 = vunpack.c.l.b16 %v209
  %v866 = vunpack.c.l.b16 %v210
  %v867 = vunpack.c.l.b16 %v211
  %v868 = vunpack.c.l.b16 %v212
  %v869 = vunpack.c.l.b16 %v213
  %v870 = vunpack.c.l.b16 %v214
  %v871 = vunpack.c.l.b16 %v215
  %v872 = vunpack.c.l.b16 %v216
  %v873 = vunpack.c.l.b16 %v217
  %v874 = vunpack.c.l.b16 %v218
  %v875 = vunpack.c.l.b16 %v219
  %v876 = vunpack.c.l.b16 %v220
  %v877 = vunpack.c.l.b16 %v221
  %v878 = vunpack.c.l.b16 %v222
  %v879 = vunpack.c.l.b16 %v223
  %v880 = vunpack.c.l.b16 %v224
  %v881 = vunpack.c.l.b16 %v225
  %v882 = vunpack.c.l.b16 %v226
  %v883 = vunpack.c.l.b16 %v227
  %v884 = vunpack.c.l.b16 %v228
  %v885 = vunpack.c.l.b16 %v229
  %v886 = vunpack.c.l.b16 %v230
  %v887 = vunpack.c.l.b16 %v231
  %v888 = vunpack.c.l.b16 %v232
  %v889 = vunpack.c.l.b16 %v233
  %v890 = vunpack.c.l.b16 %v234
  %v891 = vunpack.c.l.b16 %v235
  %v892 = vunpack.c.l.b16 %v236
  %v893 = vunpack.c.l.b16 %v237
  %v894 = vunpack.c.l.b16 %v238
  %v895 = vunpack.c.l.b16 %v239
  %v896 = vunpack.c.l.b16 %v240
  %v897 = vpack.c.b16 %v754, %v753
  %v898 = vpack.c.b16 %v756, %v755
  %v899 = vpack.c.b16 %v758, %v757
  %v900 = vpack.c.b16 %v760, %v759
  %v901 = vpack.c.b16 %v762, %v761
  %v902 = vpack.c.b16 %v764, %v763
  %v903 = vpack.c.b16 %v766, %v765
  %v904 = vpack.c.b16 %v768, %v767
  %v905 = vpack.c.b16 %v770, %v769
  %v906 = vpack.c.b16 %v772, %v771
  %v907 = vpack.c.b16 %v774, %v773
  %v908 = vpack.c.b16 %v776, %v775
  %v909 = vpack.c.b16 %v778, %v777
  %v910 = vpack.c.b16 %v780, %v779
  %v911 = vpack.c.b16 %v782, %v781
  %v912 = vpack.c.b16 %v784, %v783
  %v913 = vpack.c.b16 %v786, %v785
  %v914 = vpack.c.b16 %v788, %v787
  %v915 = vpack.c.b16 %v790, %v789
  %v916 = vpack.c.b16 %v792, %v791
  %v917 = vpack.c.b16 %v794, %v793
  %v918 = vpack.c.b16 %v796, %v795
  %v919 = vpack.c.b16 %v798, %v797
  %v920 = vpack.c.b16 %v800, %v799
  %v921 = vpack.c.b16 %v802, %v801
  %v922 = vpack.c.b16 %v804, %v803
  %v923 = vpack.c.b16 %v806, %v805
  %v924 = vpack.c.b16 %v808, %v807
  %v925 = vpack.c.b16 %v810, %v809
  %v926 = vpack.c.b16 %v812, %v811
  %v927 = vpack.c.b16 %v814, %v813
  %v928 = vpack.c.b16 %v816, %v815
  %v929 = vpack.c.b16 %v818, %v817
  %v930 = vpack.c.b16 %v820, %v819
  %v931 = vpack.c.b16 %v822, %v821
  %v932 = vpack.c.b16 %v824, %v823
  %v933 = vpack.c.b16 %v826, %v825
  %v934 = vpack.c.b16 %v828, %v827
  %v935 = vpack.c.b16 %v830, %v829
  %v936 = vpack.c.b16 %v832, %v831
  %v937 = vpack.c.b16 %v834, %v833
  %v938 = vpack.c.b16 %v836, %v835
  %v939 = vpack.c.b16 %v838, %v837
  %v940 = vpack.c.b16 %v840, %v839
  %v941 = vpack.c.b16 %v842, %v841
  %v942 = vpack.c.b16 %v844, %v843
  %v943 = vpack.c.b16 %v846, %v845
  %v944 = vpack.c.b16 %v848, %v847
  %v945 = vpack.c.b16 %v850, %v849
  %v946 = vpack.c.b16 %v852, %v851
  %v947 = vpack.c.b16 %v854, %v853
  %v948 = vpack.c.b16 %v856, %v855
  %v949 = vpack.c.b16 %v858, %v857
  %v950 = vpack.c.b16 %v860, %v859
  %v951 = vpack.c.b16 %v862, %v861
  %v952 = vpack.c.b16 %v864, %v863
  %v953 = vpack.c.b16 %v866, %v865
  %v954 = vpack.c.b16 %v868, %v867
  %v955 = vpack.c.b16 %v870, %v869
  %v956 = vpack.c.b16 %v872, %v871
  %v957 = vpack.c.b16 %v874, %v873
  %v958 = vpack.c.b16 %v876, %v875
  %v959 = vpack.c.b16 %v878, %v877
  %v960 = vpack.c.b16 %v880, %v879
  %v961 = vpack.c.b16 %v882, %v881
  %v962 = vpack.c.b16 %v884, %v883
  %v963 = vpack.c.b16 %v886, %v885
  %v964 = vpack.c.b16 %v888, %v887
  %v965 = vpack.c.b16 %v890, %v889
  %v966 = vpack.c.b16 %v892, %v891
  %v967 = vpack.c.b16 %v894, %v893
  %v968 = vpack.c.b16 %v896, %v895
  %1041 = vmatpush.bf16.msra.mxu0 %v904
  %1042 = vmatpush.bf16.msra.mxu0 %v903
  %1043 = vmatpush.bf16.msra.mxu0 %v902
  %1044 = vmatpush.bf16.msra.mxu0 %v901
  %1045 = vmatpush.bf16.msra.mxu0 %v900
  %1046 = vmatpush.bf16.msra.mxu0 %v899
  %1047 = vmatpush.bf16.msra.mxu0 %v898
  %1048 = vmatpush.bf16.msra.mxu0 %v897
  %1049 = vmatmul.bf16.gmra.mxu0 %v465
  %v1050 = vpop.f32.mrf.mxu0
  %v1051 = vadd.f32 0.0, %v1050
  %v1052 = vpop.f32.mrf.mxu0
  %v1053 = vadd.f32 0.0, %v1052
  %1054 = vmatmul.bf16.gmra.mxu0 %v474
  %v1055 = vpop.f32.mrf.mxu0
  %v1056 = vadd.f32 0.0, %v1055
  %v1057 = vpop.f32.mrf.mxu0
  %v1058 = vadd.f32 0.0, %v1057
  %1059 = vmatmul.bf16.gmra.mxu0 %v483
  %v1060 = vpop.f32.mrf.mxu0
  %v1061 = vadd.f32 0.0, %v1060
  %v1062 = vpop.f32.mrf.mxu0
  %v1063 = vadd.f32 0.0, %v1062
  %1064 = vmatmul.bf16.gmra.mxu0 %v492
  %v1065 = vpop.f32.mrf.mxu0
  %v1066 = vadd.f32 0.0, %v1065
  %v1067 = vpop.f32.mrf.mxu0
  %v1068 = vadd.f32 0.0, %v1067
  %1069 = vmatmul.bf16.gmra.mxu0 %v501
  %v1070 = vpop.f32.mrf.mxu0
  %v1071 = vadd.f32 0.0, %v1070
  %v1072 = vpop.f32.mrf.mxu0
  %v1073 = vadd.f32 0.0, %v1072
  %1074 = vmatmul.bf16.gmra.mxu0 %v510
  %v1075 = vpop.f32.mrf.mxu0
  %v1076 = vadd.f32 0.0, %v1075
  %v1077 = vpop.f32.mrf.mxu0
  %v1078 = vadd.f32 0.0, %v1077
  %1079 = vmatmul.bf16.gmra.mxu0 %v519
  %v1080 = vpop.f32.mrf.mxu0
  %v1081 = vadd.f32 0.0, %v1080
  %v1082 = vpop.f32.mrf.mxu0
  %v1083 = vadd.f32 0.0, %v1082
  %1084 = vmatmul.bf16.gmra.mxu0 %v528
  %v1085 = vpop.f32.mrf.mxu0
  %v1086 = vadd.f32 0.0, %v1085
  %v1087 = vpop.f32.mrf.mxu0
  %v1088 = vadd.f32 0.0, %v1087
  %1089 = vdwg.mxu0
  %1090 = vmatpush.bf16.msra.mxu0 %v912
  %1091 = vmatpush.bf16.msra.mxu0 %v911
  %1092 = vmatpush.bf16.msra.mxu0 %v910
  %1093 = vmatpush.bf16.msra.mxu0 %v909
  %1094 = vmatpush.bf16.msra.mxu0 %v908
  %1095 = vmatpush.bf16.msra.mxu0 %v907
  %1096 = vmatpush.bf16.msra.mxu0 %v906
  %1097 = vmatpush.bf16.msra.mxu0 %v905
  %1098 = vmatmul.bf16.gmra.mxu0 %v466
  %v1099 = vpop.f32.mrf.mxu0
  %v1100 = vadd.f32 %v1051, %v1099
  %v1101 = vpop.f32.mrf.mxu0
  %v1102 = vadd.f32 %v1053, %v1101
  %1103 = vmatmul.bf16.gmra.mxu0 %v475
  %v1104 = vpop.f32.mrf.mxu0
  %v1105 = vadd.f32 %v1056, %v1104
  %v1106 = vpop.f32.mrf.mxu0
  %v1107 = vadd.f32 %v1058, %v1106
  %1108 = vmatmul.bf16.gmra.mxu0 %v484
  %v1109 = vpop.f32.mrf.mxu0
  %v1110 = vadd.f32 %v1061, %v1109
  %v1111 = vpop.f32.mrf.mxu0
  %v1112 = vadd.f32 %v1063, %v1111
  %1113 = vmatmul.bf16.gmra.mxu0 %v493
  %v1114 = vpop.f32.mrf.mxu0
  %v1115 = vadd.f32 %v1066, %v1114
  %v1116 = vpop.f32.mrf.mxu0
  %v1117 = vadd.f32 %v1068, %v1116
  %1118 = vmatmul.bf16.gmra.mxu0 %v502
  %v1119 = vpop.f32.mrf.mxu0
  %v1120 = vadd.f32 %v1071, %v1119
  %v1121 = vpop.f32.mrf.mxu0
  %v1122 = vadd.f32 %v1073, %v1121
  %1123 = vmatmul.bf16.gmra.mxu0 %v511
  %v1124 = vpop.f32.mrf.mxu0
  %v1125 = vadd.f32 %v1076, %v1124
  %v1126 = vpop.f32.mrf.mxu0
  %v1127 = vadd.f32 %v1078, %v1126
  %1128 = vmatmul.bf16.gmra.mxu0 %v520
  %v1129 = vpop.f32.mrf.mxu0
  %v1130 = vadd.f32 %v1081, %v1129
  %v1131 = vpop.f32.mrf.mxu0
  %v1132 = vadd.f32 %v1083, %v1131
  %1133 = vmatmul.bf16.gmra.mxu0 %v529
  %v1134 = vpop.f32.mrf.mxu0
  %v1135 = vadd.f32 %v1086, %v1134
  %v1136 = vpop.f32.mrf.mxu0
  %v1137 = vadd.f32 %v1088, %v1136
  %1138 = vdwg.mxu0
  %1139 = vmatpush.bf16.msra.mxu0 %v920
  %1140 = vmatpush.bf16.msra.mxu0 %v919
  %1141 = vmatpush.bf16.msra.mxu0 %v918
  %1142 = vmatpush.bf16.msra.mxu0 %v917
  %1143 = vmatpush.bf16.msra.mxu0 %v916
  %1144 = vmatpush.bf16.msra.mxu0 %v915
  %1145 = vmatpush.bf16.msra.mxu0 %v914
  %1146 = vmatpush.bf16.msra.mxu0 %v913
  %1147 = vmatmul.bf16.gmra.mxu0 %v467
  %v1148 = vpop.f32.mrf.mxu0
  %v1149 = vadd.f32 %v1100, %v1148
  %v1150 = vpop.f32.mrf.mxu0
  %v1151 = vadd.f32 %v1102, %v1150
  %1152 = vmatmul.bf16.gmra.mxu0 %v476
  %v1153 = vpop.f32.mrf.mxu0
  %v1154 = vadd.f32 %v1105, %v1153
  %v1155 = vpop.f32.mrf.mxu0
  %v1156 = vadd.f32 %v1107, %v1155
  %1157 = vmatmul.bf16.gmra.mxu0 %v485
  %v1158 = vpop.f32.mrf.mxu0
  %v1159 = vadd.f32 %v1110, %v1158
  %v1160 = vpop.f32.mrf.mxu0
  %v1161 = vadd.f32 %v1112, %v1160
  %1162 = vmatmul.bf16.gmra.mxu0 %v494
  %v1163 = vpop.f32.mrf.mxu0
  %v1164 = vadd.f32 %v1115, %v1163
  %v1165 = vpop.f32.mrf.mxu0
  %v1166 = vadd.f32 %v1117, %v1165
  %1167 = vmatmul.bf16.gmra.mxu0 %v503
  %v1168 = vpop.f32.mrf.mxu0
  %v1169 = vadd.f32 %v1120, %v1168
  %v1170 = vpop.f32.mrf.mxu0
  %v1171 = vadd.f32 %v1122, %v1170
  %1172 = vmatmul.bf16.gmra.mxu0 %v512
  %v1173 = vpop.f32.mrf.mxu0
  %v1174 = vadd.f32 %v1125, %v1173
  %v1175 = vpop.f32.mrf.mxu0
  %v1176 = vadd.f32 %v1127, %v1175
  %1177 = vmatmul.bf16.gmra.mxu0 %v521
  %v1178 = vpop.f32.mrf.mxu0
  %v1179 = vadd.f32 %v1130, %v1178
  %v1180 = vpop.f32.mrf.mxu0
  %v1181 = vadd.f32 %v1132, %v1180
  %1182 = vmatmul.bf16.gmra.mxu0 %v530
  %v1183 = vpop.f32.mrf.mxu0
  %v1184 = vadd.f32 %v1135, %v1183
  %v1185 = vpop.f32.mrf.mxu0
  %v1186 = vadd.f32 %v1137, %v1185
  %1187 = vdwg.mxu0
  %1188 = vmatpush.bf16.msra.mxu0 %v928
  %1189 = vmatpush.bf16.msra.mxu0 %v927
  %1190 = vmatpush.bf16.msra.mxu0 %v926
  %1191 = vmatpush.bf16.msra.mxu0 %v925
  %1192 = vmatpush.bf16.msra.mxu0 %v924
  %1193 = vmatpush.bf16.msra.mxu0 %v923
  %1194 = vmatpush.bf16.msra.mxu0 %v922
  %1195 = vmatpush.bf16.msra.mxu0 %v921
  %1196 = vmatmul.bf16.gmra.mxu0 %v468
  %v1197 = vpop.f32.mrf.mxu0
  %v1198 = vadd.f32 %v1149, %v1197
  %v1199 = vpop.f32.mrf.mxu0
  %v1200 = vadd.f32 %v1151, %v1199
  %1201 = vmatmul.bf16.gmra.mxu0 %v477
  %v1202 = vpop.f32.mrf.mxu0
  %v1203 = vadd.f32 %v1154, %v1202
  %v1204 = vpop.f32.mrf.mxu0
  %v1205 = vadd.f32 %v1156, %v1204
  %1206 = vmatmul.bf16.gmra.mxu0 %v486
  %v1207 = vpop.f32.mrf.mxu0
  %v1208 = vadd.f32 %v1159, %v1207
  %v1209 = vpop.f32.mrf.mxu0
  %v1210 = vadd.f32 %v1161, %v1209
  %1211 = vmatmul.bf16.gmra.mxu0 %v495
  %v1212 = vpop.f32.mrf.mxu0
  %v1213 = vadd.f32 %v1164, %v1212
  %v1214 = vpop.f32.mrf.mxu0
  %v1215 = vadd.f32 %v1166, %v1214
  %1216 = vmatmul.bf16.gmra.mxu0 %v504
  %v1217 = vpop.f32.mrf.mxu0
  %v1218 = vadd.f32 %v1169, %v1217
  %v1219 = vpop.f32.mrf.mxu0
  %v1220 = vadd.f32 %v1171, %v1219
  %1221 = vmatmul.bf16.gmra.mxu0 %v513
  %v1222 = vpop.f32.mrf.mxu0
  %v1223 = vadd.f32 %v1174, %v1222
  %v1224 = vpop.f32.mrf.mxu0
  %v1225 = vadd.f32 %v1176, %v1224
  %1226 = vmatmul.bf16.gmra.mxu0 %v522
  %v1227 = vpop.f32.mrf.mxu0
  %v1228 = vadd.f32 %v1179, %v1227
  %v1229 = vpop.f32.mrf.mxu0
  %v1230 = vadd.f32 %v1181, %v1229
  %1231 = vmatmul.bf16.gmra.mxu0 %v531
  %v1232 = vpop.f32.mrf.mxu0
  %v1233 = vadd.f32 %v1184, %v1232
  %v1234 = vpop.f32.mrf.mxu0
  %v1235 = vadd.f32 %v1186, %v1234
  %1236 = vdwg.mxu0
  %1237 = vmatpush.bf16.msra.mxu0 %v936
  %1238 = vmatpush.bf16.msra.mxu0 %v935
  %1239 = vmatpush.bf16.msra.mxu0 %v934
  %1240 = vmatpush.bf16.msra.mxu0 %v933
  %1241 = vmatpush.bf16.msra.mxu0 %v932
  %1242 = vmatpush.bf16.msra.mxu0 %v931
  %1243 = vmatpush.bf16.msra.mxu0 %v930
  %1244 = vmatpush.bf16.msra.mxu0 %v929
  %1245 = vmatmul.bf16.gmra.mxu0 %v469
  %v1246 = vpop.f32.mrf.mxu0
  %v1247 = vadd.f32 %v1198, %v1246
  %v1248 = vpop.f32.mrf.mxu0
  %v1249 = vadd.f32 %v1200, %v1248
  %1250 = vmatmul.bf16.gmra.mxu0 %v478
  %v1251 = vpop.f32.mrf.mxu0
  %v1252 = vadd.f32 %v1203, %v1251
  %v1253 = vpop.f32.mrf.mxu0
  %v1254 = vadd.f32 %v1205, %v1253
  %1255 = vmatmul.bf16.gmra.mxu0 %v487
  %v1256 = vpop.f32.mrf.mxu0
  %v1257 = vadd.f32 %v1208, %v1256
  %v1258 = vpop.f32.mrf.mxu0
  %v1259 = vadd.f32 %v1210, %v1258
  %1260 = vmatmul.bf16.gmra.mxu0 %v496
  %v1261 = vpop.f32.mrf.mxu0
  %v1262 = vadd.f32 %v1213, %v1261
  %v1263 = vpop.f32.mrf.mxu0
  %v1264 = vadd.f32 %v1215, %v1263
  %1265 = vmatmul.bf16.gmra.mxu0 %v505
  %v1266 = vpop.f32.mrf.mxu0
  %v1267 = vadd.f32 %v1218, %v1266
  %v1268 = vpop.f32.mrf.mxu0
  %v1269 = vadd.f32 %v1220, %v1268
  %1270 = vmatmul.bf16.gmra.mxu0 %v514
  %v1271 = vpop.f32.mrf.mxu0
  %v1272 = vadd.f32 %v1223, %v1271
  %v1273 = vpop.f32.mrf.mxu0
  %v1274 = vadd.f32 %v1225, %v1273
  %1275 = vmatmul.bf16.gmra.mxu0 %v523
  %v1276 = vpop.f32.mrf.mxu0
  %v1277 = vadd.f32 %v1228, %v1276
  %v1278 = vpop.f32.mrf.mxu0
  %v1279 = vadd.f32 %v1230, %v1278
  %1280 = vmatmul.bf16.gmra.mxu0 %v532
  %v1281 = vpop.f32.mrf.mxu0
  %v1282 = vadd.f32 %v1233, %v1281
  %v1283 = vpop.f32.mrf.mxu0
  %v1284 = vadd.f32 %v1235, %v1283
  %1285 = vdwg.mxu0
  %1286 = vmatpush.bf16.msra.mxu0 %v944
  %1287 = vmatpush.bf16.msra.mxu0 %v943
  %1288 = vmatpush.bf16.msra.mxu0 %v942
  %1289 = vmatpush.bf16.msra.mxu0 %v941
  %1290 = vmatpush.bf16.msra.mxu0 %v940
  %1291 = vmatpush.bf16.msra.mxu0 %v939
  %1292 = vmatpush.bf16.msra.mxu0 %v938
  %1293 = vmatpush.bf16.msra.mxu0 %v937
  %1294 = vmatmul.bf16.gmra.mxu0 %v470
  %v1295 = vpop.f32.mrf.mxu0
  %v1296 = vadd.f32 %v1247, %v1295
  %v1297 = vpop.f32.mrf.mxu0
  %v1298 = vadd.f32 %v1249, %v1297
  %1299 = vmatmul.bf16.gmra.mxu0 %v479
  %v1300 = vpop.f32.mrf.mxu0
  %v1301 = vadd.f32 %v1252, %v1300
  %v1302 = vpop.f32.mrf.mxu0
  %v1303 = vadd.f32 %v1254, %v1302
  %1304 = vmatmul.bf16.gmra.mxu0 %v488
  %v1305 = vpop.f32.mrf.mxu0
  %v1306 = vadd.f32 %v1257, %v1305
  %v1307 = vpop.f32.mrf.mxu0
  %v1308 = vadd.f32 %v1259, %v1307
  %1309 = vmatmul.bf16.gmra.mxu0 %v497
  %v1310 = vpop.f32.mrf.mxu0
  %v1311 = vadd.f32 %v1262, %v1310
  %v1312 = vpop.f32.mrf.mxu0
  %v1313 = vadd.f32 %v1264, %v1312
  %1314 = vmatmul.bf16.gmra.mxu0 %v506
  %v1315 = vpop.f32.mrf.mxu0
  %v1316 = vadd.f32 %v1267, %v1315
  %v1317 = vpop.f32.mrf.mxu0
  %v1318 = vadd.f32 %v1269, %v1317
  %1319 = vmatmul.bf16.gmra.mxu0 %v515
  %v1320 = vpop.f32.mrf.mxu0
  %v1321 = vadd.f32 %v1272, %v1320
  %v1322 = vpop.f32.mrf.mxu0
  %v1323 = vadd.f32 %v1274, %v1322
  %1324 = vmatmul.bf16.gmra.mxu0 %v524
  %v1325 = vpop.f32.mrf.mxu0
  %v1326 = vadd.f32 %v1277, %v1325
  %v1327 = vpop.f32.mrf.mxu0
  %v1328 = vadd.f32 %v1279, %v1327
  %1329 = vmatmul.bf16.gmra.mxu0 %v533
  %v1330 = vpop.f32.mrf.mxu0
  %v1331 = vadd.f32 %v1282, %v1330
  %v1332 = vpop.f32.mrf.mxu0
  %v1333 = vadd.f32 %v1284, %v1332
  %1334 = vdwg.mxu0
  %1335 = vmatpush.bf16.msra.mxu0 %v952
  %1336 = vmatpush.bf16.msra.mxu0 %v951
  %1337 = vmatpush.bf16.msra.mxu0 %v950
  %1338 = vmatpush.bf16.msra.mxu0 %v949
  %1339 = vmatpush.bf16.msra.mxu0 %v948
  %1340 = vmatpush.bf16.msra.mxu0 %v947
  %1341 = vmatpush.bf16.msra.mxu0 %v946
  %1342 = vmatpush.bf16.msra.mxu0 %v945
  %1343 = vmatmul.bf16.gmra.mxu0 %v471
  %v1344 = vpop.f32.mrf.mxu0
  %v1345 = vadd.f32 %v1296, %v1344
  %v1346 = vpop.f32.mrf.mxu0
  %v1347 = vadd.f32 %v1298, %v1346
  %1348 = vmatmul.bf16.gmra.mxu0 %v480
  %v1349 = vpop.f32.mrf.mxu0
  %v1350 = vadd.f32 %v1301, %v1349
  %v1351 = vpop.f32.mrf.mxu0
  %v1352 = vadd.f32 %v1303, %v1351
  %1353 = vmatmul.bf16.gmra.mxu0 %v489
  %v1354 = vpop.f32.mrf.mxu0
  %v1355 = vadd.f32 %v1306, %v1354
  %v1356 = vpop.f32.mrf.mxu0
  %v1357 = vadd.f32 %v1308, %v1356
  %1358 = vmatmul.bf16.gmra.mxu0 %v498
  %v1359 = vpop.f32.mrf.mxu0
  %v1360 = vadd.f32 %v1311, %v1359
  %v1361 = vpop.f32.mrf.mxu0
  %v1362 = vadd.f32 %v1313, %v1361
  %1363 = vmatmul.bf16.gmra.mxu0 %v507
  %v1364 = vpop.f32.mrf.mxu0
  %v1365 = vadd.f32 %v1316, %v1364
  %v1366 = vpop.f32.mrf.mxu0
  %v1367 = vadd.f32 %v1318, %v1366
  %1368 = vmatmul.bf16.gmra.mxu0 %v516
  %v1369 = vpop.f32.mrf.mxu0
  %v1370 = vadd.f32 %v1321, %v1369
  %v1371 = vpop.f32.mrf.mxu0
  %v1372 = vadd.f32 %v1323, %v1371
  %1373 = vmatmul.bf16.gmra.mxu0 %v525
  %v1374 = vpop.f32.mrf.mxu0
  %v1375 = vadd.f32 %v1326, %v1374
  %v1376 = vpop.f32.mrf.mxu0
  %v1377 = vadd.f32 %v1328, %v1376
  %1378 = vmatmul.bf16.gmra.mxu0 %v534
  %v1379 = vpop.f32.mrf.mxu0
  %v1380 = vadd.f32 %v1331, %v1379
  %v1381 = vpop.f32.mrf.mxu0
  %v1382 = vadd.f32 %v1333, %v1381
  %1383 = vdwg.mxu0
  %1384 = vmatpush.bf16.msra.mxu0 %v960
  %1385 = vmatpush.bf16.msra.mxu0 %v959
  %1386 = vmatpush.bf16.msra.mxu0 %v958
  %1387 = vmatpush.bf16.msra.mxu0 %v957
  %1388 = vmatpush.bf16.msra.mxu0 %v956
  %1389 = vmatpush.bf16.msra.mxu0 %v955
  %1390 = vmatpush.bf16.msra.mxu0 %v954
  %1391 = vmatpush.bf16.msra.mxu0 %v953
  %1392 = vmatmul.bf16.gmra.mxu0 %v472
  %v1393 = vpop.f32.mrf.mxu0
  %v1394 = vadd.f32 %v1345, %v1393
  %v1395 = vpop.f32.mrf.mxu0
  %v1396 = vadd.f32 %v1347, %v1395
  %1397 = vmatmul.bf16.gmra.mxu0 %v481
  %v1398 = vpop.f32.mrf.mxu0
  %v1399 = vadd.f32 %v1350, %v1398
  %v1400 = vpop.f32.mrf.mxu0
  %v1401 = vadd.f32 %v1352, %v1400
  %1402 = vmatmul.bf16.gmra.mxu0 %v490
  %v1403 = vpop.f32.mrf.mxu0
  %v1404 = vadd.f32 %v1355, %v1403
  %v1405 = vpop.f32.mrf.mxu0
  %v1406 = vadd.f32 %v1357, %v1405
  %1407 = vmatmul.bf16.gmra.mxu0 %v499
  %v1408 = vpop.f32.mrf.mxu0
  %v1409 = vadd.f32 %v1360, %v1408
  %v1410 = vpop.f32.mrf.mxu0
  %v1411 = vadd.f32 %v1362, %v1410
  %1412 = vmatmul.bf16.gmra.mxu0 %v508
  %v1413 = vpop.f32.mrf.mxu0
  %v1414 = vadd.f32 %v1365, %v1413
  %v1415 = vpop.f32.mrf.mxu0
  %v1416 = vadd.f32 %v1367, %v1415
  %1417 = vmatmul.bf16.gmra.mxu0 %v517
  %v1418 = vpop.f32.mrf.mxu0
  %v1419 = vadd.f32 %v1370, %v1418
  %v1420 = vpop.f32.mrf.mxu0
  %v1421 = vadd.f32 %v1372, %v1420
  %1422 = vmatmul.bf16.gmra.mxu0 %v526
  %v1423 = vpop.f32.mrf.mxu0
  %v1424 = vadd.f32 %v1375, %v1423
  %v1425 = vpop.f32.mrf.mxu0
  %v1426 = vadd.f32 %v1377, %v1425
  %1427 = vmatmul.bf16.gmra.mxu0 %v535
  %v1428 = vpop.f32.mrf.mxu0
  %v1429 = vadd.f32 %v1380, %v1428
  %v1430 = vpop.f32.mrf.mxu0
  %v1431 = vadd.f32 %v1382, %v1430
  %1432 = vdwg.mxu0
  %1433 = vmatpush.bf16.msra.mxu0 %v968
  %1434 = vmatpush.bf16.msra.mxu0 %v967
  %1435 = vmatpush.bf16.msra.mxu0 %v966
  %1436 = vmatpush.bf16.msra.mxu0 %v965
  %1437 = vmatpush.bf16.msra.mxu0 %v964
  %1438 = vmatpush.bf16.msra.mxu0 %v963
  %1439 = vmatpush.bf16.msra.mxu0 %v962
  %1440 = vmatpush.bf16.msra.mxu0 %v961
  %1441 = vmatmul.bf16.gmra.mxu0 %v473
  %v1442 = vpop.f32.mrf.mxu0
  %v1443 = vadd.f32 %v1394, %v1442
  %v1444 = vpop.f32.mrf.mxu0
  %v1445 = vadd.f32 %v1396, %v1444
  %1446 = vmatmul.bf16.gmra.mxu0 %v482
  %v1447 = vpop.f32.mrf.mxu0
  %v1448 = vadd.f32 %v1399, %v1447
  %v1449 = vpop.f32.mrf.mxu0
  %v1450 = vadd.f32 %v1401, %v1449
  %1451 = vmatmul.bf16.gmra.mxu0 %v491
  %v1452 = vpop.f32.mrf.mxu0
  %v1453 = vadd.f32 %v1404, %v1452
  %v1454 = vpop.f32.mrf.mxu0
  %v1455 = vadd.f32 %v1406, %v1454
  %1456 = vmatmul.bf16.gmra.mxu0 %v500
  %v1457 = vpop.f32.mrf.mxu0
  %v1458 = vadd.f32 %v1409, %v1457
  %v1459 = vpop.f32.mrf.mxu0
  %v1460 = vadd.f32 %v1411, %v1459
  %1461 = vmatmul.bf16.gmra.mxu0 %v509
  %v1462 = vpop.f32.mrf.mxu0
  %v1463 = vadd.f32 %v1414, %v1462
  %v1464 = vpop.f32.mrf.mxu0
  %v1465 = vadd.f32 %v1416, %v1464
  %1466 = vmatmul.bf16.gmra.mxu0 %v518
  %v1467 = vpop.f32.mrf.mxu0
  %v1468 = vadd.f32 %v1419, %v1467
  %v1469 = vpop.f32.mrf.mxu0
  %v1470 = vadd.f32 %v1421, %v1469
  %1471 = vmatmul.bf16.gmra.mxu0 %v527
  %v1472 = vpop.f32.mrf.mxu0
  %v1473 = vadd.f32 %v1424, %v1472
  %v1474 = vpop.f32.mrf.mxu0
  %v1475 = vadd.f32 %v1426, %v1474
  %1476 = vmatmul.bf16.gmra.mxu0 %v536
  %v1477 = vpop.f32.mrf.mxu0
  %v1478 = vadd.f32 %v1429, %v1477
  %v1479 = vpop.f32.mrf.mxu0
  %v1480 = vadd.f32 %v1431, %v1479
  %1481 = vdwg.mxu0
  %v1482 = vld [vmem:[%s2] sm:$0x1]
  %v1484 = vperm.slane %v1482, 0
  %v1486 = vmul.f32 %v1443, %v1484
  %v1487 = vmul.f32 %v1445, %v1484
  %v1488 = vmul.f32 %v1448, %v1484
  %v1489 = vmul.f32 %v1450, %v1484
  %v1490 = vmul.f32 %v1453, %v1484
  %v1491 = vmul.f32 %v1455, %v1484
  %v1492 = vmul.f32 %v1458, %v1484
  %v1493 = vmul.f32 %v1460, %v1484
  %v1494 = vmul.f32 %v1463, %v1484
  %v1495 = vmul.f32 %v1465, %v1484
  %v1496 = vmul.f32 %v1468, %v1484
  %v1497 = vmul.f32 %v1470, %v1484
  %v1498 = vmul.f32 %v1473, %v1484
  %v1499 = vmul.f32 %v1475, %v1484
  %v1500 = vmul.f32 %v1478, %v1484
  %v1501 = vmul.f32 %v1480, %v1484
  %v1502 = vld [vmem:[%s3] sm:$0x1]
  %v1504 = vperm.slane %v1502, 0
  %v1506 = vadd.f32 %v1486, %v1504
  %v1507 = vadd.f32 %v1487, %v1504
  %v1508 = vadd.f32 %v1488, %v1504
  %v1509 = vadd.f32 %v1489, %v1504
  %v1510 = vadd.f32 %v1490, %v1504
  %v1511 = vadd.f32 %v1491, %v1504
  %v1512 = vadd.f32 %v1492, %v1504
  %v1513 = vadd.f32 %v1493, %v1504
  %v1514 = vadd.f32 %v1494, %v1504
  %v1515 = vadd.f32 %v1495, %v1504
  %v1516 = vadd.f32 %v1496, %v1504
  %v1517 = vadd.f32 %v1497, %v1504
  %v1518 = vadd.f32 %v1498, %v1504
  %v1519 = vadd.f32 %v1499, %v1504
  %v1520 = vadd.f32 %v1500, %v1504
  %v1521 = vadd.f32 %v1501, %v1504
  %v1522 = vmax.f32 %v1506, 0.0
  %v1523 = vmax.f32 %v1507, 0.0
  %v1524 = vmax.f32 %v1508, 0.0
  %v1525 = vmax.f32 %v1509, 0.0
  %v1526 = vmax.f32 %v1510, 0.0
  %v1527 = vmax.f32 %v1511, 0.0
  %v1528 = vmax.f32 %v1512, 0.0
  %v1529 = vmax.f32 %v1513, 0.0
  %v1530 = vmax.f32 %v1514, 0.0
  %v1531 = vmax.f32 %v1515, 0.0
  %v1532 = vmax.f32 %v1516, 0.0
  %v1533 = vmax.f32 %v1517, 0.0
  %v1534 = vmax.f32 %v1518, 0.0
  %v1535 = vmax.f32 %v1519, 0.0
  %v1536 = vmax.f32 %v1520, 0.0
  %v1537 = vmax.f32 %v1521, 0.0
  %v1538 = vpack.c.bf16 %v1522, %v1522
  %v1539 = vpack.c.bf16 %v1523, %v1523
  %v1540 = vpack.c.bf16 %v1524, %v1524
  %v1541 = vpack.c.bf16 %v1525, %v1525
  %v1542 = vpack.c.bf16 %v1526, %v1526
  %v1543 = vpack.c.bf16 %v1527, %v1527
  %v1544 = vpack.c.bf16 %v1528, %v1528
  %v1545 = vpack.c.bf16 %v1529, %v1529
  %v1546 = vpack.c.bf16 %v1530, %v1530
  %v1547 = vpack.c.bf16 %v1531, %v1531
  %v1548 = vpack.c.bf16 %v1532, %v1532
  %v1549 = vpack.c.bf16 %v1533, %v1533
  %v1550 = vpack.c.bf16 %v1534, %v1534
  %v1551 = vpack.c.bf16 %v1535, %v1535
  %v1552 = vpack.c.bf16 %v1536, %v1536
  %v1553 = vpack.c.bf16 %v1537, %v1537
  %1554 = vst [vmem:[%s4] sm:$0xf] %v1538
  %1555 = vst [vmem:[%s4 + $0x4] sm:$0xf] %v1539
  %1556 = vst [vmem:[%s4 + $0x8] sm:$0xf] %v1540
  %1557 = vst [vmem:[%s4 + $0xc] sm:$0xf] %v1541
  %1558 = vst [vmem:[%s4 + $0x10] sm:$0xf] %v1542
  %1559 = vst [vmem:[%s4 + $0x14] sm:$0xf] %v1543
  %1560 = vst [vmem:[%s4 + $0x18] sm:$0xf] %v1544
  %1561 = vst [vmem:[%s4 + $0x1c] sm:$0xf] %v1545
  %1562 = vst [vmem:[%s4 + $0x20] sm:$0xf] %v1546
  %1563 = vst [vmem:[%s4 + $0x24] sm:$0xf] %v1547
  %1564 = vst [vmem:[%s4 + $0x28] sm:$0xf] %v1548
  %1565 = vst [vmem:[%s4 + $0x2c] sm:$0xf] %v1549
  %1566 = vst [vmem:[%s4 + $0x30] sm:$0xf] %v1550
  %1567 = vst [vmem:[%s4 + $0x34] sm:$0xf] %v1551
  %1568 = vst [vmem:[%s4 + $0x38] sm:$0xf] %v1552
  %1569 = vst [vmem:[%s4 + $0x3c] sm:$0xf] %v1553
  // Predicated region
  $region18: #{forward.16} parent=0 // pred_check
    _
  $region19: #{forward.16} parent=0 // pred_check_branch
    %1571 = sbr.rel (0) target = $region21
  $region20: #{forward.16} parent=0 // pred_region
    _
  $region21: #{forward.16} parent=0 // pred_fallthru
    _
  // Predicated region
  $region22: #{forward.16} parent=0 // pred_check
    _
  $region23: #{forward.16} parent=0 // pred_check_branch
    %1573 = sbr.rel (0) target = $region25
  $region24: #{forward.16} parent=0 // pred_region
    _
  $region25: #{forward.16} parent=0 // pred_fallthru
    _

// kernel: forward.17
$region0: #{forward.17}
  #allocation0 [shape = 'u32[]', space=smem, size = 0x4, offset = 0x4, fixed_abs, tag = 'smem constant byte address 0x4 - core index']
  #allocation1 [shape = 'u32[72,128]{1,0:T(1,128)}', space=vmem, size = 0x9000, scoped, tag = 'internal scratch']
  %s0 = inlined_call_operand.vmem [shape: bf16[128,128], index: 0, kind: input, shape index: {}]
  %s1 = inlined_call_operand.vmem [shape: bf16[128,128], index: 1, kind: input, shape index: {}]
  %s2 = inlined_call_operand.vmem [shape: f32[1,128], index: 2, kind: input, shape index: {}]
  %s3 = inlined_call_operand.vmem [shape: f32[1,128], index: 3, kind: input, shape index: {}]
  %s4 = inlined_call_operand.vmem [shape: bf16[128,128], index: 4, kind: output, shape index: {}]
  %s5 = sld [smem:[#allocation0]]
  $region26: #{forward.17} parent=0
    _
  %s7 = ssub.s32 1, %s5
  %s8 = scalar_select 0, %s7, %s5
  // Predicated region
  $region2: #{forward.17} parent=0 // pred_check
    _
  $region3: #{forward.17} parent=0 // pred_check_branch
    %10 = sbr.rel (0) target = $region5
  $region4: #{forward.17} parent=0 // pred_region
    _
  $region5: #{forward.17} parent=0 // pred_fallthru
    _
  // Predicated region
  $region6: #{forward.17} parent=0 // pred_check
    _
  $region7: #{forward.17} parent=0 // pred_check_branch
    %12 = sbr.rel (0) target = $region9
  $region8: #{forward.17} parent=0 // pred_region
    _
  $region9: #{forward.17} parent=0 // pred_fallthru
    _
  // Predicated region
  $region10: #{forward.17} parent=0 // pred_check
    _
  $region11: #{forward.17} parent=0 // pred_check_branch
    %14 = sbr.rel (0) target = $region13
  $region12: #{forward.17} parent=0 // pred_region
    _
  $region13: #{forward.17} parent=0 // pred_fallthru
    _
  // Predicated region
  $region14: #{forward.17} parent=0 // pred_check
    _
  $region15: #{forward.17} parent=0 // pred_check_branch
    %16 = sbr.rel (0) target = $region17
  $region16: #{forward.17} parent=0 // pred_region
    _
  $region17: #{forward.17} parent=0 // pred_fallthru
    _
  %v17 = vld [vmem:[%s0] sm:$0xf]
  %v18 = vld [vmem:[%s0 + $0x4] sm:$0xf]
  %v19 = vld [vmem:[%s0 + $0x8] sm:$0xf]
  %v20 = vld [vmem:[%s0 + $0xc] sm:$0xf]
  %v21 = vld [vmem:[%s0 + $0x10] sm:$0xf]
  %v22 = vld [vmem:[%s0 + $0x14] sm:$0xf]
  %v23 = vld [vmem:[%s0 + $0x18] sm:$0xf]
  %v24 = vld [vmem:[%s0 + $0x1c] sm:$0xf]
  %v25 = vld [vmem:[%s0 + $0x20] sm:$0xf]
  %v26 = vld [vmem:[%s0 + $0x24] sm:$0xf]
  %v27 = vld [vmem:[%s0 + $0x28] sm:$0xf]
  %v28 = vld [vmem:[%s0 + $0x2c] sm:$0xf]
  %v29 = vld [vmem:[%s0 + $0x30] sm:$0xf]
  %v30 = vld [vmem:[%s0 + $0x34] sm:$0xf]
  %v31 = vld [vmem:[%s0 + $0x38] sm:$0xf]
  %v32 = vld [vmem:[%s0 + $0x3c] sm:$0xf]
  %v33 = vld [vmem:[%s1] sm:$0xf]
  %v34 = vld [vmem:[%s1 + $0x4] sm:$0xf]
  %v35 = vld [vmem:[%s1 + $0x8] sm:$0xf]
  %v36 = vld [vmem:[%s1 + $0xc] sm:$0xf]
  %v37 = vld [vmem:[%s1 + $0x10] sm:$0xf]
  %v38 = vld [vmem:[%s1 + $0x14] sm:$0xf]
  %v39 = vld [vmem:[%s1 + $0x18] sm:$0xf]
  %v40 = vld [vmem:[%s1 + $0x1c] sm:$0xf]
  %v41 = vld [vmem:[%s1 + $0x20] sm:$0xf]
  %v42 = vld [vmem:[%s1 + $0x24] sm:$0xf]
  %v43 = vld [vmem:[%s1 + $0x28] sm:$0xf]
  %v44 = vld [vmem:[%s1 + $0x2c] sm:$0xf]
  %v45 = vld [vmem:[%s1 + $0x30] sm:$0xf]
  %v46 = vld [vmem:[%s1 + $0x34] sm:$0xf]
  %v47 = vld [vmem:[%s1 + $0x38] sm:$0xf]
  %v48 = vld [vmem:[%s1 + $0x3c] sm:$0xf]
  %v65 = vunpack.c.l.b16 %v17
  %v66 = vunpack.c.l.b16 %v18
  %v67 = vunpack.c.l.b16 %v19
  %v68 = vunpack.c.l.b16 %v20
  %v69 = vunpack.c.l.b16 %v21
  %v70 = vunpack.c.l.b16 %v22
  %v71 = vunpack.c.l.b16 %v23
  %v72 = vunpack.c.l.b16 %v24
  %v73 = vunpack.c.l.b16 %v25
  %v74 = vunpack.c.l.b16 %v26
  %v75 = vunpack.c.l.b16 %v27
  %v76 = vunpack.c.l.b16 %v28
  %v77 = vunpack.c.l.b16 %v29
  %v78 = vunpack.c.l.b16 %v30
  %v79 = vunpack.c.l.b16 %v31
  %v80 = vunpack.c.l.b16 %v32
  %v81 = vpack.c.b16 %v66, %v65
  %v82 = vpack.c.b16 %v68, %v67
  %v83 = vpack.c.b16 %v70, %v69
  %v84 = vpack.c.b16 %v72, %v71
  %v85 = vpack.c.b16 %v74, %v73
  %v86 = vpack.c.b16 %v76, %v75
  %v87 = vpack.c.b16 %v78, %v77
  %v88 = vpack.c.b16 %v80, %v79
  %v113 = vunpack.c.l.b16 %v33
  %v114 = vunpack.c.l.b16 %v34
  %v115 = vunpack.c.l.b16 %v35
  %v116 = vunpack.c.l.b16 %v36
  %v117 = vunpack.c.l.b16 %v37
  %v118 = vunpack.c.l.b16 %v38
  %v119 = vunpack.c.l.b16 %v39
  %v120 = vunpack.c.l.b16 %v40
  %v121 = vunpack.c.l.b16 %v41
  %v122 = vunpack.c.l.b16 %v42
  %v123 = vunpack.c.l.b16 %v43
  %v124 = vunpack.c.l.b16 %v44
  %v125 = vunpack.c.l.b16 %v45
  %v126 = vunpack.c.l.b16 %v46
  %v127 = vunpack.c.l.b16 %v47
  %v128 = vunpack.c.l.b16 %v48
  %v129 = vpack.c.b16 %v114, %v113
  %v130 = vpack.c.b16 %v116, %v115
  %v131 = vpack.c.b16 %v118, %v117
  %v132 = vpack.c.b16 %v120, %v119
  %v133 = vpack.c.b16 %v122, %v121
  %v134 = vpack.c.b16 %v124, %v123
  %v135 = vpack.c.b16 %v126, %v125
  %v136 = vpack.c.b16 %v128, %v127
  %145 = vmatpush.bf16.msra.mxu0 %v136
  %146 = vmatpush.bf16.msra.mxu0 %v135
  %147 = vmatpush.bf16.msra.mxu0 %v134
  %148 = vmatpush.bf16.msra.mxu0 %v133
  %149 = vmatpush.bf16.msra.mxu0 %v132
  %150 = vmatpush.bf16.msra.mxu0 %v131
  %151 = vmatpush.bf16.msra.mxu0 %v130
  %152 = vmatpush.bf16.msra.mxu0 %v129
  %153 = vmatmul.bf16.gmra.mxu0 %v81
  %v154 = vpop.f32.mrf.mxu0
  %v155 = vadd.f32 0.0, %v154
  %v156 = vpop.f32.mrf.mxu0
  %v157 = vadd.f32 0.0, %v156
  %158 = vmatmul.bf16.gmra.mxu0 %v82
  %v159 = vpop.f32.mrf.mxu0
  %v160 = vadd.f32 0.0, %v159
  %v161 = vpop.f32.mrf.mxu0
  %v162 = vadd.f32 0.0, %v161
  %163 = vmatmul.bf16.gmra.mxu0 %v83
  %v164 = vpop.f32.mrf.mxu0
  %v165 = vadd.f32 0.0, %v164
  %v166 = vpop.f32.mrf.mxu0
  %v167 = vadd.f32 0.0, %v166
  %168 = vmatmul.bf16.gmra.mxu0 %v84
  %v169 = vpop.f32.mrf.mxu0
  %v170 = vadd.f32 0.0, %v169
  %v171 = vpop.f32.mrf.mxu0
  %v172 = vadd.f32 0.0, %v171
  %173 = vmatmul.bf16.gmra.mxu0 %v85
  %v174 = vpop.f32.mrf.mxu0
  %v175 = vadd.f32 0.0, %v174
  %v176 = vpop.f32.mrf.mxu0
  %v177 = vadd.f32 0.0, %v176
  %178 = vmatmul.bf16.gmra.mxu0 %v86
  %v179 = vpop.f32.mrf.mxu0
  %v180 = vadd.f32 0.0, %v179
  %v181 = vpop.f32.mrf.mxu0
  %v182 = vadd.f32 0.0, %v181
  %183 = vmatmul.bf16.gmra.mxu0 %v87
  %v184 = vpop.f32.mrf.mxu0
  %v185 = vadd.f32 0.0, %v184
  %v186 = vpop.f32.mrf.mxu0
  %v187 = vadd.f32 0.0, %v186
  %188 = vmatmul.bf16.gmra.mxu0 %v88
  %v189 = vpop.f32.mrf.mxu0
  %v190 = vadd.f32 0.0, %v189
  %v191 = vpop.f32.mrf.mxu0
  %v192 = vadd.f32 0.0, %v191
  %193 = vdwg.mxu0
  %v194 = vld [vmem:[%s2] sm:$0x1]
  %v196 = vperm.slane %v194, 0
  %v198 = vmul.f32 %v155, %v196
  %v199 = vmul.f32 %v157, %v196
  %v200 = vmul.f32 %v160, %v196
  %v201 = vmul.f32 %v162, %v196
  %v202 = vmul.f32 %v165, %v196
  %v203 = vmul.f32 %v167, %v196
  %v204 = vmul.f32 %v170, %v196
  %v205 = vmul.f32 %v172, %v196
  %v206 = vmul.f32 %v175, %v196
  %v207 = vmul.f32 %v177, %v196
  %v208 = vmul.f32 %v180, %v196
  %v209 = vmul.f32 %v182, %v196
  %v210 = vmul.f32 %v185, %v196
  %v211 = vmul.f32 %v187, %v196
  %v212 = vmul.f32 %v190, %v196
  %v213 = vmul.f32 %v192, %v196
  %v214 = vld [vmem:[%s3] sm:$0x1]
  %v216 = vperm.slane %v214, 0
  %v218 = vadd.f32 %v198, %v216
  %v219 = vadd.f32 %v199, %v216
  %v220 = vadd.f32 %v200, %v216
  %v221 = vadd.f32 %v201, %v216
  %v222 = vadd.f32 %v202, %v216
  %v223 = vadd.f32 %v203, %v216
  %v224 = vadd.f32 %v204, %v216
  %v225 = vadd.f32 %v205, %v216
  %v226 = vadd.f32 %v206, %v216
  %v227 = vadd.f32 %v207, %v216
  %v228 = vadd.f32 %v208, %v216
  %v229 = vadd.f32 %v209, %v216
  %v230 = vadd.f32 %v210, %v216
  %v231 = vadd.f32 %v211, %v216
  %v232 = vadd.f32 %v212, %v216
  %v233 = vadd.f32 %v213, %v216
  %v234 = vpack.c.bf16 %v218, %v218
  %v235 = vpack.c.bf16 %v219, %v219
  %v236 = vpack.c.bf16 %v220, %v220
  %v237 = vpack.c.bf16 %v221, %v221
  %v238 = vpack.c.bf16 %v222, %v222
  %v239 = vpack.c.bf16 %v223, %v223
  %v240 = vpack.c.bf16 %v224, %v224
  %v241 = vpack.c.bf16 %v225, %v225
  %v242 = vpack.c.bf16 %v226, %v226
  %v243 = vpack.c.bf16 %v227, %v227
  %v244 = vpack.c.bf16 %v228, %v228
  %v245 = vpack.c.bf16 %v229, %v229
  %v246 = vpack.c.bf16 %v230, %v230
  %v247 = vpack.c.bf16 %v231, %v231
  %v248 = vpack.c.bf16 %v232, %v232
  %v249 = vpack.c.bf16 %v233, %v233
  %250 = vst [vmem:[%s4] sm:$0xf] %v234
  %251 = vst [vmem:[%s4 + $0x4] sm:$0xf] %v235
  %252 = vst [vmem:[%s4 + $0x8] sm:$0xf] %v236
  %253 = vst [vmem:[%s4 + $0xc] sm:$0xf] %v237
  %254 = vst [vmem:[%s4 + $0x10] sm:$0xf] %v238
  %255 = vst [vmem:[%s4 + $0x14] sm:$0xf] %v239
  %256 = vst [vmem:[%s4 + $0x18] sm:$0xf] %v240
  %257 = vst [vmem:[%s4 + $0x1c] sm:$0xf] %v241
  %258 = vst [vmem:[%s4 + $0x20] sm:$0xf] %v242
  %259 = vst [vmem:[%s4 + $0x24] sm:$0xf] %v243
  %260 = vst [vmem:[%s4 + $0x28] sm:$0xf] %v244
  %261 = vst [vmem:[%s4 + $0x2c] sm:$0xf] %v245
  %262 = vst [vmem:[%s4 + $0x30] sm:$0xf] %v246
  %263 = vst [vmem:[%s4 + $0x34] sm:$0xf] %v247
  %264 = vst [vmem:[%s4 + $0x38] sm:$0xf] %v248
  %265 = vst [vmem:[%s4 + $0x3c] sm:$0xf] %v249
  // Predicated region
  $region18: #{forward.17} parent=0 // pred_check
    _
  $region19: #{forward.17} parent=0 // pred_check_branch
    %267 = sbr.rel (0) target = $region21
  $region20: #{forward.17} parent=0 // pred_region
    _
  $region21: #{forward.17} parent=0 // pred_fallthru
    _
  // Predicated region
  $region22: #{forward.17} parent=0 // pred_check
    _
  $region23: #{forward.17} parent=0 // pred_check_branch
    %269 = sbr.rel (0) target = $region25
  $region24: #{forward.17} parent=0 // pred_region
    _
  $region25: #{forward.17} parent=0 // pred_fallthru
    _

// kernel: forward.18
$region0: #{forward.18}
  #allocation0 [shape = 'u32[]', space=smem, size = 0x4, offset = 0x4, fixed_abs, tag = 'smem constant byte address 0x4 - core index']
  #allocation1 [shape = 'u32[72,128]{1,0:T(1,128)}', space=vmem, size = 0x9000, scoped, tag = 'internal scratch']
  %s0 = inlined_call_operand.vmem [shape: bf16[128,1152], index: 0, kind: input, shape index: {}]
  %s1 = inlined_call_operand.vmem [shape: bf16[1152,128], index: 1, kind: input, shape index: {}]
  %s2 = inlined_call_operand.vmem [shape: f32[1,128], index: 2, kind: input, shape index: {}]
  %s3 = inlined_call_operand.vmem [shape: f32[1,128], index: 3, kind: input, shape index: {}]
  %s4 = inlined_call_operand.vmem [shape: bf16[128,128], index: 4, kind: input, shape index: {}]
  %s5 = inlined_call_operand.vmem [shape: bf16[128,128], index: 5, kind: output, shape index: {}]
  %s6 = sld [smem:[#allocation0]]
  $region30: #{forward.18} parent=0
    _
  %s8 = ssub.s32 1, %s6
  %s9 = scalar_select 0, %s8, %s6
  // Predicated region
  $region2: #{forward.18} parent=0 // pred_check
    _
  $region3: #{forward.18} parent=0 // pred_check_branch
    %11 = sbr.rel (0) target = $region5
  $region4: #{forward.18} parent=0 // pred_region
    _
  $region5: #{forward.18} parent=0 // pred_fallthru
    _
  // Predicated region
  $region6: #{forward.18} parent=0 // pred_check
    _
  $region7: #{forward.18} parent=0 // pred_check_branch
    %13 = sbr.rel (0) target = $region9
  $region8: #{forward.18} parent=0 // pred_region
    _
  $region9: #{forward.18} parent=0 // pred_fallthru
    _
  // Predicated region
  $region10: #{forward.18} parent=0 // pred_check
    _
  $region11: #{forward.18} parent=0 // pred_check_branch
    %15 = sbr.rel (0) target = $region13
  $region12: #{forward.18} parent=0 // pred_region
    _
  $region13: #{forward.18} parent=0 // pred_fallthru
    _
  // Predicated region
  $region14: #{forward.18} parent=0 // pred_check
    _
  $region15: #{forward.18} parent=0 // pred_check_branch
    %17 = sbr.rel (0) target = $region17
  $region16: #{forward.18} parent=0 // pred_region
    _
  $region17: #{forward.18} parent=0 // pred_fallthru
    _
  // Predicated region
  $region18: #{forward.18} parent=0 // pred_check
    _
  $region19: #{forward.18} parent=0 // pred_check_branch
    %19 = sbr.rel (0) target = $region21
  $region20: #{forward.18} parent=0 // pred_region
    _
  $region21: #{forward.18} parent=0 // pred_fallthru
    _
  %v20 = vld [vmem:[%s0] sm:$0xff]
  %v21 = vld [vmem:[%s0 + $0x8] sm:$0xff]
  %v22 = vld [vmem:[%s0 + $0x10] sm:$0xff]
  %v23 = vld [vmem:[%s0 + $0x18] sm:$0xff]
  %v24 = vld [vmem:[%s0 + $0x20] sm:$0xf]
  %v25 = vld [vmem:[%s0 + $0x24] sm:$0xff]
  %v26 = vld [vmem:[%s0 + $0x2c] sm:$0xff]
  %v27 = vld [vmem:[%s0 + $0x34] sm:$0xff]
  %v28 = vld [vmem:[%s0 + $0x3c] sm:$0xff]
  %v29 = vld [vmem:[%s0 + $0x44] sm:$0xf]
  %v30 = vld [vmem:[%s0 + $0x48] sm:$0xff]
  %v31 = vld [vmem:[%s0 + $0x50] sm:$0xff]
  %v32 = vld [vmem:[%s0 + $0x58] sm:$0xff]
  %v33 = vld [vmem:[%s0 + $0x60] sm:$0xff]
  %v34 = vld [vmem:[%s0 + $0x68] sm:$0xf]
  %v35 = vld [vmem:[%s0 + $0x6c] sm:$0xff]
  %v36 = vld [vmem:[%s0 + $0x74] sm:$0xff]
  %v37 = vld [vmem:[%s0 + $0x7c] sm:$0xff]
  %v38 = vld [vmem:[%s0 + $0x84] sm:$0xff]
  %v39 = vld [vmem:[%s0 + $0x8c] sm:$0xf]
  %v40 = vld [vmem:[%s0 + $0x90] sm:$0xff]
  %v41 = vld [vmem:[%s0 + $0x98] sm:$0xff]
  %v42 = vld [vmem:[%s0 + $0xa0] sm:$0xff]
  %v43 = vld [vmem:[%s0 + $0xa8] sm:$0xff]
  %v44 = vld [vmem:[%s0 + $0xb0] sm:$0xf]
  %v45 = vld [vmem:[%s0 + $0xb4] sm:$0xff]
  %v46 = vld [vmem:[%s0 + $0xbc] sm:$0xff]
  %v47 = vld [vmem:[%s0 + $0xc4] sm:$0xff]
  %v48 = vld [vmem:[%s0 + $0xcc] sm:$0xff]
  %v49 = vld [vmem:[%s0 + $0xd4] sm:$0xf]
  %v50 = vld [vmem:[%s0 + $0xd8] sm:$0xff]
  %v51 = vld [vmem:[%s0 + $0xe0] sm:$0xff]
  %v52 = vld [vmem:[%s0 + $0xe8] sm:$0xff]
  %v53 = vld [vmem:[%s0 + $0xf0] sm:$0xff]
  %v54 = vld [vmem:[%s0 + $0xf8] sm:$0xf]
  %v55 = vld [vmem:[%s0 + $0xfc] sm:$0xff]
  %v56 = vld [vmem:[%s0 + $0x104] sm:$0xff]
  %v57 = vld [vmem:[%s0 + $0x10c] sm:$0xff]
  %v58 = vld [vmem:[%s0 + $0x114] sm:$0xff]
  %v59 = vld [vmem:[%s0 + $0x11c] sm:$0xf]
  %v60 = vld [vmem:[%s0 + $0x120] sm:$0xff]
  %v61 = vld [vmem:[%s0 + $0x128] sm:$0xff]
  %v62 = vld [vmem:[%s0 + $0x130] sm:$0xff]
  %v63 = vld [vmem:[%s0 + $0x138] sm:$0xff]
  %v64 = vld [vmem:[%s0 + $0x140] sm:$0xf]
  %v65 = vld [vmem:[%s0 + $0x144] sm:$0xff]
  %v66 = vld [vmem:[%s0 + $0x14c] sm:$0xff]
  %v67 = vld [vmem:[%s0 + $0x154] sm:$0xff]
  %v68 = vld [vmem:[%s0 + $0x15c] sm:$0xff]
  %v69 = vld [vmem:[%s0 + $0x164] sm:$0xf]
  %v70 = vld [vmem:[%s0 + $0x168] sm:$0xff]
  %v71 = vld [vmem:[%s0 + $0x170] sm:$0xff]
  %v72 = vld [vmem:[%s0 + $0x178] sm:$0xff]
  %v73 = vld [vmem:[%s0 + $0x180] sm:$0xff]
  %v74 = vld [vmem:[%s0 + $0x188] sm:$0xf]
  %v75 = vld [vmem:[%s0 + $0x18c] sm:$0xff]
  %v76 = vld [vmem:[%s0 + $0x194] sm:$0xff]
  %v77 = vld [vmem:[%s0 + $0x19c] sm:$0xff]
  %v78 = vld [vmem:[%s0 + $0x1a4] sm:$0xff]
  %v79 = vld [vmem:[%s0 + $0x1ac] sm:$0xf]
  %v80 = vld [vmem:[%s0 + $0x1b0] sm:$0xff]
  %v81 = vld [vmem:[%s0 + $0x1b8] sm:$0xff]
  %v82 = vld [vmem:[%s0 + $0x1c0] sm:$0xff]
  %v83 = vld [vmem:[%s0 + $0x1c8] sm:$0xff]
  %v84 = vld [vmem:[%s0 + $0x1d0] sm:$0xf]
  %v85 = vld [vmem:[%s0 + $0x1d4] sm:$0xff]
  %v86 = vld [vmem:[%s0 + $0x1dc] sm:$0xff]
  %v87 = vld [vmem:[%s0 + $0x1e4] sm:$0xff]
  %v88 = vld [vmem:[%s0 + $0x1ec] sm:$0xff]
  %v89 = vld [vmem:[%s0 + $0x1f4] sm:$0xf]
  %v90 = vld [vmem:[%s0 + $0x1f8] sm:$0xff]
  %v91 = vld [vmem:[%s0 + $0x200] sm:$0xff]
  %v92 = vld [vmem:[%s0 + $0x208] sm:$0xff]
  %v93 = vld [vmem:[%s0 + $0x210] sm:$0xff]
  %v94 = vld [vmem:[%s0 + $0x218] sm:$0xf]
  %v95 = vld [vmem:[%s0 + $0x21c] sm:$0xff]
  %v96 = vld [vmem:[%s0 + $0x224] sm:$0xff]
  %v97 = vld [vmem:[%s0 + $0x22c] sm:$0xff]
  %v98 = vld [vmem:[%s0 + $0x234] sm:$0xff]
  %v99 = vld [vmem:[%s0 + $0x23c] sm:$0xf]
  %v100 = vld [vmem:[%s1] sm:$0xf]
  %v101 = vld [vmem:[%s1 + $0x4] sm:$0xf]
  %v102 = vld [vmem:[%s1 + $0x8] sm:$0xf]
  %v103 = vld [vmem:[%s1 + $0xc] sm:$0xf]
  %v104 = vld [vmem:[%s1 + $0x10] sm:$0xf]
  %v105 = vld [vmem:[%s1 + $0x14] sm:$0xf]
  %v106 = vld [vmem:[%s1 + $0x18] sm:$0xf]
  %v107 = vld [vmem:[%s1 + $0x1c] sm:$0xf]
  %v108 = vld [vmem:[%s1 + $0x20] sm:$0xf]
  %v109 = vld [vmem:[%s1 + $0x24] sm:$0xf]
  %v110 = vld [vmem:[%s1 + $0x28] sm:$0xf]
  %v111 = vld [vmem:[%s1 + $0x2c] sm:$0xf]
  %v112 = vld [vmem:[%s1 + $0x30] sm:$0xf]
  %v113 = vld [vmem:[%s1 + $0x34] sm:$0xf]
  %v114 = vld [vmem:[%s1 + $0x38] sm:$0xf]
  %v115 = vld [vmem:[%s1 + $0x3c] sm:$0xf]
  %v116 = vld [vmem:[%s1 + $0x40] sm:$0xf]
  %v117 = vld [vmem:[%s1 + $0x44] sm:$0xf]
  %v118 = vld [vmem:[%s1 + $0x48] sm:$0xf]
  %v119 = vld [vmem:[%s1 + $0x4c] sm:$0xf]
  %v120 = vld [vmem:[%s1 + $0x50] sm:$0xf]
  %v121 = vld [vmem:[%s1 + $0x54] sm:$0xf]
  %v122 = vld [vmem:[%s1 + $0x58] sm:$0xf]
  %v123 = vld [vmem:[%s1 + $0x5c] sm:$0xf]
  %v124 = vld [vmem:[%s1 + $0x60] sm:$0xf]
  %v125 = vld [vmem:[%s1 + $0x64] sm:$0xf]
  %v126 = vld [vmem:[%s1 + $0x68] sm:$0xf]
  %v127 = vld [vmem:[%s1 + $0x6c] sm:$0xf]
  %v128 = vld [vmem:[%s1 + $0x70] sm:$0xf]
  %v129 = vld [vmem:[%s1 + $0x74] sm:$0xf]
  %v130 = vld [vmem:[%s1 + $0x78] sm:$0xf]
  %v131 = vld [vmem:[%s1 + $0x7c] sm:$0xf]
  %v132 = vld [vmem:[%s1 + $0x80] sm:$0xf]
  %v133 = vld [vmem:[%s1 + $0x84] sm:$0xf]
  %v134 = vld [vmem:[%s1 + $0x88] sm:$0xf]
  %v135 = vld [vmem:[%s1 + $0x8c] sm:$0xf]
  %v136 = vld [vmem:[%s1 + $0x90] sm:$0xf]
  %v137 = vld [vmem:[%s1 + $0x94] sm:$0xf]
  %v138 = vld [vmem:[%s1 + $0x98] sm:$0xf]
  %v139 = vld [vmem:[%s1 + $0x9c] sm:$0xf]
  %v140 = vld [vmem:[%s1 + $0xa0] sm:$0xf]
  %v141 = vld [vmem:[%s1 + $0xa4] sm:$0xf]
  %v142 = vld [vmem:[%s1 + $0xa8] sm:$0xf]
  %v143 = vld [vmem:[%s1 + $0xac] sm:$0xf]
  %v144 = vld [vmem:[%s1 + $0xb0] sm:$0xf]
  %v145 = vld [vmem:[%s1 + $0xb4] sm:$0xf]
  %v146 = vld [vmem:[%s1 + $0xb8] sm:$0xf]
  %v147 = vld [vmem:[%s1 + $0xbc] sm:$0xf]
  %v148 = vld [vmem:[%s1 + $0xc0] sm:$0xf]
  %v149 = vld [vmem:[%s1 + $0xc4] sm:$0xf]
  %v150 = vld [vmem:[%s1 + $0xc8] sm:$0xf]
  %v151 = vld [vmem:[%s1 + $0xcc] sm:$0xf]
  %v152 = vld [vmem:[%s1 + $0xd0] sm:$0xf]
  %v153 = vld [vmem:[%s1 + $0xd4] sm:$0xf]
  %v154 = vld [vmem:[%s1 + $0xd8] sm:$0xf]
  %v155 = vld [vmem:[%s1 + $0xdc] sm:$0xf]
  %v156 = vld [vmem:[%s1 + $0xe0] sm:$0xf]
  %v157 = vld [vmem:[%s1 + $0xe4] sm:$0xf]
  %v158 = vld [vmem:[%s1 + $0xe8] sm:$0xf]
  %v159 = vld [vmem:[%s1 + $0xec] sm:$0xf]
  %v160 = vld [vmem:[%s1 + $0xf0] sm:$0xf]
  %v161 = vld [vmem:[%s1 + $0xf4] sm:$0xf]
  %v162 = vld [vmem:[%s1 + $0xf8] sm:$0xf]
  %v163 = vld [vmem:[%s1 + $0xfc] sm:$0xf]
  %v164 = vld [vmem:[%s1 + $0x100] sm:$0xf]
  %v165 = vld [vmem:[%s1 + $0x104] sm:$0xf]
  %v166 = vld [vmem:[%s1 + $0x108] sm:$0xf]
  %v167 = vld [vmem:[%s1 + $0x10c] sm:$0xf]
  %v168 = vld [vmem:[%s1 + $0x110] sm:$0xf]
  %v169 = vld [vmem:[%s1 + $0x114] sm:$0xf]
  %v170 = vld [vmem:[%s1 + $0x118] sm:$0xf]
  %v171 = vld [vmem:[%s1 + $0x11c] sm:$0xf]
  %v172 = vld [vmem:[%s1 + $0x120] sm:$0xf]
  %v173 = vld [vmem:[%s1 + $0x124] sm:$0xf]
  %v174 = vld [vmem:[%s1 + $0x128] sm:$0xf]
  %v175 = vld [vmem:[%s1 + $0x12c] sm:$0xf]
  %v176 = vld [vmem:[%s1 + $0x130] sm:$0xf]
  %v177 = vld [vmem:[%s1 + $0x134] sm:$0xf]
  %v178 = vld [vmem:[%s1 + $0x138] sm:$0xf]
  %v179 = vld [vmem:[%s1 + $0x13c] sm:$0xf]
  %v180 = vld [vmem:[%s1 + $0x140] sm:$0xf]
  %v181 = vld [vmem:[%s1 + $0x144] sm:$0xf]
  %v182 = vld [vmem:[%s1 + $0x148] sm:$0xf]
  %v183 = vld [vmem:[%s1 + $0x14c] sm:$0xf]
  %v184 = vld [vmem:[%s1 + $0x150] sm:$0xf]
  %v185 = vld [vmem:[%s1 + $0x154] sm:$0xf]
  %v186 = vld [vmem:[%s1 + $0x158] sm:$0xf]
  %v187 = vld [vmem:[%s1 + $0x15c] sm:$0xf]
  %v188 = vld [vmem:[%s1 + $0x160] sm:$0xf]
  %v189 = vld [vmem:[%s1 + $0x164] sm:$0xf]
  %v190 = vld [vmem:[%s1 + $0x168] sm:$0xf]
  %v191 = vld [vmem:[%s1 + $0x16c] sm:$0xf]
  %v192 = vld [vmem:[%s1 + $0x170] sm:$0xf]
  %v193 = vld [vmem:[%s1 + $0x174] sm:$0xf]
  %v194 = vld [vmem:[%s1 + $0x178] sm:$0xf]
  %v195 = vld [vmem:[%s1 + $0x17c] sm:$0xf]
  %v196 = vld [vmem:[%s1 + $0x180] sm:$0xf]
  %v197 = vld [vmem:[%s1 + $0x184] sm:$0xf]
  %v198 = vld [vmem:[%s1 + $0x188] sm:$0xf]
  %v199 = vld [vmem:[%s1 + $0x18c] sm:$0xf]
  %v200 = vld [vmem:[%s1 + $0x190] sm:$0xf]
  %v201 = vld [vmem:[%s1 + $0x194] sm:$0xf]
  %v202 = vld [vmem:[%s1 + $0x198] sm:$0xf]
  %v203 = vld [vmem:[%s1 + $0x19c] sm:$0xf]
  %v204 = vld [vmem:[%s1 + $0x1a0] sm:$0xf]
  %v205 = vld [vmem:[%s1 + $0x1a4] sm:$0xf]
  %v206 = vld [vmem:[%s1 + $0x1a8] sm:$0xf]
  %v207 = vld [vmem:[%s1 + $0x1ac] sm:$0xf]
  %v208 = vld [vmem:[%s1 + $0x1b0] sm:$0xf]
  %v209 = vld [vmem:[%s1 + $0x1b4] sm:$0xf]
  %v210 = vld [vmem:[%s1 + $0x1b8] sm:$0xf]
  %v211 = vld [vmem:[%s1 + $0x1bc] sm:$0xf]
  %v212 = vld [vmem:[%s1 + $0x1c0] sm:$0xf]
  %v213 = vld [vmem:[%s1 + $0x1c4] sm:$0xf]
  %v214 = vld [vmem:[%s1 + $0x1c8] sm:$0xf]
  %v215 = vld [vmem:[%s1 + $0x1cc] sm:$0xf]
  %v216 = vld [vmem:[%s1 + $0x1d0] sm:$0xf]
  %v217 = vld [vmem:[%s1 + $0x1d4] sm:$0xf]
  %v218 = vld [vmem:[%s1 + $0x1d8] sm:$0xf]
  %v219 = vld [vmem:[%s1 + $0x1dc] sm:$0xf]
  %v220 = vld [vmem:[%s1 + $0x1e0] sm:$0xf]
  %v221 = vld [vmem:[%s1 + $0x1e4] sm:$0xf]
  %v222 = vld [vmem:[%s1 + $0x1e8] sm:$0xf]
  %v223 = vld [vmem:[%s1 + $0x1ec] sm:$0xf]
  %v224 = vld [vmem:[%s1 + $0x1f0] sm:$0xf]
  %v225 = vld [vmem:[%s1 + $0x1f4] sm:$0xf]
  %v226 = vld [vmem:[%s1 + $0x1f8] sm:$0xf]
  %v227 = vld [vmem:[%s1 + $0x1fc] sm:$0xf]
  %v228 = vld [vmem:[%s1 + $0x200] sm:$0xf]
  %v229 = vld [vmem:[%s1 + $0x204] sm:$0xf]
  %v230 = vld [vmem:[%s1 + $0x208] sm:$0xf]
  %v231 = vld [vmem:[%s1 + $0x20c] sm:$0xf]
  %v232 = vld [vmem:[%s1 + $0x210] sm:$0xf]
  %v233 = vld [vmem:[%s1 + $0x214] sm:$0xf]
  %v234 = vld [vmem:[%s1 + $0x218] sm:$0xf]
  %v235 = vld [vmem:[%s1 + $0x21c] sm:$0xf]
  %v236 = vld [vmem:[%s1 + $0x220] sm:$0xf]
  %v237 = vld [vmem:[%s1 + $0x224] sm:$0xf]
  %v238 = vld [vmem:[%s1 + $0x228] sm:$0xf]
  %v239 = vld [vmem:[%s1 + $0x22c] sm:$0xf]
  %v240 = vld [vmem:[%s1 + $0x230] sm:$0xf]
  %v241 = vld [vmem:[%s1 + $0x234] sm:$0xf]
  %v242 = vld [vmem:[%s1 + $0x238] sm:$0xf]
  %v243 = vld [vmem:[%s1 + $0x23c] sm:$0xf]
  %v324 = vunpack.c.l.b16 %v20
  %v325 = vunpack.c.h.b16 %v20
  %v326 = vunpack.c.l.b16 %v21
  %v327 = vunpack.c.h.b16 %v21
  %v328 = vunpack.c.l.b16 %v22
  %v329 = vunpack.c.h.b16 %v22
  %v330 = vunpack.c.l.b16 %v23
  %v331 = vunpack.c.h.b16 %v23
  %v332 = vunpack.c.l.b16 %v24
  %v333 = vunpack.c.l.b16 %v25
  %v334 = vunpack.c.h.b16 %v25
  %v335 = vunpack.c.l.b16 %v26
  %v336 = vunpack.c.h.b16 %v26
  %v337 = vunpack.c.l.b16 %v27
  %v338 = vunpack.c.h.b16 %v27
  %v339 = vunpack.c.l.b16 %v28
  %v340 = vunpack.c.h.b16 %v28
  %v341 = vunpack.c.l.b16 %v29
  %v342 = vunpack.c.l.b16 %v30
  %v343 = vunpack.c.h.b16 %v30
  %v344 = vunpack.c.l.b16 %v31
  %v345 = vunpack.c.h.b16 %v31
  %v346 = vunpack.c.l.b16 %v32
  %v347 = vunpack.c.h.b16 %v32
  %v348 = vunpack.c.l.b16 %v33
  %v349 = vunpack.c.h.b16 %v33
  %v350 = vunpack.c.l.b16 %v34
  %v351 = vunpack.c.l.b16 %v35
  %v352 = vunpack.c.h.b16 %v35
  %v353 = vunpack.c.l.b16 %v36
  %v354 = vunpack.c.h.b16 %v36
  %v355 = vunpack.c.l.b16 %v37
  %v356 = vunpack.c.h.b16 %v37
  %v357 = vunpack.c.l.b16 %v38
  %v358 = vunpack.c.h.b16 %v38
  %v359 = vunpack.c.l.b16 %v39
  %v360 = vunpack.c.l.b16 %v40
  %v361 = vunpack.c.h.b16 %v40
  %v362 = vunpack.c.l.b16 %v41
  %v363 = vunpack.c.h.b16 %v41
  %v364 = vunpack.c.l.b16 %v42
  %v365 = vunpack.c.h.b16 %v42
  %v366 = vunpack.c.l.b16 %v43
  %v367 = vunpack.c.h.b16 %v43
  %v368 = vunpack.c.l.b16 %v44
  %v369 = vunpack.c.l.b16 %v45
  %v370 = vunpack.c.h.b16 %v45
  %v371 = vunpack.c.l.b16 %v46
  %v372 = vunpack.c.h.b16 %v46
  %v373 = vunpack.c.l.b16 %v47
  %v374 = vunpack.c.h.b16 %v47
  %v375 = vunpack.c.l.b16 %v48
  %v376 = vunpack.c.h.b16 %v48
  %v377 = vunpack.c.l.b16 %v49
  %v378 = vunpack.c.l.b16 %v50
  %v379 = vunpack.c.h.b16 %v50
  %v380 = vunpack.c.l.b16 %v51
  %v381 = vunpack.c.h.b16 %v51
  %v382 = vunpack.c.l.b16 %v52
  %v383 = vunpack.c.h.b16 %v52
  %v384 = vunpack.c.l.b16 %v53
  %v385 = vunpack.c.h.b16 %v53
  %v386 = vunpack.c.l.b16 %v54
  %v387 = vunpack.c.l.b16 %v55
  %v388 = vunpack.c.h.b16 %v55
  %v389 = vunpack.c.l.b16 %v56
  %v390 = vunpack.c.h.b16 %v56
  %v391 = vunpack.c.l.b16 %v57
  %v392 = vunpack.c.h.b16 %v57
  %v393 = vunpack.c.l.b16 %v58
  %v394 = vunpack.c.h.b16 %v58
  %v395 = vunpack.c.l.b16 %v59
  %v396 = vunpack.c.l.b16 %v60
  %v397 = vunpack.c.h.b16 %v60
  %v398 = vunpack.c.l.b16 %v61
  %v399 = vunpack.c.h.b16 %v61
  %v400 = vunpack.c.l.b16 %v62
  %v401 = vunpack.c.h.b16 %v62
  %v402 = vunpack.c.l.b16 %v63
  %v403 = vunpack.c.h.b16 %v63
  %v404 = vunpack.c.l.b16 %v64
  %v405 = vunpack.c.l.b16 %v65
  %v406 = vunpack.c.h.b16 %v65
  %v407 = vunpack.c.l.b16 %v66
  %v408 = vunpack.c.h.b16 %v66
  %v409 = vunpack.c.l.b16 %v67
  %v410 = vunpack.c.h.b16 %v67
  %v411 = vunpack.c.l.b16 %v68
  %v412 = vunpack.c.h.b16 %v68
  %v413 = vunpack.c.l.b16 %v69
  %v414 = vunpack.c.l.b16 %v70
  %v415 = vunpack.c.h.b16 %v70
  %v416 = vunpack.c.l.b16 %v71
  %v417 = vunpack.c.h.b16 %v71
  %v418 = vunpack.c.l.b16 %v72
  %v419 = vunpack.c.h.b16 %v72
  %v420 = vunpack.c.l.b16 %v73
  %v421 = vunpack.c.h.b16 %v73
  %v422 = vunpack.c.l.b16 %v74
  %v423 = vunpack.c.l.b16 %v75
  %v424 = vunpack.c.h.b16 %v75
  %v425 = vunpack.c.l.b16 %v76
  %v426 = vunpack.c.h.b16 %v76
  %v427 = vunpack.c.l.b16 %v77
  %v428 = vunpack.c.h.b16 %v77
  %v429 = vunpack.c.l.b16 %v78
  %v430 = vunpack.c.h.b16 %v78
  %v431 = vunpack.c.l.b16 %v79
  %v432 = vunpack.c.l.b16 %v80
  %v433 = vunpack.c.h.b16 %v80
  %v434 = vunpack.c.l.b16 %v81
  %v435 = vunpack.c.h.b16 %v81
  %v436 = vunpack.c.l.b16 %v82
  %v437 = vunpack.c.h.b16 %v82
  %v438 = vunpack.c.l.b16 %v83
  %v439 = vunpack.c.h.b16 %v83
  %v440 = vunpack.c.l.b16 %v84
  %v441 = vunpack.c.l.b16 %v85
  %v442 = vunpack.c.h.b16 %v85
  %v443 = vunpack.c.l.b16 %v86
  %v444 = vunpack.c.h.b16 %v86
  %v445 = vunpack.c.l.b16 %v87
  %v446 = vunpack.c.h.b16 %v87
  %v447 = vunpack.c.l.b16 %v88
  %v448 = vunpack.c.h.b16 %v88
  %v449 = vunpack.c.l.b16 %v89
  %v450 = vunpack.c.l.b16 %v90
  %v451 = vunpack.c.h.b16 %v90
  %v452 = vunpack.c.l.b16 %v91
  %v453 = vunpack.c.h.b16 %v91
  %v454 = vunpack.c.l.b16 %v92
  %v455 = vunpack.c.h.b16 %v92
  %v456 = vunpack.c.l.b16 %v93
  %v457 = vunpack.c.h.b16 %v93
  %v458 = vunpack.c.l.b16 %v94
  %v459 = vunpack.c.l.b16 %v95
  %v460 = vunpack.c.h.b16 %v95
  %v461 = vunpack.c.l.b16 %v96
  %v462 = vunpack.c.h.b16 %v96
  %v463 = vunpack.c.l.b16 %v97
  %v464 = vunpack.c.h.b16 %v97
  %v465 = vunpack.c.l.b16 %v98
  %v466 = vunpack.c.h.b16 %v98
  %v467 = vunpack.c.l.b16 %v99
  %v468 = vpack.c.b16 %v333, %v324
  %v469 = vpack.c.b16 %v334, %v325
  %v470 = vpack.c.b16 %v335, %v326
  %v471 = vpack.c.b16 %v336, %v327
  %v472 = vpack.c.b16 %v337, %v328
  %v473 = vpack.c.b16 %v338, %v329
  %v474 = vpack.c.b16 %v339, %v330
  %v475 = vpack.c.b16 %v340, %v331
  %v476 = vpack.c.b16 %v341, %v332
  %v477 = vpack.c.b16 %v351, %v342
  %v478 = vpack.c.b16 %v352, %v343
  %v479 = vpack.c.b16 %v353, %v344
  %v480 = vpack.c.b16 %v354, %v345
  %v481 = vpack.c.b16 %v355, %v346
  %v482 = vpack.c.b16 %v356, %v347
  %v483 = vpack.c.b16 %v357, %v348
  %v484 = vpack.c.b16 %v358, %v349
  %v485 = vpack.c.b16 %v359, %v350
  %v486 = vpack.c.b16 %v369, %v360
  %v487 = vpack.c.b16 %v370, %v361
  %v488 = vpack.c.b16 %v371, %v362
  %v489 = vpack.c.b16 %v372, %v363
  %v490 = vpack.c.b16 %v373, %v364
  %v491 = vpack.c.b16 %v374, %v365
  %v492 = vpack.c.b16 %v375, %v366
  %v493 = vpack.c.b16 %v376, %v367
  %v494 = vpack.c.b16 %v377, %v368
  %v495 = vpack.c.b16 %v387, %v378
  %v496 = vpack.c.b16 %v388, %v379
  %v497 = vpack.c.b16 %v389, %v380
  %v498 = vpack.c.b16 %v390, %v381
  %v499 = vpack.c.b16 %v391, %v382
  %v500 = vpack.c.b16 %v392, %v383
  %v501 = vpack.c.b16 %v393, %v384
  %v502 = vpack.c.b16 %v394, %v385
  %v503 = vpack.c.b16 %v395, %v386
  %v504 = vpack.c.b16 %v405, %v396
  %v505 = vpack.c.b16 %v406, %v397
  %v506 = vpack.c.b16 %v407, %v398
  %v507 = vpack.c.b16 %v408, %v399
  %v508 = vpack.c.b16 %v409, %v400
  %v509 = vpack.c.b16 %v410, %v401
  %v510 = vpack.c.b16 %v411, %v402
  %v511 = vpack.c.b16 %v412, %v403
  %v512 = vpack.c.b16 %v413, %v404
  %v513 = vpack.c.b16 %v423, %v414
  %v514 = vpack.c.b16 %v424, %v415
  %v515 = vpack.c.b16 %v425, %v416
  %v516 = vpack.c.b16 %v426, %v417
  %v517 = vpack.c.b16 %v427, %v418
  %v518 = vpack.c.b16 %v428, %v419
  %v519 = vpack.c.b16 %v429, %v420
  %v520 = vpack.c.b16 %v430, %v421
  %v521 = vpack.c.b16 %v431, %v422
  %v522 = vpack.c.b16 %v441, %v432
  %v523 = vpack.c.b16 %v442, %v433
  %v524 = vpack.c.b16 %v443, %v434
  %v525 = vpack.c.b16 %v444, %v435
  %v526 = vpack.c.b16 %v445, %v436
  %v527 = vpack.c.b16 %v446, %v437
  %v528 = vpack.c.b16 %v447, %v438
  %v529 = vpack.c.b16 %v448, %v439
  %v530 = vpack.c.b16 %v449, %v440
  %v531 = vpack.c.b16 %v459, %v450
  %v532 = vpack.c.b16 %v460, %v451
  %v533 = vpack.c.b16 %v461, %v452
  %v534 = vpack.c.b16 %v462, %v453
  %v535 = vpack.c.b16 %v463, %v454
  %v536 = vpack.c.b16 %v464, %v455
  %v537 = vpack.c.b16 %v465, %v456
  %v538 = vpack.c.b16 %v466, %v457
  %v539 = vpack.c.b16 %v467, %v458
  %v756 = vunpack.c.l.b16 %v100
  %v757 = vunpack.c.l.b16 %v101
  %v758 = vunpack.c.l.b16 %v102
  %v759 = vunpack.c.l.b16 %v103
  %v760 = vunpack.c.l.b16 %v104
  %v761 = vunpack.c.l.b16 %v105
  %v762 = vunpack.c.l.b16 %v106
  %v763 = vunpack.c.l.b16 %v107
  %v764 = vunpack.c.l.b16 %v108
  %v765 = vunpack.c.l.b16 %v109
  %v766 = vunpack.c.l.b16 %v110
  %v767 = vunpack.c.l.b16 %v111
  %v768 = vunpack.c.l.b16 %v112
  %v769 = vunpack.c.l.b16 %v113
  %v770 = vunpack.c.l.b16 %v114
  %v771 = vunpack.c.l.b16 %v115
  %v772 = vunpack.c.l.b16 %v116
  %v773 = vunpack.c.l.b16 %v117
  %v774 = vunpack.c.l.b16 %v118
  %v775 = vunpack.c.l.b16 %v119
  %v776 = vunpack.c.l.b16 %v120
  %v777 = vunpack.c.l.b16 %v121
  %v778 = vunpack.c.l.b16 %v122
  %v779 = vunpack.c.l.b16 %v123
  %v780 = vunpack.c.l.b16 %v124
  %v781 = vunpack.c.l.b16 %v125
  %v782 = vunpack.c.l.b16 %v126
  %v783 = vunpack.c.l.b16 %v127
  %v784 = vunpack.c.l.b16 %v128
  %v785 = vunpack.c.l.b16 %v129
  %v786 = vunpack.c.l.b16 %v130
  %v787 = vunpack.c.l.b16 %v131
  %v788 = vunpack.c.l.b16 %v132
  %v789 = vunpack.c.l.b16 %v133
  %v790 = vunpack.c.l.b16 %v134
  %v791 = vunpack.c.l.b16 %v135
  %v792 = vunpack.c.l.b16 %v136
  %v793 = vunpack.c.l.b16 %v137
  %v794 = vunpack.c.l.b16 %v138
  %v795 = vunpack.c.l.b16 %v139
  %v796 = vunpack.c.l.b16 %v140
  %v797 = vunpack.c.l.b16 %v141
  %v798 = vunpack.c.l.b16 %v142
  %v799 = vunpack.c.l.b16 %v143
  %v800 = vunpack.c.l.b16 %v144
  %v801 = vunpack.c.l.b16 %v145
  %v802 = vunpack.c.l.b16 %v146
  %v803 = vunpack.c.l.b16 %v147
  %v804 = vunpack.c.l.b16 %v148
  %v805 = vunpack.c.l.b16 %v149
  %v806 = vunpack.c.l.b16 %v150
  %v807 = vunpack.c.l.b16 %v151
  %v808 = vunpack.c.l.b16 %v152
  %v809 = vunpack.c.l.b16 %v153
  %v810 = vunpack.c.l.b16 %v154
  %v811 = vunpack.c.l.b16 %v155
  %v812 = vunpack.c.l.b16 %v156
  %v813 = vunpack.c.l.b16 %v157
  %v814 = vunpack.c.l.b16 %v158
  %v815 = vunpack.c.l.b16 %v159
  %v816 = vunpack.c.l.b16 %v160
  %v817 = vunpack.c.l.b16 %v161
  %v818 = vunpack.c.l.b16 %v162
  %v819 = vunpack.c.l.b16 %v163
  %v820 = vunpack.c.l.b16 %v164
  %v821 = vunpack.c.l.b16 %v165
  %v822 = vunpack.c.l.b16 %v166
  %v823 = vunpack.c.l.b16 %v167
  %v824 = vunpack.c.l.b16 %v168
  %v825 = vunpack.c.l.b16 %v169
  %v826 = vunpack.c.l.b16 %v170
  %v827 = vunpack.c.l.b16 %v171
  %v828 = vunpack.c.l.b16 %v172
  %v829 = vunpack.c.l.b16 %v173
  %v830 = vunpack.c.l.b16 %v174
  %v831 = vunpack.c.l.b16 %v175
  %v832 = vunpack.c.l.b16 %v176
  %v833 = vunpack.c.l.b16 %v177
  %v834 = vunpack.c.l.b16 %v178
  %v835 = vunpack.c.l.b16 %v179
  %v836 = vunpack.c.l.b16 %v180
  %v837 = vunpack.c.l.b16 %v181
  %v838 = vunpack.c.l.b16 %v182
  %v839 = vunpack.c.l.b16 %v183
  %v840 = vunpack.c.l.b16 %v184
  %v841 = vunpack.c.l.b16 %v185
  %v842 = vunpack.c.l.b16 %v186
  %v843 = vunpack.c.l.b16 %v187
  %v844 = vunpack.c.l.b16 %v188
  %v845 = vunpack.c.l.b16 %v189
  %v846 = vunpack.c.l.b16 %v190
  %v847 = vunpack.c.l.b16 %v191
  %v848 = vunpack.c.l.b16 %v192
  %v849 = vunpack.c.l.b16 %v193
  %v850 = vunpack.c.l.b16 %v194
  %v851 = vunpack.c.l.b16 %v195
  %v852 = vunpack.c.l.b16 %v196
  %v853 = vunpack.c.l.b16 %v197
  %v854 = vunpack.c.l.b16 %v198
  %v855 = vunpack.c.l.b16 %v199
  %v856 = vunpack.c.l.b16 %v200
  %v857 = vunpack.c.l.b16 %v201
  %v858 = vunpack.c.l.b16 %v202
  %v859 = vunpack.c.l.b16 %v203
  %v860 = vunpack.c.l.b16 %v204
  %v861 = vunpack.c.l.b16 %v205
  %v862 = vunpack.c.l.b16 %v206
  %v863 = vunpack.c.l.b16 %v207
  %v864 = vunpack.c.l.b16 %v208
  %v865 = vunpack.c.l.b16 %v209
  %v866 = vunpack.c.l.b16 %v210
  %v867 = vunpack.c.l.b16 %v211
  %v868 = vunpack.c.l.b16 %v212
  %v869 = vunpack.c.l.b16 %v213
  %v870 = vunpack.c.l.b16 %v214
  %v871 = vunpack.c.l.b16 %v215
  %v872 = vunpack.c.l.b16 %v216
  %v873 = vunpack.c.l.b16 %v217
  %v874 = vunpack.c.l.b16 %v218
  %v875 = vunpack.c.l.b16 %v219
  %v876 = vunpack.c.l.b16 %v220
  %v877 = vunpack.c.l.b16 %v221
  %v878 = vunpack.c.l.b16 %v222
  %v879 = vunpack.c.l.b16 %v223
  %v880 = vunpack.c.l.b16 %v224
  %v881 = vunpack.c.l.b16 %v225
  %v882 = vunpack.c.l.b16 %v226
  %v883 = vunpack.c.l.b16 %v227
  %v884 = vunpack.c.l.b16 %v228
  %v885 = vunpack.c.l.b16 %v229
  %v886 = vunpack.c.l.b16 %v230
  %v887 = vunpack.c.l.b16 %v231
  %v888 = vunpack.c.l.b16 %v232
  %v889 = vunpack.c.l.b16 %v233
  %v890 = vunpack.c.l.b16 %v234
  %v891 = vunpack.c.l.b16 %v235
  %v892 = vunpack.c.l.b16 %v236
  %v893 = vunpack.c.l.b16 %v237
  %v894 = vunpack.c.l.b16 %v238
  %v895 = vunpack.c.l.b16 %v239
  %v896 = vunpack.c.l.b16 %v240
  %v897 = vunpack.c.l.b16 %v241
  %v898 = vunpack.c.l.b16 %v242
  %v899 = vunpack.c.l.b16 %v243
  %v900 = vpack.c.b16 %v757, %v756
  %v901 = vpack.c.b16 %v759, %v758
  %v902 = vpack.c.b16 %v761, %v760
  %v903 = vpack.c.b16 %v763, %v762
  %v904 = vpack.c.b16 %v765, %v764
  %v905 = vpack.c.b16 %v767, %v766
  %v906 = vpack.c.b16 %v769, %v768
  %v907 = vpack.c.b16 %v771, %v770
  %v908 = vpack.c.b16 %v773, %v772
  %v909 = vpack.c.b16 %v775, %v774
  %v910 = vpack.c.b16 %v777, %v776
  %v911 = vpack.c.b16 %v779, %v778
  %v912 = vpack.c.b16 %v781, %v780
  %v913 = vpack.c.b16 %v783, %v782
  %v914 = vpack.c.b16 %v785, %v784
  %v915 = vpack.c.b16 %v787, %v786
  %v916 = vpack.c.b16 %v789, %v788
  %v917 = vpack.c.b16 %v791, %v790
  %v918 = vpack.c.b16 %v793, %v792
  %v919 = vpack.c.b16 %v795, %v794
  %v920 = vpack.c.b16 %v797, %v796
  %v921 = vpack.c.b16 %v799, %v798
  %v922 = vpack.c.b16 %v801, %v800
  %v923 = vpack.c.b16 %v803, %v802
  %v924 = vpack.c.b16 %v805, %v804
  %v925 = vpack.c.b16 %v807, %v806
  %v926 = vpack.c.b16 %v809, %v808
  %v927 = vpack.c.b16 %v811, %v810
  %v928 = vpack.c.b16 %v813, %v812
  %v929 = vpack.c.b16 %v815, %v814
  %v930 = vpack.c.b16 %v817, %v816
  %v931 = vpack.c.b16 %v819, %v818
  %v932 = vpack.c.b16 %v821, %v820
  %v933 = vpack.c.b16 %v823, %v822
  %v934 = vpack.c.b16 %v825, %v824
  %v935 = vpack.c.b16 %v827, %v826
  %v936 = vpack.c.b16 %v829, %v828
  %v937 = vpack.c.b16 %v831, %v830
  %v938 = vpack.c.b16 %v833, %v832
  %v939 = vpack.c.b16 %v835, %v834
  %v940 = vpack.c.b16 %v837, %v836
  %v941 = vpack.c.b16 %v839, %v838
  %v942 = vpack.c.b16 %v841, %v840
  %v943 = vpack.c.b16 %v843, %v842
  %v944 = vpack.c.b16 %v845, %v844
  %v945 = vpack.c.b16 %v847, %v846
  %v946 = vpack.c.b16 %v849, %v848
  %v947 = vpack.c.b16 %v851, %v850
  %v948 = vpack.c.b16 %v853, %v852
  %v949 = vpack.c.b16 %v855, %v854
  %v950 = vpack.c.b16 %v857, %v856
  %v951 = vpack.c.b16 %v859, %v858
  %v952 = vpack.c.b16 %v861, %v860
  %v953 = vpack.c.b16 %v863, %v862
  %v954 = vpack.c.b16 %v865, %v864
  %v955 = vpack.c.b16 %v867, %v866
  %v956 = vpack.c.b16 %v869, %v868
  %v957 = vpack.c.b16 %v871, %v870
  %v958 = vpack.c.b16 %v873, %v872
  %v959 = vpack.c.b16 %v875, %v874
  %v960 = vpack.c.b16 %v877, %v876
  %v961 = vpack.c.b16 %v879, %v878
  %v962 = vpack.c.b16 %v881, %v880
  %v963 = vpack.c.b16 %v883, %v882
  %v964 = vpack.c.b16 %v885, %v884
  %v965 = vpack.c.b16 %v887, %v886
  %v966 = vpack.c.b16 %v889, %v888
  %v967 = vpack.c.b16 %v891, %v890
  %v968 = vpack.c.b16 %v893, %v892
  %v969 = vpack.c.b16 %v895, %v894
  %v970 = vpack.c.b16 %v897, %v896
  %v971 = vpack.c.b16 %v899, %v898
  %1044 = vmatpush.bf16.msra.mxu0 %v907
  %1045 = vmatpush.bf16.msra.mxu0 %v906
  %1046 = vmatpush.bf16.msra.mxu0 %v905
  %1047 = vmatpush.bf16.msra.mxu0 %v904
  %1048 = vmatpush.bf16.msra.mxu0 %v903
  %1049 = vmatpush.bf16.msra.mxu0 %v902
  %1050 = vmatpush.bf16.msra.mxu0 %v901
  %1051 = vmatpush.bf16.msra.mxu0 %v900
  %1052 = vmatmul.bf16.gmra.mxu0 %v468
  %v1053 = vpop.f32.mrf.mxu0
  %v1054 = vadd.f32 0.0, %v1053
  %v1055 = vpop.f32.mrf.mxu0
  %v1056 = vadd.f32 0.0, %v1055
  %1057 = vmatmul.bf16.gmra.mxu0 %v477
  %v1058 = vpop.f32.mrf.mxu0
  %v1059 = vadd.f32 0.0, %v1058
  %v1060 = vpop.f32.mrf.mxu0
  %v1061 = vadd.f32 0.0, %v1060
  %1062 = vmatmul.bf16.gmra.mxu0 %v486
  %v1063 = vpop.f32.mrf.mxu0
  %v1064 = vadd.f32 0.0, %v1063
  %v1065 = vpop.f32.mrf.mxu0
  %v1066 = vadd.f32 0.0, %v1065
  %1067 = vmatmul.bf16.gmra.mxu0 %v495
  %v1068 = vpop.f32.mrf.mxu0
  %v1069 = vadd.f32 0.0, %v1068
  %v1070 = vpop.f32.mrf.mxu0
  %v1071 = vadd.f32 0.0, %v1070
  %1072 = vmatmul.bf16.gmra.mxu0 %v504
  %v1073 = vpop.f32.mrf.mxu0
  %v1074 = vadd.f32 0.0, %v1073
  %v1075 = vpop.f32.mrf.mxu0
  %v1076 = vadd.f32 0.0, %v1075
  %1077 = vmatmul.bf16.gmra.mxu0 %v513
  %v1078 = vpop.f32.mrf.mxu0
  %v1079 = vadd.f32 0.0, %v1078
  %v1080 = vpop.f32.mrf.mxu0
  %v1081 = vadd.f32 0.0, %v1080
  %1082 = vmatmul.bf16.gmra.mxu0 %v522
  %v1083 = vpop.f32.mrf.mxu0
  %v1084 = vadd.f32 0.0, %v1083
  %v1085 = vpop.f32.mrf.mxu0
  %v1086 = vadd.f32 0.0, %v1085
  %1087 = vmatmul.bf16.gmra.mxu0 %v531
  %v1088 = vpop.f32.mrf.mxu0
  %v1089 = vadd.f32 0.0, %v1088
  %v1090 = vpop.f32.mrf.mxu0
  %v1091 = vadd.f32 0.0, %v1090
  %1092 = vdwg.mxu0
  %1093 = vmatpush.bf16.msra.mxu0 %v915
  %1094 = vmatpush.bf16.msra.mxu0 %v914
  %1095 = vmatpush.bf16.msra.mxu0 %v913
  %1096 = vmatpush.bf16.msra.mxu0 %v912
  %1097 = vmatpush.bf16.msra.mxu0 %v911
  %1098 = vmatpush.bf16.msra.mxu0 %v910
  %1099 = vmatpush.bf16.msra.mxu0 %v909
  %1100 = vmatpush.bf16.msra.mxu0 %v908
  %1101 = vmatmul.bf16.gmra.mxu0 %v469
  %v1102 = vpop.f32.mrf.mxu0
  %v1103 = vadd.f32 %v1054, %v1102
  %v1104 = vpop.f32.mrf.mxu0
  %v1105 = vadd.f32 %v1056, %v1104
  %1106 = vmatmul.bf16.gmra.mxu0 %v478
  %v1107 = vpop.f32.mrf.mxu0
  %v1108 = vadd.f32 %v1059, %v1107
  %v1109 = vpop.f32.mrf.mxu0
  %v1110 = vadd.f32 %v1061, %v1109
  %1111 = vmatmul.bf16.gmra.mxu0 %v487
  %v1112 = vpop.f32.mrf.mxu0
  %v1113 = vadd.f32 %v1064, %v1112
  %v1114 = vpop.f32.mrf.mxu0
  %v1115 = vadd.f32 %v1066, %v1114
  %1116 = vmatmul.bf16.gmra.mxu0 %v496
  %v1117 = vpop.f32.mrf.mxu0
  %v1118 = vadd.f32 %v1069, %v1117
  %v1119 = vpop.f32.mrf.mxu0
  %v1120 = vadd.f32 %v1071, %v1119
  %1121 = vmatmul.bf16.gmra.mxu0 %v505
  %v1122 = vpop.f32.mrf.mxu0
  %v1123 = vadd.f32 %v1074, %v1122
  %v1124 = vpop.f32.mrf.mxu0
  %v1125 = vadd.f32 %v1076, %v1124
  %1126 = vmatmul.bf16.gmra.mxu0 %v514
  %v1127 = vpop.f32.mrf.mxu0
  %v1128 = vadd.f32 %v1079, %v1127
  %v1129 = vpop.f32.mrf.mxu0
  %v1130 = vadd.f32 %v1081, %v1129
  %1131 = vmatmul.bf16.gmra.mxu0 %v523
  %v1132 = vpop.f32.mrf.mxu0
  %v1133 = vadd.f32 %v1084, %v1132
  %v1134 = vpop.f32.mrf.mxu0
  %v1135 = vadd.f32 %v1086, %v1134
  %1136 = vmatmul.bf16.gmra.mxu0 %v532
  %v1137 = vpop.f32.mrf.mxu0
  %v1138 = vadd.f32 %v1089, %v1137
  %v1139 = vpop.f32.mrf.mxu0
  %v1140 = vadd.f32 %v1091, %v1139
  %1141 = vdwg.mxu0
  %1142 = vmatpush.bf16.msra.mxu0 %v923
  %1143 = vmatpush.bf16.msra.mxu0 %v922
  %1144 = vmatpush.bf16.msra.mxu0 %v921
  %1145 = vmatpush.bf16.msra.mxu0 %v920
  %1146 = vmatpush.bf16.msra.mxu0 %v919
  %1147 = vmatpush.bf16.msra.mxu0 %v918
  %1148 = vmatpush.bf16.msra.mxu0 %v917
  %1149 = vmatpush.bf16.msra.mxu0 %v916
  %1150 = vmatmul.bf16.gmra.mxu0 %v470
  %v1151 = vpop.f32.mrf.mxu0
  %v1152 = vadd.f32 %v1103, %v1151
  %v1153 = vpop.f32.mrf.mxu0
  %v1154 = vadd.f32 %v1105, %v1153
  %1155 = vmatmul.bf16.gmra.mxu0 %v479
  %v1156 = vpop.f32.mrf.mxu0
  %v1157 = vadd.f32 %v1108, %v1156
  %v1158 = vpop.f32.mrf.mxu0
  %v1159 = vadd.f32 %v1110, %v1158
  %1160 = vmatmul.bf16.gmra.mxu0 %v488
  %v1161 = vpop.f32.mrf.mxu0
  %v1162 = vadd.f32 %v1113, %v1161
  %v1163 = vpop.f32.mrf.mxu0
  %v1164 = vadd.f32 %v1115, %v1163
  %1165 = vmatmul.bf16.gmra.mxu0 %v497
  %v1166 = vpop.f32.mrf.mxu0
  %v1167 = vadd.f32 %v1118, %v1166
  %v1168 = vpop.f32.mrf.mxu0
  %v1169 = vadd.f32 %v1120, %v1168
  %1170 = vmatmul.bf16.gmra.mxu0 %v506
  %v1171 = vpop.f32.mrf.mxu0
  %v1172 = vadd.f32 %v1123, %v1171
  %v1173 = vpop.f32.mrf.mxu0
  %v1174 = vadd.f32 %v1125, %v1173
  %1175 = vmatmul.bf16.gmra.mxu0 %v515
  %v1176 = vpop.f32.mrf.mxu0
  %v1177 = vadd.f32 %v1128, %v1176
  %v1178 = vpop.f32.mrf.mxu0
  %v1179 = vadd.f32 %v1130, %v1178
  %1180 = vmatmul.bf16.gmra.mxu0 %v524
  %v1181 = vpop.f32.mrf.mxu0
  %v1182 = vadd.f32 %v1133, %v1181
  %v1183 = vpop.f32.mrf.mxu0
  %v1184 = vadd.f32 %v1135, %v1183
  %1185 = vmatmul.bf16.gmra.mxu0 %v533
  %v1186 = vpop.f32.mrf.mxu0
  %v1187 = vadd.f32 %v1138, %v1186
  %v1188 = vpop.f32.mrf.mxu0
  %v1189 = vadd.f32 %v1140, %v1188
  %1190 = vdwg.mxu0
  %1191 = vmatpush.bf16.msra.mxu0 %v931
  %1192 = vmatpush.bf16.msra.mxu0 %v930
  %1193 = vmatpush.bf16.msra.mxu0 %v929
  %1194 = vmatpush.bf16.msra.mxu0 %v928
  %1195 = vmatpush.bf16.msra.mxu0 %v927
  %1196 = vmatpush.bf16.msra.mxu0 %v926
  %1197 = vmatpush.bf16.msra.mxu0 %v925
  %1198 = vmatpush.bf16.msra.mxu0 %v924
  %1199 = vmatmul.bf16.gmra.mxu0 %v471
  %v1200 = vpop.f32.mrf.mxu0
  %v1201 = vadd.f32 %v1152, %v1200
  %v1202 = vpop.f32.mrf.mxu0
  %v1203 = vadd.f32 %v1154, %v1202
  %1204 = vmatmul.bf16.gmra.mxu0 %v480
  %v1205 = vpop.f32.mrf.mxu0
  %v1206 = vadd.f32 %v1157, %v1205
  %v1207 = vpop.f32.mrf.mxu0
  %v1208 = vadd.f32 %v1159, %v1207
  %1209 = vmatmul.bf16.gmra.mxu0 %v489
  %v1210 = vpop.f32.mrf.mxu0
  %v1211 = vadd.f32 %v1162, %v1210
  %v1212 = vpop.f32.mrf.mxu0
  %v1213 = vadd.f32 %v1164, %v1212
  %1214 = vmatmul.bf16.gmra.mxu0 %v498
  %v1215 = vpop.f32.mrf.mxu0
  %v1216 = vadd.f32 %v1167, %v1215
  %v1217 = vpop.f32.mrf.mxu0
  %v1218 = vadd.f32 %v1169, %v1217
  %1219 = vmatmul.bf16.gmra.mxu0 %v507
  %v1220 = vpop.f32.mrf.mxu0
  %v1221 = vadd.f32 %v1172, %v1220
  %v1222 = vpop.f32.mrf.mxu0
  %v1223 = vadd.f32 %v1174, %v1222
  %1224 = vmatmul.bf16.gmra.mxu0 %v516
  %v1225 = vpop.f32.mrf.mxu0
  %v1226 = vadd.f32 %v1177, %v1225
  %v1227 = vpop.f32.mrf.mxu0
  %v1228 = vadd.f32 %v1179, %v1227
  %1229 = vmatmul.bf16.gmra.mxu0 %v525
  %v1230 = vpop.f32.mrf.mxu0
  %v1231 = vadd.f32 %v1182, %v1230
  %v1232 = vpop.f32.mrf.mxu0
  %v1233 = vadd.f32 %v1184, %v1232
  %1234 = vmatmul.bf16.gmra.mxu0 %v534
  %v1235 = vpop.f32.mrf.mxu0
  %v1236 = vadd.f32 %v1187, %v1235
  %v1237 = vpop.f32.mrf.mxu0
  %v1238 = vadd.f32 %v1189, %v1237
  %1239 = vdwg.mxu0
  %1240 = vmatpush.bf16.msra.mxu0 %v939
  %1241 = vmatpush.bf16.msra.mxu0 %v938
  %1242 = vmatpush.bf16.msra.mxu0 %v937
  %1243 = vmatpush.bf16.msra.mxu0 %v936
  %1244 = vmatpush.bf16.msra.mxu0 %v935
  %1245 = vmatpush.bf16.msra.mxu0 %v934
  %1246 = vmatpush.bf16.msra.mxu0 %v933
  %1247 = vmatpush.bf16.msra.mxu0 %v932
  %1248 = vmatmul.bf16.gmra.mxu0 %v472
  %v1249 = vpop.f32.mrf.mxu0
  %v1250 = vadd.f32 %v1201, %v1249
  %v1251 = vpop.f32.mrf.mxu0
  %v1252 = vadd.f32 %v1203, %v1251
  %1253 = vmatmul.bf16.gmra.mxu0 %v481
  %v1254 = vpop.f32.mrf.mxu0
  %v1255 = vadd.f32 %v1206, %v1254
  %v1256 = vpop.f32.mrf.mxu0
  %v1257 = vadd.f32 %v1208, %v1256
  %1258 = vmatmul.bf16.gmra.mxu0 %v490
  %v1259 = vpop.f32.mrf.mxu0
  %v1260 = vadd.f32 %v1211, %v1259
  %v1261 = vpop.f32.mrf.mxu0
  %v1262 = vadd.f32 %v1213, %v1261
  %1263 = vmatmul.bf16.gmra.mxu0 %v499
  %v1264 = vpop.f32.mrf.mxu0
  %v1265 = vadd.f32 %v1216, %v1264
  %v1266 = vpop.f32.mrf.mxu0
  %v1267 = vadd.f32 %v1218, %v1266
  %1268 = vmatmul.bf16.gmra.mxu0 %v508
  %v1269 = vpop.f32.mrf.mxu0
  %v1270 = vadd.f32 %v1221, %v1269
  %v1271 = vpop.f32.mrf.mxu0
  %v1272 = vadd.f32 %v1223, %v1271
  %1273 = vmatmul.bf16.gmra.mxu0 %v517
  %v1274 = vpop.f32.mrf.mxu0
  %v1275 = vadd.f32 %v1226, %v1274
  %v1276 = vpop.f32.mrf.mxu0
  %v1277 = vadd.f32 %v1228, %v1276
  %1278 = vmatmul.bf16.gmra.mxu0 %v526
  %v1279 = vpop.f32.mrf.mxu0
  %v1280 = vadd.f32 %v1231, %v1279
  %v1281 = vpop.f32.mrf.mxu0
  %v1282 = vadd.f32 %v1233, %v1281
  %1283 = vmatmul.bf16.gmra.mxu0 %v535
  %v1284 = vpop.f32.mrf.mxu0
  %v1285 = vadd.f32 %v1236, %v1284
  %v1286 = vpop.f32.mrf.mxu0
  %v1287 = vadd.f32 %v1238, %v1286
  %1288 = vdwg.mxu0
  %1289 = vmatpush.bf16.msra.mxu0 %v947
  %1290 = vmatpush.bf16.msra.mxu0 %v946
  %1291 = vmatpush.bf16.msra.mxu0 %v945
  %1292 = vmatpush.bf16.msra.mxu0 %v944
  %1293 = vmatpush.bf16.msra.mxu0 %v943
  %1294 = vmatpush.bf16.msra.mxu0 %v942
  %1295 = vmatpush.bf16.msra.mxu0 %v941
  %1296 = vmatpush.bf16.msra.mxu0 %v940
  %1297 = vmatmul.bf16.gmra.mxu0 %v473
  %v1298 = vpop.f32.mrf.mxu0
  %v1299 = vadd.f32 %v1250, %v1298
  %v1300 = vpop.f32.mrf.mxu0
  %v1301 = vadd.f32 %v1252, %v1300
  %1302 = vmatmul.bf16.gmra.mxu0 %v482
  %v1303 = vpop.f32.mrf.mxu0
  %v1304 = vadd.f32 %v1255, %v1303
  %v1305 = vpop.f32.mrf.mxu0
  %v1306 = vadd.f32 %v1257, %v1305
  %1307 = vmatmul.bf16.gmra.mxu0 %v491
  %v1308 = vpop.f32.mrf.mxu0
  %v1309 = vadd.f32 %v1260, %v1308
  %v1310 = vpop.f32.mrf.mxu0
  %v1311 = vadd.f32 %v1262, %v1310
  %1312 = vmatmul.bf16.gmra.mxu0 %v500
  %v1313 = vpop.f32.mrf.mxu0
  %v1314 = vadd.f32 %v1265, %v1313
  %v1315 = vpop.f32.mrf.mxu0
  %v1316 = vadd.f32 %v1267, %v1315
  %1317 = vmatmul.bf16.gmra.mxu0 %v509
  %v1318 = vpop.f32.mrf.mxu0
  %v1319 = vadd.f32 %v1270, %v1318
  %v1320 = vpop.f32.mrf.mxu0
  %v1321 = vadd.f32 %v1272, %v1320
  %1322 = vmatmul.bf16.gmra.mxu0 %v518
  %v1323 = vpop.f32.mrf.mxu0
  %v1324 = vadd.f32 %v1275, %v1323
  %v1325 = vpop.f32.mrf.mxu0
  %v1326 = vadd.f32 %v1277, %v1325
  %1327 = vmatmul.bf16.gmra.mxu0 %v527
  %v1328 = vpop.f32.mrf.mxu0
  %v1329 = vadd.f32 %v1280, %v1328
  %v1330 = vpop.f32.mrf.mxu0
  %v1331 = vadd.f32 %v1282, %v1330
  %1332 = vmatmul.bf16.gmra.mxu0 %v536
  %v1333 = vpop.f32.mrf.mxu0
  %v1334 = vadd.f32 %v1285, %v1333
  %v1335 = vpop.f32.mrf.mxu0
  %v1336 = vadd.f32 %v1287, %v1335
  %1337 = vdwg.mxu0
  %1338 = vmatpush.bf16.msra.mxu0 %v955
  %1339 = vmatpush.bf16.msra.mxu0 %v954
  %1340 = vmatpush.bf16.msra.mxu0 %v953
  %1341 = vmatpush.bf16.msra.mxu0 %v952
  %1342 = vmatpush.bf16.msra.mxu0 %v951
  %1343 = vmatpush.bf16.msra.mxu0 %v950
  %1344 = vmatpush.bf16.msra.mxu0 %v949
  %1345 = vmatpush.bf16.msra.mxu0 %v948
  %1346 = vmatmul.bf16.gmra.mxu0 %v474
  %v1347 = vpop.f32.mrf.mxu0
  %v1348 = vadd.f32 %v1299, %v1347
  %v1349 = vpop.f32.mrf.mxu0
  %v1350 = vadd.f32 %v1301, %v1349
  %1351 = vmatmul.bf16.gmra.mxu0 %v483
  %v1352 = vpop.f32.mrf.mxu0
  %v1353 = vadd.f32 %v1304, %v1352
  %v1354 = vpop.f32.mrf.mxu0
  %v1355 = vadd.f32 %v1306, %v1354
  %1356 = vmatmul.bf16.gmra.mxu0 %v492
  %v1357 = vpop.f32.mrf.mxu0
  %v1358 = vadd.f32 %v1309, %v1357
  %v1359 = vpop.f32.mrf.mxu0
  %v1360 = vadd.f32 %v1311, %v1359
  %1361 = vmatmul.bf16.gmra.mxu0 %v501
  %v1362 = vpop.f32.mrf.mxu0
  %v1363 = vadd.f32 %v1314, %v1362
  %v1364 = vpop.f32.mrf.mxu0
  %v1365 = vadd.f32 %v1316, %v1364
  %1366 = vmatmul.bf16.gmra.mxu0 %v510
  %v1367 = vpop.f32.mrf.mxu0
  %v1368 = vadd.f32 %v1319, %v1367
  %v1369 = vpop.f32.mrf.mxu0
  %v1370 = vadd.f32 %v1321, %v1369
  %1371 = vmatmul.bf16.gmra.mxu0 %v519
  %v1372 = vpop.f32.mrf.mxu0
  %v1373 = vadd.f32 %v1324, %v1372
  %v1374 = vpop.f32.mrf.mxu0
  %v1375 = vadd.f32 %v1326, %v1374
  %1376 = vmatmul.bf16.gmra.mxu0 %v528
  %v1377 = vpop.f32.mrf.mxu0
  %v1378 = vadd.f32 %v1329, %v1377
  %v1379 = vpop.f32.mrf.mxu0
  %v1380 = vadd.f32 %v1331, %v1379
  %1381 = vmatmul.bf16.gmra.mxu0 %v537
  %v1382 = vpop.f32.mrf.mxu0
  %v1383 = vadd.f32 %v1334, %v1382
  %v1384 = vpop.f32.mrf.mxu0
  %v1385 = vadd.f32 %v1336, %v1384
  %1386 = vdwg.mxu0
  %1387 = vmatpush.bf16.msra.mxu0 %v963
  %1388 = vmatpush.bf16.msra.mxu0 %v962
  %1389 = vmatpush.bf16.msra.mxu0 %v961
  %1390 = vmatpush.bf16.msra.mxu0 %v960
  %1391 = vmatpush.bf16.msra.mxu0 %v959
  %1392 = vmatpush.bf16.msra.mxu0 %v958
  %1393 = vmatpush.bf16.msra.mxu0 %v957
  %1394 = vmatpush.bf16.msra.mxu0 %v956
  %1395 = vmatmul.bf16.gmra.mxu0 %v475
  %v1396 = vpop.f32.mrf.mxu0
  %v1397 = vadd.f32 %v1348, %v1396
  %v1398 = vpop.f32.mrf.mxu0
  %v1399 = vadd.f32 %v1350, %v1398
  %1400 = vmatmul.bf16.gmra.mxu0 %v484
  %v1401 = vpop.f32.mrf.mxu0
  %v1402 = vadd.f32 %v1353, %v1401
  %v1403 = vpop.f32.mrf.mxu0
  %v1404 = vadd.f32 %v1355, %v1403
  %1405 = vmatmul.bf16.gmra.mxu0 %v493
  %v1406 = vpop.f32.mrf.mxu0
  %v1407 = vadd.f32 %v1358, %v1406
  %v1408 = vpop.f32.mrf.mxu0
  %v1409 = vadd.f32 %v1360, %v1408
  %1410 = vmatmul.bf16.gmra.mxu0 %v502
  %v1411 = vpop.f32.mrf.mxu0
  %v1412 = vadd.f32 %v1363, %v1411
  %v1413 = vpop.f32.mrf.mxu0
  %v1414 = vadd.f32 %v1365, %v1413
  %1415 = vmatmul.bf16.gmra.mxu0 %v511
  %v1416 = vpop.f32.mrf.mxu0
  %v1417 = vadd.f32 %v1368, %v1416
  %v1418 = vpop.f32.mrf.mxu0
  %v1419 = vadd.f32 %v1370, %v1418
  %1420 = vmatmul.bf16.gmra.mxu0 %v520
  %v1421 = vpop.f32.mrf.mxu0
  %v1422 = vadd.f32 %v1373, %v1421
  %v1423 = vpop.f32.mrf.mxu0
  %v1424 = vadd.f32 %v1375, %v1423
  %1425 = vmatmul.bf16.gmra.mxu0 %v529
  %v1426 = vpop.f32.mrf.mxu0
  %v1427 = vadd.f32 %v1378, %v1426
  %v1428 = vpop.f32.mrf.mxu0
  %v1429 = vadd.f32 %v1380, %v1428
  %1430 = vmatmul.bf16.gmra.mxu0 %v538
  %v1431 = vpop.f32.mrf.mxu0
  %v1432 = vadd.f32 %v1383, %v1431
  %v1433 = vpop.f32.mrf.mxu0
  %v1434 = vadd.f32 %v1385, %v1433
  %1435 = vdwg.mxu0
  %1436 = vmatpush.bf16.msra.mxu0 %v971
  %1437 = vmatpush.bf16.msra.mxu0 %v970
  %1438 = vmatpush.bf16.msra.mxu0 %v969
  %1439 = vmatpush.bf16.msra.mxu0 %v968
  %1440 = vmatpush.bf16.msra.mxu0 %v967
  %1441 = vmatpush.bf16.msra.mxu0 %v966
  %1442 = vmatpush.bf16.msra.mxu0 %v965
  %1443 = vmatpush.bf16.msra.mxu0 %v964
  %1444 = vmatmul.bf16.gmra.mxu0 %v476
  %v1445 = vpop.f32.mrf.mxu0
  %v1446 = vadd.f32 %v1397, %v1445
  %v1447 = vpop.f32.mrf.mxu0
  %v1448 = vadd.f32 %v1399, %v1447
  %1449 = vmatmul.bf16.gmra.mxu0 %v485
  %v1450 = vpop.f32.mrf.mxu0
  %v1451 = vadd.f32 %v1402, %v1450
  %v1452 = vpop.f32.mrf.mxu0
  %v1453 = vadd.f32 %v1404, %v1452
  %1454 = vmatmul.bf16.gmra.mxu0 %v494
  %v1455 = vpop.f32.mrf.mxu0
  %v1456 = vadd.f32 %v1407, %v1455
  %v1457 = vpop.f32.mrf.mxu0
  %v1458 = vadd.f32 %v1409, %v1457
  %1459 = vmatmul.bf16.gmra.mxu0 %v503
  %v1460 = vpop.f32.mrf.mxu0
  %v1461 = vadd.f32 %v1412, %v1460
  %v1462 = vpop.f32.mrf.mxu0
  %v1463 = vadd.f32 %v1414, %v1462
  %1464 = vmatmul.bf16.gmra.mxu0 %v512
  %v1465 = vpop.f32.mrf.mxu0
  %v1466 = vadd.f32 %v1417, %v1465
  %v1467 = vpop.f32.mrf.mxu0
  %v1468 = vadd.f32 %v1419, %v1467
  %1469 = vmatmul.bf16.gmra.mxu0 %v521
  %v1470 = vpop.f32.mrf.mxu0
  %v1471 = vadd.f32 %v1422, %v1470
  %v1472 = vpop.f32.mrf.mxu0
  %v1473 = vadd.f32 %v1424, %v1472
  %1474 = vmatmul.bf16.gmra.mxu0 %v530
  %v1475 = vpop.f32.mrf.mxu0
  %v1476 = vadd.f32 %v1427, %v1475
  %v1477 = vpop.f32.mrf.mxu0
  %v1478 = vadd.f32 %v1429, %v1477
  %1479 = vmatmul.bf16.gmra.mxu0 %v539
  %v1480 = vpop.f32.mrf.mxu0
  %v1481 = vadd.f32 %v1432, %v1480
  %v1482 = vpop.f32.mrf.mxu0
  %v1483 = vadd.f32 %v1434, %v1482
  %1484 = vdwg.mxu0
  %v1485 = vld [vmem:[%s2] sm:$0x1]
  %v1487 = vperm.slane %v1485, 0
  %v1489 = vmul.f32 %v1446, %v1487
  %v1490 = vmul.f32 %v1448, %v1487
  %v1491 = vmul.f32 %v1451, %v1487
  %v1492 = vmul.f32 %v1453, %v1487
  %v1493 = vmul.f32 %v1456, %v1487
  %v1494 = vmul.f32 %v1458, %v1487
  %v1495 = vmul.f32 %v1461, %v1487
  %v1496 = vmul.f32 %v1463, %v1487
  %v1497 = vmul.f32 %v1466, %v1487
  %v1498 = vmul.f32 %v1468, %v1487
  %v1499 = vmul.f32 %v1471, %v1487
  %v1500 = vmul.f32 %v1473, %v1487
  %v1501 = vmul.f32 %v1476, %v1487
  %v1502 = vmul.f32 %v1478, %v1487
  %v1503 = vmul.f32 %v1481, %v1487
  %v1504 = vmul.f32 %v1483, %v1487
  %v1505 = vld [vmem:[%s3] sm:$0x1]
  %v1507 = vperm.slane %v1505, 0
  %v1509 = vadd.f32 %v1489, %v1507
  %v1510 = vadd.f32 %v1490, %v1507
  %v1511 = vadd.f32 %v1491, %v1507
  %v1512 = vadd.f32 %v1492, %v1507
  %v1513 = vadd.f32 %v1493, %v1507
  %v1514 = vadd.f32 %v1494, %v1507
  %v1515 = vadd.f32 %v1495, %v1507
  %v1516 = vadd.f32 %v1496, %v1507
  %v1517 = vadd.f32 %v1497, %v1507
  %v1518 = vadd.f32 %v1498, %v1507
  %v1519 = vadd.f32 %v1499, %v1507
  %v1520 = vadd.f32 %v1500, %v1507
  %v1521 = vadd.f32 %v1501, %v1507
  %v1522 = vadd.f32 %v1502, %v1507
  %v1523 = vadd.f32 %v1503, %v1507
  %v1524 = vadd.f32 %v1504, %v1507
  %v1525 = vld [vmem:[%s4] sm:$0xf]
  %v1526 = vld [vmem:[%s4 + $0x4] sm:$0xf]
  %v1527 = vld [vmem:[%s4 + $0x8] sm:$0xf]
  %v1528 = vld [vmem:[%s4 + $0xc] sm:$0xf]
  %v1529 = vld [vmem:[%s4 + $0x10] sm:$0xf]
  %v1530 = vld [vmem:[%s4 + $0x14] sm:$0xf]
  %v1531 = vld [vmem:[%s4 + $0x18] sm:$0xf]
  %v1532 = vld [vmem:[%s4 + $0x1c] sm:$0xf]
  %v1533 = vld [vmem:[%s4 + $0x20] sm:$0xf]
  %v1534 = vld [vmem:[%s4 + $0x24] sm:$0xf]
  %v1535 = vld [vmem:[%s4 + $0x28] sm:$0xf]
  %v1536 = vld [vmem:[%s4 + $0x2c] sm:$0xf]
  %v1537 = vld [vmem:[%s4 + $0x30] sm:$0xf]
  %v1538 = vld [vmem:[%s4 + $0x34] sm:$0xf]
  %v1539 = vld [vmem:[%s4 + $0x38] sm:$0xf]
  %v1540 = vld [vmem:[%s4 + $0x3c] sm:$0xf]
  %v1541 = vunpack.c.l.bf16 %v1525
  %v1542 = vunpack.c.l.bf16 %v1526
  %v1543 = vunpack.c.l.bf16 %v1527
  %v1544 = vunpack.c.l.bf16 %v1528
  %v1545 = vunpack.c.l.bf16 %v1529
  %v1546 = vunpack.c.l.bf16 %v1530
  %v1547 = vunpack.c.l.bf16 %v1531
  %v1548 = vunpack.c.l.bf16 %v1532
  %v1549 = vunpack.c.l.bf16 %v1533
  %v1550 = vunpack.c.l.bf16 %v1534
  %v1551 = vunpack.c.l.bf16 %v1535
  %v1552 = vunpack.c.l.bf16 %v1536
  %v1553 = vunpack.c.l.bf16 %v1537
  %v1554 = vunpack.c.l.bf16 %v1538
  %v1555 = vunpack.c.l.bf16 %v1539
  %v1556 = vunpack.c.l.bf16 %v1540
  %v1557 = vadd.f32 %v1509, %v1541
  %v1558 = vadd.f32 %v1510, %v1542
  %v1559 = vadd.f32 %v1511, %v1543
  %v1560 = vadd.f32 %v1512, %v1544
  %v1561 = vadd.f32 %v1513, %v1545
  %v1562 = vadd.f32 %v1514, %v1546
  %v1563 = vadd.f32 %v1515, %v1547
  %v1564 = vadd.f32 %v1516, %v1548
  %v1565 = vadd.f32 %v1517, %v1549
  %v1566 = vadd.f32 %v1518, %v1550
  %v1567 = vadd.f32 %v1519, %v1551
  %v1568 = vadd.f32 %v1520, %v1552
  %v1569 = vadd.f32 %v1521, %v1553
  %v1570 = vadd.f32 %v1522, %v1554
  %v1571 = vadd.f32 %v1523, %v1555
  %v1572 = vadd.f32 %v1524, %v1556
  %v1573 = vmax.f32 %v1557, 0.0
  %v1574 = vmax.f32 %v1558, 0.0
  %v1575 = vmax.f32 %v1559, 0.0
  %v1576 = vmax.f32 %v1560, 0.0
  %v1577 = vmax.f32 %v1561, 0.0
  %v1578 = vmax.f32 %v1562, 0.0
  %v1579 = vmax.f32 %v1563, 0.0
  %v1580 = vmax.f32 %v1564, 0.0
  %v1581 = vmax.f32 %v1565, 0.0
  %v1582 = vmax.f32 %v1566, 0.0
  %v1583 = vmax.f32 %v1567, 0.0
  %v1584 = vmax.f32 %v1568, 0.0
  %v1585 = vmax.f32 %v1569, 0.0
  %v1586 = vmax.f32 %v1570, 0.0
  %v1587 = vmax.f32 %v1571, 0.0
  %v1588 = vmax.f32 %v1572, 0.0
  %v1589 = vpack.c.bf16 %v1573, %v1573
  %v1590 = vpack.c.bf16 %v1574, %v1574
  %v1591 = vpack.c.bf16 %v1575, %v1575
  %v1592 = vpack.c.bf16 %v1576, %v1576
  %v1593 = vpack.c.bf16 %v1577, %v1577
  %v1594 = vpack.c.bf16 %v1578, %v1578
  %v1595 = vpack.c.bf16 %v1579, %v1579
  %v1596 = vpack.c.bf16 %v1580, %v1580
  %v1597 = vpack.c.bf16 %v1581, %v1581
  %v1598 = vpack.c.bf16 %v1582, %v1582
  %v1599 = vpack.c.bf16 %v1583, %v1583
  %v1600 = vpack.c.bf16 %v1584, %v1584
  %v1601 = vpack.c.bf16 %v1585, %v1585
  %v1602 = vpack.c.bf16 %v1586, %v1586
  %v1603 = vpack.c.bf16 %v1587, %v1587
  %v1604 = vpack.c.bf16 %v1588, %v1588
  %1605 = vst [vmem:[%s5] sm:$0xf] %v1589
  %1606 = vst [vmem:[%s5 + $0x4] sm:$0xf] %v1590
  %1607 = vst [vmem:[%s5 + $0x8] sm:$0xf] %v1591
  %1608 = vst [vmem:[%s5 + $0xc] sm:$0xf] %v1592
  %1609 = vst [vmem:[%s5 + $0x10] sm:$0xf] %v1593
  %1610 = vst [vmem:[%s5 + $0x14] sm:$0xf] %v1594
  %1611 = vst [vmem:[%s5 + $0x18] sm:$0xf] %v1595
  %1612 = vst [vmem:[%s5 + $0x1c] sm:$0xf] %v1596
  %1613 = vst [vmem:[%s5 + $0x20] sm:$0xf] %v1597
  %1614 = vst [vmem:[%s5 + $0x24] sm:$0xf] %v1598
  %1615 = vst [vmem:[%s5 + $0x28] sm:$0xf] %v1599
  %1616 = vst [vmem:[%s5 + $0x2c] sm:$0xf] %v1600
  %1617 = vst [vmem:[%s5 + $0x30] sm:$0xf] %v1601
  %1618 = vst [vmem:[%s5 + $0x34] sm:$0xf] %v1602
  %1619 = vst [vmem:[%s5 + $0x38] sm:$0xf] %v1603
  %1620 = vst [vmem:[%s5 + $0x3c] sm:$0xf] %v1604
  // Predicated region
  $region22: #{forward.18} parent=0 // pred_check
    _
  $region23: #{forward.18} parent=0 // pred_check_branch
    %1622 = sbr.rel (0) target = $region25
  $region24: #{forward.18} parent=0 // pred_region
    _
  $region25: #{forward.18} parent=0 // pred_fallthru
    _
  // Predicated region
  $region26: #{forward.18} parent=0 // pred_check
    _
  $region27: #{forward.18} parent=0 // pred_check_branch
    %1624 = sbr.rel (0) target = $region29
  $region28: #{forward.18} parent=0 // pred_region
    _
  $region29: #{forward.18} parent=0 // pred_fallthru
    _

// kernel: forward.20
$region0: #{forward.20}
  #allocation0 [shape = 'u32[]', space=smem, size = 0x4, offset = 0x4, fixed_abs, tag = 'smem constant byte address 0x4 - core index']
  #allocation1 [shape = 'u32[72,128]{1,0:T(1,128)}', space=vmem, size = 0x9000, scoped, tag = 'internal scratch']
  %s0 = inlined_call_operand.vmem [shape: bf16[32,128], index: 0, kind: input, shape index: {}]
  %s1 = inlined_call_operand.vmem [shape: bf16[128,128], index: 1, kind: input, shape index: {}]
  %s2 = inlined_call_operand.vmem [shape: f32[1,128], index: 2, kind: input, shape index: {}]
  %s3 = inlined_call_operand.vmem [shape: f32[1,128], index: 3, kind: input, shape index: {}]
  %s4 = inlined_call_operand.vmem [shape: bf16[32,128], index: 4, kind: output, shape index: {}]
  %s5 = sld [smem:[#allocation0]]
  $region26: #{forward.20} parent=0
    _
  %s7 = ssub.s32 1, %s5
  %s8 = scalar_select 0, %s7, %s5
  // Predicated region
  $region2: #{forward.20} parent=0 // pred_check
    _
  $region3: #{forward.20} parent=0 // pred_check_branch
    %10 = sbr.rel (0) target = $region5
  $region4: #{forward.20} parent=0 // pred_region
    _
  $region5: #{forward.20} parent=0 // pred_fallthru
    _
  // Predicated region
  $region6: #{forward.20} parent=0 // pred_check
    _
  $region7: #{forward.20} parent=0 // pred_check_branch
    %12 = sbr.rel (0) target = $region9
  $region8: #{forward.20} parent=0 // pred_region
    _
  $region9: #{forward.20} parent=0 // pred_fallthru
    _
  // Predicated region
  $region10: #{forward.20} parent=0 // pred_check
    _
  $region11: #{forward.20} parent=0 // pred_check_branch
    %14 = sbr.rel (0) target = $region13
  $region12: #{forward.20} parent=0 // pred_region
    _
  $region13: #{forward.20} parent=0 // pred_fallthru
    _
  // Predicated region
  $region14: #{forward.20} parent=0 // pred_check
    _
  $region15: #{forward.20} parent=0 // pred_check_branch
    %16 = sbr.rel (0) target = $region17
  $region16: #{forward.20} parent=0 // pred_region
    _
  $region17: #{forward.20} parent=0 // pred_fallthru
    _
  %v17 = vld [vmem:[%s0] sm:$0xf]
  %v18 = vld [vmem:[%s0 + $0x4] sm:$0xf]
  %v19 = vld [vmem:[%s0 + $0x8] sm:$0xf]
  %v20 = vld [vmem:[%s0 + $0xc] sm:$0xf]
  %v21 = vld [vmem:[%s1] sm:$0xf]
  %v22 = vld [vmem:[%s1 + $0x4] sm:$0xf]
  %v23 = vld [vmem:[%s1 + $0x8] sm:$0xf]
  %v24 = vld [vmem:[%s1 + $0xc] sm:$0xf]
  %v25 = vld [vmem:[%s1 + $0x10] sm:$0xf]
  %v26 = vld [vmem:[%s1 + $0x14] sm:$0xf]
  %v27 = vld [vmem:[%s1 + $0x18] sm:$0xf]
  %v28 = vld [vmem:[%s1 + $0x1c] sm:$0xf]
  %v29 = vld [vmem:[%s1 + $0x20] sm:$0xf]
  %v30 = vld [vmem:[%s1 + $0x24] sm:$0xf]
  %v31 = vld [vmem:[%s1 + $0x28] sm:$0xf]
  %v32 = vld [vmem:[%s1 + $0x2c] sm:$0xf]
  %v33 = vld [vmem:[%s1 + $0x30] sm:$0xf]
  %v34 = vld [vmem:[%s1 + $0x34] sm:$0xf]
  %v35 = vld [vmem:[%s1 + $0x38] sm:$0xf]
  %v36 = vld [vmem:[%s1 + $0x3c] sm:$0xf]
  %v41 = vunpack.c.l.b16 %v17
  %v42 = vunpack.c.l.b16 %v18
  %v43 = vunpack.c.l.b16 %v19
  %v44 = vunpack.c.l.b16 %v20
  %v45 = vpack.c.b16 %v42, %v41
  %v46 = vpack.c.b16 %v44, %v43
  %v65 = vunpack.c.l.b16 %v21
  %v66 = vunpack.c.l.b16 %v22
  %v67 = vunpack.c.l.b16 %v23
  %v68 = vunpack.c.l.b16 %v24
  %v69 = vunpack.c.l.b16 %v25
  %v70 = vunpack.c.l.b16 %v26
  %v71 = vunpack.c.l.b16 %v27
  %v72 = vunpack.c.l.b16 %v28
  %v73 = vunpack.c.l.b16 %v29
  %v74 = vunpack.c.l.b16 %v30
  %v75 = vunpack.c.l.b16 %v31
  %v76 = vunpack.c.l.b16 %v32
  %v77 = vunpack.c.l.b16 %v33
  %v78 = vunpack.c.l.b16 %v34
  %v79 = vunpack.c.l.b16 %v35
  %v80 = vunpack.c.l.b16 %v36
  %v81 = vpack.c.b16 %v66, %v65
  %v82 = vpack.c.b16 %v68, %v67
  %v83 = vpack.c.b16 %v70, %v69
  %v84 = vpack.c.b16 %v72, %v71
  %v85 = vpack.c.b16 %v74, %v73
  %v86 = vpack.c.b16 %v76, %v75
  %v87 = vpack.c.b16 %v78, %v77
  %v88 = vpack.c.b16 %v80, %v79
  %97 = vmatpush.bf16.msra.mxu0 %v88
  %98 = vmatpush.bf16.msra.mxu0 %v87
  %99 = vmatpush.bf16.msra.mxu0 %v86
  %100 = vmatpush.bf16.msra.mxu0 %v85
  %101 = vmatpush.bf16.msra.mxu0 %v84
  %102 = vmatpush.bf16.msra.mxu0 %v83
  %103 = vmatpush.bf16.msra.mxu0 %v82
  %104 = vmatpush.bf16.msra.mxu0 %v81
  %105 = vmatmul.bf16.gmra.mxu0 %v45
  %v106 = vpop.f32.mrf.mxu0
  %v107 = vadd.f32 0.0, %v106
  %v108 = vpop.f32.mrf.mxu0
  %v109 = vadd.f32 0.0, %v108
  %110 = vmatmul.bf16.gmra.mxu0 %v46
  %v111 = vpop.f32.mrf.mxu0
  %v112 = vadd.f32 0.0, %v111
  %v113 = vpop.f32.mrf.mxu0
  %v114 = vadd.f32 0.0, %v113
  %115 = vdwg.mxu0
  %v116 = vld [vmem:[%s2] sm:$0x1]
  %v118 = vperm.slane %v116, 0
  %v120 = vmul.f32 %v107, %v118
  %v121 = vmul.f32 %v109, %v118
  %v122 = vmul.f32 %v112, %v118
  %v123 = vmul.f32 %v114, %v118
  %v124 = vld [vmem:[%s3] sm:$0x1]
  %v126 = vperm.slane %v124, 0
  %v128 = vadd.f32 %v120, %v126
  %v129 = vadd.f32 %v121, %v126
  %v130 = vadd.f32 %v122, %v126
  %v131 = vadd.f32 %v123, %v126
  %v132 = vpack.c.bf16 %v128, %v128
  %v133 = vpack.c.bf16 %v129, %v129
  %v134 = vpack.c.bf16 %v130, %v130
  %v135 = vpack.c.bf16 %v131, %v131
  %136 = vst [vmem:[%s4] sm:$0xf] %v132
  %137 = vst [vmem:[%s4 + $0x4] sm:$0xf] %v133
  %138 = vst [vmem:[%s4 + $0x8] sm:$0xf] %v134
  %139 = vst [vmem:[%s4 + $0xc] sm:$0xf] %v135
  // Predicated region
  $region18: #{forward.20} parent=0 // pred_check
    _
  $region19: #{forward.20} parent=0 // pred_check_branch
    %141 = sbr.rel (0) target = $region21
  $region20: #{forward.20} parent=0 // pred_region
    _
  $region21: #{forward.20} parent=0 // pred_fallthru
    _
  // Predicated region
  $region22: #{forward.20} parent=0 // pred_check
    _
  $region23: #{forward.20} parent=0 // pred_check_branch
    %143 = sbr.rel (0) target = $region25
  $region24: #{forward.20} parent=0 // pred_region
    _
  $region25: #{forward.20} parent=0 // pred_fallthru
    _

// kernel: forward.19
$region0: #{forward.19}
  #allocation0 [shape = 'u32[]', space=smem, size = 0x4, offset = 0x4, fixed_abs, tag = 'smem constant byte address 0x4 - core index']
  #allocation1 [shape = 'u32[72,128]{1,0:T(1,128)}', space=vmem, size = 0x9000, scoped, tag = 'internal scratch']
  %s0 = inlined_call_operand.vmem [shape: bf16[32,1152], index: 0, kind: input, shape index: {}]
  %s1 = inlined_call_operand.vmem [shape: bf16[1152,128], index: 1, kind: input, shape index: {}]
  %s2 = inlined_call_operand.vmem [shape: f32[1,128], index: 2, kind: input, shape index: {}]
  %s3 = inlined_call_operand.vmem [shape: f32[1,128], index: 3, kind: input, shape index: {}]
  %s4 = inlined_call_operand.vmem [shape: bf16[32,128], index: 4, kind: output, shape index: {}]
  %s5 = sld [smem:[#allocation0]]
  $region26: #{forward.19} parent=0
    _
  %s7 = ssub.s32 1, %s5
  %s8 = scalar_select 0, %s7, %s5
  // Predicated region
  $region2: #{forward.19} parent=0 // pred_check
    _
  $region3: #{forward.19} parent=0 // pred_check_branch
    %10 = sbr.rel (0) target = $region5
  $region4: #{forward.19} parent=0 // pred_region
    _
  $region5: #{forward.19} parent=0 // pred_fallthru
    _
  // Predicated region
  $region6: #{forward.19} parent=0 // pred_check
    _
  $region7: #{forward.19} parent=0 // pred_check_branch
    %12 = sbr.rel (0) target = $region9
  $region8: #{forward.19} parent=0 // pred_region
    _
  $region9: #{forward.19} parent=0 // pred_fallthru
    _
  // Predicated region
  $region10: #{forward.19} parent=0 // pred_check
    _
  $region11: #{forward.19} parent=0 // pred_check_branch
    %14 = sbr.rel (0) target = $region13
  $region12: #{forward.19} parent=0 // pred_region
    _
  $region13: #{forward.19} parent=0 // pred_fallthru
    _
  // Predicated region
  $region14: #{forward.19} parent=0 // pred_check
    _
  $region15: #{forward.19} parent=0 // pred_check_branch
    %16 = sbr.rel (0) target = $region17
  $region16: #{forward.19} parent=0 // pred_region
    _
  $region17: #{forward.19} parent=0 // pred_fallthru
    _
  %v17 = vld [vmem:[%s0] sm:$0xff]
  %v18 = vld [vmem:[%s0 + $0x8] sm:$0xff]
  %v19 = vld [vmem:[%s0 + $0x10] sm:$0xff]
  %v20 = vld [vmem:[%s0 + $0x18] sm:$0xff]
  %v21 = vld [vmem:[%s0 + $0x20] sm:$0xf]
  %v22 = vld [vmem:[%s0 + $0x24] sm:$0xff]
  %v23 = vld [vmem:[%s0 + $0x2c] sm:$0xff]
  %v24 = vld [vmem:[%s0 + $0x34] sm:$0xff]
  %v25 = vld [vmem:[%s0 + $0x3c] sm:$0xff]
  %v26 = vld [vmem:[%s0 + $0x44] sm:$0xf]
  %v27 = vld [vmem:[%s0 + $0x48] sm:$0xff]
  %v28 = vld [vmem:[%s0 + $0x50] sm:$0xff]
  %v29 = vld [vmem:[%s0 + $0x58] sm:$0xff]
  %v30 = vld [vmem:[%s0 + $0x60] sm:$0xff]
  %v31 = vld [vmem:[%s0 + $0x68] sm:$0xf]
  %v32 = vld [vmem:[%s0 + $0x6c] sm:$0xff]
  %v33 = vld [vmem:[%s0 + $0x74] sm:$0xff]
  %v34 = vld [vmem:[%s0 + $0x7c] sm:$0xff]
  %v35 = vld [vmem:[%s0 + $0x84] sm:$0xff]
  %v36 = vld [vmem:[%s0 + $0x8c] sm:$0xf]
  %v37 = vld [vmem:[%s1] sm:$0xf]
  %v38 = vld [vmem:[%s1 + $0x4] sm:$0xf]
  %v39 = vld [vmem:[%s1 + $0x8] sm:$0xf]
  %v40 = vld [vmem:[%s1 + $0xc] sm:$0xf]
  %v41 = vld [vmem:[%s1 + $0x10] sm:$0xf]
  %v42 = vld [vmem:[%s1 + $0x14] sm:$0xf]
  %v43 = vld [vmem:[%s1 + $0x18] sm:$0xf]
  %v44 = vld [vmem:[%s1 + $0x1c] sm:$0xf]
  %v45 = vld [vmem:[%s1 + $0x20] sm:$0xf]
  %v46 = vld [vmem:[%s1 + $0x24] sm:$0xf]
  %v47 = vld [vmem:[%s1 + $0x28] sm:$0xf]
  %v48 = vld [vmem:[%s1 + $0x2c] sm:$0xf]
  %v49 = vld [vmem:[%s1 + $0x30] sm:$0xf]
  %v50 = vld [vmem:[%s1 + $0x34] sm:$0xf]
  %v51 = vld [vmem:[%s1 + $0x38] sm:$0xf]
  %v52 = vld [vmem:[%s1 + $0x3c] sm:$0xf]
  %v53 = vld [vmem:[%s1 + $0x40] sm:$0xf]
  %v54 = vld [vmem:[%s1 + $0x44] sm:$0xf]
  %v55 = vld [vmem:[%s1 + $0x48] sm:$0xf]
  %v56 = vld [vmem:[%s1 + $0x4c] sm:$0xf]
  %v57 = vld [vmem:[%s1 + $0x50] sm:$0xf]
  %v58 = vld [vmem:[%s1 + $0x54] sm:$0xf]
  %v59 = vld [vmem:[%s1 + $0x58] sm:$0xf]
  %v60 = vld [vmem:[%s1 + $0x5c] sm:$0xf]
  %v61 = vld [vmem:[%s1 + $0x60] sm:$0xf]
  %v62 = vld [vmem:[%s1 + $0x64] sm:$0xf]
  %v63 = vld [vmem:[%s1 + $0x68] sm:$0xf]
  %v64 = vld [vmem:[%s1 + $0x6c] sm:$0xf]
  %v65 = vld [vmem:[%s1 + $0x70] sm:$0xf]
  %v66 = vld [vmem:[%s1 + $0x74] sm:$0xf]
  %v67 = vld [vmem:[%s1 + $0x78] sm:$0xf]
  %v68 = vld [vmem:[%s1 + $0x7c] sm:$0xf]
  %v69 = vld [vmem:[%s1 + $0x80] sm:$0xf]
  %v70 = vld [vmem:[%s1 + $0x84] sm:$0xf]
  %v71 = vld [vmem:[%s1 + $0x88] sm:$0xf]
  %v72 = vld [vmem:[%s1 + $0x8c] sm:$0xf]
  %v73 = vld [vmem:[%s1 + $0x90] sm:$0xf]
  %v74 = vld [vmem:[%s1 + $0x94] sm:$0xf]
  %v75 = vld [vmem:[%s1 + $0x98] sm:$0xf]
  %v76 = vld [vmem:[%s1 + $0x9c] sm:$0xf]
  %v77 = vld [vmem:[%s1 + $0xa0] sm:$0xf]
  %v78 = vld [vmem:[%s1 + $0xa4] sm:$0xf]
  %v79 = vld [vmem:[%s1 + $0xa8] sm:$0xf]
  %v80 = vld [vmem:[%s1 + $0xac] sm:$0xf]
  %v81 = vld [vmem:[%s1 + $0xb0] sm:$0xf]
  %v82 = vld [vmem:[%s1 + $0xb4] sm:$0xf]
  %v83 = vld [vmem:[%s1 + $0xb8] sm:$0xf]
  %v84 = vld [vmem:[%s1 + $0xbc] sm:$0xf]
  %v85 = vld [vmem:[%s1 + $0xc0] sm:$0xf]
  %v86 = vld [vmem:[%s1 + $0xc4] sm:$0xf]
  %v87 = vld [vmem:[%s1 + $0xc8] sm:$0xf]
  %v88 = vld [vmem:[%s1 + $0xcc] sm:$0xf]
  %v89 = vld [vmem:[%s1 + $0xd0] sm:$0xf]
  %v90 = vld [vmem:[%s1 + $0xd4] sm:$0xf]
  %v91 = vld [vmem:[%s1 + $0xd8] sm:$0xf]
  %v92 = vld [vmem:[%s1 + $0xdc] sm:$0xf]
  %v93 = vld [vmem:[%s1 + $0xe0] sm:$0xf]
  %v94 = vld [vmem:[%s1 + $0xe4] sm:$0xf]
  %v95 = vld [vmem:[%s1 + $0xe8] sm:$0xf]
  %v96 = vld [vmem:[%s1 + $0xec] sm:$0xf]
  %v97 = vld [vmem:[%s1 + $0xf0] sm:$0xf]
  %v98 = vld [vmem:[%s1 + $0xf4] sm:$0xf]
  %v99 = vld [vmem:[%s1 + $0xf8] sm:$0xf]
  %v100 = vld [vmem:[%s1 + $0xfc] sm:$0xf]
  %v101 = vld [vmem:[%s1 + $0x100] sm:$0xf]
  %v102 = vld [vmem:[%s1 + $0x104] sm:$0xf]
  %v103 = vld [vmem:[%s1 + $0x108] sm:$0xf]
  %v104 = vld [vmem:[%s1 + $0x10c] sm:$0xf]
  %v105 = vld [vmem:[%s1 + $0x110] sm:$0xf]
  %v106 = vld [vmem:[%s1 + $0x114] sm:$0xf]
  %v107 = vld [vmem:[%s1 + $0x118] sm:$0xf]
  %v108 = vld [vmem:[%s1 + $0x11c] sm:$0xf]
  %v109 = vld [vmem:[%s1 + $0x120] sm:$0xf]
  %v110 = vld [vmem:[%s1 + $0x124] sm:$0xf]
  %v111 = vld [vmem:[%s1 + $0x128] sm:$0xf]
  %v112 = vld [vmem:[%s1 + $0x12c] sm:$0xf]
  %v113 = vld [vmem:[%s1 + $0x130] sm:$0xf]
  %v114 = vld [vmem:[%s1 + $0x134] sm:$0xf]
  %v115 = vld [vmem:[%s1 + $0x138] sm:$0xf]
  %v116 = vld [vmem:[%s1 + $0x13c] sm:$0xf]
  %v117 = vld [vmem:[%s1 + $0x140] sm:$0xf]
  %v118 = vld [vmem:[%s1 + $0x144] sm:$0xf]
  %v119 = vld [vmem:[%s1 + $0x148] sm:$0xf]
  %v120 = vld [vmem:[%s1 + $0x14c] sm:$0xf]
  %v121 = vld [vmem:[%s1 + $0x150] sm:$0xf]
  %v122 = vld [vmem:[%s1 + $0x154] sm:$0xf]
  %v123 = vld [vmem:[%s1 + $0x158] sm:$0xf]
  %v124 = vld [vmem:[%s1 + $0x15c] sm:$0xf]
  %v125 = vld [vmem:[%s1 + $0x160] sm:$0xf]
  %v126 = vld [vmem:[%s1 + $0x164] sm:$0xf]
  %v127 = vld [vmem:[%s1 + $0x168] sm:$0xf]
  %v128 = vld [vmem:[%s1 + $0x16c] sm:$0xf]
  %v129 = vld [vmem:[%s1 + $0x170] sm:$0xf]
  %v130 = vld [vmem:[%s1 + $0x174] sm:$0xf]
  %v131 = vld [vmem:[%s1 + $0x178] sm:$0xf]
  %v132 = vld [vmem:[%s1 + $0x17c] sm:$0xf]
  %v133 = vld [vmem:[%s1 + $0x180] sm:$0xf]
  %v134 = vld [vmem:[%s1 + $0x184] sm:$0xf]
  %v135 = vld [vmem:[%s1 + $0x188] sm:$0xf]
  %v136 = vld [vmem:[%s1 + $0x18c] sm:$0xf]
  %v137 = vld [vmem:[%s1 + $0x190] sm:$0xf]
  %v138 = vld [vmem:[%s1 + $0x194] sm:$0xf]
  %v139 = vld [vmem:[%s1 + $0x198] sm:$0xf]
  %v140 = vld [vmem:[%s1 + $0x19c] sm:$0xf]
  %v141 = vld [vmem:[%s1 + $0x1a0] sm:$0xf]
  %v142 = vld [vmem:[%s1 + $0x1a4] sm:$0xf]
  %v143 = vld [vmem:[%s1 + $0x1a8] sm:$0xf]
  %v144 = vld [vmem:[%s1 + $0x1ac] sm:$0xf]
  %v145 = vld [vmem:[%s1 + $0x1b0] sm:$0xf]
  %v146 = vld [vmem:[%s1 + $0x1b4] sm:$0xf]
  %v147 = vld [vmem:[%s1 + $0x1b8] sm:$0xf]
  %v148 = vld [vmem:[%s1 + $0x1bc] sm:$0xf]
  %v149 = vld [vmem:[%s1 + $0x1c0] sm:$0xf]
  %v150 = vld [vmem:[%s1 + $0x1c4] sm:$0xf]
  %v151 = vld [vmem:[%s1 + $0x1c8] sm:$0xf]
  %v152 = vld [vmem:[%s1 + $0x1cc] sm:$0xf]
  %v153 = vld [vmem:[%s1 + $0x1d0] sm:$0xf]
  %v154 = vld [vmem:[%s1 + $0x1d4] sm:$0xf]
  %v155 = vld [vmem:[%s1 + $0x1d8] sm:$0xf]
  %v156 = vld [vmem:[%s1 + $0x1dc] sm:$0xf]
  %v157 = vld [vmem:[%s1 + $0x1e0] sm:$0xf]
  %v158 = vld [vmem:[%s1 + $0x1e4] sm:$0xf]
  %v159 = vld [vmem:[%s1 + $0x1e8] sm:$0xf]
  %v160 = vld [vmem:[%s1 + $0x1ec] sm:$0xf]
  %v161 = vld [vmem:[%s1 + $0x1f0] sm:$0xf]
  %v162 = vld [vmem:[%s1 + $0x1f4] sm:$0xf]
  %v163 = vld [vmem:[%s1 + $0x1f8] sm:$0xf]
  %v164 = vld [vmem:[%s1 + $0x1fc] sm:$0xf]
  %v165 = vld [vmem:[%s1 + $0x200] sm:$0xf]
  %v166 = vld [vmem:[%s1 + $0x204] sm:$0xf]
  %v167 = vld [vmem:[%s1 + $0x208] sm:$0xf]
  %v168 = vld [vmem:[%s1 + $0x20c] sm:$0xf]
  %v169 = vld [vmem:[%s1 + $0x210] sm:$0xf]
  %v170 = vld [vmem:[%s1 + $0x214] sm:$0xf]
  %v171 = vld [vmem:[%s1 + $0x218] sm:$0xf]
  %v172 = vld [vmem:[%s1 + $0x21c] sm:$0xf]
  %v173 = vld [vmem:[%s1 + $0x220] sm:$0xf]
  %v174 = vld [vmem:[%s1 + $0x224] sm:$0xf]
  %v175 = vld [vmem:[%s1 + $0x228] sm:$0xf]
  %v176 = vld [vmem:[%s1 + $0x22c] sm:$0xf]
  %v177 = vld [vmem:[%s1 + $0x230] sm:$0xf]
  %v178 = vld [vmem:[%s1 + $0x234] sm:$0xf]
  %v179 = vld [vmem:[%s1 + $0x238] sm:$0xf]
  %v180 = vld [vmem:[%s1 + $0x23c] sm:$0xf]
  %v201 = vunpack.c.l.b16 %v17
  %v202 = vunpack.c.h.b16 %v17
  %v203 = vunpack.c.l.b16 %v18
  %v204 = vunpack.c.h.b16 %v18
  %v205 = vunpack.c.l.b16 %v19
  %v206 = vunpack.c.h.b16 %v19
  %v207 = vunpack.c.l.b16 %v20
  %v208 = vunpack.c.h.b16 %v20
  %v209 = vunpack.c.l.b16 %v21
  %v210 = vunpack.c.l.b16 %v22
  %v211 = vunpack.c.h.b16 %v22
  %v212 = vunpack.c.l.b16 %v23
  %v213 = vunpack.c.h.b16 %v23
  %v214 = vunpack.c.l.b16 %v24
  %v215 = vunpack.c.h.b16 %v24
  %v216 = vunpack.c.l.b16 %v25
  %v217 = vunpack.c.h.b16 %v25
  %v218 = vunpack.c.l.b16 %v26
  %v219 = vunpack.c.l.b16 %v27
  %v220 = vunpack.c.h.b16 %v27
  %v221 = vunpack.c.l.b16 %v28
  %v222 = vunpack.c.h.b16 %v28
  %v223 = vunpack.c.l.b16 %v29
  %v224 = vunpack.c.h.b16 %v29
  %v225 = vunpack.c.l.b16 %v30
  %v226 = vunpack.c.h.b16 %v30
  %v227 = vunpack.c.l.b16 %v31
  %v228 = vunpack.c.l.b16 %v32
  %v229 = vunpack.c.h.b16 %v32
  %v230 = vunpack.c.l.b16 %v33
  %v231 = vunpack.c.h.b16 %v33
  %v232 = vunpack.c.l.b16 %v34
  %v233 = vunpack.c.h.b16 %v34
  %v234 = vunpack.c.l.b16 %v35
  %v235 = vunpack.c.h.b16 %v35
  %v236 = vunpack.c.l.b16 %v36
  %v237 = vpack.c.b16 %v210, %v201
  %v238 = vpack.c.b16 %v211, %v202
  %v239 = vpack.c.b16 %v212, %v203
  %v240 = vpack.c.b16 %v213, %v204
  %v241 = vpack.c.b16 %v214, %v205
  %v242 = vpack.c.b16 %v215, %v206
  %v243 = vpack.c.b16 %v216, %v207
  %v244 = vpack.c.b16 %v217, %v208
  %v245 = vpack.c.b16 %v218, %v209
  %v246 = vpack.c.b16 %v228, %v219
  %v247 = vpack.c.b16 %v229, %v220
  %v248 = vpack.c.b16 %v230, %v221
  %v249 = vpack.c.b16 %v231, %v222
  %v250 = vpack.c.b16 %v232, %v223
  %v251 = vpack.c.b16 %v233, %v224
  %v252 = vpack.c.b16 %v234, %v225
  %v253 = vpack.c.b16 %v235, %v226
  %v254 = vpack.c.b16 %v236, %v227
  %v417 = vunpack.c.l.b16 %v37
  %v418 = vunpack.c.l.b16 %v38
  %v419 = vunpack.c.l.b16 %v39
  %v420 = vunpack.c.l.b16 %v40
  %v421 = vunpack.c.l.b16 %v41
  %v422 = vunpack.c.l.b16 %v42
  %v423 = vunpack.c.l.b16 %v43
  %v424 = vunpack.c.l.b16 %v44
  %v425 = vunpack.c.l.b16 %v45
  %v426 = vunpack.c.l.b16 %v46
  %v427 = vunpack.c.l.b16 %v47
  %v428 = vunpack.c.l.b16 %v48
  %v429 = vunpack.c.l.b16 %v49
  %v430 = vunpack.c.l.b16 %v50
  %v431 = vunpack.c.l.b16 %v51
  %v432 = vunpack.c.l.b16 %v52
  %v433 = vunpack.c.l.b16 %v53
  %v434 = vunpack.c.l.b16 %v54
  %v435 = vunpack.c.l.b16 %v55
  %v436 = vunpack.c.l.b16 %v56
  %v437 = vunpack.c.l.b16 %v57
  %v438 = vunpack.c.l.b16 %v58
  %v439 = vunpack.c.l.b16 %v59
  %v440 = vunpack.c.l.b16 %v60
  %v441 = vunpack.c.l.b16 %v61
  %v442 = vunpack.c.l.b16 %v62
  %v443 = vunpack.c.l.b16 %v63
  %v444 = vunpack.c.l.b16 %v64
  %v445 = vunpack.c.l.b16 %v65
  %v446 = vunpack.c.l.b16 %v66
  %v447 = vunpack.c.l.b16 %v67
  %v448 = vunpack.c.l.b16 %v68
  %v449 = vunpack.c.l.b16 %v69
  %v450 = vunpack.c.l.b16 %v70
  %v451 = vunpack.c.l.b16 %v71
  %v452 = vunpack.c.l.b16 %v72
  %v453 = vunpack.c.l.b16 %v73
  %v454 = vunpack.c.l.b16 %v74
  %v455 = vunpack.c.l.b16 %v75
  %v456 = vunpack.c.l.b16 %v76
  %v457 = vunpack.c.l.b16 %v77
  %v458 = vunpack.c.l.b16 %v78
  %v459 = vunpack.c.l.b16 %v79
  %v460 = vunpack.c.l.b16 %v80
  %v461 = vunpack.c.l.b16 %v81
  %v462 = vunpack.c.l.b16 %v82
  %v463 = vunpack.c.l.b16 %v83
  %v464 = vunpack.c.l.b16 %v84
  %v465 = vunpack.c.l.b16 %v85
  %v466 = vunpack.c.l.b16 %v86
  %v467 = vunpack.c.l.b16 %v87
  %v468 = vunpack.c.l.b16 %v88
  %v469 = vunpack.c.l.b16 %v89
  %v470 = vunpack.c.l.b16 %v90
  %v471 = vunpack.c.l.b16 %v91
  %v472 = vunpack.c.l.b16 %v92
  %v473 = vunpack.c.l.b16 %v93
  %v474 = vunpack.c.l.b16 %v94
  %v475 = vunpack.c.l.b16 %v95
  %v476 = vunpack.c.l.b16 %v96
  %v477 = vunpack.c.l.b16 %v97
  %v478 = vunpack.c.l.b16 %v98
  %v479 = vunpack.c.l.b16 %v99
  %v480 = vunpack.c.l.b16 %v100
  %v481 = vunpack.c.l.b16 %v101
  %v482 = vunpack.c.l.b16 %v102
  %v483 = vunpack.c.l.b16 %v103
  %v484 = vunpack.c.l.b16 %v104
  %v485 = vunpack.c.l.b16 %v105
  %v486 = vunpack.c.l.b16 %v106
  %v487 = vunpack.c.l.b16 %v107
  %v488 = vunpack.c.l.b16 %v108
  %v489 = vunpack.c.l.b16 %v109
  %v490 = vunpack.c.l.b16 %v110
  %v491 = vunpack.c.l.b16 %v111
  %v492 = vunpack.c.l.b16 %v112
  %v493 = vunpack.c.l.b16 %v113
  %v494 = vunpack.c.l.b16 %v114
  %v495 = vunpack.c.l.b16 %v115
  %v496 = vunpack.c.l.b16 %v116
  %v497 = vunpack.c.l.b16 %v117
  %v498 = vunpack.c.l.b16 %v118
  %v499 = vunpack.c.l.b16 %v119
  %v500 = vunpack.c.l.b16 %v120
  %v501 = vunpack.c.l.b16 %v121
  %v502 = vunpack.c.l.b16 %v122
  %v503 = vunpack.c.l.b16 %v123
  %v504 = vunpack.c.l.b16 %v124
  %v505 = vunpack.c.l.b16 %v125
  %v506 = vunpack.c.l.b16 %v126
  %v507 = vunpack.c.l.b16 %v127
  %v508 = vunpack.c.l.b16 %v128
  %v509 = vunpack.c.l.b16 %v129
  %v510 = vunpack.c.l.b16 %v130
  %v511 = vunpack.c.l.b16 %v131
  %v512 = vunpack.c.l.b16 %v132
  %v513 = vunpack.c.l.b16 %v133
  %v514 = vunpack.c.l.b16 %v134
  %v515 = vunpack.c.l.b16 %v135
  %v516 = vunpack.c.l.b16 %v136
  %v517 = vunpack.c.l.b16 %v137
  %v518 = vunpack.c.l.b16 %v138
  %v519 = vunpack.c.l.b16 %v139
  %v520 = vunpack.c.l.b16 %v140
  %v521 = vunpack.c.l.b16 %v141
  %v522 = vunpack.c.l.b16 %v142
  %v523 = vunpack.c.l.b16 %v143
  %v524 = vunpack.c.l.b16 %v144
  %v525 = vunpack.c.l.b16 %v145
  %v526 = vunpack.c.l.b16 %v146
  %v527 = vunpack.c.l.b16 %v147
  %v528 = vunpack.c.l.b16 %v148
  %v529 = vunpack.c.l.b16 %v149
  %v530 = vunpack.c.l.b16 %v150
  %v531 = vunpack.c.l.b16 %v151
  %v532 = vunpack.c.l.b16 %v152
  %v533 = vunpack.c.l.b16 %v153
  %v534 = vunpack.c.l.b16 %v154
  %v535 = vunpack.c.l.b16 %v155
  %v536 = vunpack.c.l.b16 %v156
  %v537 = vunpack.c.l.b16 %v157
  %v538 = vunpack.c.l.b16 %v158
  %v539 = vunpack.c.l.b16 %v159
  %v540 = vunpack.c.l.b16 %v160
  %v541 = vunpack.c.l.b16 %v161
  %v542 = vunpack.c.l.b16 %v162
  %v543 = vunpack.c.l.b16 %v163
  %v544 = vunpack.c.l.b16 %v164
  %v545 = vunpack.c.l.b16 %v165
  %v546 = vunpack.c.l.b16 %v166
  %v547 = vunpack.c.l.b16 %v167
  %v548 = vunpack.c.l.b16 %v168
  %v549 = vunpack.c.l.b16 %v169
  %v550 = vunpack.c.l.b16 %v170
  %v551 = vunpack.c.l.b16 %v171
  %v552 = vunpack.c.l.b16 %v172
  %v553 = vunpack.c.l.b16 %v173
  %v554 = vunpack.c.l.b16 %v174
  %v555 = vunpack.c.l.b16 %v175
  %v556 = vunpack.c.l.b16 %v176
  %v557 = vunpack.c.l.b16 %v177
  %v558 = vunpack.c.l.b16 %v178
  %v559 = vunpack.c.l.b16 %v179
  %v560 = vunpack.c.l.b16 %v180
  %v561 = vpack.c.b16 %v418, %v417
  %v562 = vpack.c.b16 %v420, %v419
  %v563 = vpack.c.b16 %v422, %v421
  %v564 = vpack.c.b16 %v424, %v423
  %v565 = vpack.c.b16 %v426, %v425
  %v566 = vpack.c.b16 %v428, %v427
  %v567 = vpack.c.b16 %v430, %v429
  %v568 = vpack.c.b16 %v432, %v431
  %v569 = vpack.c.b16 %v434, %v433
  %v570 = vpack.c.b16 %v436, %v435
  %v571 = vpack.c.b16 %v438, %v437
  %v572 = vpack.c.b16 %v440, %v439
  %v573 = vpack.c.b16 %v442, %v441
  %v574 = vpack.c.b16 %v444, %v443
  %v575 = vpack.c.b16 %v446, %v445
  %v576 = vpack.c.b16 %v448, %v447
  %v577 = vpack.c.b16 %v450, %v449
  %v578 = vpack.c.b16 %v452, %v451
  %v579 = vpack.c.b16 %v454, %v453
  %v580 = vpack.c.b16 %v456, %v455
  %v581 = vpack.c.b16 %v458, %v457
  %v582 = vpack.c.b16 %v460, %v459
  %v583 = vpack.c.b16 %v462, %v461
  %v584 = vpack.c.b16 %v464, %v463
  %v585 = vpack.c.b16 %v466, %v465
  %v586 = vpack.c.b16 %v468, %v467
  %v587 = vpack.c.b16 %v470, %v469
  %v588 = vpack.c.b16 %v472, %v471
  %v589 = vpack.c.b16 %v474, %v473
  %v590 = vpack.c.b16 %v476, %v475
  %v591 = vpack.c.b16 %v478, %v477
  %v592 = vpack.c.b16 %v480, %v479
  %v593 = vpack.c.b16 %v482, %v481
  %v594 = vpack.c.b16 %v484, %v483
  %v595 = vpack.c.b16 %v486, %v485
  %v596 = vpack.c.b16 %v488, %v487
  %v597 = vpack.c.b16 %v490, %v489
  %v598 = vpack.c.b16 %v492, %v491
  %v599 = vpack.c.b16 %v494, %v493
  %v600 = vpack.c.b16 %v496, %v495
  %v601 = vpack.c.b16 %v498, %v497
  %v602 = vpack.c.b16 %v500, %v499
  %v603 = vpack.c.b16 %v502, %v501
  %v604 = vpack.c.b16 %v504, %v503
  %v605 = vpack.c.b16 %v506, %v505
  %v606 = vpack.c.b16 %v508, %v507
  %v607 = vpack.c.b16 %v510, %v509
  %v608 = vpack.c.b16 %v512, %v511
  %v609 = vpack.c.b16 %v514, %v513
  %v610 = vpack.c.b16 %v516, %v515
  %v611 = vpack.c.b16 %v518, %v517
  %v612 = vpack.c.b16 %v520, %v519
  %v613 = vpack.c.b16 %v522, %v521
  %v614 = vpack.c.b16 %v524, %v523
  %v615 = vpack.c.b16 %v526, %v525
  %v616 = vpack.c.b16 %v528, %v527
  %v617 = vpack.c.b16 %v530, %v529
  %v618 = vpack.c.b16 %v532, %v531
  %v619 = vpack.c.b16 %v534, %v533
  %v620 = vpack.c.b16 %v536, %v535
  %v621 = vpack.c.b16 %v538, %v537
  %v622 = vpack.c.b16 %v540, %v539
  %v623 = vpack.c.b16 %v542, %v541
  %v624 = vpack.c.b16 %v544, %v543
  %v625 = vpack.c.b16 %v546, %v545
  %v626 = vpack.c.b16 %v548, %v547
  %v627 = vpack.c.b16 %v550, %v549
  %v628 = vpack.c.b16 %v552, %v551
  %v629 = vpack.c.b16 %v554, %v553
  %v630 = vpack.c.b16 %v556, %v555
  %v631 = vpack.c.b16 %v558, %v557
  %v632 = vpack.c.b16 %v560, %v559
  %705 = vmatpush.bf16.msra.mxu0 %v568
  %706 = vmatpush.bf16.msra.mxu0 %v567
  %707 = vmatpush.bf16.msra.mxu0 %v566
  %708 = vmatpush.bf16.msra.mxu0 %v565
  %709 = vmatpush.bf16.msra.mxu0 %v564
  %710 = vmatpush.bf16.msra.mxu0 %v563
  %711 = vmatpush.bf16.msra.mxu0 %v562
  %712 = vmatpush.bf16.msra.mxu0 %v561
  %713 = vmatmul.bf16.gmra.mxu0 %v237
  %v714 = vpop.f32.mrf.mxu0
  %v715 = vadd.f32 0.0, %v714
  %v716 = vpop.f32.mrf.mxu0
  %v717 = vadd.f32 0.0, %v716
  %718 = vmatmul.bf16.gmra.mxu0 %v246
  %v719 = vpop.f32.mrf.mxu0
  %v720 = vadd.f32 0.0, %v719
  %v721 = vpop.f32.mrf.mxu0
  %v722 = vadd.f32 0.0, %v721
  %723 = vdwg.mxu0
  %724 = vmatpush.bf16.msra.mxu0 %v576
  %725 = vmatpush.bf16.msra.mxu0 %v575
  %726 = vmatpush.bf16.msra.mxu0 %v574
  %727 = vmatpush.bf16.msra.mxu0 %v573
  %728 = vmatpush.bf16.msra.mxu0 %v572
  %729 = vmatpush.bf16.msra.mxu0 %v571
  %730 = vmatpush.bf16.msra.mxu0 %v570
  %731 = vmatpush.bf16.msra.mxu0 %v569
  %732 = vmatmul.bf16.gmra.mxu0 %v238
  %v733 = vpop.f32.mrf.mxu0
  %v734 = vadd.f32 %v715, %v733
  %v735 = vpop.f32.mrf.mxu0
  %v736 = vadd.f32 %v717, %v735
  %737 = vmatmul.bf16.gmra.mxu0 %v247
  %v738 = vpop.f32.mrf.mxu0
  %v739 = vadd.f32 %v720, %v738
  %v740 = vpop.f32.mrf.mxu0
  %v741 = vadd.f32 %v722, %v740
  %742 = vdwg.mxu0
  %743 = vmatpush.bf16.msra.mxu0 %v584
  %744 = vmatpush.bf16.msra.mxu0 %v583
  %745 = vmatpush.bf16.msra.mxu0 %v582
  %746 = vmatpush.bf16.msra.mxu0 %v581
  %747 = vmatpush.bf16.msra.mxu0 %v580
  %748 = vmatpush.bf16.msra.mxu0 %v579
  %749 = vmatpush.bf16.msra.mxu0 %v578
  %750 = vmatpush.bf16.msra.mxu0 %v577
  %751 = vmatmul.bf16.gmra.mxu0 %v239
  %v752 = vpop.f32.mrf.mxu0
  %v753 = vadd.f32 %v734, %v752
  %v754 = vpop.f32.mrf.mxu0
  %v755 = vadd.f32 %v736, %v754
  %756 = vmatmul.bf16.gmra.mxu0 %v248
  %v757 = vpop.f32.mrf.mxu0
  %v758 = vadd.f32 %v739, %v757
  %v759 = vpop.f32.mrf.mxu0
  %v760 = vadd.f32 %v741, %v759
  %761 = vdwg.mxu0
  %762 = vmatpush.bf16.msra.mxu0 %v592
  %763 = vmatpush.bf16.msra.mxu0 %v591
  %764 = vmatpush.bf16.msra.mxu0 %v590
  %765 = vmatpush.bf16.msra.mxu0 %v589
  %766 = vmatpush.bf16.msra.mxu0 %v588
  %767 = vmatpush.bf16.msra.mxu0 %v587
  %768 = vmatpush.bf16.msra.mxu0 %v586
  %769 = vmatpush.bf16.msra.mxu0 %v585
  %770 = vmatmul.bf16.gmra.mxu0 %v240
  %v771 = vpop.f32.mrf.mxu0
  %v772 = vadd.f32 %v753, %v771
  %v773 = vpop.f32.mrf.mxu0
  %v774 = vadd.f32 %v755, %v773
  %775 = vmatmul.bf16.gmra.mxu0 %v249
  %v776 = vpop.f32.mrf.mxu0
  %v777 = vadd.f32 %v758, %v776
  %v778 = vpop.f32.mrf.mxu0
  %v779 = vadd.f32 %v760, %v778
  %780 = vdwg.mxu0
  %781 = vmatpush.bf16.msra.mxu0 %v600
  %782 = vmatpush.bf16.msra.mxu0 %v599
  %783 = vmatpush.bf16.msra.mxu0 %v598
  %784 = vmatpush.bf16.msra.mxu0 %v597
  %785 = vmatpush.bf16.msra.mxu0 %v596
  %786 = vmatpush.bf16.msra.mxu0 %v595
  %787 = vmatpush.bf16.msra.mxu0 %v594
  %788 = vmatpush.bf16.msra.mxu0 %v593
  %789 = vmatmul.bf16.gmra.mxu0 %v241
  %v790 = vpop.f32.mrf.mxu0
  %v791 = vadd.f32 %v772, %v790
  %v792 = vpop.f32.mrf.mxu0
  %v793 = vadd.f32 %v774, %v792
  %794 = vmatmul.bf16.gmra.mxu0 %v250
  %v795 = vpop.f32.mrf.mxu0
  %v796 = vadd.f32 %v777, %v795
  %v797 = vpop.f32.mrf.mxu0
  %v798 = vadd.f32 %v779, %v797
  %799 = vdwg.mxu0
  %800 = vmatpush.bf16.msra.mxu0 %v608
  %801 = vmatpush.bf16.msra.mxu0 %v607
  %802 = vmatpush.bf16.msra.mxu0 %v606
  %803 = vmatpush.bf16.msra.mxu0 %v605
  %804 = vmatpush.bf16.msra.mxu0 %v604
  %805 = vmatpush.bf16.msra.mxu0 %v603
  %806 = vmatpush.bf16.msra.mxu0 %v602
  %807 = vmatpush.bf16.msra.mxu0 %v601
  %808 = vmatmul.bf16.gmra.mxu0 %v242
  %v809 = vpop.f32.mrf.mxu0
  %v810 = vadd.f32 %v791, %v809
  %v811 = vpop.f32.mrf.mxu0
  %v812 = vadd.f32 %v793, %v811
  %813 = vmatmul.bf16.gmra.mxu0 %v251
  %v814 = vpop.f32.mrf.mxu0
  %v815 = vadd.f32 %v796, %v814
  %v816 = vpop.f32.mrf.mxu0
  %v817 = vadd.f32 %v798, %v816
  %818 = vdwg.mxu0
  %819 = vmatpush.bf16.msra.mxu0 %v616
  %820 = vmatpush.bf16.msra.mxu0 %v615
  %821 = vmatpush.bf16.msra.mxu0 %v614
  %822 = vmatpush.bf16.msra.mxu0 %v613
  %823 = vmatpush.bf16.msra.mxu0 %v612
  %824 = vmatpush.bf16.msra.mxu0 %v611
  %825 = vmatpush.bf16.msra.mxu0 %v610
  %826 = vmatpush.bf16.msra.mxu0 %v609
  %827 = vmatmul.bf16.gmra.mxu0 %v243
  %v828 = vpop.f32.mrf.mxu0
  %v829 = vadd.f32 %v810, %v828
  %v830 = vpop.f32.mrf.mxu0
  %v831 = vadd.f32 %v812, %v830
  %832 = vmatmul.bf16.gmra.mxu0 %v252
  %v833 = vpop.f32.mrf.mxu0
  %v834 = vadd.f32 %v815, %v833
  %v835 = vpop.f32.mrf.mxu0
  %v836 = vadd.f32 %v817, %v835
  %837 = vdwg.mxu0
  %838 = vmatpush.bf16.msra.mxu0 %v624
  %839 = vmatpush.bf16.msra.mxu0 %v623
  %840 = vmatpush.bf16.msra.mxu0 %v622
  %841 = vmatpush.bf16.msra.mxu0 %v621
  %842 = vmatpush.bf16.msra.mxu0 %v620
  %843 = vmatpush.bf16.msra.mxu0 %v619
  %844 = vmatpush.bf16.msra.mxu0 %v618
  %845 = vmatpush.bf16.msra.mxu0 %v617
  %846 = vmatmul.bf16.gmra.mxu0 %v244
  %v847 = vpop.f32.mrf.mxu0
  %v848 = vadd.f32 %v829, %v847
  %v849 = vpop.f32.mrf.mxu0
  %v850 = vadd.f32 %v831, %v849
  %851 = vmatmul.bf16.gmra.mxu0 %v253
  %v852 = vpop.f32.mrf.mxu0
  %v853 = vadd.f32 %v834, %v852
  %v854 = vpop.f32.mrf.mxu0
  %v855 = vadd.f32 %v836, %v854
  %856 = vdwg.mxu0
  %857 = vmatpush.bf16.msra.mxu0 %v632
  %858 = vmatpush.bf16.msra.mxu0 %v631
  %859 = vmatpush.bf16.msra.mxu0 %v630
  %860 = vmatpush.bf16.msra.mxu0 %v629
  %861 = vmatpush.bf16.msra.mxu0 %v628
  %862 = vmatpush.bf16.msra.mxu0 %v627
  %863 = vmatpush.bf16.msra.mxu0 %v626
  %864 = vmatpush.bf16.msra.mxu0 %v625
  %865 = vmatmul.bf16.gmra.mxu0 %v245
  %v866 = vpop.f32.mrf.mxu0
  %v867 = vadd.f32 %v848, %v866
  %v868 = vpop.f32.mrf.mxu0
  %v869 = vadd.f32 %v850, %v868
  %870 = vmatmul.bf16.gmra.mxu0 %v254
  %v871 = vpop.f32.mrf.mxu0
  %v872 = vadd.f32 %v853, %v871
  %v873 = vpop.f32.mrf.mxu0
  %v874 = vadd.f32 %v855, %v873
  %875 = vdwg.mxu0
  %v876 = vld [vmem:[%s2] sm:$0x1]
  %v878 = vperm.slane %v876, 0
  %v880 = vmul.f32 %v867, %v878
  %v881 = vmul.f32 %v869, %v878
  %v882 = vmul.f32 %v872, %v878
  %v883 = vmul.f32 %v874, %v878
  %v884 = vld [vmem:[%s3] sm:$0x1]
  %v886 = vperm.slane %v884, 0
  %v888 = vadd.f32 %v880, %v886
  %v889 = vadd.f32 %v881, %v886
  %v890 = vadd.f32 %v882, %v886
  %v891 = vadd.f32 %v883, %v886
  %v892 = vmax.f32 %v888, 0.0
  %v893 = vmax.f32 %v889, 0.0
  %v894 = vmax.f32 %v890, 0.0
  %v895 = vmax.f32 %v891, 0.0
  %v896 = vpack.c.bf16 %v892, %v892
  %v897 = vpack.c.bf16 %v893, %v893
  %v898 = vpack.c.bf16 %v894, %v894
  %v899 = vpack.c.bf16 %v895, %v895
  %900 = vst [vmem:[%s4] sm:$0xf] %v896
  %901 = vst [vmem:[%s4 + $0x4] sm:$0xf] %v897
  %902 = vst [vmem:[%s4 + $0x8] sm:$0xf] %v898
  %903 = vst [vmem:[%s4 + $0xc] sm:$0xf] %v899
  // Predicated region
  $region18: #{forward.19} parent=0 // pred_check
    _
  $region19: #{forward.19} parent=0 // pred_check_branch
    %905 = sbr.rel (0) target = $region21
  $region20: #{forward.19} parent=0 // pred_region
    _
  $region21: #{forward.19} parent=0 // pred_fallthru
    _
  // Predicated region
  $region22: #{forward.19} parent=0 // pred_check
    _
  $region23: #{forward.19} parent=0 // pred_check_branch
    %907 = sbr.rel (0) target = $region25
  $region24: #{forward.19} parent=0 // pred_region
    _
  $region25: #{forward.19} parent=0 // pred_fallthru
    _

// kernel: forward.21
$region0: #{forward.21}
  #allocation0 [shape = 'u32[]', space=smem, size = 0x4, offset = 0x4, fixed_abs, tag = 'smem constant byte address 0x4 - core index']
  #allocation1 [shape = 'u32[72,128]{1,0:T(1,128)}', space=vmem, size = 0x9000, scoped, tag = 'internal scratch']
  %s0 = inlined_call_operand.vmem [shape: bf16[32,1152], index: 0, kind: input, shape index: {}]
  %s1 = inlined_call_operand.vmem [shape: bf16[1152,128], index: 1, kind: input, shape index: {}]
  %s2 = inlined_call_operand.vmem [shape: f32[1,128], index: 2, kind: input, shape index: {}]
  %s3 = inlined_call_operand.vmem [shape: f32[1,128], index: 3, kind: input, shape index: {}]
  %s4 = inlined_call_operand.vmem [shape: bf16[32,128], index: 4, kind: input, shape index: {}]
  %s5 = inlined_call_operand.vmem [shape: bf16[32,128], index: 5, kind: output, shape index: {}]
  %s6 = sld [smem:[#allocation0]]
  $region30: #{forward.21} parent=0
    _
  %s8 = ssub.s32 1, %s6
  %s9 = scalar_select 0, %s8, %s6
  // Predicated region
  $region2: #{forward.21} parent=0 // pred_check
    _
  $region3: #{forward.21} parent=0 // pred_check_branch
    %11 = sbr.rel (0) target = $region5
  $region4: #{forward.21} parent=0 // pred_region
    _
  $region5: #{forward.21} parent=0 // pred_fallthru
    _
  // Predicated region
  $region6: #{forward.21} parent=0 // pred_check
    _
  $region7: #{forward.21} parent=0 // pred_check_branch
    %13 = sbr.rel (0) target = $region9
  $region8: #{forward.21} parent=0 // pred_region
    _
  $region9: #{forward.21} parent=0 // pred_fallthru
    _
  // Predicated region
  $region10: #{forward.21} parent=0 // pred_check
    _
  $region11: #{forward.21} parent=0 // pred_check_branch
    %15 = sbr.rel (0) target = $region13
  $region12: #{forward.21} parent=0 // pred_region
    _
  $region13: #{forward.21} parent=0 // pred_fallthru
    _
  // Predicated region
  $region14: #{forward.21} parent=0 // pred_check
    _
  $region15: #{forward.21} parent=0 // pred_check_branch
    %17 = sbr.rel (0) target = $region17
  $region16: #{forward.21} parent=0 // pred_region
    _
  $region17: #{forward.21} parent=0 // pred_fallthru
    _
  // Predicated region
  $region18: #{forward.21} parent=0 // pred_check
    _
  $region19: #{forward.21} parent=0 // pred_check_branch
    %19 = sbr.rel (0) target = $region21
  $region20: #{forward.21} parent=0 // pred_region
    _
  $region21: #{forward.21} parent=0 // pred_fallthru
    _
  %v20 = vld [vmem:[%s0] sm:$0xff]
  %v21 = vld [vmem:[%s0 + $0x8] sm:$0xff]
  %v22 = vld [vmem:[%s0 + $0x10] sm:$0xff]
  %v23 = vld [vmem:[%s0 + $0x18] sm:$0xff]
  %v24 = vld [vmem:[%s0 + $0x20] sm:$0xf]
  %v25 = vld [vmem:[%s0 + $0x24] sm:$0xff]
  %v26 = vld [vmem:[%s0 + $0x2c] sm:$0xff]
  %v27 = vld [vmem:[%s0 + $0x34] sm:$0xff]
  %v28 = vld [vmem:[%s0 + $0x3c] sm:$0xff]
  %v29 = vld [vmem:[%s0 + $0x44] sm:$0xf]
  %v30 = vld [vmem:[%s0 + $0x48] sm:$0xff]
  %v31 = vld [vmem:[%s0 + $0x50] sm:$0xff]
  %v32 = vld [vmem:[%s0 + $0x58] sm:$0xff]
  %v33 = vld [vmem:[%s0 + $0x60] sm:$0xff]
  %v34 = vld [vmem:[%s0 + $0x68] sm:$0xf]
  %v35 = vld [vmem:[%s0 + $0x6c] sm:$0xff]
  %v36 = vld [vmem:[%s0 + $0x74] sm:$0xff]
  %v37 = vld [vmem:[%s0 + $0x7c] sm:$0xff]
  %v38 = vld [vmem:[%s0 + $0x84] sm:$0xff]
  %v39 = vld [vmem:[%s0 + $0x8c] sm:$0xf]
  %v40 = vld [vmem:[%s1] sm:$0xf]
  %v41 = vld [vmem:[%s1 + $0x4] sm:$0xf]
  %v42 = vld [vmem:[%s1 + $0x8] sm:$0xf]
  %v43 = vld [vmem:[%s1 + $0xc] sm:$0xf]
  %v44 = vld [vmem:[%s1 + $0x10] sm:$0xf]
  %v45 = vld [vmem:[%s1 + $0x14] sm:$0xf]
  %v46 = vld [vmem:[%s1 + $0x18] sm:$0xf]
  %v47 = vld [vmem:[%s1 + $0x1c] sm:$0xf]
  %v48 = vld [vmem:[%s1 + $0x20] sm:$0xf]
  %v49 = vld [vmem:[%s1 + $0x24] sm:$0xf]
  %v50 = vld [vmem:[%s1 + $0x28] sm:$0xf]
  %v51 = vld [vmem:[%s1 + $0x2c] sm:$0xf]
  %v52 = vld [vmem:[%s1 + $0x30] sm:$0xf]
  %v53 = vld [vmem:[%s1 + $0x34] sm:$0xf]
  %v54 = vld [vmem:[%s1 + $0x38] sm:$0xf]
  %v55 = vld [vmem:[%s1 + $0x3c] sm:$0xf]
  %v56 = vld [vmem:[%s1 + $0x40] sm:$0xf]
  %v57 = vld [vmem:[%s1 + $0x44] sm:$0xf]
  %v58 = vld [vmem:[%s1 + $0x48] sm:$0xf]
  %v59 = vld [vmem:[%s1 + $0x4c] sm:$0xf]
  %v60 = vld [vmem:[%s1 + $0x50] sm:$0xf]
  %v61 = vld [vmem:[%s1 + $0x54] sm:$0xf]
  %v62 = vld [vmem:[%s1 + $0x58] sm:$0xf]
  %v63 = vld [vmem:[%s1 + $0x5c] sm:$0xf]
  %v64 = vld [vmem:[%s1 + $0x60] sm:$0xf]
  %v65 = vld [vmem:[%s1 + $0x64] sm:$0xf]
  %v66 = vld [vmem:[%s1 + $0x68] sm:$0xf]
  %v67 = vld [vmem:[%s1 + $0x6c] sm:$0xf]
  %v68 = vld [vmem:[%s1 + $0x70] sm:$0xf]
  %v69 = vld [vmem:[%s1 + $0x74] sm:$0xf]
  %v70 = vld [vmem:[%s1 + $0x78] sm:$0xf]
  %v71 = vld [vmem:[%s1 + $0x7c] sm:$0xf]
  %v72 = vld [vmem:[%s1 + $0x80] sm:$0xf]
  %v73 = vld [vmem:[%s1 + $0x84] sm:$0xf]
  %v74 = vld [vmem:[%s1 + $0x88] sm:$0xf]
  %v75 = vld [vmem:[%s1 + $0x8c] sm:$0xf]
  %v76 = vld [vmem:[%s1 + $0x90] sm:$0xf]
  %v77 = vld [vmem:[%s1 + $0x94] sm:$0xf]
  %v78 = vld [vmem:[%s1 + $0x98] sm:$0xf]
  %v79 = vld [vmem:[%s1 + $0x9c] sm:$0xf]
  %v80 = vld [vmem:[%s1 + $0xa0] sm:$0xf]
  %v81 = vld [vmem:[%s1 + $0xa4] sm:$0xf]
  %v82 = vld [vmem:[%s1 + $0xa8] sm:$0xf]
  %v83 = vld [vmem:[%s1 + $0xac] sm:$0xf]
  %v84 = vld [vmem:[%s1 + $0xb0] sm:$0xf]
  %v85 = vld [vmem:[%s1 + $0xb4] sm:$0xf]
  %v86 = vld [vmem:[%s1 + $0xb8] sm:$0xf]
  %v87 = vld [vmem:[%s1 + $0xbc] sm:$0xf]
  %v88 = vld [vmem:[%s1 + $0xc0] sm:$0xf]
  %v89 = vld [vmem:[%s1 + $0xc4] sm:$0xf]
  %v90 = vld [vmem:[%s1 + $0xc8] sm:$0xf]
  %v91 = vld [vmem:[%s1 + $0xcc] sm:$0xf]
  %v92 = vld [vmem:[%s1 + $0xd0] sm:$0xf]
  %v93 = vld [vmem:[%s1 + $0xd4] sm:$0xf]
  %v94 = vld [vmem:[%s1 + $0xd8] sm:$0xf]
  %v95 = vld [vmem:[%s1 + $0xdc] sm:$0xf]
  %v96 = vld [vmem:[%s1 + $0xe0] sm:$0xf]
  %v97 = vld [vmem:[%s1 + $0xe4] sm:$0xf]
  %v98 = vld [vmem:[%s1 + $0xe8] sm:$0xf]
  %v99 = vld [vmem:[%s1 + $0xec] sm:$0xf]
  %v100 = vld [vmem:[%s1 + $0xf0] sm:$0xf]
  %v101 = vld [vmem:[%s1 + $0xf4] sm:$0xf]
  %v102 = vld [vmem:[%s1 + $0xf8] sm:$0xf]
  %v103 = vld [vmem:[%s1 + $0xfc] sm:$0xf]
  %v104 = vld [vmem:[%s1 + $0x100] sm:$0xf]
  %v105 = vld [vmem:[%s1 + $0x104] sm:$0xf]
  %v106 = vld [vmem:[%s1 + $0x108] sm:$0xf]
  %v107 = vld [vmem:[%s1 + $0x10c] sm:$0xf]
  %v108 = vld [vmem:[%s1 + $0x110] sm:$0xf]
  %v109 = vld [vmem:[%s1 + $0x114] sm:$0xf]
  %v110 = vld [vmem:[%s1 + $0x118] sm:$0xf]
  %v111 = vld [vmem:[%s1 + $0x11c] sm:$0xf]
  %v112 = vld [vmem:[%s1 + $0x120] sm:$0xf]
  %v113 = vld [vmem:[%s1 + $0x124] sm:$0xf]
  %v114 = vld [vmem:[%s1 + $0x128] sm:$0xf]
  %v115 = vld [vmem:[%s1 + $0x12c] sm:$0xf]
  %v116 = vld [vmem:[%s1 + $0x130] sm:$0xf]
  %v117 = vld [vmem:[%s1 + $0x134] sm:$0xf]
  %v118 = vld [vmem:[%s1 + $0x138] sm:$0xf]
  %v119 = vld [vmem:[%s1 + $0x13c] sm:$0xf]
  %v120 = vld [vmem:[%s1 + $0x140] sm:$0xf]
  %v121 = vld [vmem:[%s1 + $0x144] sm:$0xf]
  %v122 = vld [vmem:[%s1 + $0x148] sm:$0xf]
  %v123 = vld [vmem:[%s1 + $0x14c] sm:$0xf]
  %v124 = vld [vmem:[%s1 + $0x150] sm:$0xf]
  %v125 = vld [vmem:[%s1 + $0x154] sm:$0xf]
  %v126 = vld [vmem:[%s1 + $0x158] sm:$0xf]
  %v127 = vld [vmem:[%s1 + $0x15c] sm:$0xf]
  %v128 = vld [vmem:[%s1 + $0x160] sm:$0xf]
  %v129 = vld [vmem:[%s1 + $0x164] sm:$0xf]
  %v130 = vld [vmem:[%s1 + $0x168] sm:$0xf]
  %v131 = vld [vmem:[%s1 + $0x16c] sm:$0xf]
  %v132 = vld [vmem:[%s1 + $0x170] sm:$0xf]
  %v133 = vld [vmem:[%s1 + $0x174] sm:$0xf]
  %v134 = vld [vmem:[%s1 + $0x178] sm:$0xf]
  %v135 = vld [vmem:[%s1 + $0x17c] sm:$0xf]
  %v136 = vld [vmem:[%s1 + $0x180] sm:$0xf]
  %v137 = vld [vmem:[%s1 + $0x184] sm:$0xf]
  %v138 = vld [vmem:[%s1 + $0x188] sm:$0xf]
  %v139 = vld [vmem:[%s1 + $0x18c] sm:$0xf]
  %v140 = vld [vmem:[%s1 + $0x190] sm:$0xf]
  %v141 = vld [vmem:[%s1 + $0x194] sm:$0xf]
  %v142 = vld [vmem:[%s1 + $0x198] sm:$0xf]
  %v143 = vld [vmem:[%s1 + $0x19c] sm:$0xf]
  %v144 = vld [vmem:[%s1 + $0x1a0] sm:$0xf]
  %v145 = vld [vmem:[%s1 + $0x1a4] sm:$0xf]
  %v146 = vld [vmem:[%s1 + $0x1a8] sm:$0xf]
  %v147 = vld [vmem:[%s1 + $0x1ac] sm:$0xf]
  %v148 = vld [vmem:[%s1 + $0x1b0] sm:$0xf]
  %v149 = vld [vmem:[%s1 + $0x1b4] sm:$0xf]
  %v150 = vld [vmem:[%s1 + $0x1b8] sm:$0xf]
  %v151 = vld [vmem:[%s1 + $0x1bc] sm:$0xf]
  %v152 = vld [vmem:[%s1 + $0x1c0] sm:$0xf]
  %v153 = vld [vmem:[%s1 + $0x1c4] sm:$0xf]
  %v154 = vld [vmem:[%s1 + $0x1c8] sm:$0xf]
  %v155 = vld [vmem:[%s1 + $0x1cc] sm:$0xf]
  %v156 = vld [vmem:[%s1 + $0x1d0] sm:$0xf]
  %v157 = vld [vmem:[%s1 + $0x1d4] sm:$0xf]
  %v158 = vld [vmem:[%s1 + $0x1d8] sm:$0xf]
  %v159 = vld [vmem:[%s1 + $0x1dc] sm:$0xf]
  %v160 = vld [vmem:[%s1 + $0x1e0] sm:$0xf]
  %v161 = vld [vmem:[%s1 + $0x1e4] sm:$0xf]
  %v162 = vld [vmem:[%s1 + $0x1e8] sm:$0xf]
  %v163 = vld [vmem:[%s1 + $0x1ec] sm:$0xf]
  %v164 = vld [vmem:[%s1 + $0x1f0] sm:$0xf]
  %v165 = vld [vmem:[%s1 + $0x1f4] sm:$0xf]
  %v166 = vld [vmem:[%s1 + $0x1f8] sm:$0xf]
  %v167 = vld [vmem:[%s1 + $0x1fc] sm:$0xf]
  %v168 = vld [vmem:[%s1 + $0x200] sm:$0xf]
  %v169 = vld [vmem:[%s1 + $0x204] sm:$0xf]
  %v170 = vld [vmem:[%s1 + $0x208] sm:$0xf]
  %v171 = vld [vmem:[%s1 + $0x20c] sm:$0xf]
  %v172 = vld [vmem:[%s1 + $0x210] sm:$0xf]
  %v173 = vld [vmem:[%s1 + $0x214] sm:$0xf]
  %v174 = vld [vmem:[%s1 + $0x218] sm:$0xf]
  %v175 = vld [vmem:[%s1 + $0x21c] sm:$0xf]
  %v176 = vld [vmem:[%s1 + $0x220] sm:$0xf]
  %v177 = vld [vmem:[%s1 + $0x224] sm:$0xf]
  %v178 = vld [vmem:[%s1 + $0x228] sm:$0xf]
  %v179 = vld [vmem:[%s1 + $0x22c] sm:$0xf]
  %v180 = vld [vmem:[%s1 + $0x230] sm:$0xf]
  %v181 = vld [vmem:[%s1 + $0x234] sm:$0xf]
  %v182 = vld [vmem:[%s1 + $0x238] sm:$0xf]
  %v183 = vld [vmem:[%s1 + $0x23c] sm:$0xf]
  %v204 = vunpack.c.l.b16 %v20
  %v205 = vunpack.c.h.b16 %v20
  %v206 = vunpack.c.l.b16 %v21
  %v207 = vunpack.c.h.b16 %v21
  %v208 = vunpack.c.l.b16 %v22
  %v209 = vunpack.c.h.b16 %v22
  %v210 = vunpack.c.l.b16 %v23
  %v211 = vunpack.c.h.b16 %v23
  %v212 = vunpack.c.l.b16 %v24
  %v213 = vunpack.c.l.b16 %v25
  %v214 = vunpack.c.h.b16 %v25
  %v215 = vunpack.c.l.b16 %v26
  %v216 = vunpack.c.h.b16 %v26
  %v217 = vunpack.c.l.b16 %v27
  %v218 = vunpack.c.h.b16 %v27
  %v219 = vunpack.c.l.b16 %v28
  %v220 = vunpack.c.h.b16 %v28
  %v221 = vunpack.c.l.b16 %v29
  %v222 = vunpack.c.l.b16 %v30
  %v223 = vunpack.c.h.b16 %v30
  %v224 = vunpack.c.l.b16 %v31
  %v225 = vunpack.c.h.b16 %v31
  %v226 = vunpack.c.l.b16 %v32
  %v227 = vunpack.c.h.b16 %v32
  %v228 = vunpack.c.l.b16 %v33
  %v229 = vunpack.c.h.b16 %v33
  %v230 = vunpack.c.l.b16 %v34
  %v231 = vunpack.c.l.b16 %v35
  %v232 = vunpack.c.h.b16 %v35
  %v233 = vunpack.c.l.b16 %v36
  %v234 = vunpack.c.h.b16 %v36
  %v235 = vunpack.c.l.b16 %v37
  %v236 = vunpack.c.h.b16 %v37
  %v237 = vunpack.c.l.b16 %v38
  %v238 = vunpack.c.h.b16 %v38
  %v239 = vunpack.c.l.b16 %v39
  %v240 = vpack.c.b16 %v213, %v204
  %v241 = vpack.c.b16 %v214, %v205
  %v242 = vpack.c.b16 %v215, %v206
  %v243 = vpack.c.b16 %v216, %v207
  %v244 = vpack.c.b16 %v217, %v208
  %v245 = vpack.c.b16 %v218, %v209
  %v246 = vpack.c.b16 %v219, %v210
  %v247 = vpack.c.b16 %v220, %v211
  %v248 = vpack.c.b16 %v221, %v212
  %v249 = vpack.c.b16 %v231, %v222
  %v250 = vpack.c.b16 %v232, %v223
  %v251 = vpack.c.b16 %v233, %v224
  %v252 = vpack.c.b16 %v234, %v225
  %v253 = vpack.c.b16 %v235, %v226
  %v254 = vpack.c.b16 %v236, %v227
  %v255 = vpack.c.b16 %v237, %v228
  %v256 = vpack.c.b16 %v238, %v229
  %v257 = vpack.c.b16 %v239, %v230
  %v420 = vunpack.c.l.b16 %v40
  %v421 = vunpack.c.l.b16 %v41
  %v422 = vunpack.c.l.b16 %v42
  %v423 = vunpack.c.l.b16 %v43
  %v424 = vunpack.c.l.b16 %v44
  %v425 = vunpack.c.l.b16 %v45
  %v426 = vunpack.c.l.b16 %v46
  %v427 = vunpack.c.l.b16 %v47
  %v428 = vunpack.c.l.b16 %v48
  %v429 = vunpack.c.l.b16 %v49
  %v430 = vunpack.c.l.b16 %v50
  %v431 = vunpack.c.l.b16 %v51
  %v432 = vunpack.c.l.b16 %v52
  %v433 = vunpack.c.l.b16 %v53
  %v434 = vunpack.c.l.b16 %v54
  %v435 = vunpack.c.l.b16 %v55
  %v436 = vunpack.c.l.b16 %v56
  %v437 = vunpack.c.l.b16 %v57
  %v438 = vunpack.c.l.b16 %v58
  %v439 = vunpack.c.l.b16 %v59
  %v440 = vunpack.c.l.b16 %v60
  %v441 = vunpack.c.l.b16 %v61
  %v442 = vunpack.c.l.b16 %v62
  %v443 = vunpack.c.l.b16 %v63
  %v444 = vunpack.c.l.b16 %v64
  %v445 = vunpack.c.l.b16 %v65
  %v446 = vunpack.c.l.b16 %v66
  %v447 = vunpack.c.l.b16 %v67
  %v448 = vunpack.c.l.b16 %v68
  %v449 = vunpack.c.l.b16 %v69
  %v450 = vunpack.c.l.b16 %v70
  %v451 = vunpack.c.l.b16 %v71
  %v452 = vunpack.c.l.b16 %v72
  %v453 = vunpack.c.l.b16 %v73
  %v454 = vunpack.c.l.b16 %v74
  %v455 = vunpack.c.l.b16 %v75
  %v456 = vunpack.c.l.b16 %v76
  %v457 = vunpack.c.l.b16 %v77
  %v458 = vunpack.c.l.b16 %v78
  %v459 = vunpack.c.l.b16 %v79
  %v460 = vunpack.c.l.b16 %v80
  %v461 = vunpack.c.l.b16 %v81
  %v462 = vunpack.c.l.b16 %v82
  %v463 = vunpack.c.l.b16 %v83
  %v464 = vunpack.c.l.b16 %v84
  %v465 = vunpack.c.l.b16 %v85
  %v466 = vunpack.c.l.b16 %v86
  %v467 = vunpack.c.l.b16 %v87
  %v468 = vunpack.c.l.b16 %v88
  %v469 = vunpack.c.l.b16 %v89
  %v470 = vunpack.c.l.b16 %v90
  %v471 = vunpack.c.l.b16 %v91
  %v472 = vunpack.c.l.b16 %v92
  %v473 = vunpack.c.l.b16 %v93
  %v474 = vunpack.c.l.b16 %v94
  %v475 = vunpack.c.l.b16 %v95
  %v476 = vunpack.c.l.b16 %v96
  %v477 = vunpack.c.l.b16 %v97
  %v478 = vunpack.c.l.b16 %v98
  %v479 = vunpack.c.l.b16 %v99
  %v480 = vunpack.c.l.b16 %v100
  %v481 = vunpack.c.l.b16 %v101
  %v482 = vunpack.c.l.b16 %v102
  %v483 = vunpack.c.l.b16 %v103
  %v484 = vunpack.c.l.b16 %v104
  %v485 = vunpack.c.l.b16 %v105
  %v486 = vunpack.c.l.b16 %v106
  %v487 = vunpack.c.l.b16 %v107
  %v488 = vunpack.c.l.b16 %v108
  %v489 = vunpack.c.l.b16 %v109
  %v490 = vunpack.c.l.b16 %v110
  %v491 = vunpack.c.l.b16 %v111
  %v492 = vunpack.c.l.b16 %v112
  %v493 = vunpack.c.l.b16 %v113
  %v494 = vunpack.c.l.b16 %v114
  %v495 = vunpack.c.l.b16 %v115
  %v496 = vunpack.c.l.b16 %v116
  %v497 = vunpack.c.l.b16 %v117
  %v498 = vunpack.c.l.b16 %v118
  %v499 = vunpack.c.l.b16 %v119
  %v500 = vunpack.c.l.b16 %v120
  %v501 = vunpack.c.l.b16 %v121
  %v502 = vunpack.c.l.b16 %v122
  %v503 = vunpack.c.l.b16 %v123
  %v504 = vunpack.c.l.b16 %v124
  %v505 = vunpack.c.l.b16 %v125
  %v506 = vunpack.c.l.b16 %v126
  %v507 = vunpack.c.l.b16 %v127
  %v508 = vunpack.c.l.b16 %v128
  %v509 = vunpack.c.l.b16 %v129
  %v510 = vunpack.c.l.b16 %v130
  %v511 = vunpack.c.l.b16 %v131
  %v512 = vunpack.c.l.b16 %v132
  %v513 = vunpack.c.l.b16 %v133
  %v514 = vunpack.c.l.b16 %v134
  %v515 = vunpack.c.l.b16 %v135
  %v516 = vunpack.c.l.b16 %v136
  %v517 = vunpack.c.l.b16 %v137
  %v518 = vunpack.c.l.b16 %v138
  %v519 = vunpack.c.l.b16 %v139
  %v520 = vunpack.c.l.b16 %v140
  %v521 = vunpack.c.l.b16 %v141
  %v522 = vunpack.c.l.b16 %v142
  %v523 = vunpack.c.l.b16 %v143
  %v524 = vunpack.c.l.b16 %v144
  %v525 = vunpack.c.l.b16 %v145
  %v526 = vunpack.c.l.b16 %v146
  %v527 = vunpack.c.l.b16 %v147
  %v528 = vunpack.c.l.b16 %v148
  %v529 = vunpack.c.l.b16 %v149
  %v530 = vunpack.c.l.b16 %v150
  %v531 = vunpack.c.l.b16 %v151
  %v532 = vunpack.c.l.b16 %v152
  %v533 = vunpack.c.l.b16 %v153
  %v534 = vunpack.c.l.b16 %v154
  %v535 = vunpack.c.l.b16 %v155
  %v536 = vunpack.c.l.b16 %v156
  %v537 = vunpack.c.l.b16 %v157
  %v538 = vunpack.c.l.b16 %v158
  %v539 = vunpack.c.l.b16 %v159
  %v540 = vunpack.c.l.b16 %v160
  %v541 = vunpack.c.l.b16 %v161
  %v542 = vunpack.c.l.b16 %v162
  %v543 = vunpack.c.l.b16 %v163
  %v544 = vunpack.c.l.b16 %v164
  %v545 = vunpack.c.l.b16 %v165
  %v546 = vunpack.c.l.b16 %v166
  %v547 = vunpack.c.l.b16 %v167
  %v548 = vunpack.c.l.b16 %v168
  %v549 = vunpack.c.l.b16 %v169
  %v550 = vunpack.c.l.b16 %v170
  %v551 = vunpack.c.l.b16 %v171
  %v552 = vunpack.c.l.b16 %v172
  %v553 = vunpack.c.l.b16 %v173
  %v554 = vunpack.c.l.b16 %v174
  %v555 = vunpack.c.l.b16 %v175
  %v556 = vunpack.c.l.b16 %v176
  %v557 = vunpack.c.l.b16 %v177
  %v558 = vunpack.c.l.b16 %v178
  %v559 = vunpack.c.l.b16 %v179
  %v560 = vunpack.c.l.b16 %v180
  %v561 = vunpack.c.l.b16 %v181
  %v562 = vunpack.c.l.b16 %v182
  %v563 = vunpack.c.l.b16 %v183
  %v564 = vpack.c.b16 %v421, %v420
  %v565 = vpack.c.b16 %v423, %v422
  %v566 = vpack.c.b16 %v425, %v424
  %v567 = vpack.c.b16 %v427, %v426
  %v568 = vpack.c.b16 %v429, %v428
  %v569 = vpack.c.b16 %v431, %v430
  %v570 = vpack.c.b16 %v433, %v432
  %v571 = vpack.c.b16 %v435, %v434
  %v572 = vpack.c.b16 %v437, %v436
  %v573 = vpack.c.b16 %v439, %v438
  %v574 = vpack.c.b16 %v441, %v440
  %v575 = vpack.c.b16 %v443, %v442
  %v576 = vpack.c.b16 %v445, %v444
  %v577 = vpack.c.b16 %v447, %v446
  %v578 = vpack.c.b16 %v449, %v448
  %v579 = vpack.c.b16 %v451, %v450
  %v580 = vpack.c.b16 %v453, %v452
  %v581 = vpack.c.b16 %v455, %v454
  %v582 = vpack.c.b16 %v457, %v456
  %v583 = vpack.c.b16 %v459, %v458
  %v584 = vpack.c.b16 %v461, %v460
  %v585 = vpack.c.b16 %v463, %v462
  %v586 = vpack.c.b16 %v465, %v464
  %v587 = vpack.c.b16 %v467, %v466
  %v588 = vpack.c.b16 %v469, %v468
  %v589 = vpack.c.b16 %v471, %v470
  %v590 = vpack.c.b16 %v473, %v472
  %v591 = vpack.c.b16 %v475, %v474
  %v592 = vpack.c.b16 %v477, %v476
  %v593 = vpack.c.b16 %v479, %v478
  %v594 = vpack.c.b16 %v481, %v480
  %v595 = vpack.c.b16 %v483, %v482
  %v596 = vpack.c.b16 %v485, %v484
  %v597 = vpack.c.b16 %v487, %v486
  %v598 = vpack.c.b16 %v489, %v488
  %v599 = vpack.c.b16 %v491, %v490
  %v600 = vpack.c.b16 %v493, %v492
  %v601 = vpack.c.b16 %v495, %v494
  %v602 = vpack.c.b16 %v497, %v496
  %v603 = vpack.c.b16 %v499, %v498
  %v604 = vpack.c.b16 %v501, %v500
  %v605 = vpack.c.b16 %v503, %v502
  %v606 = vpack.c.b16 %v505, %v504
  %v607 = vpack.c.b16 %v507, %v506
  %v608 = vpack.c.b16 %v509, %v508
  %v609 = vpack.c.b16 %v511, %v510
  %v610 = vpack.c.b16 %v513, %v512
  %v611 = vpack.c.b16 %v515, %v514
  %v612 = vpack.c.b16 %v517, %v516
  %v613 = vpack.c.b16 %v519, %v518
  %v614 = vpack.c.b16 %v521, %v520
  %v615 = vpack.c.b16 %v523, %v522
  %v616 = vpack.c.b16 %v525, %v524
  %v617 = vpack.c.b16 %v527, %v526
  %v618 = vpack.c.b16 %v529, %v528
  %v619 = vpack.c.b16 %v531, %v530
  %v620 = vpack.c.b16 %v533, %v532
  %v621 = vpack.c.b16 %v535, %v534
  %v622 = vpack.c.b16 %v537, %v536
  %v623 = vpack.c.b16 %v539, %v538
  %v624 = vpack.c.b16 %v541, %v540
  %v625 = vpack.c.b16 %v543, %v542
  %v626 = vpack.c.b16 %v545, %v544
  %v627 = vpack.c.b16 %v547, %v546
  %v628 = vpack.c.b16 %v549, %v548
  %v629 = vpack.c.b16 %v551, %v550
  %v630 = vpack.c.b16 %v553, %v552
  %v631 = vpack.c.b16 %v555, %v554
  %v632 = vpack.c.b16 %v557, %v556
  %v633 = vpack.c.b16 %v559, %v558
  %v634 = vpack.c.b16 %v561, %v560
  %v635 = vpack.c.b16 %v563, %v562
  %708 = vmatpush.bf16.msra.mxu0 %v571
  %709 = vmatpush.bf16.msra.mxu0 %v570
  %710 = vmatpush.bf16.msra.mxu0 %v569
  %711 = vmatpush.bf16.msra.mxu0 %v568
  %712 = vmatpush.bf16.msra.mxu0 %v567
  %713 = vmatpush.bf16.msra.mxu0 %v566
  %714 = vmatpush.bf16.msra.mxu0 %v565
  %715 = vmatpush.bf16.msra.mxu0 %v564
  %716 = vmatmul.bf16.gmra.mxu0 %v240
  %v717 = vpop.f32.mrf.mxu0
  %v718 = vadd.f32 0.0, %v717
  %v719 = vpop.f32.mrf.mxu0
  %v720 = vadd.f32 0.0, %v719
  %721 = vmatmul.bf16.gmra.mxu0 %v249
  %v722 = vpop.f32.mrf.mxu0
  %v723 = vadd.f32 0.0, %v722
  %v724 = vpop.f32.mrf.mxu0
  %v725 = vadd.f32 0.0, %v724
  %726 = vdwg.mxu0
  %727 = vmatpush.bf16.msra.mxu0 %v579
  %728 = vmatpush.bf16.msra.mxu0 %v578
  %729 = vmatpush.bf16.msra.mxu0 %v577
  %730 = vmatpush.bf16.msra.mxu0 %v576
  %731 = vmatpush.bf16.msra.mxu0 %v575
  %732 = vmatpush.bf16.msra.mxu0 %v574
  %733 = vmatpush.bf16.msra.mxu0 %v573
  %734 = vmatpush.bf16.msra.mxu0 %v572
  %735 = vmatmul.bf16.gmra.mxu0 %v241
  %v736 = vpop.f32.mrf.mxu0
  %v737 = vadd.f32 %v718, %v736
  %v738 = vpop.f32.mrf.mxu0
  %v739 = vadd.f32 %v720, %v738
  %740 = vmatmul.bf16.gmra.mxu0 %v250
  %v741 = vpop.f32.mrf.mxu0
  %v742 = vadd.f32 %v723, %v741
  %v743 = vpop.f32.mrf.mxu0
  %v744 = vadd.f32 %v725, %v743
  %745 = vdwg.mxu0
  %746 = vmatpush.bf16.msra.mxu0 %v587
  %747 = vmatpush.bf16.msra.mxu0 %v586
  %748 = vmatpush.bf16.msra.mxu0 %v585
  %749 = vmatpush.bf16.msra.mxu0 %v584
  %750 = vmatpush.bf16.msra.mxu0 %v583
  %751 = vmatpush.bf16.msra.mxu0 %v582
  %752 = vmatpush.bf16.msra.mxu0 %v581
  %753 = vmatpush.bf16.msra.mxu0 %v580
  %754 = vmatmul.bf16.gmra.mxu0 %v242
  %v755 = vpop.f32.mrf.mxu0
  %v756 = vadd.f32 %v737, %v755
  %v757 = vpop.f32.mrf.mxu0
  %v758 = vadd.f32 %v739, %v757
  %759 = vmatmul.bf16.gmra.mxu0 %v251
  %v760 = vpop.f32.mrf.mxu0
  %v761 = vadd.f32 %v742, %v760
  %v762 = vpop.f32.mrf.mxu0
  %v763 = vadd.f32 %v744, %v762
  %764 = vdwg.mxu0
  %765 = vmatpush.bf16.msra.mxu0 %v595
  %766 = vmatpush.bf16.msra.mxu0 %v594
  %767 = vmatpush.bf16.msra.mxu0 %v593
  %768 = vmatpush.bf16.msra.mxu0 %v592
  %769 = vmatpush.bf16.msra.mxu0 %v591
  %770 = vmatpush.bf16.msra.mxu0 %v590
  %771 = vmatpush.bf16.msra.mxu0 %v589
  %772 = vmatpush.bf16.msra.mxu0 %v588
  %773 = vmatmul.bf16.gmra.mxu0 %v243
  %v774 = vpop.f32.mrf.mxu0
  %v775 = vadd.f32 %v756, %v774
  %v776 = vpop.f32.mrf.mxu0
  %v777 = vadd.f32 %v758, %v776
  %778 = vmatmul.bf16.gmra.mxu0 %v252
  %v779 = vpop.f32.mrf.mxu0
  %v780 = vadd.f32 %v761, %v779
  %v781 = vpop.f32.mrf.mxu0
  %v782 = vadd.f32 %v763, %v781
  %783 = vdwg.mxu0
  %784 = vmatpush.bf16.msra.mxu0 %v603
  %785 = vmatpush.bf16.msra.mxu0 %v602
  %786 = vmatpush.bf16.msra.mxu0 %v601
  %787 = vmatpush.bf16.msra.mxu0 %v600
  %788 = vmatpush.bf16.msra.mxu0 %v599
  %789 = vmatpush.bf16.msra.mxu0 %v598
  %790 = vmatpush.bf16.msra.mxu0 %v597
  %791 = vmatpush.bf16.msra.mxu0 %v596
  %792 = vmatmul.bf16.gmra.mxu0 %v244
  %v793 = vpop.f32.mrf.mxu0
  %v794 = vadd.f32 %v775, %v793
  %v795 = vpop.f32.mrf.mxu0
  %v796 = vadd.f32 %v777, %v795
  %797 = vmatmul.bf16.gmra.mxu0 %v253
  %v798 = vpop.f32.mrf.mxu0
  %v799 = vadd.f32 %v780, %v798
  %v800 = vpop.f32.mrf.mxu0
  %v801 = vadd.f32 %v782, %v800
  %802 = vdwg.mxu0
  %803 = vmatpush.bf16.msra.mxu0 %v611
  %804 = vmatpush.bf16.msra.mxu0 %v610
  %805 = vmatpush.bf16.msra.mxu0 %v609
  %806 = vmatpush.bf16.msra.mxu0 %v608
  %807 = vmatpush.bf16.msra.mxu0 %v607
  %808 = vmatpush.bf16.msra.mxu0 %v606
  %809 = vmatpush.bf16.msra.mxu0 %v605
  %810 = vmatpush.bf16.msra.mxu0 %v604
  %811 = vmatmul.bf16.gmra.mxu0 %v245
  %v812 = vpop.f32.mrf.mxu0
  %v813 = vadd.f32 %v794, %v812
  %v814 = vpop.f32.mrf.mxu0
  %v815 = vadd.f32 %v796, %v814
  %816 = vmatmul.bf16.gmra.mxu0 %v254
  %v817 = vpop.f32.mrf.mxu0
  %v818 = vadd.f32 %v799, %v817
  %v819 = vpop.f32.mrf.mxu0
  %v820 = vadd.f32 %v801, %v819
  %821 = vdwg.mxu0
  %822 = vmatpush.bf16.msra.mxu0 %v619
  %823 = vmatpush.bf16.msra.mxu0 %v618
  %824 = vmatpush.bf16.msra.mxu0 %v617
  %825 = vmatpush.bf16.msra.mxu0 %v616
  %826 = vmatpush.bf16.msra.mxu0 %v615
  %827 = vmatpush.bf16.msra.mxu0 %v614
  %828 = vmatpush.bf16.msra.mxu0 %v613
  %829 = vmatpush.bf16.msra.mxu0 %v612
  %830 = vmatmul.bf16.gmra.mxu0 %v246
  %v831 = vpop.f32.mrf.mxu0
  %v832 = vadd.f32 %v813, %v831
  %v833 = vpop.f32.mrf.mxu0
  %v834 = vadd.f32 %v815, %v833
  %835 = vmatmul.bf16.gmra.mxu0 %v255
  %v836 = vpop.f32.mrf.mxu0
  %v837 = vadd.f32 %v818, %v836
  %v838 = vpop.f32.mrf.mxu0
  %v839 = vadd.f32 %v820, %v838
  %840 = vdwg.mxu0
  %841 = vmatpush.bf16.msra.mxu0 %v627
  %842 = vmatpush.bf16.msra.mxu0 %v626
  %843 = vmatpush.bf16.msra.mxu0 %v625
  %844 = vmatpush.bf16.msra.mxu0 %v624
  %845 = vmatpush.bf16.msra.mxu0 %v623
  %846 = vmatpush.bf16.msra.mxu0 %v622
  %847 = vmatpush.bf16.msra.mxu0 %v621
  %848 = vmatpush.bf16.msra.mxu0 %v620
  %849 = vmatmul.bf16.gmra.mxu0 %v247
  %v850 = vpop.f32.mrf.mxu0
  %v851 = vadd.f32 %v832, %v850
  %v852 = vpop.f32.mrf.mxu0
  %v853 = vadd.f32 %v834, %v852
  %854 = vmatmul.bf16.gmra.mxu0 %v256
  %v855 = vpop.f32.mrf.mxu0
  %v856 = vadd.f32 %v837, %v855
  %v857 = vpop.f32.mrf.mxu0
  %v858 = vadd.f32 %v839, %v857
  %859 = vdwg.mxu0
  %860 = vmatpush.bf16.msra.mxu0 %v635
  %861 = vmatpush.bf16.msra.mxu0 %v634
  %862 = vmatpush.bf16.msra.mxu0 %v633
  %863 = vmatpush.bf16.msra.mxu0 %v632
  %864 = vmatpush.bf16.msra.mxu0 %v631
  %865 = vmatpush.bf16.msra.mxu0 %v630
  %866 = vmatpush.bf16.msra.mxu0 %v629
  %867 = vmatpush.bf16.msra.mxu0 %v628
  %868 = vmatmul.bf16.gmra.mxu0 %v248
  %v869 = vpop.f32.mrf.mxu0
  %v870 = vadd.f32 %v851, %v869
  %v871 = vpop.f32.mrf.mxu0
  %v872 = vadd.f32 %v853, %v871
  %873 = vmatmul.bf16.gmra.mxu0 %v257
  %v874 = vpop.f32.mrf.mxu0
  %v875 = vadd.f32 %v856, %v874
  %v876 = vpop.f32.mrf.mxu0
  %v877 = vadd.f32 %v858, %v876
  %878 = vdwg.mxu0
  %v879 = vld [vmem:[%s2] sm:$0x1]
  %v881 = vperm.slane %v879, 0
  %v883 = vmul.f32 %v870, %v881
  %v884 = vmul.f32 %v872, %v881
  %v885 = vmul.f32 %v875, %v881
  %v886 = vmul.f32 %v877, %v881
  %v887 = vld [vmem:[%s3] sm:$0x1]
  %v889 = vperm.slane %v887, 0
  %v891 = vadd.f32 %v883, %v889
  %v892 = vadd.f32 %v884, %v889
  %v893 = vadd.f32 %v885, %v889
  %v894 = vadd.f32 %v886, %v889
  %v895 = vld [vmem:[%s4] sm:$0xf]
  %v896 = vld [vmem:[%s4 + $0x4] sm:$0xf]
  %v897 = vld [vmem:[%s4 + $0x8] sm:$0xf]
  %v898 = vld [vmem:[%s4 + $0xc] sm:$0xf]
  %v899 = vunpack.c.l.bf16 %v895
  %v900 = vunpack.c.l.bf16 %v896
  %v901 = vunpack.c.l.bf16 %v897
  %v902 = vunpack.c.l.bf16 %v898
  %v903 = vadd.f32 %v891, %v899
  %v904 = vadd.f32 %v892, %v900
  %v905 = vadd.f32 %v893, %v901
  %v906 = vadd.f32 %v894, %v902
  %v907 = vmax.f32 %v903, 0.0
  %v908 = vmax.f32 %v904, 0.0
  %v909 = vmax.f32 %v905, 0.0
  %v910 = vmax.f32 %v906, 0.0
  %v911 = vpack.c.bf16 %v907, %v907
  %v912 = vpack.c.bf16 %v908, %v908
  %v913 = vpack.c.bf16 %v909, %v909
  %v914 = vpack.c.bf16 %v910, %v910
  %915 = vst [vmem:[%s5] sm:$0xf] %v911
  %916 = vst [vmem:[%s5 + $0x4] sm:$0xf] %v912
  %917 = vst [vmem:[%s5 + $0x8] sm:$0xf] %v913
  %918 = vst [vmem:[%s5 + $0xc] sm:$0xf] %v914
  // Predicated region
  $region22: #{forward.21} parent=0 // pred_check
    _
  $region23: #{forward.21} parent=0 // pred_check_branch
    %920 = sbr.rel (0) target = $region25
  $region24: #{forward.21} parent=0 // pred_region
    _
  $region25: #{forward.21} parent=0 // pred_fallthru
    _
  // Predicated region
  $region26: #{forward.21} parent=0 // pred_check
    _
  $region27: #{forward.21} parent=0 // pred_check_branch
    %922 = sbr.rel (0) target = $region29
  $region28: #{forward.21} parent=0 // pred_region
    _
  $region29: #{forward.21} parent=0 // pred_fallthru
    _

// kernel: forward.22
$region0: #{forward.22}
  #allocation0 [shape = 'u32[]', space=smem, size = 0x4, offset = 0x4, fixed_abs, tag = 'smem constant byte address 0x4 - core index']
  #allocation1 [shape = 'u32[72,128]{1,0:T(1,128)}', space=vmem, size = 0x9000, scoped, tag = 'internal scratch']
  %s0 = inlined_call_operand.vmem [shape: bf16[8,1152], index: 0, kind: input, shape index: {}]
  %s1 = inlined_call_operand.vmem [shape: bf16[1152,128], index: 1, kind: input, shape index: {}]
  %s2 = inlined_call_operand.vmem [shape: f32[1,128], index: 2, kind: input, shape index: {}]
  %s3 = inlined_call_operand.vmem [shape: f32[1,128], index: 3, kind: input, shape index: {}]
  %s4 = inlined_call_operand.vmem [shape: bf16[8,128], index: 4, kind: output, shape index: {}]
  %s5 = sld [smem:[#allocation0]]
  $region26: #{forward.22} parent=0
    _
  %s7 = ssub.s32 1, %s5
  %s8 = scalar_select 0, %s7, %s5
  // Predicated region
  $region2: #{forward.22} parent=0 // pred_check
    _
  $region3: #{forward.22} parent=0 // pred_check_branch
    %10 = sbr.rel (0) target = $region5
  $region4: #{forward.22} parent=0 // pred_region
    _
  $region5: #{forward.22} parent=0 // pred_fallthru
    _
  // Predicated region
  $region6: #{forward.22} parent=0 // pred_check
    _
  $region7: #{forward.22} parent=0 // pred_check_branch
    %12 = sbr.rel (0) target = $region9
  $region8: #{forward.22} parent=0 // pred_region
    _
  $region9: #{forward.22} parent=0 // pred_fallthru
    _
  // Predicated region
  $region10: #{forward.22} parent=0 // pred_check
    _
  $region11: #{forward.22} parent=0 // pred_check_branch
    %14 = sbr.rel (0) target = $region13
  $region12: #{forward.22} parent=0 // pred_region
    _
  $region13: #{forward.22} parent=0 // pred_fallthru
    _
  // Predicated region
  $region14: #{forward.22} parent=0 // pred_check
    _
  $region15: #{forward.22} parent=0 // pred_check_branch
    %16 = sbr.rel (0) target = $region17
  $region16: #{forward.22} parent=0 // pred_region
    _
  $region17: #{forward.22} parent=0 // pred_fallthru
    _
  %v17 = vld [vmem:[%s0] sm:$0xff]
  %v18 = vld [vmem:[%s0 + $0x8] sm:$0xff]
  %v19 = vld [vmem:[%s0 + $0x10] sm:$0xff]
  %v20 = vld [vmem:[%s0 + $0x18] sm:$0xff]
  %v21 = vld [vmem:[%s0 + $0x20] sm:$0xf]
  %v22 = vld [vmem:[%s1] sm:$0xf]
  %v23 = vld [vmem:[%s1 + $0x4] sm:$0xf]
  %v24 = vld [vmem:[%s1 + $0x8] sm:$0xf]
  %v25 = vld [vmem:[%s1 + $0xc] sm:$0xf]
  %v26 = vld [vmem:[%s1 + $0x10] sm:$0xf]
  %v27 = vld [vmem:[%s1 + $0x14] sm:$0xf]
  %v28 = vld [vmem:[%s1 + $0x18] sm:$0xf]
  %v29 = vld [vmem:[%s1 + $0x1c] sm:$0xf]
  %v30 = vld [vmem:[%s1 + $0x20] sm:$0xf]
  %v31 = vld [vmem:[%s1 + $0x24] sm:$0xf]
  %v32 = vld [vmem:[%s1 + $0x28] sm:$0xf]
  %v33 = vld [vmem:[%s1 + $0x2c] sm:$0xf]
  %v34 = vld [vmem:[%s1 + $0x30] sm:$0xf]
  %v35 = vld [vmem:[%s1 + $0x34] sm:$0xf]
  %v36 = vld [vmem:[%s1 + $0x38] sm:$0xf]
  %v37 = vld [vmem:[%s1 + $0x3c] sm:$0xf]
  %v38 = vld [vmem:[%s1 + $0x40] sm:$0xf]
  %v39 = vld [vmem:[%s1 + $0x44] sm:$0xf]
  %v40 = vld [vmem:[%s1 + $0x48] sm:$0xf]
  %v41 = vld [vmem:[%s1 + $0x4c] sm:$0xf]
  %v42 = vld [vmem:[%s1 + $0x50] sm:$0xf]
  %v43 = vld [vmem:[%s1 + $0x54] sm:$0xf]
  %v44 = vld [vmem:[%s1 + $0x58] sm:$0xf]
  %v45 = vld [vmem:[%s1 + $0x5c] sm:$0xf]
  %v46 = vld [vmem:[%s1 + $0x60] sm:$0xf]
  %v47 = vld [vmem:[%s1 + $0x64] sm:$0xf]
  %v48 = vld [vmem:[%s1 + $0x68] sm:$0xf]
  %v49 = vld [vmem:[%s1 + $0x6c] sm:$0xf]
  %v50 = vld [vmem:[%s1 + $0x70] sm:$0xf]
  %v51 = vld [vmem:[%s1 + $0x74] sm:$0xf]
  %v52 = vld [vmem:[%s1 + $0x78] sm:$0xf]
  %v53 = vld [vmem:[%s1 + $0x7c] sm:$0xf]
  %v54 = vld [vmem:[%s1 + $0x80] sm:$0xf]
  %v55 = vld [vmem:[%s1 + $0x84] sm:$0xf]
  %v56 = vld [vmem:[%s1 + $0x88] sm:$0xf]
  %v57 = vld [vmem:[%s1 + $0x8c] sm:$0xf]
  %v58 = vld [vmem:[%s1 + $0x90] sm:$0xf]
  %v59 = vld [vmem:[%s1 + $0x94] sm:$0xf]
  %v60 = vld [vmem:[%s1 + $0x98] sm:$0xf]
  %v61 = vld [vmem:[%s1 + $0x9c] sm:$0xf]
  %v62 = vld [vmem:[%s1 + $0xa0] sm:$0xf]
  %v63 = vld [vmem:[%s1 + $0xa4] sm:$0xf]
  %v64 = vld [vmem:[%s1 + $0xa8] sm:$0xf]
  %v65 = vld [vmem:[%s1 + $0xac] sm:$0xf]
  %v66 = vld [vmem:[%s1 + $0xb0] sm:$0xf]
  %v67 = vld [vmem:[%s1 + $0xb4] sm:$0xf]
  %v68 = vld [vmem:[%s1 + $0xb8] sm:$0xf]
  %v69 = vld [vmem:[%s1 + $0xbc] sm:$0xf]
  %v70 = vld [vmem:[%s1 + $0xc0] sm:$0xf]
  %v71 = vld [vmem:[%s1 + $0xc4] sm:$0xf]
  %v72 = vld [vmem:[%s1 + $0xc8] sm:$0xf]
  %v73 = vld [vmem:[%s1 + $0xcc] sm:$0xf]
  %v74 = vld [vmem:[%s1 + $0xd0] sm:$0xf]
  %v75 = vld [vmem:[%s1 + $0xd4] sm:$0xf]
  %v76 = vld [vmem:[%s1 + $0xd8] sm:$0xf]
  %v77 = vld [vmem:[%s1 + $0xdc] sm:$0xf]
  %v78 = vld [vmem:[%s1 + $0xe0] sm:$0xf]
  %v79 = vld [vmem:[%s1 + $0xe4] sm:$0xf]
  %v80 = vld [vmem:[%s1 + $0xe8] sm:$0xf]
  %v81 = vld [vmem:[%s1 + $0xec] sm:$0xf]
  %v82 = vld [vmem:[%s1 + $0xf0] sm:$0xf]
  %v83 = vld [vmem:[%s1 + $0xf4] sm:$0xf]
  %v84 = vld [vmem:[%s1 + $0xf8] sm:$0xf]
  %v85 = vld [vmem:[%s1 + $0xfc] sm:$0xf]
  %v86 = vld [vmem:[%s1 + $0x100] sm:$0xf]
  %v87 = vld [vmem:[%s1 + $0x104] sm:$0xf]
  %v88 = vld [vmem:[%s1 + $0x108] sm:$0xf]
  %v89 = vld [vmem:[%s1 + $0x10c] sm:$0xf]
  %v90 = vld [vmem:[%s1 + $0x110] sm:$0xf]
  %v91 = vld [vmem:[%s1 + $0x114] sm:$0xf]
  %v92 = vld [vmem:[%s1 + $0x118] sm:$0xf]
  %v93 = vld [vmem:[%s1 + $0x11c] sm:$0xf]
  %v94 = vld [vmem:[%s1 + $0x120] sm:$0xf]
  %v95 = vld [vmem:[%s1 + $0x124] sm:$0xf]
  %v96 = vld [vmem:[%s1 + $0x128] sm:$0xf]
  %v97 = vld [vmem:[%s1 + $0x12c] sm:$0xf]
  %v98 = vld [vmem:[%s1 + $0x130] sm:$0xf]
  %v99 = vld [vmem:[%s1 + $0x134] sm:$0xf]
  %v100 = vld [vmem:[%s1 + $0x138] sm:$0xf]
  %v101 = vld [vmem:[%s1 + $0x13c] sm:$0xf]
  %v102 = vld [vmem:[%s1 + $0x140] sm:$0xf]
  %v103 = vld [vmem:[%s1 + $0x144] sm:$0xf]
  %v104 = vld [vmem:[%s1 + $0x148] sm:$0xf]
  %v105 = vld [vmem:[%s1 + $0x14c] sm:$0xf]
  %v106 = vld [vmem:[%s1 + $0x150] sm:$0xf]
  %v107 = vld [vmem:[%s1 + $0x154] sm:$0xf]
  %v108 = vld [vmem:[%s1 + $0x158] sm:$0xf]
  %v109 = vld [vmem:[%s1 + $0x15c] sm:$0xf]
  %v110 = vld [vmem:[%s1 + $0x160] sm:$0xf]
  %v111 = vld [vmem:[%s1 + $0x164] sm:$0xf]
  %v112 = vld [vmem:[%s1 + $0x168] sm:$0xf]
  %v113 = vld [vmem:[%s1 + $0x16c] sm:$0xf]
  %v114 = vld [vmem:[%s1 + $0x170] sm:$0xf]
  %v115 = vld [vmem:[%s1 + $0x174] sm:$0xf]
  %v116 = vld [vmem:[%s1 + $0x178] sm:$0xf]
  %v117 = vld [vmem:[%s1 + $0x17c] sm:$0xf]
  %v118 = vld [vmem:[%s1 + $0x180] sm:$0xf]
  %v119 = vld [vmem:[%s1 + $0x184] sm:$0xf]
  %v120 = vld [vmem:[%s1 + $0x188] sm:$0xf]
  %v121 = vld [vmem:[%s1 + $0x18c] sm:$0xf]
  %v122 = vld [vmem:[%s1 + $0x190] sm:$0xf]
  %v123 = vld [vmem:[%s1 + $0x194] sm:$0xf]
  %v124 = vld [vmem:[%s1 + $0x198] sm:$0xf]
  %v125 = vld [vmem:[%s1 + $0x19c] sm:$0xf]
  %v126 = vld [vmem:[%s1 + $0x1a0] sm:$0xf]
  %v127 = vld [vmem:[%s1 + $0x1a4] sm:$0xf]
  %v128 = vld [vmem:[%s1 + $0x1a8] sm:$0xf]
  %v129 = vld [vmem:[%s1 + $0x1ac] sm:$0xf]
  %v130 = vld [vmem:[%s1 + $0x1b0] sm:$0xf]
  %v131 = vld [vmem:[%s1 + $0x1b4] sm:$0xf]
  %v132 = vld [vmem:[%s1 + $0x1b8] sm:$0xf]
  %v133 = vld [vmem:[%s1 + $0x1bc] sm:$0xf]
  %v134 = vld [vmem:[%s1 + $0x1c0] sm:$0xf]
  %v135 = vld [vmem:[%s1 + $0x1c4] sm:$0xf]
  %v136 = vld [vmem:[%s1 + $0x1c8] sm:$0xf]
  %v137 = vld [vmem:[%s1 + $0x1cc] sm:$0xf]
  %v138 = vld [vmem:[%s1 + $0x1d0] sm:$0xf]
  %v139 = vld [vmem:[%s1 + $0x1d4] sm:$0xf]
  %v140 = vld [vmem:[%s1 + $0x1d8] sm:$0xf]
  %v141 = vld [vmem:[%s1 + $0x1dc] sm:$0xf]
  %v142 = vld [vmem:[%s1 + $0x1e0] sm:$0xf]
  %v143 = vld [vmem:[%s1 + $0x1e4] sm:$0xf]
  %v144 = vld [vmem:[%s1 + $0x1e8] sm:$0xf]
  %v145 = vld [vmem:[%s1 + $0x1ec] sm:$0xf]
  %v146 = vld [vmem:[%s1 + $0x1f0] sm:$0xf]
  %v147 = vld [vmem:[%s1 + $0x1f4] sm:$0xf]
  %v148 = vld [vmem:[%s1 + $0x1f8] sm:$0xf]
  %v149 = vld [vmem:[%s1 + $0x1fc] sm:$0xf]
  %v150 = vld [vmem:[%s1 + $0x200] sm:$0xf]
  %v151 = vld [vmem:[%s1 + $0x204] sm:$0xf]
  %v152 = vld [vmem:[%s1 + $0x208] sm:$0xf]
  %v153 = vld [vmem:[%s1 + $0x20c] sm:$0xf]
  %v154 = vld [vmem:[%s1 + $0x210] sm:$0xf]
  %v155 = vld [vmem:[%s1 + $0x214] sm:$0xf]
  %v156 = vld [vmem:[%s1 + $0x218] sm:$0xf]
  %v157 = vld [vmem:[%s1 + $0x21c] sm:$0xf]
  %v158 = vld [vmem:[%s1 + $0x220] sm:$0xf]
  %v159 = vld [vmem:[%s1 + $0x224] sm:$0xf]
  %v160 = vld [vmem:[%s1 + $0x228] sm:$0xf]
  %v161 = vld [vmem:[%s1 + $0x22c] sm:$0xf]
  %v162 = vld [vmem:[%s1 + $0x230] sm:$0xf]
  %v163 = vld [vmem:[%s1 + $0x234] sm:$0xf]
  %v164 = vld [vmem:[%s1 + $0x238] sm:$0xf]
  %v165 = vld [vmem:[%s1 + $0x23c] sm:$0xf]
  %v171 = vunpack.c.l.b16 %v17
  %v172 = vunpack.c.h.b16 %v17
  %v173 = vunpack.c.l.b16 %v18
  %v174 = vunpack.c.h.b16 %v18
  %v175 = vunpack.c.l.b16 %v19
  %v176 = vunpack.c.h.b16 %v19
  %v177 = vunpack.c.l.b16 %v20
  %v178 = vunpack.c.h.b16 %v20
  %v179 = vunpack.c.l.b16 %v21
  %v180 = vpack.c.b16 %v171, %v171
  %v181 = vpack.c.b16 %v172, %v172
  %v182 = vpack.c.b16 %v173, %v173
  %v183 = vpack.c.b16 %v174, %v174
  %v184 = vpack.c.b16 %v175, %v175
  %v185 = vpack.c.b16 %v176, %v176
  %v186 = vpack.c.b16 %v177, %v177
  %v187 = vpack.c.b16 %v178, %v178
  %v188 = vpack.c.b16 %v179, %v179
  %v342 = vunpack.c.l.b16 %v22
  %v343 = vunpack.c.l.b16 %v23
  %v344 = vunpack.c.l.b16 %v24
  %v345 = vunpack.c.l.b16 %v25
  %v346 = vunpack.c.l.b16 %v26
  %v347 = vunpack.c.l.b16 %v27
  %v348 = vunpack.c.l.b16 %v28
  %v349 = vunpack.c.l.b16 %v29
  %v350 = vunpack.c.l.b16 %v30
  %v351 = vunpack.c.l.b16 %v31
  %v352 = vunpack.c.l.b16 %v32
  %v353 = vunpack.c.l.b16 %v33
  %v354 = vunpack.c.l.b16 %v34
  %v355 = vunpack.c.l.b16 %v35
  %v356 = vunpack.c.l.b16 %v36
  %v357 = vunpack.c.l.b16 %v37
  %v358 = vunpack.c.l.b16 %v38
  %v359 = vunpack.c.l.b16 %v39
  %v360 = vunpack.c.l.b16 %v40
  %v361 = vunpack.c.l.b16 %v41
  %v362 = vunpack.c.l.b16 %v42
  %v363 = vunpack.c.l.b16 %v43
  %v364 = vunpack.c.l.b16 %v44
  %v365 = vunpack.c.l.b16 %v45
  %v366 = vunpack.c.l.b16 %v46
  %v367 = vunpack.c.l.b16 %v47
  %v368 = vunpack.c.l.b16 %v48
  %v369 = vunpack.c.l.b16 %v49
  %v370 = vunpack.c.l.b16 %v50
  %v371 = vunpack.c.l.b16 %v51
  %v372 = vunpack.c.l.b16 %v52
  %v373 = vunpack.c.l.b16 %v53
  %v374 = vunpack.c.l.b16 %v54
  %v375 = vunpack.c.l.b16 %v55
  %v376 = vunpack.c.l.b16 %v56
  %v377 = vunpack.c.l.b16 %v57
  %v378 = vunpack.c.l.b16 %v58
  %v379 = vunpack.c.l.b16 %v59
  %v380 = vunpack.c.l.b16 %v60
  %v381 = vunpack.c.l.b16 %v61
  %v382 = vunpack.c.l.b16 %v62
  %v383 = vunpack.c.l.b16 %v63
  %v384 = vunpack.c.l.b16 %v64
  %v385 = vunpack.c.l.b16 %v65
  %v386 = vunpack.c.l.b16 %v66
  %v387 = vunpack.c.l.b16 %v67
  %v388 = vunpack.c.l.b16 %v68
  %v389 = vunpack.c.l.b16 %v69
  %v390 = vunpack.c.l.b16 %v70
  %v391 = vunpack.c.l.b16 %v71
  %v392 = vunpack.c.l.b16 %v72
  %v393 = vunpack.c.l.b16 %v73
  %v394 = vunpack.c.l.b16 %v74
  %v395 = vunpack.c.l.b16 %v75
  %v396 = vunpack.c.l.b16 %v76
  %v397 = vunpack.c.l.b16 %v77
  %v398 = vunpack.c.l.b16 %v78
  %v399 = vunpack.c.l.b16 %v79
  %v400 = vunpack.c.l.b16 %v80
  %v401 = vunpack.c.l.b16 %v81
  %v402 = vunpack.c.l.b16 %v82
  %v403 = vunpack.c.l.b16 %v83
  %v404 = vunpack.c.l.b16 %v84
  %v405 = vunpack.c.l.b16 %v85
  %v406 = vunpack.c.l.b16 %v86
  %v407 = vunpack.c.l.b16 %v87
  %v408 = vunpack.c.l.b16 %v88
  %v409 = vunpack.c.l.b16 %v89
  %v410 = vunpack.c.l.b16 %v90
  %v411 = vunpack.c.l.b16 %v91
  %v412 = vunpack.c.l.b16 %v92
  %v413 = vunpack.c.l.b16 %v93
  %v414 = vunpack.c.l.b16 %v94
  %v415 = vunpack.c.l.b16 %v95
  %v416 = vunpack.c.l.b16 %v96
  %v417 = vunpack.c.l.b16 %v97
  %v418 = vunpack.c.l.b16 %v98
  %v419 = vunpack.c.l.b16 %v99
  %v420 = vunpack.c.l.b16 %v100
  %v421 = vunpack.c.l.b16 %v101
  %v422 = vunpack.c.l.b16 %v102
  %v423 = vunpack.c.l.b16 %v103
  %v424 = vunpack.c.l.b16 %v104
  %v425 = vunpack.c.l.b16 %v105
  %v426 = vunpack.c.l.b16 %v106
  %v427 = vunpack.c.l.b16 %v107
  %v428 = vunpack.c.l.b16 %v108
  %v429 = vunpack.c.l.b16 %v109
  %v430 = vunpack.c.l.b16 %v110
  %v431 = vunpack.c.l.b16 %v111
  %v432 = vunpack.c.l.b16 %v112
  %v433 = vunpack.c.l.b16 %v113
  %v434 = vunpack.c.l.b16 %v114
  %v435 = vunpack.c.l.b16 %v115
  %v436 = vunpack.c.l.b16 %v116
  %v437 = vunpack.c.l.b16 %v117
  %v438 = vunpack.c.l.b16 %v118
  %v439 = vunpack.c.l.b16 %v119
  %v440 = vunpack.c.l.b16 %v120
  %v441 = vunpack.c.l.b16 %v121
  %v442 = vunpack.c.l.b16 %v122
  %v443 = vunpack.c.l.b16 %v123
  %v444 = vunpack.c.l.b16 %v124
  %v445 = vunpack.c.l.b16 %v125
  %v446 = vunpack.c.l.b16 %v126
  %v447 = vunpack.c.l.b16 %v127
  %v448 = vunpack.c.l.b16 %v128
  %v449 = vunpack.c.l.b16 %v129
  %v450 = vunpack.c.l.b16 %v130
  %v451 = vunpack.c.l.b16 %v131
  %v452 = vunpack.c.l.b16 %v132
  %v453 = vunpack.c.l.b16 %v133
  %v454 = vunpack.c.l.b16 %v134
  %v455 = vunpack.c.l.b16 %v135
  %v456 = vunpack.c.l.b16 %v136
  %v457 = vunpack.c.l.b16 %v137
  %v458 = vunpack.c.l.b16 %v138
  %v459 = vunpack.c.l.b16 %v139
  %v460 = vunpack.c.l.b16 %v140
  %v461 = vunpack.c.l.b16 %v141
  %v462 = vunpack.c.l.b16 %v142
  %v463 = vunpack.c.l.b16 %v143
  %v464 = vunpack.c.l.b16 %v144
  %v465 = vunpack.c.l.b16 %v145
  %v466 = vunpack.c.l.b16 %v146
  %v467 = vunpack.c.l.b16 %v147
  %v468 = vunpack.c.l.b16 %v148
  %v469 = vunpack.c.l.b16 %v149
  %v470 = vunpack.c.l.b16 %v150
  %v471 = vunpack.c.l.b16 %v151
  %v472 = vunpack.c.l.b16 %v152
  %v473 = vunpack.c.l.b16 %v153
  %v474 = vunpack.c.l.b16 %v154
  %v475 = vunpack.c.l.b16 %v155
  %v476 = vunpack.c.l.b16 %v156
  %v477 = vunpack.c.l.b16 %v157
  %v478 = vunpack.c.l.b16 %v158
  %v479 = vunpack.c.l.b16 %v159
  %v480 = vunpack.c.l.b16 %v160
  %v481 = vunpack.c.l.b16 %v161
  %v482 = vunpack.c.l.b16 %v162
  %v483 = vunpack.c.l.b16 %v163
  %v484 = vunpack.c.l.b16 %v164
  %v485 = vunpack.c.l.b16 %v165
  %v486 = vpack.c.b16 %v343, %v342
  %v487 = vpack.c.b16 %v345, %v344
  %v488 = vpack.c.b16 %v347, %v346
  %v489 = vpack.c.b16 %v349, %v348
  %v490 = vpack.c.b16 %v351, %v350
  %v491 = vpack.c.b16 %v353, %v352
  %v492 = vpack.c.b16 %v355, %v354
  %v493 = vpack.c.b16 %v357, %v356
  %v494 = vpack.c.b16 %v359, %v358
  %v495 = vpack.c.b16 %v361, %v360
  %v496 = vpack.c.b16 %v363, %v362
  %v497 = vpack.c.b16 %v365, %v364
  %v498 = vpack.c.b16 %v367, %v366
  %v499 = vpack.c.b16 %v369, %v368
  %v500 = vpack.c.b16 %v371, %v370
  %v501 = vpack.c.b16 %v373, %v372
  %v502 = vpack.c.b16 %v375, %v374
  %v503 = vpack.c.b16 %v377, %v376
  %v504 = vpack.c.b16 %v379, %v378
  %v505 = vpack.c.b16 %v381, %v380
  %v506 = vpack.c.b16 %v383, %v382
  %v507 = vpack.c.b16 %v385, %v384
  %v508 = vpack.c.b16 %v387, %v386
  %v509 = vpack.c.b16 %v389, %v388
  %v510 = vpack.c.b16 %v391, %v390
  %v511 = vpack.c.b16 %v393, %v392
  %v512 = vpack.c.b16 %v395, %v394
  %v513 = vpack.c.b16 %v397, %v396
  %v514 = vpack.c.b16 %v399, %v398
  %v515 = vpack.c.b16 %v401, %v400
  %v516 = vpack.c.b16 %v403, %v402
  %v517 = vpack.c.b16 %v405, %v404
  %v518 = vpack.c.b16 %v407, %v406
  %v519 = vpack.c.b16 %v409, %v408
  %v520 = vpack.c.b16 %v411, %v410
  %v521 = vpack.c.b16 %v413, %v412
  %v522 = vpack.c.b16 %v415, %v414
  %v523 = vpack.c.b16 %v417, %v416
  %v524 = vpack.c.b16 %v419, %v418
  %v525 = vpack.c.b16 %v421, %v420
  %v526 = vpack.c.b16 %v423, %v422
  %v527 = vpack.c.b16 %v425, %v424
  %v528 = vpack.c.b16 %v427, %v426
  %v529 = vpack.c.b16 %v429, %v428
  %v530 = vpack.c.b16 %v431, %v430
  %v531 = vpack.c.b16 %v433, %v432
  %v532 = vpack.c.b16 %v435, %v434
  %v533 = vpack.c.b16 %v437, %v436
  %v534 = vpack.c.b16 %v439, %v438
  %v535 = vpack.c.b16 %v441, %v440
  %v536 = vpack.c.b16 %v443, %v442
  %v537 = vpack.c.b16 %v445, %v444
  %v538 = vpack.c.b16 %v447, %v446
  %v539 = vpack.c.b16 %v449, %v448
  %v540 = vpack.c.b16 %v451, %v450
  %v541 = vpack.c.b16 %v453, %v452
  %v542 = vpack.c.b16 %v455, %v454
  %v543 = vpack.c.b16 %v457, %v456
  %v544 = vpack.c.b16 %v459, %v458
  %v545 = vpack.c.b16 %v461, %v460
  %v546 = vpack.c.b16 %v463, %v462
  %v547 = vpack.c.b16 %v465, %v464
  %v548 = vpack.c.b16 %v467, %v466
  %v549 = vpack.c.b16 %v469, %v468
  %v550 = vpack.c.b16 %v471, %v470
  %v551 = vpack.c.b16 %v473, %v472
  %v552 = vpack.c.b16 %v475, %v474
  %v553 = vpack.c.b16 %v477, %v476
  %v554 = vpack.c.b16 %v479, %v478
  %v555 = vpack.c.b16 %v481, %v480
  %v556 = vpack.c.b16 %v483, %v482
  %v557 = vpack.c.b16 %v485, %v484
  %630 = vmatpush.bf16.msra.mxu0 %v493
  %631 = vmatpush.bf16.msra.mxu0 %v492
  %632 = vmatpush.bf16.msra.mxu0 %v491
  %633 = vmatpush.bf16.msra.mxu0 %v490
  %634 = vmatpush.bf16.msra.mxu0 %v489
  %635 = vmatpush.bf16.msra.mxu0 %v488
  %636 = vmatpush.bf16.msra.mxu0 %v487
  %637 = vmatpush.bf16.msra.mxu0 %v486
  %638 = vmatmul.bf16.gmra.mxu0 %v180
  %v639 = vpop.f32.mrf.mxu0
  %v640 = vadd.f32 0.0, %v639
  %v641 = vpop.f32.mrf.mxu0
  %642 = vdwg.mxu0
  %643 = vmatpush.bf16.msra.mxu0 %v501
  %644 = vmatpush.bf16.msra.mxu0 %v500
  %645 = vmatpush.bf16.msra.mxu0 %v499
  %646 = vmatpush.bf16.msra.mxu0 %v498
  %647 = vmatpush.bf16.msra.mxu0 %v497
  %648 = vmatpush.bf16.msra.mxu0 %v496
  %649 = vmatpush.bf16.msra.mxu0 %v495
  %650 = vmatpush.bf16.msra.mxu0 %v494
  %651 = vmatmul.bf16.gmra.mxu0 %v181
  %v652 = vpop.f32.mrf.mxu0
  %v653 = vadd.f32 %v640, %v652
  %v654 = vpop.f32.mrf.mxu0
  %655 = vdwg.mxu0
  %656 = vmatpush.bf16.msra.mxu0 %v509
  %657 = vmatpush.bf16.msra.mxu0 %v508
  %658 = vmatpush.bf16.msra.mxu0 %v507
  %659 = vmatpush.bf16.msra.mxu0 %v506
  %660 = vmatpush.bf16.msra.mxu0 %v505
  %661 = vmatpush.bf16.msra.mxu0 %v504
  %662 = vmatpush.bf16.msra.mxu0 %v503
  %663 = vmatpush.bf16.msra.mxu0 %v502
  %664 = vmatmul.bf16.gmra.mxu0 %v182
  %v665 = vpop.f32.mrf.mxu0
  %v666 = vadd.f32 %v653, %v665
  %v667 = vpop.f32.mrf.mxu0
  %668 = vdwg.mxu0
  %669 = vmatpush.bf16.msra.mxu0 %v517
  %670 = vmatpush.bf16.msra.mxu0 %v516
  %671 = vmatpush.bf16.msra.mxu0 %v515
  %672 = vmatpush.bf16.msra.mxu0 %v514
  %673 = vmatpush.bf16.msra.mxu0 %v513
  %674 = vmatpush.bf16.msra.mxu0 %v512
  %675 = vmatpush.bf16.msra.mxu0 %v511
  %676 = vmatpush.bf16.msra.mxu0 %v510
  %677 = vmatmul.bf16.gmra.mxu0 %v183
  %v678 = vpop.f32.mrf.mxu0
  %v679 = vadd.f32 %v666, %v678
  %v680 = vpop.f32.mrf.mxu0
  %681 = vdwg.mxu0
  %682 = vmatpush.bf16.msra.mxu0 %v525
  %683 = vmatpush.bf16.msra.mxu0 %v524
  %684 = vmatpush.bf16.msra.mxu0 %v523
  %685 = vmatpush.bf16.msra.mxu0 %v522
  %686 = vmatpush.bf16.msra.mxu0 %v521
  %687 = vmatpush.bf16.msra.mxu0 %v520
  %688 = vmatpush.bf16.msra.mxu0 %v519
  %689 = vmatpush.bf16.msra.mxu0 %v518
  %690 = vmatmul.bf16.gmra.mxu0 %v184
  %v691 = vpop.f32.mrf.mxu0
  %v692 = vadd.f32 %v679, %v691
  %v693 = vpop.f32.mrf.mxu0
  %694 = vdwg.mxu0
  %695 = vmatpush.bf16.msra.mxu0 %v533
  %696 = vmatpush.bf16.msra.mxu0 %v532
  %697 = vmatpush.bf16.msra.mxu0 %v531
  %698 = vmatpush.bf16.msra.mxu0 %v530
  %699 = vmatpush.bf16.msra.mxu0 %v529
  %700 = vmatpush.bf16.msra.mxu0 %v528
  %701 = vmatpush.bf16.msra.mxu0 %v527
  %702 = vmatpush.bf16.msra.mxu0 %v526
  %703 = vmatmul.bf16.gmra.mxu0 %v185
  %v704 = vpop.f32.mrf.mxu0
  %v705 = vadd.f32 %v692, %v704
  %v706 = vpop.f32.mrf.mxu0
  %707 = vdwg.mxu0
  %708 = vmatpush.bf16.msra.mxu0 %v541
  %709 = vmatpush.bf16.msra.mxu0 %v540
  %710 = vmatpush.bf16.msra.mxu0 %v539
  %711 = vmatpush.bf16.msra.mxu0 %v538
  %712 = vmatpush.bf16.msra.mxu0 %v537
  %713 = vmatpush.bf16.msra.mxu0 %v536
  %714 = vmatpush.bf16.msra.mxu0 %v535
  %715 = vmatpush.bf16.msra.mxu0 %v534
  %716 = vmatmul.bf16.gmra.mxu0 %v186
  %v717 = vpop.f32.mrf.mxu0
  %v718 = vadd.f32 %v705, %v717
  %v719 = vpop.f32.mrf.mxu0
  %720 = vdwg.mxu0
  %721 = vmatpush.bf16.msra.mxu0 %v549
  %722 = vmatpush.bf16.msra.mxu0 %v548
  %723 = vmatpush.bf16.msra.mxu0 %v547
  %724 = vmatpush.bf16.msra.mxu0 %v546
  %725 = vmatpush.bf16.msra.mxu0 %v545
  %726 = vmatpush.bf16.msra.mxu0 %v544
  %727 = vmatpush.bf16.msra.mxu0 %v543
  %728 = vmatpush.bf16.msra.mxu0 %v542
  %729 = vmatmul.bf16.gmra.mxu0 %v187
  %v730 = vpop.f32.mrf.mxu0
  %v731 = vadd.f32 %v718, %v730
  %v732 = vpop.f32.mrf.mxu0
  %733 = vdwg.mxu0
  %734 = vmatpush.bf16.msra.mxu0 %v557
  %735 = vmatpush.bf16.msra.mxu0 %v556
  %736 = vmatpush.bf16.msra.mxu0 %v555
  %737 = vmatpush.bf16.msra.mxu0 %v554
  %738 = vmatpush.bf16.msra.mxu0 %v553
  %739 = vmatpush.bf16.msra.mxu0 %v552
  %740 = vmatpush.bf16.msra.mxu0 %v551
  %741 = vmatpush.bf16.msra.mxu0 %v550
  %742 = vmatmul.bf16.gmra.mxu0 %v188
  %v743 = vpop.f32.mrf.mxu0
  %v744 = vadd.f32 %v731, %v743
  %v745 = vpop.f32.mrf.mxu0
  %746 = vdwg.mxu0
  %v747 = vld [vmem:[%s2] sm:$0x1]
  %v749 = vperm.slane %v747, 0
  %v751 = vmul.f32 %v744, %v749
  %v752 = vld [vmem:[%s3] sm:$0x1]
  %v754 = vperm.slane %v752, 0
  %v756 = vadd.f32 %v751, %v754
  %v757 = vmax.f32 %v756, 0.0
  %v758 = vpack.c.bf16 %v757, %v757
  %759 = vst [vmem:[%s4] sm:$0xf] %v758
  // Predicated region
  $region18: #{forward.22} parent=0 // pred_check
    _
  $region19: #{forward.22} parent=0 // pred_check_branch
    %761 = sbr.rel (0) target = $region21
  $region20: #{forward.22} parent=0 // pred_region
    _
  $region21: #{forward.22} parent=0 // pred_fallthru
    _
  // Predicated region
  $region22: #{forward.22} parent=0 // pred_check
    _
  $region23: #{forward.22} parent=0 // pred_check_branch
    %763 = sbr.rel (0) target = $region25
  $region24: #{forward.22} parent=0 // pred_region
    _
  $region25: #{forward.22} parent=0 // pred_fallthru
    _

// kernel: forward.23
$region0: #{forward.23}
  #allocation0 [shape = 'u32[]', space=smem, size = 0x4, offset = 0x4, fixed_abs, tag = 'smem constant byte address 0x4 - core index']
  #allocation1 [shape = 'u32[72,128]{1,0:T(1,128)}', space=vmem, size = 0x9000, scoped, tag = 'internal scratch']
  %s0 = inlined_call_operand.vmem [shape: bf16[8,128], index: 0, kind: input, shape index: {}]
  %s1 = inlined_call_operand.vmem [shape: bf16[128,128], index: 1, kind: input, shape index: {}]
  %s2 = inlined_call_operand.vmem [shape: f32[1,128], index: 2, kind: input, shape index: {}]
  %s3 = inlined_call_operand.vmem [shape: f32[1,128], index: 3, kind: input, shape index: {}]
  %s4 = inlined_call_operand.vmem [shape: bf16[8,128], index: 4, kind: output, shape index: {}]
  %s5 = sld [smem:[#allocation0]]
  $region26: #{forward.23} parent=0
    _
  %s7 = ssub.s32 1, %s5
  %s8 = scalar_select 0, %s7, %s5
  // Predicated region
  $region2: #{forward.23} parent=0 // pred_check
    _
  $region3: #{forward.23} parent=0 // pred_check_branch
    %10 = sbr.rel (0) target = $region5
  $region4: #{forward.23} parent=0 // pred_region
    _
  $region5: #{forward.23} parent=0 // pred_fallthru
    _
  // Predicated region
  $region6: #{forward.23} parent=0 // pred_check
    _
  $region7: #{forward.23} parent=0 // pred_check_branch
    %12 = sbr.rel (0) target = $region9
  $region8: #{forward.23} parent=0 // pred_region
    _
  $region9: #{forward.23} parent=0 // pred_fallthru
    _
  // Predicated region
  $region10: #{forward.23} parent=0 // pred_check
    _
  $region11: #{forward.23} parent=0 // pred_check_branch
    %14 = sbr.rel (0) target = $region13
  $region12: #{forward.23} parent=0 // pred_region
    _
  $region13: #{forward.23} parent=0 // pred_fallthru
    _
  // Predicated region
  $region14: #{forward.23} parent=0 // pred_check
    _
  $region15: #{forward.23} parent=0 // pred_check_branch
    %16 = sbr.rel (0) target = $region17
  $region16: #{forward.23} parent=0 // pred_region
    _
  $region17: #{forward.23} parent=0 // pred_fallthru
    _
  %v17 = vld [vmem:[%s0] sm:$0xf]
  %v18 = vld [vmem:[%s1] sm:$0xf]
  %v19 = vld [vmem:[%s1 + $0x4] sm:$0xf]
  %v20 = vld [vmem:[%s1 + $0x8] sm:$0xf]
  %v21 = vld [vmem:[%s1 + $0xc] sm:$0xf]
  %v22 = vld [vmem:[%s1 + $0x10] sm:$0xf]
  %v23 = vld [vmem:[%s1 + $0x14] sm:$0xf]
  %v24 = vld [vmem:[%s1 + $0x18] sm:$0xf]
  %v25 = vld [vmem:[%s1 + $0x1c] sm:$0xf]
  %v26 = vld [vmem:[%s1 + $0x20] sm:$0xf]
  %v27 = vld [vmem:[%s1 + $0x24] sm:$0xf]
  %v28 = vld [vmem:[%s1 + $0x28] sm:$0xf]
  %v29 = vld [vmem:[%s1 + $0x2c] sm:$0xf]
  %v30 = vld [vmem:[%s1 + $0x30] sm:$0xf]
  %v31 = vld [vmem:[%s1 + $0x34] sm:$0xf]
  %v32 = vld [vmem:[%s1 + $0x38] sm:$0xf]
  %v33 = vld [vmem:[%s1 + $0x3c] sm:$0xf]
  %v50 = vunpack.c.l.b16 %v18
  %v51 = vunpack.c.l.b16 %v19
  %v52 = vunpack.c.l.b16 %v20
  %v53 = vunpack.c.l.b16 %v21
  %v54 = vunpack.c.l.b16 %v22
  %v55 = vunpack.c.l.b16 %v23
  %v56 = vunpack.c.l.b16 %v24
  %v57 = vunpack.c.l.b16 %v25
  %v58 = vunpack.c.l.b16 %v26
  %v59 = vunpack.c.l.b16 %v27
  %v60 = vunpack.c.l.b16 %v28
  %v61 = vunpack.c.l.b16 %v29
  %v62 = vunpack.c.l.b16 %v30
  %v63 = vunpack.c.l.b16 %v31
  %v64 = vunpack.c.l.b16 %v32
  %v65 = vunpack.c.l.b16 %v33
  %v66 = vpack.c.b16 %v51, %v50
  %v67 = vpack.c.b16 %v53, %v52
  %v68 = vpack.c.b16 %v55, %v54
  %v69 = vpack.c.b16 %v57, %v56
  %v70 = vpack.c.b16 %v59, %v58
  %v71 = vpack.c.b16 %v61, %v60
  %v72 = vpack.c.b16 %v63, %v62
  %v73 = vpack.c.b16 %v65, %v64
  %82 = vmatpush.bf16.msra.mxu0 %v73
  %83 = vmatpush.bf16.msra.mxu0 %v72
  %84 = vmatpush.bf16.msra.mxu0 %v71
  %85 = vmatpush.bf16.msra.mxu0 %v70
  %86 = vmatpush.bf16.msra.mxu0 %v69
  %87 = vmatpush.bf16.msra.mxu0 %v68
  %88 = vmatpush.bf16.msra.mxu0 %v67
  %89 = vmatpush.bf16.msra.mxu0 %v66
  %90 = vmatmul.bf16.gmra.mxu0 %v17
  %v91 = vpop.f32.mrf.mxu0
  %v92 = vadd.f32 0.0, %v91
  %v93 = vpop.f32.mrf.mxu0
  %94 = vdwg.mxu0
  %v95 = vld [vmem:[%s2] sm:$0x1]
  %v97 = vperm.slane %v95, 0
  %v99 = vmul.f32 %v92, %v97
  %v100 = vld [vmem:[%s3] sm:$0x1]
  %v102 = vperm.slane %v100, 0
  %v104 = vadd.f32 %v99, %v102
  %v105 = vpack.c.bf16 %v104, %v104
  %106 = vst [vmem:[%s4] sm:$0xf] %v105
  // Predicated region
  $region18: #{forward.23} parent=0 // pred_check
    _
  $region19: #{forward.23} parent=0 // pred_check_branch
    %108 = sbr.rel (0) target = $region21
  $region20: #{forward.23} parent=0 // pred_region
    _
  $region21: #{forward.23} parent=0 // pred_fallthru
    _
  // Predicated region
  $region22: #{forward.23} parent=0 // pred_check
    _
  $region23: #{forward.23} parent=0 // pred_check_branch
    %110 = sbr.rel (0) target = $region25
  $region24: #{forward.23} parent=0 // pred_region
    _
  $region25: #{forward.23} parent=0 // pred_fallthru
    _

// kernel: forward.24
$region0: #{forward.24}
  #allocation0 [shape = 'u32[]', space=smem, size = 0x4, offset = 0x4, fixed_abs, tag = 'smem constant byte address 0x4 - core index']
  #allocation1 [shape = 'u32[72,128]{1,0:T(1,128)}', space=vmem, size = 0x9000, scoped, tag = 'internal scratch']
  %s0 = inlined_call_operand.vmem [shape: bf16[8,1152], index: 0, kind: input, shape index: {}]
  %s1 = inlined_call_operand.vmem [shape: bf16[1152,128], index: 1, kind: input, shape index: {}]
  %s2 = inlined_call_operand.vmem [shape: f32[1,128], index: 2, kind: input, shape index: {}]
  %s3 = inlined_call_operand.vmem [shape: f32[1,128], index: 3, kind: input, shape index: {}]
  %s4 = inlined_call_operand.vmem [shape: bf16[8,128], index: 4, kind: input, shape index: {}]
  %s5 = inlined_call_operand.vmem [shape: bf16[8,128], index: 5, kind: output, shape index: {}]
  %s6 = sld [smem:[#allocation0]]
  $region30: #{forward.24} parent=0
    _
  %s8 = ssub.s32 1, %s6
  %s9 = scalar_select 0, %s8, %s6
  // Predicated region
  $region2: #{forward.24} parent=0 // pred_check
    _
  $region3: #{forward.24} parent=0 // pred_check_branch
    %11 = sbr.rel (0) target = $region5
  $region4: #{forward.24} parent=0 // pred_region
    _
  $region5: #{forward.24} parent=0 // pred_fallthru
    _
  // Predicated region
  $region6: #{forward.24} parent=0 // pred_check
    _
  $region7: #{forward.24} parent=0 // pred_check_branch
    %13 = sbr.rel (0) target = $region9
  $region8: #{forward.24} parent=0 // pred_region
    _
  $region9: #{forward.24} parent=0 // pred_fallthru
    _
  // Predicated region
  $region10: #{forward.24} parent=0 // pred_check
    _
  $region11: #{forward.24} parent=0 // pred_check_branch
    %15 = sbr.rel (0) target = $region13
  $region12: #{forward.24} parent=0 // pred_region
    _
  $region13: #{forward.24} parent=0 // pred_fallthru
    _
  // Predicated region
  $region14: #{forward.24} parent=0 // pred_check
    _
  $region15: #{forward.24} parent=0 // pred_check_branch
    %17 = sbr.rel (0) target = $region17
  $region16: #{forward.24} parent=0 // pred_region
    _
  $region17: #{forward.24} parent=0 // pred_fallthru
    _
  // Predicated region
  $region18: #{forward.24} parent=0 // pred_check
    _
  $region19: #{forward.24} parent=0 // pred_check_branch
    %19 = sbr.rel (0) target = $region21
  $region20: #{forward.24} parent=0 // pred_region
    _
  $region21: #{forward.24} parent=0 // pred_fallthru
    _
  %v20 = vld [vmem:[%s0] sm:$0xff]
  %v21 = vld [vmem:[%s0 + $0x8] sm:$0xff]
  %v22 = vld [vmem:[%s0 + $0x10] sm:$0xff]
  %v23 = vld [vmem:[%s0 + $0x18] sm:$0xff]
  %v24 = vld [vmem:[%s0 + $0x20] sm:$0xf]
  %v25 = vld [vmem:[%s1] sm:$0xf]
  %v26 = vld [vmem:[%s1 + $0x4] sm:$0xf]
  %v27 = vld [vmem:[%s1 + $0x8] sm:$0xf]
  %v28 = vld [vmem:[%s1 + $0xc] sm:$0xf]
  %v29 = vld [vmem:[%s1 + $0x10] sm:$0xf]
  %v30 = vld [vmem:[%s1 + $0x14] sm:$0xf]
  %v31 = vld [vmem:[%s1 + $0x18] sm:$0xf]
  %v32 = vld [vmem:[%s1 + $0x1c] sm:$0xf]
  %v33 = vld [vmem:[%s1 + $0x20] sm:$0xf]
  %v34 = vld [vmem:[%s1 + $0x24] sm:$0xf]
  %v35 = vld [vmem:[%s1 + $0x28] sm:$0xf]
  %v36 = vld [vmem:[%s1 + $0x2c] sm:$0xf]
  %v37 = vld [vmem:[%s1 + $0x30] sm:$0xf]
  %v38 = vld [vmem:[%s1 + $0x34] sm:$0xf]
  %v39 = vld [vmem:[%s1 + $0x38] sm:$0xf]
  %v40 = vld [vmem:[%s1 + $0x3c] sm:$0xf]
  %v41 = vld [vmem:[%s1 + $0x40] sm:$0xf]
  %v42 = vld [vmem:[%s1 + $0x44] sm:$0xf]
  %v43 = vld [vmem:[%s1 + $0x48] sm:$0xf]
  %v44 = vld [vmem:[%s1 + $0x4c] sm:$0xf]
  %v45 = vld [vmem:[%s1 + $0x50] sm:$0xf]
  %v46 = vld [vmem:[%s1 + $0x54] sm:$0xf]
  %v47 = vld [vmem:[%s1 + $0x58] sm:$0xf]
  %v48 = vld [vmem:[%s1 + $0x5c] sm:$0xf]
  %v49 = vld [vmem:[%s1 + $0x60] sm:$0xf]
  %v50 = vld [vmem:[%s1 + $0x64] sm:$0xf]
  %v51 = vld [vmem:[%s1 + $0x68] sm:$0xf]
  %v52 = vld [vmem:[%s1 + $0x6c] sm:$0xf]
  %v53 = vld [vmem:[%s1 + $0x70] sm:$0xf]
  %v54 = vld [vmem:[%s1 + $0x74] sm:$0xf]
  %v55 = vld [vmem:[%s1 + $0x78] sm:$0xf]
  %v56 = vld [vmem:[%s1 + $0x7c] sm:$0xf]
  %v57 = vld [vmem:[%s1 + $0x80] sm:$0xf]
  %v58 = vld [vmem:[%s1 + $0x84] sm:$0xf]
  %v59 = vld [vmem:[%s1 + $0x88] sm:$0xf]
  %v60 = vld [vmem:[%s1 + $0x8c] sm:$0xf]
  %v61 = vld [vmem:[%s1 + $0x90] sm:$0xf]
  %v62 = vld [vmem:[%s1 + $0x94] sm:$0xf]
  %v63 = vld [vmem:[%s1 + $0x98] sm:$0xf]
  %v64 = vld [vmem:[%s1 + $0x9c] sm:$0xf]
  %v65 = vld [vmem:[%s1 + $0xa0] sm:$0xf]
  %v66 = vld [vmem:[%s1 + $0xa4] sm:$0xf]
  %v67 = vld [vmem:[%s1 + $0xa8] sm:$0xf]
  %v68 = vld [vmem:[%s1 + $0xac] sm:$0xf]
  %v69 = vld [vmem:[%s1 + $0xb0] sm:$0xf]
  %v70 = vld [vmem:[%s1 + $0xb4] sm:$0xf]
  %v71 = vld [vmem:[%s1 + $0xb8] sm:$0xf]
  %v72 = vld [vmem:[%s1 + $0xbc] sm:$0xf]
  %v73 = vld [vmem:[%s1 + $0xc0] sm:$0xf]
  %v74 = vld [vmem:[%s1 + $0xc4] sm:$0xf]
  %v75 = vld [vmem:[%s1 + $0xc8] sm:$0xf]
  %v76 = vld [vmem:[%s1 + $0xcc] sm:$0xf]
  %v77 = vld [vmem:[%s1 + $0xd0] sm:$0xf]
  %v78 = vld [vmem:[%s1 + $0xd4] sm:$0xf]
  %v79 = vld [vmem:[%s1 + $0xd8] sm:$0xf]
  %v80 = vld [vmem:[%s1 + $0xdc] sm:$0xf]
  %v81 = vld [vmem:[%s1 + $0xe0] sm:$0xf]
  %v82 = vld [vmem:[%s1 + $0xe4] sm:$0xf]
  %v83 = vld [vmem:[%s1 + $0xe8] sm:$0xf]
  %v84 = vld [vmem:[%s1 + $0xec] sm:$0xf]
  %v85 = vld [vmem:[%s1 + $0xf0] sm:$0xf]
  %v86 = vld [vmem:[%s1 + $0xf4] sm:$0xf]
  %v87 = vld [vmem:[%s1 + $0xf8] sm:$0xf]
  %v88 = vld [vmem:[%s1 + $0xfc] sm:$0xf]
  %v89 = vld [vmem:[%s1 + $0x100] sm:$0xf]
  %v90 = vld [vmem:[%s1 + $0x104] sm:$0xf]
  %v91 = vld [vmem:[%s1 + $0x108] sm:$0xf]
  %v92 = vld [vmem:[%s1 + $0x10c] sm:$0xf]
  %v93 = vld [vmem:[%s1 + $0x110] sm:$0xf]
  %v94 = vld [vmem:[%s1 + $0x114] sm:$0xf]
  %v95 = vld [vmem:[%s1 + $0x118] sm:$0xf]
  %v96 = vld [vmem:[%s1 + $0x11c] sm:$0xf]
  %v97 = vld [vmem:[%s1 + $0x120] sm:$0xf]
  %v98 = vld [vmem:[%s1 + $0x124] sm:$0xf]
  %v99 = vld [vmem:[%s1 + $0x128] sm:$0xf]
  %v100 = vld [vmem:[%s1 + $0x12c] sm:$0xf]
  %v101 = vld [vmem:[%s1 + $0x130] sm:$0xf]
  %v102 = vld [vmem:[%s1 + $0x134] sm:$0xf]
  %v103 = vld [vmem:[%s1 + $0x138] sm:$0xf]
  %v104 = vld [vmem:[%s1 + $0x13c] sm:$0xf]
  %v105 = vld [vmem:[%s1 + $0x140] sm:$0xf]
  %v106 = vld [vmem:[%s1 + $0x144] sm:$0xf]
  %v107 = vld [vmem:[%s1 + $0x148] sm:$0xf]
  %v108 = vld [vmem:[%s1 + $0x14c] sm:$0xf]
  %v109 = vld [vmem:[%s1 + $0x150] sm:$0xf]
  %v110 = vld [vmem:[%s1 + $0x154] sm:$0xf]
  %v111 = vld [vmem:[%s1 + $0x158] sm:$0xf]
  %v112 = vld [vmem:[%s1 + $0x15c] sm:$0xf]
  %v113 = vld [vmem:[%s1 + $0x160] sm:$0xf]
  %v114 = vld [vmem:[%s1 + $0x164] sm:$0xf]
  %v115 = vld [vmem:[%s1 + $0x168] sm:$0xf]
  %v116 = vld [vmem:[%s1 + $0x16c] sm:$0xf]
  %v117 = vld [vmem:[%s1 + $0x170] sm:$0xf]
  %v118 = vld [vmem:[%s1 + $0x174] sm:$0xf]
  %v119 = vld [vmem:[%s1 + $0x178] sm:$0xf]
  %v120 = vld [vmem:[%s1 + $0x17c] sm:$0xf]
  %v121 = vld [vmem:[%s1 + $0x180] sm:$0xf]
  %v122 = vld [vmem:[%s1 + $0x184] sm:$0xf]
  %v123 = vld [vmem:[%s1 + $0x188] sm:$0xf]
  %v124 = vld [vmem:[%s1 + $0x18c] sm:$0xf]
  %v125 = vld [vmem:[%s1 + $0x190] sm:$0xf]
  %v126 = vld [vmem:[%s1 + $0x194] sm:$0xf]
  %v127 = vld [vmem:[%s1 + $0x198] sm:$0xf]
  %v128 = vld [vmem:[%s1 + $0x19c] sm:$0xf]
  %v129 = vld [vmem:[%s1 + $0x1a0] sm:$0xf]
  %v130 = vld [vmem:[%s1 + $0x1a4] sm:$0xf]
  %v131 = vld [vmem:[%s1 + $0x1a8] sm:$0xf]
  %v132 = vld [vmem:[%s1 + $0x1ac] sm:$0xf]
  %v133 = vld [vmem:[%s1 + $0x1b0] sm:$0xf]
  %v134 = vld [vmem:[%s1 + $0x1b4] sm:$0xf]
  %v135 = vld [vmem:[%s1 + $0x1b8] sm:$0xf]
  %v136 = vld [vmem:[%s1 + $0x1bc] sm:$0xf]
  %v137 = vld [vmem:[%s1 + $0x1c0] sm:$0xf]
  %v138 = vld [vmem:[%s1 + $0x1c4] sm:$0xf]
  %v139 = vld [vmem:[%s1 + $0x1c8] sm:$0xf]
  %v140 = vld [vmem:[%s1 + $0x1cc] sm:$0xf]
  %v141 = vld [vmem:[%s1 + $0x1d0] sm:$0xf]
  %v142 = vld [vmem:[%s1 + $0x1d4] sm:$0xf]
  %v143 = vld [vmem:[%s1 + $0x1d8] sm:$0xf]
  %v144 = vld [vmem:[%s1 + $0x1dc] sm:$0xf]
  %v145 = vld [vmem:[%s1 + $0x1e0] sm:$0xf]
  %v146 = vld [vmem:[%s1 + $0x1e4] sm:$0xf]
  %v147 = vld [vmem:[%s1 + $0x1e8] sm:$0xf]
  %v148 = vld [vmem:[%s1 + $0x1ec] sm:$0xf]
  %v149 = vld [vmem:[%s1 + $0x1f0] sm:$0xf]
  %v150 = vld [vmem:[%s1 + $0x1f4] sm:$0xf]
  %v151 = vld [vmem:[%s1 + $0x1f8] sm:$0xf]
  %v152 = vld [vmem:[%s1 + $0x1fc] sm:$0xf]
  %v153 = vld [vmem:[%s1 + $0x200] sm:$0xf]
  %v154 = vld [vmem:[%s1 + $0x204] sm:$0xf]
  %v155 = vld [vmem:[%s1 + $0x208] sm:$0xf]
  %v156 = vld [vmem:[%s1 + $0x20c] sm:$0xf]
  %v157 = vld [vmem:[%s1 + $0x210] sm:$0xf]
  %v158 = vld [vmem:[%s1 + $0x214] sm:$0xf]
  %v159 = vld [vmem:[%s1 + $0x218] sm:$0xf]
  %v160 = vld [vmem:[%s1 + $0x21c] sm:$0xf]
  %v161 = vld [vmem:[%s1 + $0x220] sm:$0xf]
  %v162 = vld [vmem:[%s1 + $0x224] sm:$0xf]
  %v163 = vld [vmem:[%s1 + $0x228] sm:$0xf]
  %v164 = vld [vmem:[%s1 + $0x22c] sm:$0xf]
  %v165 = vld [vmem:[%s1 + $0x230] sm:$0xf]
  %v166 = vld [vmem:[%s1 + $0x234] sm:$0xf]
  %v167 = vld [vmem:[%s1 + $0x238] sm:$0xf]
  %v168 = vld [vmem:[%s1 + $0x23c] sm:$0xf]
  %v174 = vunpack.c.l.b16 %v20
  %v175 = vunpack.c.h.b16 %v20
  %v176 = vunpack.c.l.b16 %v21
  %v177 = vunpack.c.h.b16 %v21
  %v178 = vunpack.c.l.b16 %v22
  %v179 = vunpack.c.h.b16 %v22
  %v180 = vunpack.c.l.b16 %v23
  %v181 = vunpack.c.h.b16 %v23
  %v182 = vunpack.c.l.b16 %v24
  %v183 = vpack.c.b16 %v174, %v174
  %v184 = vpack.c.b16 %v175, %v175
  %v185 = vpack.c.b16 %v176, %v176
  %v186 = vpack.c.b16 %v177, %v177
  %v187 = vpack.c.b16 %v178, %v178
  %v188 = vpack.c.b16 %v179, %v179
  %v189 = vpack.c.b16 %v180, %v180
  %v190 = vpack.c.b16 %v181, %v181
  %v191 = vpack.c.b16 %v182, %v182
  %v345 = vunpack.c.l.b16 %v25
  %v346 = vunpack.c.l.b16 %v26
  %v347 = vunpack.c.l.b16 %v27
  %v348 = vunpack.c.l.b16 %v28
  %v349 = vunpack.c.l.b16 %v29
  %v350 = vunpack.c.l.b16 %v30
  %v351 = vunpack.c.l.b16 %v31
  %v352 = vunpack.c.l.b16 %v32
  %v353 = vunpack.c.l.b16 %v33
  %v354 = vunpack.c.l.b16 %v34
  %v355 = vunpack.c.l.b16 %v35
  %v356 = vunpack.c.l.b16 %v36
  %v357 = vunpack.c.l.b16 %v37
  %v358 = vunpack.c.l.b16 %v38
  %v359 = vunpack.c.l.b16 %v39
  %v360 = vunpack.c.l.b16 %v40
  %v361 = vunpack.c.l.b16 %v41
  %v362 = vunpack.c.l.b16 %v42
  %v363 = vunpack.c.l.b16 %v43
  %v364 = vunpack.c.l.b16 %v44
  %v365 = vunpack.c.l.b16 %v45
  %v366 = vunpack.c.l.b16 %v46
  %v367 = vunpack.c.l.b16 %v47
  %v368 = vunpack.c.l.b16 %v48
  %v369 = vunpack.c.l.b16 %v49
  %v370 = vunpack.c.l.b16 %v50
  %v371 = vunpack.c.l.b16 %v51
  %v372 = vunpack.c.l.b16 %v52
  %v373 = vunpack.c.l.b16 %v53
  %v374 = vunpack.c.l.b16 %v54
  %v375 = vunpack.c.l.b16 %v55
  %v376 = vunpack.c.l.b16 %v56
  %v377 = vunpack.c.l.b16 %v57
  %v378 = vunpack.c.l.b16 %v58
  %v379 = vunpack.c.l.b16 %v59
  %v380 = vunpack.c.l.b16 %v60
  %v381 = vunpack.c.l.b16 %v61
  %v382 = vunpack.c.l.b16 %v62
  %v383 = vunpack.c.l.b16 %v63
  %v384 = vunpack.c.l.b16 %v64
  %v385 = vunpack.c.l.b16 %v65
  %v386 = vunpack.c.l.b16 %v66
  %v387 = vunpack.c.l.b16 %v67
  %v388 = vunpack.c.l.b16 %v68
  %v389 = vunpack.c.l.b16 %v69
  %v390 = vunpack.c.l.b16 %v70
  %v391 = vunpack.c.l.b16 %v71
  %v392 = vunpack.c.l.b16 %v72
  %v393 = vunpack.c.l.b16 %v73
  %v394 = vunpack.c.l.b16 %v74
  %v395 = vunpack.c.l.b16 %v75
  %v396 = vunpack.c.l.b16 %v76
  %v397 = vunpack.c.l.b16 %v77
  %v398 = vunpack.c.l.b16 %v78
  %v399 = vunpack.c.l.b16 %v79
  %v400 = vunpack.c.l.b16 %v80
  %v401 = vunpack.c.l.b16 %v81
  %v402 = vunpack.c.l.b16 %v82
  %v403 = vunpack.c.l.b16 %v83
  %v404 = vunpack.c.l.b16 %v84
  %v405 = vunpack.c.l.b16 %v85
  %v406 = vunpack.c.l.b16 %v86
  %v407 = vunpack.c.l.b16 %v87
  %v408 = vunpack.c.l.b16 %v88
  %v409 = vunpack.c.l.b16 %v89
  %v410 = vunpack.c.l.b16 %v90
  %v411 = vunpack.c.l.b16 %v91
  %v412 = vunpack.c.l.b16 %v92
  %v413 = vunpack.c.l.b16 %v93
  %v414 = vunpack.c.l.b16 %v94
  %v415 = vunpack.c.l.b16 %v95
  %v416 = vunpack.c.l.b16 %v96
  %v417 = vunpack.c.l.b16 %v97
  %v418 = vunpack.c.l.b16 %v98
  %v419 = vunpack.c.l.b16 %v99
  %v420 = vunpack.c.l.b16 %v100
  %v421 = vunpack.c.l.b16 %v101
  %v422 = vunpack.c.l.b16 %v102
  %v423 = vunpack.c.l.b16 %v103
  %v424 = vunpack.c.l.b16 %v104
  %v425 = vunpack.c.l.b16 %v105
  %v426 = vunpack.c.l.b16 %v106
  %v427 = vunpack.c.l.b16 %v107
  %v428 = vunpack.c.l.b16 %v108
  %v429 = vunpack.c.l.b16 %v109
  %v430 = vunpack.c.l.b16 %v110
  %v431 = vunpack.c.l.b16 %v111
  %v432 = vunpack.c.l.b16 %v112
  %v433 = vunpack.c.l.b16 %v113
  %v434 = vunpack.c.l.b16 %v114
  %v435 = vunpack.c.l.b16 %v115
  %v436 = vunpack.c.l.b16 %v116
  %v437 = vunpack.c.l.b16 %v117
  %v438 = vunpack.c.l.b16 %v118
  %v439 = vunpack.c.l.b16 %v119
  %v440 = vunpack.c.l.b16 %v120
  %v441 = vunpack.c.l.b16 %v121
  %v442 = vunpack.c.l.b16 %v122
  %v443 = vunpack.c.l.b16 %v123
  %v444 = vunpack.c.l.b16 %v124
  %v445 = vunpack.c.l.b16 %v125
  %v446 = vunpack.c.l.b16 %v126
  %v447 = vunpack.c.l.b16 %v127
  %v448 = vunpack.c.l.b16 %v128
  %v449 = vunpack.c.l.b16 %v129
  %v450 = vunpack.c.l.b16 %v130
  %v451 = vunpack.c.l.b16 %v131
  %v452 = vunpack.c.l.b16 %v132
  %v453 = vunpack.c.l.b16 %v133
  %v454 = vunpack.c.l.b16 %v134
  %v455 = vunpack.c.l.b16 %v135
  %v456 = vunpack.c.l.b16 %v136
  %v457 = vunpack.c.l.b16 %v137
  %v458 = vunpack.c.l.b16 %v138
  %v459 = vunpack.c.l.b16 %v139
  %v460 = vunpack.c.l.b16 %v140
  %v461 = vunpack.c.l.b16 %v141
  %v462 = vunpack.c.l.b16 %v142
  %v463 = vunpack.c.l.b16 %v143
  %v464 = vunpack.c.l.b16 %v144
  %v465 = vunpack.c.l.b16 %v145
  %v466 = vunpack.c.l.b16 %v146
  %v467 = vunpack.c.l.b16 %v147
  %v468 = vunpack.c.l.b16 %v148
  %v469 = vunpack.c.l.b16 %v149
  %v470 = vunpack.c.l.b16 %v150
  %v471 = vunpack.c.l.b16 %v151
  %v472 = vunpack.c.l.b16 %v152
  %v473 = vunpack.c.l.b16 %v153
  %v474 = vunpack.c.l.b16 %v154
  %v475 = vunpack.c.l.b16 %v155
  %v476 = vunpack.c.l.b16 %v156
  %v477 = vunpack.c.l.b16 %v157
  %v478 = vunpack.c.l.b16 %v158
  %v479 = vunpack.c.l.b16 %v159
  %v480 = vunpack.c.l.b16 %v160
  %v481 = vunpack.c.l.b16 %v161
  %v482 = vunpack.c.l.b16 %v162
  %v483 = vunpack.c.l.b16 %v163
  %v484 = vunpack.c.l.b16 %v164
  %v485 = vunpack.c.l.b16 %v165
  %v486 = vunpack.c.l.b16 %v166
  %v487 = vunpack.c.l.b16 %v167
  %v488 = vunpack.c.l.b16 %v168
  %v489 = vpack.c.b16 %v346, %v345
  %v490 = vpack.c.b16 %v348, %v347
  %v491 = vpack.c.b16 %v350, %v349
  %v492 = vpack.c.b16 %v352, %v351
  %v493 = vpack.c.b16 %v354, %v353
  %v494 = vpack.c.b16 %v356, %v355
  %v495 = vpack.c.b16 %v358, %v357
  %v496 = vpack.c.b16 %v360, %v359
  %v497 = vpack.c.b16 %v362, %v361
  %v498 = vpack.c.b16 %v364, %v363
  %v499 = vpack.c.b16 %v366, %v365
  %v500 = vpack.c.b16 %v368, %v367
  %v501 = vpack.c.b16 %v370, %v369
  %v502 = vpack.c.b16 %v372, %v371
  %v503 = vpack.c.b16 %v374, %v373
  %v504 = vpack.c.b16 %v376, %v375
  %v505 = vpack.c.b16 %v378, %v377
  %v506 = vpack.c.b16 %v380, %v379
  %v507 = vpack.c.b16 %v382, %v381
  %v508 = vpack.c.b16 %v384, %v383
  %v509 = vpack.c.b16 %v386, %v385
  %v510 = vpack.c.b16 %v388, %v387
  %v511 = vpack.c.b16 %v390, %v389
  %v512 = vpack.c.b16 %v392, %v391
  %v513 = vpack.c.b16 %v394, %v393
  %v514 = vpack.c.b16 %v396, %v395
  %v515 = vpack.c.b16 %v398, %v397
  %v516 = vpack.c.b16 %v400, %v399
  %v517 = vpack.c.b16 %v402, %v401
  %v518 = vpack.c.b16 %v404, %v403
  %v519 = vpack.c.b16 %v406, %v405
  %v520 = vpack.c.b16 %v408, %v407
  %v521 = vpack.c.b16 %v410, %v409
  %v522 = vpack.c.b16 %v412, %v411
  %v523 = vpack.c.b16 %v414, %v413
  %v524 = vpack.c.b16 %v416, %v415
  %v525 = vpack.c.b16 %v418, %v417
  %v526 = vpack.c.b16 %v420, %v419
  %v527 = vpack.c.b16 %v422, %v421
  %v528 = vpack.c.b16 %v424, %v423
  %v529 = vpack.c.b16 %v426, %v425
  %v530 = vpack.c.b16 %v428, %v427
  %v531 = vpack.c.b16 %v430, %v429
  %v532 = vpack.c.b16 %v432, %v431
  %v533 = vpack.c.b16 %v434, %v433
  %v534 = vpack.c.b16 %v436, %v435
  %v535 = vpack.c.b16 %v438, %v437
  %v536 = vpack.c.b16 %v440, %v439
  %v537 = vpack.c.b16 %v442, %v441
  %v538 = vpack.c.b16 %v444, %v443
  %v539 = vpack.c.b16 %v446, %v445
  %v540 = vpack.c.b16 %v448, %v447
  %v541 = vpack.c.b16 %v450, %v449
  %v542 = vpack.c.b16 %v452, %v451
  %v543 = vpack.c.b16 %v454, %v453
  %v544 = vpack.c.b16 %v456, %v455
  %v545 = vpack.c.b16 %v458, %v457
  %v546 = vpack.c.b16 %v460, %v459
  %v547 = vpack.c.b16 %v462, %v461
  %v548 = vpack.c.b16 %v464, %v463
  %v549 = vpack.c.b16 %v466, %v465
  %v550 = vpack.c.b16 %v468, %v467
  %v551 = vpack.c.b16 %v470, %v469
  %v552 = vpack.c.b16 %v472, %v471
  %v553 = vpack.c.b16 %v474, %v473
  %v554 = vpack.c.b16 %v476, %v475
  %v555 = vpack.c.b16 %v478, %v477
  %v556 = vpack.c.b16 %v480, %v479
  %v557 = vpack.c.b16 %v482, %v481
  %v558 = vpack.c.b16 %v484, %v483
  %v559 = vpack.c.b16 %v486, %v485
  %v560 = vpack.c.b16 %v488, %v487
  %633 = vmatpush.bf16.msra.mxu0 %v496
  %634 = vmatpush.bf16.msra.mxu0 %v495
  %635 = vmatpush.bf16.msra.mxu0 %v494
  %636 = vmatpush.bf16.msra.mxu0 %v493
  %637 = vmatpush.bf16.msra.mxu0 %v492
  %638 = vmatpush.bf16.msra.mxu0 %v491
  %639 = vmatpush.bf16.msra.mxu0 %v490
  %640 = vmatpush.bf16.msra.mxu0 %v489
  %641 = vmatmul.bf16.gmra.mxu0 %v183
  %v642 = vpop.f32.mrf.mxu0
  %v643 = vadd.f32 0.0, %v642
  %v644 = vpop.f32.mrf.mxu0
  %645 = vdwg.mxu0
  %646 = vmatpush.bf16.msra.mxu0 %v504
  %647 = vmatpush.bf16.msra.mxu0 %v503
  %648 = vmatpush.bf16.msra.mxu0 %v502
  %649 = vmatpush.bf16.msra.mxu0 %v501
  %650 = vmatpush.bf16.msra.mxu0 %v500
  %651 = vmatpush.bf16.msra.mxu0 %v499
  %652 = vmatpush.bf16.msra.mxu0 %v498
  %653 = vmatpush.bf16.msra.mxu0 %v497
  %654 = vmatmul.bf16.gmra.mxu0 %v184
  %v655 = vpop.f32.mrf.mxu0
  %v656 = vadd.f32 %v643, %v655
  %v657 = vpop.f32.mrf.mxu0
  %658 = vdwg.mxu0
  %659 = vmatpush.bf16.msra.mxu0 %v512
  %660 = vmatpush.bf16.msra.mxu0 %v511
  %661 = vmatpush.bf16.msra.mxu0 %v510
  %662 = vmatpush.bf16.msra.mxu0 %v509
  %663 = vmatpush.bf16.msra.mxu0 %v508
  %664 = vmatpush.bf16.msra.mxu0 %v507
  %665 = vmatpush.bf16.msra.mxu0 %v506
  %666 = vmatpush.bf16.msra.mxu0 %v505
  %667 = vmatmul.bf16.gmra.mxu0 %v185
  %v668 = vpop.f32.mrf.mxu0
  %v669 = vadd.f32 %v656, %v668
  %v670 = vpop.f32.mrf.mxu0
  %671 = vdwg.mxu0
  %672 = vmatpush.bf16.msra.mxu0 %v520
  %673 = vmatpush.bf16.msra.mxu0 %v519
  %674 = vmatpush.bf16.msra.mxu0 %v518
  %675 = vmatpush.bf16.msra.mxu0 %v517
  %676 = vmatpush.bf16.msra.mxu0 %v516
  %677 = vmatpush.bf16.msra.mxu0 %v515
  %678 = vmatpush.bf16.msra.mxu0 %v514
  %679 = vmatpush.bf16.msra.mxu0 %v513
  %680 = vmatmul.bf16.gmra.mxu0 %v186
  %v681 = vpop.f32.mrf.mxu0
  %v682 = vadd.f32 %v669, %v681
  %v683 = vpop.f32.mrf.mxu0
  %684 = vdwg.mxu0
  %685 = vmatpush.bf16.msra.mxu0 %v528
  %686 = vmatpush.bf16.msra.mxu0 %v527
  %687 = vmatpush.bf16.msra.mxu0 %v526
  %688 = vmatpush.bf16.msra.mxu0 %v525
  %689 = vmatpush.bf16.msra.mxu0 %v524
  %690 = vmatpush.bf16.msra.mxu0 %v523
  %691 = vmatpush.bf16.msra.mxu0 %v522
  %692 = vmatpush.bf16.msra.mxu0 %v521
  %693 = vmatmul.bf16.gmra.mxu0 %v187
  %v694 = vpop.f32.mrf.mxu0
  %v695 = vadd.f32 %v682, %v694
  %v696 = vpop.f32.mrf.mxu0
  %697 = vdwg.mxu0
  %698 = vmatpush.bf16.msra.mxu0 %v536
  %699 = vmatpush.bf16.msra.mxu0 %v535
  %700 = vmatpush.bf16.msra.mxu0 %v534
  %701 = vmatpush.bf16.msra.mxu0 %v533
  %702 = vmatpush.bf16.msra.mxu0 %v532
  %703 = vmatpush.bf16.msra.mxu0 %v531
  %704 = vmatpush.bf16.msra.mxu0 %v530
  %705 = vmatpush.bf16.msra.mxu0 %v529
  %706 = vmatmul.bf16.gmra.mxu0 %v188
  %v707 = vpop.f32.mrf.mxu0
  %v708 = vadd.f32 %v695, %v707
  %v709 = vpop.f32.mrf.mxu0
  %710 = vdwg.mxu0
  %711 = vmatpush.bf16.msra.mxu0 %v544
  %712 = vmatpush.bf16.msra.mxu0 %v543
  %713 = vmatpush.bf16.msra.mxu0 %v542
  %714 = vmatpush.bf16.msra.mxu0 %v541
  %715 = vmatpush.bf16.msra.mxu0 %v540
  %716 = vmatpush.bf16.msra.mxu0 %v539
  %717 = vmatpush.bf16.msra.mxu0 %v538
  %718 = vmatpush.bf16.msra.mxu0 %v537
  %719 = vmatmul.bf16.gmra.mxu0 %v189
  %v720 = vpop.f32.mrf.mxu0
  %v721 = vadd.f32 %v708, %v720
  %v722 = vpop.f32.mrf.mxu0
  %723 = vdwg.mxu0
  %724 = vmatpush.bf16.msra.mxu0 %v552
  %725 = vmatpush.bf16.msra.mxu0 %v551
  %726 = vmatpush.bf16.msra.mxu0 %v550
  %727 = vmatpush.bf16.msra.mxu0 %v549
  %728 = vmatpush.bf16.msra.mxu0 %v548
  %729 = vmatpush.bf16.msra.mxu0 %v547
  %730 = vmatpush.bf16.msra.mxu0 %v546
  %731 = vmatpush.bf16.msra.mxu0 %v545
  %732 = vmatmul.bf16.gmra.mxu0 %v190
  %v733 = vpop.f32.mrf.mxu0
  %v734 = vadd.f32 %v721, %v733
  %v735 = vpop.f32.mrf.mxu0
  %736 = vdwg.mxu0
  %737 = vmatpush.bf16.msra.mxu0 %v560
  %738 = vmatpush.bf16.msra.mxu0 %v559
  %739 = vmatpush.bf16.msra.mxu0 %v558
  %740 = vmatpush.bf16.msra.mxu0 %v557
  %741 = vmatpush.bf16.msra.mxu0 %v556
  %742 = vmatpush.bf16.msra.mxu0 %v555
  %743 = vmatpush.bf16.msra.mxu0 %v554
  %744 = vmatpush.bf16.msra.mxu0 %v553
  %745 = vmatmul.bf16.gmra.mxu0 %v191
  %v746 = vpop.f32.mrf.mxu0
  %v747 = vadd.f32 %v734, %v746
  %v748 = vpop.f32.mrf.mxu0
  %749 = vdwg.mxu0
  %v750 = vld [vmem:[%s2] sm:$0x1]
  %v752 = vperm.slane %v750, 0
  %v754 = vmul.f32 %v747, %v752
  %v755 = vld [vmem:[%s3] sm:$0x1]
  %v757 = vperm.slane %v755, 0
  %v759 = vadd.f32 %v754, %v757
  %v760 = vld [vmem:[%s4] sm:$0xf]
  %v761 = vunpack.c.l.bf16 %v760
  %v762 = vadd.f32 %v759, %v761
  %v763 = vmax.f32 %v762, 0.0
  %v764 = vpack.c.bf16 %v763, %v763
  %765 = vst [vmem:[%s5] sm:$0xf] %v764
  // Predicated region
  $region22: #{forward.24} parent=0 // pred_check
    _
  $region23: #{forward.24} parent=0 // pred_check_branch
    %767 = sbr.rel (0) target = $region25
  $region24: #{forward.24} parent=0 // pred_region
    _
  $region25: #{forward.24} parent=0 // pred_fallthru
    _
  // Predicated region
  $region26: #{forward.24} parent=0 // pred_check
    _
  $region27: #{forward.24} parent=0 // pred_check_branch
    %769 = sbr.rel (0) target = $region29
  $region28: #{forward.24} parent=0 // pred_region
    _
  $region29: #{forward.24} parent=0 // pred_fallthru
    _

// kernel: forward.25
$region0: #{forward.25}
  #allocation0 [shape = 'u32[]', space=smem, size = 0x4, offset = 0x4, fixed_abs, tag = 'smem constant byte address 0x4 - core index']
  #allocation1 [shape = 'u32[72,128]{1,0:T(1,128)}', space=vmem, size = 0x9000, scoped, tag = 'internal scratch']
  %s0 = inlined_call_operand.vmem [shape: bf16[2,128], index: 0, kind: input, shape index: {}]
  %s1 = inlined_call_operand.vmem [shape: bf16[128,128], index: 1, kind: input, shape index: {}]
  %s2 = inlined_call_operand.vmem [shape: f32[1,128], index: 2, kind: input, shape index: {}]
  %s3 = inlined_call_operand.vmem [shape: f32[1,128], index: 3, kind: input, shape index: {}]
  %s4 = inlined_call_operand.vmem [shape: bf16[2,128], index: 4, kind: output, shape index: {}]
  %s5 = sld [smem:[#allocation0]]
  $region26: #{forward.25} parent=0
    _
  %s7 = ssub.s32 1, %s5
  %s8 = scalar_select 0, %s7, %s5
  // Predicated region
  $region2: #{forward.25} parent=0 // pred_check
    _
  $region3: #{forward.25} parent=0 // pred_check_branch
    %10 = sbr.rel (0) target = $region5
  $region4: #{forward.25} parent=0 // pred_region
    _
  $region5: #{forward.25} parent=0 // pred_fallthru
    _
  // Predicated region
  $region6: #{forward.25} parent=0 // pred_check
    _
  $region7: #{forward.25} parent=0 // pred_check_branch
    %12 = sbr.rel (0) target = $region9
  $region8: #{forward.25} parent=0 // pred_region
    _
  $region9: #{forward.25} parent=0 // pred_fallthru
    _
  // Predicated region
  $region10: #{forward.25} parent=0 // pred_check
    _
  $region11: #{forward.25} parent=0 // pred_check_branch
    %14 = sbr.rel (0) target = $region13
  $region12: #{forward.25} parent=0 // pred_region
    _
  $region13: #{forward.25} parent=0 // pred_fallthru
    _
  // Predicated region
  $region14: #{forward.25} parent=0 // pred_check
    _
  $region15: #{forward.25} parent=0 // pred_check_branch
    %16 = sbr.rel (0) target = $region17
  $region16: #{forward.25} parent=0 // pred_region
    _
  $region17: #{forward.25} parent=0 // pred_fallthru
    _
  %v17 = vld [vmem:[%s0] sm:$0x1]
  %v18 = vld [vmem:[%s1] sm:$0xf]
  %v19 = vld [vmem:[%s1 + $0x4] sm:$0xf]
  %v20 = vld [vmem:[%s1 + $0x8] sm:$0xf]
  %v21 = vld [vmem:[%s1 + $0xc] sm:$0xf]
  %v22 = vld [vmem:[%s1 + $0x10] sm:$0xf]
  %v23 = vld [vmem:[%s1 + $0x14] sm:$0xf]
  %v24 = vld [vmem:[%s1 + $0x18] sm:$0xf]
  %v25 = vld [vmem:[%s1 + $0x1c] sm:$0xf]
  %v26 = vld [vmem:[%s1 + $0x20] sm:$0xf]
  %v27 = vld [vmem:[%s1 + $0x24] sm:$0xf]
  %v28 = vld [vmem:[%s1 + $0x28] sm:$0xf]
  %v29 = vld [vmem:[%s1 + $0x2c] sm:$0xf]
  %v30 = vld [vmem:[%s1 + $0x30] sm:$0xf]
  %v31 = vld [vmem:[%s1 + $0x34] sm:$0xf]
  %v32 = vld [vmem:[%s1 + $0x38] sm:$0xf]
  %v33 = vld [vmem:[%s1 + $0x3c] sm:$0xf]
  %v50 = vunpack.c.l.b16 %v18
  %v51 = vunpack.c.l.b16 %v19
  %v52 = vunpack.c.l.b16 %v20
  %v53 = vunpack.c.l.b16 %v21
  %v54 = vunpack.c.l.b16 %v22
  %v55 = vunpack.c.l.b16 %v23
  %v56 = vunpack.c.l.b16 %v24
  %v57 = vunpack.c.l.b16 %v25
  %v58 = vunpack.c.l.b16 %v26
  %v59 = vunpack.c.l.b16 %v27
  %v60 = vunpack.c.l.b16 %v28
  %v61 = vunpack.c.l.b16 %v29
  %v62 = vunpack.c.l.b16 %v30
  %v63 = vunpack.c.l.b16 %v31
  %v64 = vunpack.c.l.b16 %v32
  %v65 = vunpack.c.l.b16 %v33
  %v66 = vpack.c.b16 %v51, %v50
  %v67 = vpack.c.b16 %v53, %v52
  %v68 = vpack.c.b16 %v55, %v54
  %v69 = vpack.c.b16 %v57, %v56
  %v70 = vpack.c.b16 %v59, %v58
  %v71 = vpack.c.b16 %v61, %v60
  %v72 = vpack.c.b16 %v63, %v62
  %v73 = vpack.c.b16 %v65, %v64
  %82 = vmatpush.bf16.msra.mxu0 %v73
  %83 = vmatpush.bf16.msra.mxu0 %v72
  %84 = vmatpush.bf16.msra.mxu0 %v71
  %85 = vmatpush.bf16.msra.mxu0 %v70
  %86 = vmatpush.bf16.msra.mxu0 %v69
  %87 = vmatpush.bf16.msra.mxu0 %v68
  %88 = vmatpush.bf16.msra.mxu0 %v67
  %89 = vmatpush.bf16.msra.mxu0 %v66
  %90 = vmatmul.bf16.gmra.mxu0 %v17
  %v91 = vpop.f32.mrf.mxu0
  %v92 = vadd.f32 0.0, %v91
  %v93 = vpop.f32.mrf.mxu0
  %94 = vdwg.mxu0
  %v95 = vld [vmem:[%s2] sm:$0x1]
  %v97 = vperm.slane %v95, 0
  %v99 = vmul.f32 %v92, %v97
  %v100 = vld [vmem:[%s3] sm:$0x1]
  %v102 = vperm.slane %v100, 0
  %v104 = vadd.f32 %v99, %v102
  %v105 = vpack.c.bf16 %v104, %v104
  %106 = vst [vmem:[%s4] sm:$0x1] %v105
  // Predicated region
  $region18: #{forward.25} parent=0 // pred_check
    _
  $region19: #{forward.25} parent=0 // pred_check_branch
    %108 = sbr.rel (0) target = $region21
  $region20: #{forward.25} parent=0 // pred_region
    _
  $region21: #{forward.25} parent=0 // pred_fallthru
    _
  // Predicated region
  $region22: #{forward.25} parent=0 // pred_check
    _
  $region23: #{forward.25} parent=0 // pred_check_branch
    %110 = sbr.rel (0) target = $region25
  $region24: #{forward.25} parent=0 // pred_region
    _
  $region25: #{forward.25} parent=0 // pred_fallthru
    _

// kernel: forward.28
$region0: #{forward.28}
  #allocation0 [shape = 'u32[]', space=smem, size = 0x4, offset = 0x4, fixed_abs, tag = 'smem constant byte address 0x4 - core index']
  #allocation1 [shape = 'u32[72,128]{1,0:T(1,128)}', space=vmem, size = 0x9000, scoped, tag = 'internal scratch']
  %s0 = inlined_call_operand.vmem [shape: bf16[2,1,1,9,128], index: 0, kind: input, shape index: {}, may-alias: {0,5}]
  %s1 = inlined_call_operand.vmem [shape: bf16[2,1152], index: 1, kind: input, shape index: {}]
  %s2 = inlined_call_operand.vmem [shape: bf16[1152,128], index: 2, kind: input, shape index: {}]
  %s3 = inlined_call_operand.vmem [shape: f32[1,128], index: 3, kind: input, shape index: {}]
  %s4 = inlined_call_operand.vmem [shape: f32[1,128], index: 4, kind: input, shape index: {}]
  %s5 = inlined_call_operand.vmem [shape: bf16[2,1,1,9,128], index: 5, kind: output, shape index: {}, may-alias: {0,5}]
  %s6 = scalar_lea.vmem %s5, 4
  %s7 = sld [smem:[#allocation0]]
  $region56: #{forward.28} parent=0
    _
  %s9 = ssub.s32 1, %s7
  %s10 = scalar_select 0, %s9, %s7
  $region1: #{forward.28} parent=0
    #allocation2 [shape = 'u8[512]{0}', space=vmem, size = 0x400, scoped, tag = 'output window, operand 0, single buffered']
    // Predicated region
    $region2: #{forward.28} parent=1 // pred_check
      _
    $region3: #{forward.28} parent=1 // pred_check_branch
      %12 = sbr.rel (0) target = $region5
    $region4: #{forward.28} parent=1 // pred_region
      _
    $region5: #{forward.28} parent=1 // pred_fallthru
      _
    // Predicated region
    $region6: #{forward.28} parent=1 // pred_check
      _
    $region7: #{forward.28} parent=1 // pred_check_branch
      %14 = sbr.rel (0) target = $region9
    $region8: #{forward.28} parent=1 // pred_region
      _
    $region9: #{forward.28} parent=1 // pred_fallthru
      _
    // Predicated region
    $region10: #{forward.28} parent=1 // pred_check
      _
    $region11: #{forward.28} parent=1 // pred_check_branch
      %16 = sbr.rel (0) target = $region13
    $region12: #{forward.28} parent=1 // pred_region
      _
    $region13: #{forward.28} parent=1 // pred_fallthru
      _
    // Predicated region
    $region14: #{forward.28} parent=1 // pred_check
      _
    $region15: #{forward.28} parent=1 // pred_check_branch
      %18 = sbr.rel (0) target = $region17
    $region16: #{forward.28} parent=1 // pred_region
      _
    $region17: #{forward.28} parent=1 // pred_fallthru
      _
    %v19 = vld [vmem:[%s1] sm:$0xff]
    %v20 = vld [vmem:[%s1 + $0x8] sm:$0x1]
    %v21 = vld [vmem:[%s2] sm:$0xf]
    %v22 = vld [vmem:[%s2 + $0x4] sm:$0xf]
    %v23 = vld [vmem:[%s2 + $0x8] sm:$0xf]
    %v24 = vld [vmem:[%s2 + $0xc] sm:$0xf]
    %v25 = vld [vmem:[%s2 + $0x10] sm:$0xf]
    %v26 = vld [vmem:[%s2 + $0x14] sm:$0xf]
    %v27 = vld [vmem:[%s2 + $0x18] sm:$0xf]
    %v28 = vld [vmem:[%s2 + $0x1c] sm:$0xf]
    %v29 = vld [vmem:[%s2 + $0x20] sm:$0xf]
    %v30 = vld [vmem:[%s2 + $0x24] sm:$0xf]
    %v31 = vld [vmem:[%s2 + $0x28] sm:$0xf]
    %v32 = vld [vmem:[%s2 + $0x2c] sm:$0xf]
    %v33 = vld [vmem:[%s2 + $0x30] sm:$0xf]
    %v34 = vld [vmem:[%s2 + $0x34] sm:$0xf]
    %v35 = vld [vmem:[%s2 + $0x38] sm:$0xf]
    %v36 = vld [vmem:[%s2 + $0x3c] sm:$0xf]
    %v37 = vld [vmem:[%s2 + $0x40] sm:$0xf]
    %v38 = vld [vmem:[%s2 + $0x44] sm:$0xf]
    %v39 = vld [vmem:[%s2 + $0x48] sm:$0xf]
    %v40 = vld [vmem:[%s2 + $0x4c] sm:$0xf]
    %v41 = vld [vmem:[%s2 + $0x50] sm:$0xf]
    %v42 = vld [vmem:[%s2 + $0x54] sm:$0xf]
    %v43 = vld [vmem:[%s2 + $0x58] sm:$0xf]
    %v44 = vld [vmem:[%s2 + $0x5c] sm:$0xf]
    %v45 = vld [vmem:[%s2 + $0x60] sm:$0xf]
    %v46 = vld [vmem:[%s2 + $0x64] sm:$0xf]
    %v47 = vld [vmem:[%s2 + $0x68] sm:$0xf]
    %v48 = vld [vmem:[%s2 + $0x6c] sm:$0xf]
    %v49 = vld [vmem:[%s2 + $0x70] sm:$0xf]
    %v50 = vld [vmem:[%s2 + $0x74] sm:$0xf]
    %v51 = vld [vmem:[%s2 + $0x78] sm:$0xf]
    %v52 = vld [vmem:[%s2 + $0x7c] sm:$0xf]
    %v53 = vld [vmem:[%s2 + $0x80] sm:$0xf]
    %v54 = vld [vmem:[%s2 + $0x84] sm:$0xf]
    %v55 = vld [vmem:[%s2 + $0x88] sm:$0xf]
    %v56 = vld [vmem:[%s2 + $0x8c] sm:$0xf]
    %v57 = vld [vmem:[%s2 + $0x90] sm:$0xf]
    %v58 = vld [vmem:[%s2 + $0x94] sm:$0xf]
    %v59 = vld [vmem:[%s2 + $0x98] sm:$0xf]
    %v60 = vld [vmem:[%s2 + $0x9c] sm:$0xf]
    %v61 = vld [vmem:[%s2 + $0xa0] sm:$0xf]
    %v62 = vld [vmem:[%s2 + $0xa4] sm:$0xf]
    %v63 = vld [vmem:[%s2 + $0xa8] sm:$0xf]
    %v64 = vld [vmem:[%s2 + $0xac] sm:$0xf]
    %v65 = vld [vmem:[%s2 + $0xb0] sm:$0xf]
    %v66 = vld [vmem:[%s2 + $0xb4] sm:$0xf]
    %v67 = vld [vmem:[%s2 + $0xb8] sm:$0xf]
    %v68 = vld [vmem:[%s2 + $0xbc] sm:$0xf]
    %v69 = vld [vmem:[%s2 + $0xc0] sm:$0xf]
    %v70 = vld [vmem:[%s2 + $0xc4] sm:$0xf]
    %v71 = vld [vmem:[%s2 + $0xc8] sm:$0xf]
    %v72 = vld [vmem:[%s2 + $0xcc] sm:$0xf]
    %v73 = vld [vmem:[%s2 + $0xd0] sm:$0xf]
    %v74 = vld [vmem:[%s2 + $0xd4] sm:$0xf]
    %v75 = vld [vmem:[%s2 + $0xd8] sm:$0xf]
    %v76 = vld [vmem:[%s2 + $0xdc] sm:$0xf]
    %v77 = vld [vmem:[%s2 + $0xe0] sm:$0xf]
    %v78 = vld [vmem:[%s2 + $0xe4] sm:$0xf]
    %v79 = vld [vmem:[%s2 + $0xe8] sm:$0xf]
    %v80 = vld [vmem:[%s2 + $0xec] sm:$0xf]
    %v81 = vld [vmem:[%s2 + $0xf0] sm:$0xf]
    %v82 = vld [vmem:[%s2 + $0xf4] sm:$0xf]
    %v83 = vld [vmem:[%s2 + $0xf8] sm:$0xf]
    %v84 = vld [vmem:[%s2 + $0xfc] sm:$0xf]
    %v85 = vld [vmem:[%s2 + $0x100] sm:$0xf]
    %v86 = vld [vmem:[%s2 + $0x104] sm:$0xf]
    %v87 = vld [vmem:[%s2 + $0x108] sm:$0xf]
    %v88 = vld [vmem:[%s2 + $0x10c] sm:$0xf]
    %v89 = vld [vmem:[%s2 + $0x110] sm:$0xf]
    %v90 = vld [vmem:[%s2 + $0x114] sm:$0xf]
    %v91 = vld [vmem:[%s2 + $0x118] sm:$0xf]
    %v92 = vld [vmem:[%s2 + $0x11c] sm:$0xf]
    %v93 = vld [vmem:[%s2 + $0x120] sm:$0xf]
    %v94 = vld [vmem:[%s2 + $0x124] sm:$0xf]
    %v95 = vld [vmem:[%s2 + $0x128] sm:$0xf]
    %v96 = vld [vmem:[%s2 + $0x12c] sm:$0xf]
    %v97 = vld [vmem:[%s2 + $0x130] sm:$0xf]
    %v98 = vld [vmem:[%s2 + $0x134] sm:$0xf]
    %v99 = vld [vmem:[%s2 + $0x138] sm:$0xf]
    %v100 = vld [vmem:[%s2 + $0x13c] sm:$0xf]
    %v101 = vld [vmem:[%s2 + $0x140] sm:$0xf]
    %v102 = vld [vmem:[%s2 + $0x144] sm:$0xf]
    %v103 = vld [vmem:[%s2 + $0x148] sm:$0xf]
    %v104 = vld [vmem:[%s2 + $0x14c] sm:$0xf]
    %v105 = vld [vmem:[%s2 + $0x150] sm:$0xf]
    %v106 = vld [vmem:[%s2 + $0x154] sm:$0xf]
    %v107 = vld [vmem:[%s2 + $0x158] sm:$0xf]
    %v108 = vld [vmem:[%s2 + $0x15c] sm:$0xf]
    %v109 = vld [vmem:[%s2 + $0x160] sm:$0xf]
    %v110 = vld [vmem:[%s2 + $0x164] sm:$0xf]
    %v111 = vld [vmem:[%s2 + $0x168] sm:$0xf]
    %v112 = vld [vmem:[%s2 + $0x16c] sm:$0xf]
    %v113 = vld [vmem:[%s2 + $0x170] sm:$0xf]
    %v114 = vld [vmem:[%s2 + $0x174] sm:$0xf]
    %v115 = vld [vmem:[%s2 + $0x178] sm:$0xf]
    %v116 = vld [vmem:[%s2 + $0x17c] sm:$0xf]
    %v117 = vld [vmem:[%s2 + $0x180] sm:$0xf]
    %v118 = vld [vmem:[%s2 + $0x184] sm:$0xf]
    %v119 = vld [vmem:[%s2 + $0x188] sm:$0xf]
    %v120 = vld [vmem:[%s2 + $0x18c] sm:$0xf]
    %v121 = vld [vmem:[%s2 + $0x190] sm:$0xf]
    %v122 = vld [vmem:[%s2 + $0x194] sm:$0xf]
    %v123 = vld [vmem:[%s2 + $0x198] sm:$0xf]
    %v124 = vld [vmem:[%s2 + $0x19c] sm:$0xf]
    %v125 = vld [vmem:[%s2 + $0x1a0] sm:$0xf]
    %v126 = vld [vmem:[%s2 + $0x1a4] sm:$0xf]
    %v127 = vld [vmem:[%s2 + $0x1a8] sm:$0xf]
    %v128 = vld [vmem:[%s2 + $0x1ac] sm:$0xf]
    %v129 = vld [vmem:[%s2 + $0x1b0] sm:$0xf]
    %v130 = vld [vmem:[%s2 + $0x1b4] sm:$0xf]
    %v131 = vld [vmem:[%s2 + $0x1b8] sm:$0xf]
    %v132 = vld [vmem:[%s2 + $0x1bc] sm:$0xf]
    %v133 = vld [vmem:[%s2 + $0x1c0] sm:$0xf]
    %v134 = vld [vmem:[%s2 + $0x1c4] sm:$0xf]
    %v135 = vld [vmem:[%s2 + $0x1c8] sm:$0xf]
    %v136 = vld [vmem:[%s2 + $0x1cc] sm:$0xf]
    %v137 = vld [vmem:[%s2 + $0x1d0] sm:$0xf]
    %v138 = vld [vmem:[%s2 + $0x1d4] sm:$0xf]
    %v139 = vld [vmem:[%s2 + $0x1d8] sm:$0xf]
    %v140 = vld [vmem:[%s2 + $0x1dc] sm:$0xf]
    %v141 = vld [vmem:[%s2 + $0x1e0] sm:$0xf]
    %v142 = vld [vmem:[%s2 + $0x1e4] sm:$0xf]
    %v143 = vld [vmem:[%s2 + $0x1e8] sm:$0xf]
    %v144 = vld [vmem:[%s2 + $0x1ec] sm:$0xf]
    %v145 = vld [vmem:[%s2 + $0x1f0] sm:$0xf]
    %v146 = vld [vmem:[%s2 + $0x1f4] sm:$0xf]
    %v147 = vld [vmem:[%s2 + $0x1f8] sm:$0xf]
    %v148 = vld [vmem:[%s2 + $0x1fc] sm:$0xf]
    %v149 = vld [vmem:[%s2 + $0x200] sm:$0xf]
    %v150 = vld [vmem:[%s2 + $0x204] sm:$0xf]
    %v151 = vld [vmem:[%s2 + $0x208] sm:$0xf]
    %v152 = vld [vmem:[%s2 + $0x20c] sm:$0xf]
    %v153 = vld [vmem:[%s2 + $0x210] sm:$0xf]
    %v154 = vld [vmem:[%s2 + $0x214] sm:$0xf]
    %v155 = vld [vmem:[%s2 + $0x218] sm:$0xf]
    %v156 = vld [vmem:[%s2 + $0x21c] sm:$0xf]
    %v157 = vld [vmem:[%s2 + $0x220] sm:$0xf]
    %v158 = vld [vmem:[%s2 + $0x224] sm:$0xf]
    %v159 = vld [vmem:[%s2 + $0x228] sm:$0xf]
    %v160 = vld [vmem:[%s2 + $0x22c] sm:$0xf]
    %v161 = vld [vmem:[%s2 + $0x230] sm:$0xf]
    %v162 = vld [vmem:[%s2 + $0x234] sm:$0xf]
    %v163 = vld [vmem:[%s2 + $0x238] sm:$0xf]
    %v164 = vld [vmem:[%s2 + $0x23c] sm:$0xf]
    %166 = vst [vmem:[#allocation1] ss:$9 sm:$0xff] %v19
    %v167 = vld [vmem:[#allocation1] sm:$0xff]
    %v168 = vld [vmem:[#allocation1 + $0x9] sm:$0xff]
    %v169 = vld [vmem:[#allocation1 + $0x12] sm:$0xff]
    %v170 = vld [vmem:[#allocation1 + $0x1b] sm:$0xff]
    %v171 = vld [vmem:[#allocation1 + $0x24] sm:$0xff]
    %v172 = vld [vmem:[#allocation1 + $0x2d] sm:$0xff]
    %v173 = vld [vmem:[#allocation1 + $0x36] sm:$0xff]
    %v174 = vld [vmem:[#allocation1 + $0x3f] sm:$0xff]
    %176 = vst [vmem:[#allocation1] ss:$9 sm:$0xff] %v20
    %v177 = vld [vmem:[#allocation1] sm:$0xff]
    %v331 = vunpack.c.l.b16 %v21
    %v332 = vunpack.c.l.b16 %v22
    %v333 = vunpack.c.l.b16 %v23
    %v334 = vunpack.c.l.b16 %v24
    %v335 = vunpack.c.l.b16 %v25
    %v336 = vunpack.c.l.b16 %v26
    %v337 = vunpack.c.l.b16 %v27
    %v338 = vunpack.c.l.b16 %v28
    %v339 = vunpack.c.l.b16 %v29
    %v340 = vunpack.c.l.b16 %v30
    %v341 = vunpack.c.l.b16 %v31
    %v342 = vunpack.c.l.b16 %v32
    %v343 = vunpack.c.l.b16 %v33
    %v344 = vunpack.c.l.b16 %v34
    %v345 = vunpack.c.l.b16 %v35
    %v346 = vunpack.c.l.b16 %v36
    %v347 = vunpack.c.l.b16 %v37
    %v348 = vunpack.c.l.b16 %v38
    %v349 = vunpack.c.l.b16 %v39
    %v350 = vunpack.c.l.b16 %v40
    %v351 = vunpack.c.l.b16 %v41
    %v352 = vunpack.c.l.b16 %v42
    %v353 = vunpack.c.l.b16 %v43
    %v354 = vunpack.c.l.b16 %v44
    %v355 = vunpack.c.l.b16 %v45
    %v356 = vunpack.c.l.b16 %v46
    %v357 = vunpack.c.l.b16 %v47
    %v358 = vunpack.c.l.b16 %v48
    %v359 = vunpack.c.l.b16 %v49
    %v360 = vunpack.c.l.b16 %v50
    %v361 = vunpack.c.l.b16 %v51
    %v362 = vunpack.c.l.b16 %v52
    %v363 = vunpack.c.l.b16 %v53
    %v364 = vunpack.c.l.b16 %v54
    %v365 = vunpack.c.l.b16 %v55
    %v366 = vunpack.c.l.b16 %v56
    %v367 = vunpack.c.l.b16 %v57
    %v368 = vunpack.c.l.b16 %v58
    %v369 = vunpack.c.l.b16 %v59
    %v370 = vunpack.c.l.b16 %v60
    %v371 = vunpack.c.l.b16 %v61
    %v372 = vunpack.c.l.b16 %v62
    %v373 = vunpack.c.l.b16 %v63
    %v374 = vunpack.c.l.b16 %v64
    %v375 = vunpack.c.l.b16 %v65
    %v376 = vunpack.c.l.b16 %v66
    %v377 = vunpack.c.l.b16 %v67
    %v378 = vunpack.c.l.b16 %v68
    %v379 = vunpack.c.l.b16 %v69
    %v380 = vunpack.c.l.b16 %v70
    %v381 = vunpack.c.l.b16 %v71
    %v382 = vunpack.c.l.b16 %v72
    %v383 = vunpack.c.l.b16 %v73
    %v384 = vunpack.c.l.b16 %v74
    %v385 = vunpack.c.l.b16 %v75
    %v386 = vunpack.c.l.b16 %v76
    %v387 = vunpack.c.l.b16 %v77
    %v388 = vunpack.c.l.b16 %v78
    %v389 = vunpack.c.l.b16 %v79
    %v390 = vunpack.c.l.b16 %v80
    %v391 = vunpack.c.l.b16 %v81
    %v392 = vunpack.c.l.b16 %v82
    %v393 = vunpack.c.l.b16 %v83
    %v394 = vunpack.c.l.b16 %v84
    %v395 = vunpack.c.l.b16 %v85
    %v396 = vunpack.c.l.b16 %v86
    %v397 = vunpack.c.l.b16 %v87
    %v398 = vunpack.c.l.b16 %v88
    %v399 = vunpack.c.l.b16 %v89
    %v400 = vunpack.c.l.b16 %v90
    %v401 = vunpack.c.l.b16 %v91
    %v402 = vunpack.c.l.b16 %v92
    %v403 = vunpack.c.l.b16 %v93
    %v404 = vunpack.c.l.b16 %v94
    %v405 = vunpack.c.l.b16 %v95
    %v406 = vunpack.c.l.b16 %v96
    %v407 = vunpack.c.l.b16 %v97
    %v408 = vunpack.c.l.b16 %v98
    %v409 = vunpack.c.l.b16 %v99
    %v410 = vunpack.c.l.b16 %v100
    %v411 = vunpack.c.l.b16 %v101
    %v412 = vunpack.c.l.b16 %v102
    %v413 = vunpack.c.l.b16 %v103
    %v414 = vunpack.c.l.b16 %v104
    %v415 = vunpack.c.l.b16 %v105
    %v416 = vunpack.c.l.b16 %v106
    %v417 = vunpack.c.l.b16 %v107
    %v418 = vunpack.c.l.b16 %v108
    %v419 = vunpack.c.l.b16 %v109
    %v420 = vunpack.c.l.b16 %v110
    %v421 = vunpack.c.l.b16 %v111
    %v422 = vunpack.c.l.b16 %v112
    %v423 = vunpack.c.l.b16 %v113
    %v424 = vunpack.c.l.b16 %v114
    %v425 = vunpack.c.l.b16 %v115
    %v426 = vunpack.c.l.b16 %v116
    %v427 = vunpack.c.l.b16 %v117
    %v428 = vunpack.c.l.b16 %v118
    %v429 = vunpack.c.l.b16 %v119
    %v430 = vunpack.c.l.b16 %v120
    %v431 = vunpack.c.l.b16 %v121
    %v432 = vunpack.c.l.b16 %v122
    %v433 = vunpack.c.l.b16 %v123
    %v434 = vunpack.c.l.b16 %v124
    %v435 = vunpack.c.l.b16 %v125
    %v436 = vunpack.c.l.b16 %v126
    %v437 = vunpack.c.l.b16 %v127
    %v438 = vunpack.c.l.b16 %v128
    %v439 = vunpack.c.l.b16 %v129
    %v440 = vunpack.c.l.b16 %v130
    %v441 = vunpack.c.l.b16 %v131
    %v442 = vunpack.c.l.b16 %v132
    %v443 = vunpack.c.l.b16 %v133
    %v444 = vunpack.c.l.b16 %v134
    %v445 = vunpack.c.l.b16 %v135
    %v446 = vunpack.c.l.b16 %v136
    %v447 = vunpack.c.l.b16 %v137
    %v448 = vunpack.c.l.b16 %v138
    %v449 = vunpack.c.l.b16 %v139
    %v450 = vunpack.c.l.b16 %v140
    %v451 = vunpack.c.l.b16 %v141
    %v452 = vunpack.c.l.b16 %v142
    %v453 = vunpack.c.l.b16 %v143
    %v454 = vunpack.c.l.b16 %v144
    %v455 = vunpack.c.l.b16 %v145
    %v456 = vunpack.c.l.b16 %v146
    %v457 = vunpack.c.l.b16 %v147
    %v458 = vunpack.c.l.b16 %v148
    %v459 = vunpack.c.l.b16 %v149
    %v460 = vunpack.c.l.b16 %v150
    %v461 = vunpack.c.l.b16 %v151
    %v462 = vunpack.c.l.b16 %v152
    %v463 = vunpack.c.l.b16 %v153
    %v464 = vunpack.c.l.b16 %v154
    %v465 = vunpack.c.l.b16 %v155
    %v466 = vunpack.c.l.b16 %v156
    %v467 = vunpack.c.l.b16 %v157
    %v468 = vunpack.c.l.b16 %v158
    %v469 = vunpack.c.l.b16 %v159
    %v470 = vunpack.c.l.b16 %v160
    %v471 = vunpack.c.l.b16 %v161
    %v472 = vunpack.c.l.b16 %v162
    %v473 = vunpack.c.l.b16 %v163
    %v474 = vunpack.c.l.b16 %v164
    %v475 = vpack.c.b16 %v332, %v331
    %v476 = vpack.c.b16 %v334, %v333
    %v477 = vpack.c.b16 %v336, %v335
    %v478 = vpack.c.b16 %v338, %v337
    %v479 = vpack.c.b16 %v340, %v339
    %v480 = vpack.c.b16 %v342, %v341
    %v481 = vpack.c.b16 %v344, %v343
    %v482 = vpack.c.b16 %v346, %v345
    %v483 = vpack.c.b16 %v348, %v347
    %v484 = vpack.c.b16 %v350, %v349
    %v485 = vpack.c.b16 %v352, %v351
    %v486 = vpack.c.b16 %v354, %v353
    %v487 = vpack.c.b16 %v356, %v355
    %v488 = vpack.c.b16 %v358, %v357
    %v489 = vpack.c.b16 %v360, %v359
    %v490 = vpack.c.b16 %v362, %v361
    %v491 = vpack.c.b16 %v364, %v363
    %v492 = vpack.c.b16 %v366, %v365
    %v493 = vpack.c.b16 %v368, %v367
    %v494 = vpack.c.b16 %v370, %v369
    %v495 = vpack.c.b16 %v372, %v371
    %v496 = vpack.c.b16 %v374, %v373
    %v497 = vpack.c.b16 %v376, %v375
    %v498 = vpack.c.b16 %v378, %v377
    %v499 = vpack.c.b16 %v380, %v379
    %v500 = vpack.c.b16 %v382, %v381
    %v501 = vpack.c.b16 %v384, %v383
    %v502 = vpack.c.b16 %v386, %v385
    %v503 = vpack.c.b16 %v388, %v387
    %v504 = vpack.c.b16 %v390, %v389
    %v505 = vpack.c.b16 %v392, %v391
    %v506 = vpack.c.b16 %v394, %v393
    %v507 = vpack.c.b16 %v396, %v395
    %v508 = vpack.c.b16 %v398, %v397
    %v509 = vpack.c.b16 %v400, %v399
    %v510 = vpack.c.b16 %v402, %v401
    %v511 = vpack.c.b16 %v404, %v403
    %v512 = vpack.c.b16 %v406, %v405
    %v513 = vpack.c.b16 %v408, %v407
    %v514 = vpack.c.b16 %v410, %v409
    %v515 = vpack.c.b16 %v412, %v411
    %v516 = vpack.c.b16 %v414, %v413
    %v517 = vpack.c.b16 %v416, %v415
    %v518 = vpack.c.b16 %v418, %v417
    %v519 = vpack.c.b16 %v420, %v419
    %v520 = vpack.c.b16 %v422, %v421
    %v521 = vpack.c.b16 %v424, %v423
    %v522 = vpack.c.b16 %v426, %v425
    %v523 = vpack.c.b16 %v428, %v427
    %v524 = vpack.c.b16 %v430, %v429
    %v525 = vpack.c.b16 %v432, %v431
    %v526 = vpack.c.b16 %v434, %v433
    %v527 = vpack.c.b16 %v436, %v435
    %v528 = vpack.c.b16 %v438, %v437
    %v529 = vpack.c.b16 %v440, %v439
    %v530 = vpack.c.b16 %v442, %v441
    %v531 = vpack.c.b16 %v444, %v443
    %v532 = vpack.c.b16 %v446, %v445
    %v533 = vpack.c.b16 %v448, %v447
    %v534 = vpack.c.b16 %v450, %v449
    %v535 = vpack.c.b16 %v452, %v451
    %v536 = vpack.c.b16 %v454, %v453
    %v537 = vpack.c.b16 %v456, %v455
    %v538 = vpack.c.b16 %v458, %v457
    %v539 = vpack.c.b16 %v460, %v459
    %v540 = vpack.c.b16 %v462, %v461
    %v541 = vpack.c.b16 %v464, %v463
    %v542 = vpack.c.b16 %v466, %v465
    %v543 = vpack.c.b16 %v468, %v467
    %v544 = vpack.c.b16 %v470, %v469
    %v545 = vpack.c.b16 %v472, %v471
    %v546 = vpack.c.b16 %v474, %v473
    %619 = vmatpush.bf16.msra.mxu0 %v482
    %620 = vmatpush.bf16.msra.mxu0 %v481
    %621 = vmatpush.bf16.msra.mxu0 %v480
    %622 = vmatpush.bf16.msra.mxu0 %v479
    %623 = vmatpush.bf16.msra.mxu0 %v478
    %624 = vmatpush.bf16.msra.mxu0 %v477
    %625 = vmatpush.bf16.msra.mxu0 %v476
    %626 = vmatpush.bf16.msra.mxu0 %v475
    %627 = vmatmul.bf16.gmra.mxu0 %v167
    %v628 = vpop.f32.mrf.mxu0
    %v629 = vadd.f32 0.0, %v628
    %v630 = vpop.f32.mrf.mxu0
    %631 = vdwg.mxu0
    %632 = vmatpush.bf16.msra.mxu0 %v490
    %633 = vmatpush.bf16.msra.mxu0 %v489
    %634 = vmatpush.bf16.msra.mxu0 %v488
    %635 = vmatpush.bf16.msra.mxu0 %v487
    %636 = vmatpush.bf16.msra.mxu0 %v486
    %637 = vmatpush.bf16.msra.mxu0 %v485
    %638 = vmatpush.bf16.msra.mxu0 %v484
    %639 = vmatpush.bf16.msra.mxu0 %v483
    %640 = vmatmul.bf16.gmra.mxu0 %v168
    %v641 = vpop.f32.mrf.mxu0
    %v642 = vadd.f32 %v629, %v641
    %v643 = vpop.f32.mrf.mxu0
    %644 = vdwg.mxu0
    %645 = vmatpush.bf16.msra.mxu0 %v498
    %646 = vmatpush.bf16.msra.mxu0 %v497
    %647 = vmatpush.bf16.msra.mxu0 %v496
    %648 = vmatpush.bf16.msra.mxu0 %v495
    %649 = vmatpush.bf16.msra.mxu0 %v494
    %650 = vmatpush.bf16.msra.mxu0 %v493
    %651 = vmatpush.bf16.msra.mxu0 %v492
    %652 = vmatpush.bf16.msra.mxu0 %v491
    %653 = vmatmul.bf16.gmra.mxu0 %v169
    %v654 = vpop.f32.mrf.mxu0
    %v655 = vadd.f32 %v642, %v654
    %v656 = vpop.f32.mrf.mxu0
    %657 = vdwg.mxu0
    %658 = vmatpush.bf16.msra.mxu0 %v506
    %659 = vmatpush.bf16.msra.mxu0 %v505
    %660 = vmatpush.bf16.msra.mxu0 %v504
    %661 = vmatpush.bf16.msra.mxu0 %v503
    %662 = vmatpush.bf16.msra.mxu0 %v502
    %663 = vmatpush.bf16.msra.mxu0 %v501
    %664 = vmatpush.bf16.msra.mxu0 %v500
    %665 = vmatpush.bf16.msra.mxu0 %v499
    %666 = vmatmul.bf16.gmra.mxu0 %v170
    %v667 = vpop.f32.mrf.mxu0
    %v668 = vadd.f32 %v655, %v667
    %v669 = vpop.f32.mrf.mxu0
    %670 = vdwg.mxu0
    %671 = vmatpush.bf16.msra.mxu0 %v514
    %672 = vmatpush.bf16.msra.mxu0 %v513
    %673 = vmatpush.bf16.msra.mxu0 %v512
    %674 = vmatpush.bf16.msra.mxu0 %v511
    %675 = vmatpush.bf16.msra.mxu0 %v510
    %676 = vmatpush.bf16.msra.mxu0 %v509
    %677 = vmatpush.bf16.msra.mxu0 %v508
    %678 = vmatpush.bf16.msra.mxu0 %v507
    %679 = vmatmul.bf16.gmra.mxu0 %v171
    %v680 = vpop.f32.mrf.mxu0
    %v681 = vadd.f32 %v668, %v680
    %v682 = vpop.f32.mrf.mxu0
    %683 = vdwg.mxu0
    %684 = vmatpush.bf16.msra.mxu0 %v522
    %685 = vmatpush.bf16.msra.mxu0 %v521
    %686 = vmatpush.bf16.msra.mxu0 %v520
    %687 = vmatpush.bf16.msra.mxu0 %v519
    %688 = vmatpush.bf16.msra.mxu0 %v518
    %689 = vmatpush.bf16.msra.mxu0 %v517
    %690 = vmatpush.bf16.msra.mxu0 %v516
    %691 = vmatpush.bf16.msra.mxu0 %v515
    %692 = vmatmul.bf16.gmra.mxu0 %v172
    %v693 = vpop.f32.mrf.mxu0
    %v694 = vadd.f32 %v681, %v693
    %v695 = vpop.f32.mrf.mxu0
    %696 = vdwg.mxu0
    %697 = vmatpush.bf16.msra.mxu0 %v530
    %698 = vmatpush.bf16.msra.mxu0 %v529
    %699 = vmatpush.bf16.msra.mxu0 %v528
    %700 = vmatpush.bf16.msra.mxu0 %v527
    %701 = vmatpush.bf16.msra.mxu0 %v526
    %702 = vmatpush.bf16.msra.mxu0 %v525
    %703 = vmatpush.bf16.msra.mxu0 %v524
    %704 = vmatpush.bf16.msra.mxu0 %v523
    %705 = vmatmul.bf16.gmra.mxu0 %v173
    %v706 = vpop.f32.mrf.mxu0
    %v707 = vadd.f32 %v694, %v706
    %v708 = vpop.f32.mrf.mxu0
    %709 = vdwg.mxu0
    %710 = vmatpush.bf16.msra.mxu0 %v538
    %711 = vmatpush.bf16.msra.mxu0 %v537
    %712 = vmatpush.bf16.msra.mxu0 %v536
    %713 = vmatpush.bf16.msra.mxu0 %v535
    %714 = vmatpush.bf16.msra.mxu0 %v534
    %715 = vmatpush.bf16.msra.mxu0 %v533
    %716 = vmatpush.bf16.msra.mxu0 %v532
    %717 = vmatpush.bf16.msra.mxu0 %v531
    %718 = vmatmul.bf16.gmra.mxu0 %v174
    %v719 = vpop.f32.mrf.mxu0
    %v720 = vadd.f32 %v707, %v719
    %v721 = vpop.f32.mrf.mxu0
    %722 = vdwg.mxu0
    %723 = vmatpush.bf16.msra.mxu0 %v546
    %724 = vmatpush.bf16.msra.mxu0 %v545
    %725 = vmatpush.bf16.msra.mxu0 %v544
    %726 = vmatpush.bf16.msra.mxu0 %v543
    %727 = vmatpush.bf16.msra.mxu0 %v542
    %728 = vmatpush.bf16.msra.mxu0 %v541
    %729 = vmatpush.bf16.msra.mxu0 %v540
    %730 = vmatpush.bf16.msra.mxu0 %v539
    %731 = vmatmul.bf16.gmra.mxu0 %v177
    %v732 = vpop.f32.mrf.mxu0
    %v733 = vadd.f32 %v720, %v732
    %v734 = vpop.f32.mrf.mxu0
    %735 = vdwg.mxu0
    %v736 = vld [vmem:[%s3] sm:$0x1]
    %v738 = vperm.slane %v736, 0
    %v740 = vmul.f32 %v733, %v738
    %v741 = vld [vmem:[%s4] sm:$0x1]
    %v743 = vperm.slane %v741, 0
    %v745 = vadd.f32 %v740, %v743
    %v746 = vmax.f32 %v745, 0.0
    %v747 = vpack.c.bf16 %v746, %v746
    %748 = vst [vmem:[#allocation2] sm:$0x1] %v747
    // Predicated region
    $region18: #{forward.28} parent=1 // pred_check
      _
    $region19: #{forward.28} parent=1 // pred_check_branch
      %750 = sbr.rel (0) target = $region21
    $region20: #{forward.28} parent=1 // pred_region
      // Predicated region
      $region22: #{forward.28} parent=20 // pred_check
        _
      $region23: #{forward.28} parent=20 // pred_check_branch
        %752 = sbr.rel (0) target = $region25
      $region24: #{forward.28} parent=20 // pred_region
        // Predicated region
        $region26: #{forward.28} parent=24 // pred_check
          _
        $region27: #{forward.28} parent=24 // pred_check_branch
          %754 = sbr.rel target = $region29
        $region28: #{forward.28} parent=24 // pred_region
          // Predicated region
          $region41: #{forward.28} parent=28 // pred_check
            _
          $region42: #{forward.28} parent=28 // pred_check_branch
            %770 = sbr.rel (0) target = $region44
          $region43: #{forward.28} parent=28 // pred_region
            %s772 = ssub.s32 2, 1
            loop: start=0, step=1, limit=1
            $region45: #{forward.28} parent=43 // loop_pre_header
              _
            $region46: #{forward.28} parent=43 // loop_header
              %s774 = sphi 0, %s778
              %p775 = scmp.ge.s32.totalorder %s774, 1
              %s779 = sphi [#allocation2], [#allocation2]
              %s780 = sphi %s6, %s6
            $region47: #{forward.28} parent=43 // loop_header_branch
              %777 = sbr.rel (%p775) target = $region51
            $region48: #{forward.28} parent=43 // loop_body
              %v781 = vld [vmem:[%s779] sm:%s772]
              %782 = vst [vmem:[%s780] sm:%s772] %v781
            $region49: #{forward.28} parent=43 // loop_footer
              %s778 = sadd.s32 1, %s774
            $region50: #{forward.28} parent=43 // loop_footer_branch
              %773 = sbr.rel target = $region46
            $region51: #{forward.28} parent=43 // loop_exit
              _
          $region44: #{forward.28} parent=28 // pred_fallthru
            _
        $region29: #{forward.28} parent=24 // pred_fallthru
          _
        // Predicated region
        $region30: #{forward.28} parent=24 // pred_check
          _
        $region31: #{forward.28} parent=24 // pred_check_branch
          %756 = sbr.rel (0) target = $region33
        $region32: #{forward.28} parent=24 // pred_region
          %s758 = ssub.s32 2, 1
          loop: start=0, step=1, limit=1
          $region34: #{forward.28} parent=32 // loop_pre_header
            _
          $region35: #{forward.28} parent=32 // loop_header
            %s760 = sphi 0, %s764
            %p761 = scmp.ge.s32.totalorder %s760, 1
            %s765 = sphi [#allocation2], [#allocation2]
            %s766 = sphi %s6, %s6
          $region36: #{forward.28} parent=32 // loop_header_branch
            %763 = sbr.rel (%p761) target = $region40
          $region37: #{forward.28} parent=32 // loop_body
            %v767 = vld [vmem:[%s765] sm:%s758]
            %768 = vst [vmem:[%s766] sm:%s758] %v767
          $region38: #{forward.28} parent=32 // loop_footer
            %s764 = sadd.s32 1, %s760
          $region39: #{forward.28} parent=32 // loop_footer_branch
            %759 = sbr.rel target = $region35
          $region40: #{forward.28} parent=32 // loop_exit
            _
        $region33: #{forward.28} parent=24 // pred_fallthru
          _
      $region25: #{forward.28} parent=20 // pred_fallthru
        _
      %783 = vnop
    $region21: #{forward.28} parent=1 // pred_fallthru
      _
    // Predicated region
    $region52: #{forward.28} parent=1 // pred_check
      _
    $region53: #{forward.28} parent=1 // pred_check_branch
      %785 = sbr.rel (0) target = $region55
    $region54: #{forward.28} parent=1 // pred_region
      _
    $region55: #{forward.28} parent=1 // pred_fallthru
      _

// kernel: forward.26
$region0: #{forward.26}
  #allocation0 [shape = 'u32[]', space=smem, size = 0x4, offset = 0x4, fixed_abs, tag = 'smem constant byte address 0x4 - core index']
  #allocation1 [shape = 'u32[72,128]{1,0:T(1,128)}', space=vmem, size = 0x9000, scoped, tag = 'internal scratch']
  %s0 = inlined_call_operand.vmem [shape: bf16[2,1152], index: 0, kind: input, shape index: {}]
  %s1 = inlined_call_operand.vmem [shape: bf16[1152,128], index: 1, kind: input, shape index: {}]
  %s2 = inlined_call_operand.vmem [shape: f32[1,128], index: 2, kind: input, shape index: {}]
  %s3 = inlined_call_operand.vmem [shape: f32[1,128], index: 3, kind: input, shape index: {}]
  %s4 = inlined_call_operand.vmem [shape: bf16[2,128], index: 4, kind: input, shape index: {}]
  %s5 = inlined_call_operand.vmem [shape: bf16[2,128], index: 5, kind: output, shape index: {}]
  %s6 = sld [smem:[#allocation0]]
  $region30: #{forward.26} parent=0
    _
  %s8 = ssub.s32 1, %s6
  %s9 = scalar_select 0, %s8, %s6
  // Predicated region
  $region2: #{forward.26} parent=0 // pred_check
    _
  $region3: #{forward.26} parent=0 // pred_check_branch
    %11 = sbr.rel (0) target = $region5
  $region4: #{forward.26} parent=0 // pred_region
    _
  $region5: #{forward.26} parent=0 // pred_fallthru
    _
  // Predicated region
  $region6: #{forward.26} parent=0 // pred_check
    _
  $region7: #{forward.26} parent=0 // pred_check_branch
    %13 = sbr.rel (0) target = $region9
  $region8: #{forward.26} parent=0 // pred_region
    _
  $region9: #{forward.26} parent=0 // pred_fallthru
    _
  // Predicated region
  $region10: #{forward.26} parent=0 // pred_check
    _
  $region11: #{forward.26} parent=0 // pred_check_branch
    %15 = sbr.rel (0) target = $region13
  $region12: #{forward.26} parent=0 // pred_region
    _
  $region13: #{forward.26} parent=0 // pred_fallthru
    _
  // Predicated region
  $region14: #{forward.26} parent=0 // pred_check
    _
  $region15: #{forward.26} parent=0 // pred_check_branch
    %17 = sbr.rel (0) target = $region17
  $region16: #{forward.26} parent=0 // pred_region
    _
  $region17: #{forward.26} parent=0 // pred_fallthru
    _
  // Predicated region
  $region18: #{forward.26} parent=0 // pred_check
    _
  $region19: #{forward.26} parent=0 // pred_check_branch
    %19 = sbr.rel (0) target = $region21
  $region20: #{forward.26} parent=0 // pred_region
    _
  $region21: #{forward.26} parent=0 // pred_fallthru
    _
  %v20 = vld [vmem:[%s0] sm:$0xff]
  %v21 = vld [vmem:[%s0 + $0x8] sm:$0x1]
  %v22 = vld [vmem:[%s1] sm:$0xf]
  %v23 = vld [vmem:[%s1 + $0x4] sm:$0xf]
  %v24 = vld [vmem:[%s1 + $0x8] sm:$0xf]
  %v25 = vld [vmem:[%s1 + $0xc] sm:$0xf]
  %v26 = vld [vmem:[%s1 + $0x10] sm:$0xf]
  %v27 = vld [vmem:[%s1 + $0x14] sm:$0xf]
  %v28 = vld [vmem:[%s1 + $0x18] sm:$0xf]
  %v29 = vld [vmem:[%s1 + $0x1c] sm:$0xf]
  %v30 = vld [vmem:[%s1 + $0x20] sm:$0xf]
  %v31 = vld [vmem:[%s1 + $0x24] sm:$0xf]
  %v32 = vld [vmem:[%s1 + $0x28] sm:$0xf]
  %v33 = vld [vmem:[%s1 + $0x2c] sm:$0xf]
  %v34 = vld [vmem:[%s1 + $0x30] sm:$0xf]
  %v35 = vld [vmem:[%s1 + $0x34] sm:$0xf]
  %v36 = vld [vmem:[%s1 + $0x38] sm:$0xf]
  %v37 = vld [vmem:[%s1 + $0x3c] sm:$0xf]
  %v38 = vld [vmem:[%s1 + $0x40] sm:$0xf]
  %v39 = vld [vmem:[%s1 + $0x44] sm:$0xf]
  %v40 = vld [vmem:[%s1 + $0x48] sm:$0xf]
  %v41 = vld [vmem:[%s1 + $0x4c] sm:$0xf]
  %v42 = vld [vmem:[%s1 + $0x50] sm:$0xf]
  %v43 = vld [vmem:[%s1 + $0x54] sm:$0xf]
  %v44 = vld [vmem:[%s1 + $0x58] sm:$0xf]
  %v45 = vld [vmem:[%s1 + $0x5c] sm:$0xf]
  %v46 = vld [vmem:[%s1 + $0x60] sm:$0xf]
  %v47 = vld [vmem:[%s1 + $0x64] sm:$0xf]
  %v48 = vld [vmem:[%s1 + $0x68] sm:$0xf]
  %v49 = vld [vmem:[%s1 + $0x6c] sm:$0xf]
  %v50 = vld [vmem:[%s1 + $0x70] sm:$0xf]
  %v51 = vld [vmem:[%s1 + $0x74] sm:$0xf]
  %v52 = vld [vmem:[%s1 + $0x78] sm:$0xf]
  %v53 = vld [vmem:[%s1 + $0x7c] sm:$0xf]
  %v54 = vld [vmem:[%s1 + $0x80] sm:$0xf]
  %v55 = vld [vmem:[%s1 + $0x84] sm:$0xf]
  %v56 = vld [vmem:[%s1 + $0x88] sm:$0xf]
  %v57 = vld [vmem:[%s1 + $0x8c] sm:$0xf]
  %v58 = vld [vmem:[%s1 + $0x90] sm:$0xf]
  %v59 = vld [vmem:[%s1 + $0x94] sm:$0xf]
  %v60 = vld [vmem:[%s1 + $0x98] sm:$0xf]
  %v61 = vld [vmem:[%s1 + $0x9c] sm:$0xf]
  %v62 = vld [vmem:[%s1 + $0xa0] sm:$0xf]
  %v63 = vld [vmem:[%s1 + $0xa4] sm:$0xf]
  %v64 = vld [vmem:[%s1 + $0xa8] sm:$0xf]
  %v65 = vld [vmem:[%s1 + $0xac] sm:$0xf]
  %v66 = vld [vmem:[%s1 + $0xb0] sm:$0xf]
  %v67 = vld [vmem:[%s1 + $0xb4] sm:$0xf]
  %v68 = vld [vmem:[%s1 + $0xb8] sm:$0xf]
  %v69 = vld [vmem:[%s1 + $0xbc] sm:$0xf]
  %v70 = vld [vmem:[%s1 + $0xc0] sm:$0xf]
  %v71 = vld [vmem:[%s1 + $0xc4] sm:$0xf]
  %v72 = vld [vmem:[%s1 + $0xc8] sm:$0xf]
  %v73 = vld [vmem:[%s1 + $0xcc] sm:$0xf]
  %v74 = vld [vmem:[%s1 + $0xd0] sm:$0xf]
  %v75 = vld [vmem:[%s1 + $0xd4] sm:$0xf]
  %v76 = vld [vmem:[%s1 + $0xd8] sm:$0xf]
  %v77 = vld [vmem:[%s1 + $0xdc] sm:$0xf]
  %v78 = vld [vmem:[%s1 + $0xe0] sm:$0xf]
  %v79 = vld [vmem:[%s1 + $0xe4] sm:$0xf]
  %v80 = vld [vmem:[%s1 + $0xe8] sm:$0xf]
  %v81 = vld [vmem:[%s1 + $0xec] sm:$0xf]
  %v82 = vld [vmem:[%s1 + $0xf0] sm:$0xf]
  %v83 = vld [vmem:[%s1 + $0xf4] sm:$0xf]
  %v84 = vld [vmem:[%s1 + $0xf8] sm:$0xf]
  %v85 = vld [vmem:[%s1 + $0xfc] sm:$0xf]
  %v86 = vld [vmem:[%s1 + $0x100] sm:$0xf]
  %v87 = vld [vmem:[%s1 + $0x104] sm:$0xf]
  %v88 = vld [vmem:[%s1 + $0x108] sm:$0xf]
  %v89 = vld [vmem:[%s1 + $0x10c] sm:$0xf]
  %v90 = vld [vmem:[%s1 + $0x110] sm:$0xf]
  %v91 = vld [vmem:[%s1 + $0x114] sm:$0xf]
  %v92 = vld [vmem:[%s1 + $0x118] sm:$0xf]
  %v93 = vld [vmem:[%s1 + $0x11c] sm:$0xf]
  %v94 = vld [vmem:[%s1 + $0x120] sm:$0xf]
  %v95 = vld [vmem:[%s1 + $0x124] sm:$0xf]
  %v96 = vld [vmem:[%s1 + $0x128] sm:$0xf]
  %v97 = vld [vmem:[%s1 + $0x12c] sm:$0xf]
  %v98 = vld [vmem:[%s1 + $0x130] sm:$0xf]
  %v99 = vld [vmem:[%s1 + $0x134] sm:$0xf]
  %v100 = vld [vmem:[%s1 + $0x138] sm:$0xf]
  %v101 = vld [vmem:[%s1 + $0x13c] sm:$0xf]
  %v102 = vld [vmem:[%s1 + $0x140] sm:$0xf]
  %v103 = vld [vmem:[%s1 + $0x144] sm:$0xf]
  %v104 = vld [vmem:[%s1 + $0x148] sm:$0xf]
  %v105 = vld [vmem:[%s1 + $0x14c] sm:$0xf]
  %v106 = vld [vmem:[%s1 + $0x150] sm:$0xf]
  %v107 = vld [vmem:[%s1 + $0x154] sm:$0xf]
  %v108 = vld [vmem:[%s1 + $0x158] sm:$0xf]
  %v109 = vld [vmem:[%s1 + $0x15c] sm:$0xf]
  %v110 = vld [vmem:[%s1 + $0x160] sm:$0xf]
  %v111 = vld [vmem:[%s1 + $0x164] sm:$0xf]
  %v112 = vld [vmem:[%s1 + $0x168] sm:$0xf]
  %v113 = vld [vmem:[%s1 + $0x16c] sm:$0xf]
  %v114 = vld [vmem:[%s1 + $0x170] sm:$0xf]
  %v115 = vld [vmem:[%s1 + $0x174] sm:$0xf]
  %v116 = vld [vmem:[%s1 + $0x178] sm:$0xf]
  %v117 = vld [vmem:[%s1 + $0x17c] sm:$0xf]
  %v118 = vld [vmem:[%s1 + $0x180] sm:$0xf]
  %v119 = vld [vmem:[%s1 + $0x184] sm:$0xf]
  %v120 = vld [vmem:[%s1 + $0x188] sm:$0xf]
  %v121 = vld [vmem:[%s1 + $0x18c] sm:$0xf]
  %v122 = vld [vmem:[%s1 + $0x190] sm:$0xf]
  %v123 = vld [vmem:[%s1 + $0x194] sm:$0xf]
  %v124 = vld [vmem:[%s1 + $0x198] sm:$0xf]
  %v125 = vld [vmem:[%s1 + $0x19c] sm:$0xf]
  %v126 = vld [vmem:[%s1 + $0x1a0] sm:$0xf]
  %v127 = vld [vmem:[%s1 + $0x1a4] sm:$0xf]
  %v128 = vld [vmem:[%s1 + $0x1a8] sm:$0xf]
  %v129 = vld [vmem:[%s1 + $0x1ac] sm:$0xf]
  %v130 = vld [vmem:[%s1 + $0x1b0] sm:$0xf]
  %v131 = vld [vmem:[%s1 + $0x1b4] sm:$0xf]
  %v132 = vld [vmem:[%s1 + $0x1b8] sm:$0xf]
  %v133 = vld [vmem:[%s1 + $0x1bc] sm:$0xf]
  %v134 = vld [vmem:[%s1 + $0x1c0] sm:$0xf]
  %v135 = vld [vmem:[%s1 + $0x1c4] sm:$0xf]
  %v136 = vld [vmem:[%s1 + $0x1c8] sm:$0xf]
  %v137 = vld [vmem:[%s1 + $0x1cc] sm:$0xf]
  %v138 = vld [vmem:[%s1 + $0x1d0] sm:$0xf]
  %v139 = vld [vmem:[%s1 + $0x1d4] sm:$0xf]
  %v140 = vld [vmem:[%s1 + $0x1d8] sm:$0xf]
  %v141 = vld [vmem:[%s1 + $0x1dc] sm:$0xf]
  %v142 = vld [vmem:[%s1 + $0x1e0] sm:$0xf]
  %v143 = vld [vmem:[%s1 + $0x1e4] sm:$0xf]
  %v144 = vld [vmem:[%s1 + $0x1e8] sm:$0xf]
  %v145 = vld [vmem:[%s1 + $0x1ec] sm:$0xf]
  %v146 = vld [vmem:[%s1 + $0x1f0] sm:$0xf]
  %v147 = vld [vmem:[%s1 + $0x1f4] sm:$0xf]
  %v148 = vld [vmem:[%s1 + $0x1f8] sm:$0xf]
  %v149 = vld [vmem:[%s1 + $0x1fc] sm:$0xf]
  %v150 = vld [vmem:[%s1 + $0x200] sm:$0xf]
  %v151 = vld [vmem:[%s1 + $0x204] sm:$0xf]
  %v152 = vld [vmem:[%s1 + $0x208] sm:$0xf]
  %v153 = vld [vmem:[%s1 + $0x20c] sm:$0xf]
  %v154 = vld [vmem:[%s1 + $0x210] sm:$0xf]
  %v155 = vld [vmem:[%s1 + $0x214] sm:$0xf]
  %v156 = vld [vmem:[%s1 + $0x218] sm:$0xf]
  %v157 = vld [vmem:[%s1 + $0x21c] sm:$0xf]
  %v158 = vld [vmem:[%s1 + $0x220] sm:$0xf]
  %v159 = vld [vmem:[%s1 + $0x224] sm:$0xf]
  %v160 = vld [vmem:[%s1 + $0x228] sm:$0xf]
  %v161 = vld [vmem:[%s1 + $0x22c] sm:$0xf]
  %v162 = vld [vmem:[%s1 + $0x230] sm:$0xf]
  %v163 = vld [vmem:[%s1 + $0x234] sm:$0xf]
  %v164 = vld [vmem:[%s1 + $0x238] sm:$0xf]
  %v165 = vld [vmem:[%s1 + $0x23c] sm:$0xf]
  %167 = vst [vmem:[#allocation1] ss:$9 sm:$0xff] %v20
  %v168 = vld [vmem:[#allocation1] sm:$0xff]
  %v169 = vld [vmem:[#allocation1 + $0x9] sm:$0xff]
  %v170 = vld [vmem:[#allocation1 + $0x12] sm:$0xff]
  %v171 = vld [vmem:[#allocation1 + $0x1b] sm:$0xff]
  %v172 = vld [vmem:[#allocation1 + $0x24] sm:$0xff]
  %v173 = vld [vmem:[#allocation1 + $0x2d] sm:$0xff]
  %v174 = vld [vmem:[#allocation1 + $0x36] sm:$0xff]
  %v175 = vld [vmem:[#allocation1 + $0x3f] sm:$0xff]
  %177 = vst [vmem:[#allocation1] ss:$9 sm:$0xff] %v21
  %v178 = vld [vmem:[#allocation1] sm:$0xff]
  %v332 = vunpack.c.l.b16 %v22
  %v333 = vunpack.c.l.b16 %v23
  %v334 = vunpack.c.l.b16 %v24
  %v335 = vunpack.c.l.b16 %v25
  %v336 = vunpack.c.l.b16 %v26
  %v337 = vunpack.c.l.b16 %v27
  %v338 = vunpack.c.l.b16 %v28
  %v339 = vunpack.c.l.b16 %v29
  %v340 = vunpack.c.l.b16 %v30
  %v341 = vunpack.c.l.b16 %v31
  %v342 = vunpack.c.l.b16 %v32
  %v343 = vunpack.c.l.b16 %v33
  %v344 = vunpack.c.l.b16 %v34
  %v345 = vunpack.c.l.b16 %v35
  %v346 = vunpack.c.l.b16 %v36
  %v347 = vunpack.c.l.b16 %v37
  %v348 = vunpack.c.l.b16 %v38
  %v349 = vunpack.c.l.b16 %v39
  %v350 = vunpack.c.l.b16 %v40
  %v351 = vunpack.c.l.b16 %v41
  %v352 = vunpack.c.l.b16 %v42
  %v353 = vunpack.c.l.b16 %v43
  %v354 = vunpack.c.l.b16 %v44
  %v355 = vunpack.c.l.b16 %v45
  %v356 = vunpack.c.l.b16 %v46
  %v357 = vunpack.c.l.b16 %v47
  %v358 = vunpack.c.l.b16 %v48
  %v359 = vunpack.c.l.b16 %v49
  %v360 = vunpack.c.l.b16 %v50
  %v361 = vunpack.c.l.b16 %v51
  %v362 = vunpack.c.l.b16 %v52
  %v363 = vunpack.c.l.b16 %v53
  %v364 = vunpack.c.l.b16 %v54
  %v365 = vunpack.c.l.b16 %v55
  %v366 = vunpack.c.l.b16 %v56
  %v367 = vunpack.c.l.b16 %v57
  %v368 = vunpack.c.l.b16 %v58
  %v369 = vunpack.c.l.b16 %v59
  %v370 = vunpack.c.l.b16 %v60
  %v371 = vunpack.c.l.b16 %v61
  %v372 = vunpack.c.l.b16 %v62
  %v373 = vunpack.c.l.b16 %v63
  %v374 = vunpack.c.l.b16 %v64
  %v375 = vunpack.c.l.b16 %v65
  %v376 = vunpack.c.l.b16 %v66
  %v377 = vunpack.c.l.b16 %v67
  %v378 = vunpack.c.l.b16 %v68
  %v379 = vunpack.c.l.b16 %v69
  %v380 = vunpack.c.l.b16 %v70
  %v381 = vunpack.c.l.b16 %v71
  %v382 = vunpack.c.l.b16 %v72
  %v383 = vunpack.c.l.b16 %v73
  %v384 = vunpack.c.l.b16 %v74
  %v385 = vunpack.c.l.b16 %v75
  %v386 = vunpack.c.l.b16 %v76
  %v387 = vunpack.c.l.b16 %v77
  %v388 = vunpack.c.l.b16 %v78
  %v389 = vunpack.c.l.b16 %v79
  %v390 = vunpack.c.l.b16 %v80
  %v391 = vunpack.c.l.b16 %v81
  %v392 = vunpack.c.l.b16 %v82
  %v393 = vunpack.c.l.b16 %v83
  %v394 = vunpack.c.l.b16 %v84
  %v395 = vunpack.c.l.b16 %v85
  %v396 = vunpack.c.l.b16 %v86
  %v397 = vunpack.c.l.b16 %v87
  %v398 = vunpack.c.l.b16 %v88
  %v399 = vunpack.c.l.b16 %v89
  %v400 = vunpack.c.l.b16 %v90
  %v401 = vunpack.c.l.b16 %v91
  %v402 = vunpack.c.l.b16 %v92
  %v403 = vunpack.c.l.b16 %v93
  %v404 = vunpack.c.l.b16 %v94
  %v405 = vunpack.c.l.b16 %v95
  %v406 = vunpack.c.l.b16 %v96
  %v407 = vunpack.c.l.b16 %v97
  %v408 = vunpack.c.l.b16 %v98
  %v409 = vunpack.c.l.b16 %v99
  %v410 = vunpack.c.l.b16 %v100
  %v411 = vunpack.c.l.b16 %v101
  %v412 = vunpack.c.l.b16 %v102
  %v413 = vunpack.c.l.b16 %v103
  %v414 = vunpack.c.l.b16 %v104
  %v415 = vunpack.c.l.b16 %v105
  %v416 = vunpack.c.l.b16 %v106
  %v417 = vunpack.c.l.b16 %v107
  %v418 = vunpack.c.l.b16 %v108
  %v419 = vunpack.c.l.b16 %v109
  %v420 = vunpack.c.l.b16 %v110
  %v421 = vunpack.c.l.b16 %v111
  %v422 = vunpack.c.l.b16 %v112
  %v423 = vunpack.c.l.b16 %v113
  %v424 = vunpack.c.l.b16 %v114
  %v425 = vunpack.c.l.b16 %v115
  %v426 = vunpack.c.l.b16 %v116
  %v427 = vunpack.c.l.b16 %v117
  %v428 = vunpack.c.l.b16 %v118
  %v429 = vunpack.c.l.b16 %v119
  %v430 = vunpack.c.l.b16 %v120
  %v431 = vunpack.c.l.b16 %v121
  %v432 = vunpack.c.l.b16 %v122
  %v433 = vunpack.c.l.b16 %v123
  %v434 = vunpack.c.l.b16 %v124
  %v435 = vunpack.c.l.b16 %v125
  %v436 = vunpack.c.l.b16 %v126
  %v437 = vunpack.c.l.b16 %v127
  %v438 = vunpack.c.l.b16 %v128
  %v439 = vunpack.c.l.b16 %v129
  %v440 = vunpack.c.l.b16 %v130
  %v441 = vunpack.c.l.b16 %v131
  %v442 = vunpack.c.l.b16 %v132
  %v443 = vunpack.c.l.b16 %v133
  %v444 = vunpack.c.l.b16 %v134
  %v445 = vunpack.c.l.b16 %v135
  %v446 = vunpack.c.l.b16 %v136
  %v447 = vunpack.c.l.b16 %v137
  %v448 = vunpack.c.l.b16 %v138
  %v449 = vunpack.c.l.b16 %v139
  %v450 = vunpack.c.l.b16 %v140
  %v451 = vunpack.c.l.b16 %v141
  %v452 = vunpack.c.l.b16 %v142
  %v453 = vunpack.c.l.b16 %v143
  %v454 = vunpack.c.l.b16 %v144
  %v455 = vunpack.c.l.b16 %v145
  %v456 = vunpack.c.l.b16 %v146
  %v457 = vunpack.c.l.b16 %v147
  %v458 = vunpack.c.l.b16 %v148
  %v459 = vunpack.c.l.b16 %v149
  %v460 = vunpack.c.l.b16 %v150
  %v461 = vunpack.c.l.b16 %v151
  %v462 = vunpack.c.l.b16 %v152
  %v463 = vunpack.c.l.b16 %v153
  %v464 = vunpack.c.l.b16 %v154
  %v465 = vunpack.c.l.b16 %v155
  %v466 = vunpack.c.l.b16 %v156
  %v467 = vunpack.c.l.b16 %v157
  %v468 = vunpack.c.l.b16 %v158
  %v469 = vunpack.c.l.b16 %v159
  %v470 = vunpack.c.l.b16 %v160
  %v471 = vunpack.c.l.b16 %v161
  %v472 = vunpack.c.l.b16 %v162
  %v473 = vunpack.c.l.b16 %v163
  %v474 = vunpack.c.l.b16 %v164
  %v475 = vunpack.c.l.b16 %v165
  %v476 = vpack.c.b16 %v333, %v332
  %v477 = vpack.c.b16 %v335, %v334
  %v478 = vpack.c.b16 %v337, %v336
  %v479 = vpack.c.b16 %v339, %v338
  %v480 = vpack.c.b16 %v341, %v340
  %v481 = vpack.c.b16 %v343, %v342
  %v482 = vpack.c.b16 %v345, %v344
  %v483 = vpack.c.b16 %v347, %v346
  %v484 = vpack.c.b16 %v349, %v348
  %v485 = vpack.c.b16 %v351, %v350
  %v486 = vpack.c.b16 %v353, %v352
  %v487 = vpack.c.b16 %v355, %v354
  %v488 = vpack.c.b16 %v357, %v356
  %v489 = vpack.c.b16 %v359, %v358
  %v490 = vpack.c.b16 %v361, %v360
  %v491 = vpack.c.b16 %v363, %v362
  %v492 = vpack.c.b16 %v365, %v364
  %v493 = vpack.c.b16 %v367, %v366
  %v494 = vpack.c.b16 %v369, %v368
  %v495 = vpack.c.b16 %v371, %v370
  %v496 = vpack.c.b16 %v373, %v372
  %v497 = vpack.c.b16 %v375, %v374
  %v498 = vpack.c.b16 %v377, %v376
  %v499 = vpack.c.b16 %v379, %v378
  %v500 = vpack.c.b16 %v381, %v380
  %v501 = vpack.c.b16 %v383, %v382
  %v502 = vpack.c.b16 %v385, %v384
  %v503 = vpack.c.b16 %v387, %v386
  %v504 = vpack.c.b16 %v389, %v388
  %v505 = vpack.c.b16 %v391, %v390
  %v506 = vpack.c.b16 %v393, %v392
  %v507 = vpack.c.b16 %v395, %v394
  %v508 = vpack.c.b16 %v397, %v396
  %v509 = vpack.c.b16 %v399, %v398
  %v510 = vpack.c.b16 %v401, %v400
  %v511 = vpack.c.b16 %v403, %v402
  %v512 = vpack.c.b16 %v405, %v404
  %v513 = vpack.c.b16 %v407, %v406
  %v514 = vpack.c.b16 %v409, %v408
  %v515 = vpack.c.b16 %v411, %v410
  %v516 = vpack.c.b16 %v413, %v412
  %v517 = vpack.c.b16 %v415, %v414
  %v518 = vpack.c.b16 %v417, %v416
  %v519 = vpack.c.b16 %v419, %v418
  %v520 = vpack.c.b16 %v421, %v420
  %v521 = vpack.c.b16 %v423, %v422
  %v522 = vpack.c.b16 %v425, %v424
  %v523 = vpack.c.b16 %v427, %v426
  %v524 = vpack.c.b16 %v429, %v428
  %v525 = vpack.c.b16 %v431, %v430
  %v526 = vpack.c.b16 %v433, %v432
  %v527 = vpack.c.b16 %v435, %v434
  %v528 = vpack.c.b16 %v437, %v436
  %v529 = vpack.c.b16 %v439, %v438
  %v530 = vpack.c.b16 %v441, %v440
  %v531 = vpack.c.b16 %v443, %v442
  %v532 = vpack.c.b16 %v445, %v444
  %v533 = vpack.c.b16 %v447, %v446
  %v534 = vpack.c.b16 %v449, %v448
  %v535 = vpack.c.b16 %v451, %v450
  %v536 = vpack.c.b16 %v453, %v452
  %v537 = vpack.c.b16 %v455, %v454
  %v538 = vpack.c.b16 %v457, %v456
  %v539 = vpack.c.b16 %v459, %v458
  %v540 = vpack.c.b16 %v461, %v460
  %v541 = vpack.c.b16 %v463, %v462
  %v542 = vpack.c.b16 %v465, %v464
  %v543 = vpack.c.b16 %v467, %v466
  %v544 = vpack.c.b16 %v469, %v468
  %v545 = vpack.c.b16 %v471, %v470
  %v546 = vpack.c.b16 %v473, %v472
  %v547 = vpack.c.b16 %v475, %v474
  %620 = vmatpush.bf16.msra.mxu0 %v483
  %621 = vmatpush.bf16.msra.mxu0 %v482
  %622 = vmatpush.bf16.msra.mxu0 %v481
  %623 = vmatpush.bf16.msra.mxu0 %v480
  %624 = vmatpush.bf16.msra.mxu0 %v479
  %625 = vmatpush.bf16.msra.mxu0 %v478
  %626 = vmatpush.bf16.msra.mxu0 %v477
  %627 = vmatpush.bf16.msra.mxu0 %v476
  %628 = vmatmul.bf16.gmra.mxu0 %v168
  %v629 = vpop.f32.mrf.mxu0
  %v630 = vadd.f32 0.0, %v629
  %v631 = vpop.f32.mrf.mxu0
  %632 = vdwg.mxu0
  %633 = vmatpush.bf16.msra.mxu0 %v491
  %634 = vmatpush.bf16.msra.mxu0 %v490
  %635 = vmatpush.bf16.msra.mxu0 %v489
  %636 = vmatpush.bf16.msra.mxu0 %v488
  %637 = vmatpush.bf16.msra.mxu0 %v487
  %638 = vmatpush.bf16.msra.mxu0 %v486
  %639 = vmatpush.bf16.msra.mxu0 %v485
  %640 = vmatpush.bf16.msra.mxu0 %v484
  %641 = vmatmul.bf16.gmra.mxu0 %v169
  %v642 = vpop.f32.mrf.mxu0
  %v643 = vadd.f32 %v630, %v642
  %v644 = vpop.f32.mrf.mxu0
  %645 = vdwg.mxu0
  %646 = vmatpush.bf16.msra.mxu0 %v499
  %647 = vmatpush.bf16.msra.mxu0 %v498
  %648 = vmatpush.bf16.msra.mxu0 %v497
  %649 = vmatpush.bf16.msra.mxu0 %v496
  %650 = vmatpush.bf16.msra.mxu0 %v495
  %651 = vmatpush.bf16.msra.mxu0 %v494
  %652 = vmatpush.bf16.msra.mxu0 %v493
  %653 = vmatpush.bf16.msra.mxu0 %v492
  %654 = vmatmul.bf16.gmra.mxu0 %v170
  %v655 = vpop.f32.mrf.mxu0
  %v656 = vadd.f32 %v643, %v655
  %v657 = vpop.f32.mrf.mxu0
  %658 = vdwg.mxu0
  %659 = vmatpush.bf16.msra.mxu0 %v507
  %660 = vmatpush.bf16.msra.mxu0 %v506
  %661 = vmatpush.bf16.msra.mxu0 %v505
  %662 = vmatpush.bf16.msra.mxu0 %v504
  %663 = vmatpush.bf16.msra.mxu0 %v503
  %664 = vmatpush.bf16.msra.mxu0 %v502
  %665 = vmatpush.bf16.msra.mxu0 %v501
  %666 = vmatpush.bf16.msra.mxu0 %v500
  %667 = vmatmul.bf16.gmra.mxu0 %v171
  %v668 = vpop.f32.mrf.mxu0
  %v669 = vadd.f32 %v656, %v668
  %v670 = vpop.f32.mrf.mxu0
  %671 = vdwg.mxu0
  %672 = vmatpush.bf16.msra.mxu0 %v515
  %673 = vmatpush.bf16.msra.mxu0 %v514
  %674 = vmatpush.bf16.msra.mxu0 %v513
  %675 = vmatpush.bf16.msra.mxu0 %v512
  %676 = vmatpush.bf16.msra.mxu0 %v511
  %677 = vmatpush.bf16.msra.mxu0 %v510
  %678 = vmatpush.bf16.msra.mxu0 %v509
  %679 = vmatpush.bf16.msra.mxu0 %v508
  %680 = vmatmul.bf16.gmra.mxu0 %v172
  %v681 = vpop.f32.mrf.mxu0
  %v682 = vadd.f32 %v669, %v681
  %v683 = vpop.f32.mrf.mxu0
  %684 = vdwg.mxu0
  %685 = vmatpush.bf16.msra.mxu0 %v523
  %686 = vmatpush.bf16.msra.mxu0 %v522
  %687 = vmatpush.bf16.msra.mxu0 %v521
  %688 = vmatpush.bf16.msra.mxu0 %v520
  %689 = vmatpush.bf16.msra.mxu0 %v519
  %690 = vmatpush.bf16.msra.mxu0 %v518
  %691 = vmatpush.bf16.msra.mxu0 %v517
  %692 = vmatpush.bf16.msra.mxu0 %v516
  %693 = vmatmul.bf16.gmra.mxu0 %v173
  %v694 = vpop.f32.mrf.mxu0
  %v695 = vadd.f32 %v682, %v694
  %v696 = vpop.f32.mrf.mxu0
  %697 = vdwg.mxu0
  %698 = vmatpush.bf16.msra.mxu0 %v531
  %699 = vmatpush.bf16.msra.mxu0 %v530
  %700 = vmatpush.bf16.msra.mxu0 %v529
  %701 = vmatpush.bf16.msra.mxu0 %v528
  %702 = vmatpush.bf16.msra.mxu0 %v527
  %703 = vmatpush.bf16.msra.mxu0 %v526
  %704 = vmatpush.bf16.msra.mxu0 %v525
  %705 = vmatpush.bf16.msra.mxu0 %v524
  %706 = vmatmul.bf16.gmra.mxu0 %v174
  %v707 = vpop.f32.mrf.mxu0
  %v708 = vadd.f32 %v695, %v707
  %v709 = vpop.f32.mrf.mxu0
  %710 = vdwg.mxu0
  %711 = vmatpush.bf16.msra.mxu0 %v539
  %712 = vmatpush.bf16.msra.mxu0 %v538
  %713 = vmatpush.bf16.msra.mxu0 %v537
  %714 = vmatpush.bf16.msra.mxu0 %v536
  %715 = vmatpush.bf16.msra.mxu0 %v535
  %716 = vmatpush.bf16.msra.mxu0 %v534
  %717 = vmatpush.bf16.msra.mxu0 %v533
  %718 = vmatpush.bf16.msra.mxu0 %v532
  %719 = vmatmul.bf16.gmra.mxu0 %v175
  %v720 = vpop.f32.mrf.mxu0
  %v721 = vadd.f32 %v708, %v720
  %v722 = vpop.f32.mrf.mxu0
  %723 = vdwg.mxu0
  %724 = vmatpush.bf16.msra.mxu0 %v547
  %725 = vmatpush.bf16.msra.mxu0 %v546
  %726 = vmatpush.bf16.msra.mxu0 %v545
  %727 = vmatpush.bf16.msra.mxu0 %v544
  %728 = vmatpush.bf16.msra.mxu0 %v543
  %729 = vmatpush.bf16.msra.mxu0 %v542
  %730 = vmatpush.bf16.msra.mxu0 %v541
  %731 = vmatpush.bf16.msra.mxu0 %v540
  %732 = vmatmul.bf16.gmra.mxu0 %v178
  %v733 = vpop.f32.mrf.mxu0
  %v734 = vadd.f32 %v721, %v733
  %v735 = vpop.f32.mrf.mxu0
  %736 = vdwg.mxu0
  %v737 = vld [vmem:[%s2] sm:$0x1]
  %v739 = vperm.slane %v737, 0
  %v741 = vmul.f32 %v734, %v739
  %v742 = vld [vmem:[%s3] sm:$0x1]
  %v744 = vperm.slane %v742, 0
  %v746 = vadd.f32 %v741, %v744
  %v747 = vld [vmem:[%s4] sm:$0x1]
  %v748 = vunpack.c.l.bf16 %v747
  %v749 = vadd.f32 %v746, %v748
  %v750 = vmax.f32 %v749, 0.0
  %v751 = vpack.c.bf16 %v750, %v750
  %752 = vst [vmem:[%s5] sm:$0x1] %v751
  // Predicated region
  $region22: #{forward.26} parent=0 // pred_check
    _
  $region23: #{forward.26} parent=0 // pred_check_branch
    %754 = sbr.rel (0) target = $region25
  $region24: #{forward.26} parent=0 // pred_region
    _
  $region25: #{forward.26} parent=0 // pred_fallthru
    _
  // Predicated region
  $region26: #{forward.26} parent=0 // pred_check
    _
  $region27: #{forward.26} parent=0 // pred_check_branch
    %756 = sbr.rel (0) target = $region29
  $region28: #{forward.26} parent=0 // pred_region
    _
  $region29: #{forward.26} parent=0 // pred_fallthru
    _

// kernel: forward.27
$region0: #{forward.27}
  #allocation0 [shape = 'u32[]', space=smem, size = 0x4, offset = 0x4, fixed_abs, tag = 'smem constant byte address 0x4 - core index']
  #allocation1 [shape = 'u32[72,128]{1,0:T(1,128)}', space=vmem, size = 0x9000, scoped, tag = 'internal scratch']
  %s0 = inlined_call_operand.vmem [shape: bf16[2,1,128], index: 0, kind: input, shape index: {}]
  %s1 = inlined_call_operand.vmem [shape: f32[2,4], index: 1, kind: input, shape index: {}]
  %s2 = inlined_call_operand.vmem [shape: f32[4,8], index: 2, kind: input, shape index: {}]
  %s3 = inlined_call_operand.vmem [shape: f32[1,8], index: 3, kind: input, shape index: {}]
  %s4 = inlined_call_operand.vmem [shape: f32[1,8], index: 4, kind: input, shape index: {}]
  %s5 = inlined_call_operand.vmem [shape: f32[8,4], index: 5, kind: input, shape index: {}]
  %s6 = inlined_call_operand.vmem [shape: f32[1,4], index: 6, kind: input, shape index: {}]
  %s7 = inlined_call_operand.vmem [shape: f32[1,4], index: 7, kind: input, shape index: {}]
  %s8 = inlined_call_operand.vmem [shape: f32[128,512], index: 8, kind: input, shape index: {}]
  %s9 = inlined_call_operand.vmem [shape: f32[4,512], index: 9, kind: input, shape index: {}]
  %s10 = inlined_call_operand.vmem [shape: f32[1,512], index: 10, kind: input, shape index: {}]
  %s11 = inlined_call_operand.vmem [shape: f32[512,2], index: 11, kind: input, shape index: {}]
  %s12 = inlined_call_operand.vmem [shape: f32[1,2], index: 12, kind: input, shape index: {}]
  %s13 = inlined_call_operand.hbm [shape: f32[2,2], index: 13, kind: output, shape index: {}]
  %s14 = sld [smem:[#allocation0]]
  $region62: #{forward.27} parent=0
    _
  %s16 = ssub.s32 1, %s14
  %s17 = scalar_select 0, %s16, %s14
  $region1: #{forward.27} parent=0
    #allocation2 [shape = 'u8[1024]{0}', space=vmem, size = 0x400, scoped, tag = 'output window, operand 0, single buffered']
    #allocation3 [shape = 's32[1]{0}', space=sflag, size = 0x4, scoped, tag = 'scoped memory for forward.27']
    %18 = vsyncpa [#allocation3], 0
    // Predicated region
    $region2: #{forward.27} parent=1 // pred_check
      _
    $region3: #{forward.27} parent=1 // pred_check_branch
      %20 = sbr.rel (0) target = $region5
    $region4: #{forward.27} parent=1 // pred_region
      _
    $region5: #{forward.27} parent=1 // pred_fallthru
      _
    // Predicated region
    $region6: #{forward.27} parent=1 // pred_check
      _
    $region7: #{forward.27} parent=1 // pred_check_branch
      %22 = sbr.rel (0) target = $region9
    $region8: #{forward.27} parent=1 // pred_region
      _
    $region9: #{forward.27} parent=1 // pred_fallthru
      _
    // Predicated region
    $region10: #{forward.27} parent=1 // pred_check
      _
    $region11: #{forward.27} parent=1 // pred_check_branch
      %24 = sbr.rel (0) target = $region13
    $region12: #{forward.27} parent=1 // pred_region
      _
    $region13: #{forward.27} parent=1 // pred_fallthru
      _
    // Predicated region
    $region14: #{forward.27} parent=1 // pred_check
      _
    $region15: #{forward.27} parent=1 // pred_check_branch
      %26 = sbr.rel (0) target = $region17
    $region16: #{forward.27} parent=1 // pred_region
      _
    $region17: #{forward.27} parent=1 // pred_fallthru
      _
    // Predicated region
    $region18: #{forward.27} parent=1 // pred_check
      _
    $region19: #{forward.27} parent=1 // pred_check_branch
      %28 = sbr.rel (0) target = $region21
    $region20: #{forward.27} parent=1 // pred_region
      _
    $region21: #{forward.27} parent=1 // pred_fallthru
      _
    // Predicated region
    $region22: #{forward.27} parent=1 // pred_check
      _
    $region23: #{forward.27} parent=1 // pred_check_branch
      %30 = sbr.rel (0) target = $region25
    $region24: #{forward.27} parent=1 // pred_region
      _
    $region25: #{forward.27} parent=1 // pred_fallthru
      _
    // Predicated region
    $region26: #{forward.27} parent=1 // pred_check
      _
    $region27: #{forward.27} parent=1 // pred_check_branch
      %32 = sbr.rel (0) target = $region29
    $region28: #{forward.27} parent=1 // pred_region
      _
    $region29: #{forward.27} parent=1 // pred_fallthru
      _
    // Predicated region
    $region30: #{forward.27} parent=1 // pred_check
      _
    $region31: #{forward.27} parent=1 // pred_check_branch
      %34 = sbr.rel (0) target = $region33
    $region32: #{forward.27} parent=1 // pred_region
      _
    $region33: #{forward.27} parent=1 // pred_fallthru
      _
    // Predicated region
    $region34: #{forward.27} parent=1 // pred_check
      _
    $region35: #{forward.27} parent=1 // pred_check_branch
      %36 = sbr.rel (0) target = $region37
    $region36: #{forward.27} parent=1 // pred_region
      _
    $region37: #{forward.27} parent=1 // pred_fallthru
      _
    // Predicated region
    $region38: #{forward.27} parent=1 // pred_check
      _
    $region39: #{forward.27} parent=1 // pred_check_branch
      %38 = sbr.rel (0) target = $region41
    $region40: #{forward.27} parent=1 // pred_region
      _
    $region41: #{forward.27} parent=1 // pred_fallthru
      _
    // Predicated region
    $region42: #{forward.27} parent=1 // pred_check
      _
    $region43: #{forward.27} parent=1 // pred_check_branch
      %40 = sbr.rel (0) target = $region45
    $region44: #{forward.27} parent=1 // pred_region
      _
    $region45: #{forward.27} parent=1 // pred_fallthru
      _
    // Predicated region
    $region46: #{forward.27} parent=1 // pred_check
      _
    $region47: #{forward.27} parent=1 // pred_check_branch
      %42 = sbr.rel (0) target = $region49
    $region48: #{forward.27} parent=1 // pred_region
      _
    $region49: #{forward.27} parent=1 // pred_fallthru
      _
    // Predicated region
    $region50: #{forward.27} parent=1 // pred_check
      _
    $region51: #{forward.27} parent=1 // pred_check_branch
      %44 = sbr.rel (0) target = $region53
    $region52: #{forward.27} parent=1 // pred_region
      _
    $region53: #{forward.27} parent=1 // pred_fallthru
      _
    %v45 = vld [vmem:[%s0] sm:$0x1]
    %v46 = vld [vmem:[%s0 + $0x1] sm:$0x1]
    %v47 = vunpack.c.l.bf16 %v45
    %v48 = vunpack.c.l.bf16 %v46
    %v49 = vadd.f32 %v47, 0.0
    %v50 = vadd.f32 %v48, 0.0
    %v51 = vld [vmem:[%s1] sm:$0x3]
    %v52 = vld [vmem:[%s2] sm:$0xf]
    %vm53 = vcmask 31744
    %v55 = vsel %vm53, %v51, 0
    %vm57 = vcmask 1043456
    %v59 = vsel %vm57, %v52, 0
    %61 = vmatpush.msra.mxu0 0.0
    %62 = vmatpush.msra.mxu0 0.0
    %63 = vmatpush.msra.mxu0 0.0
    %64 = vmatpush.msra.mxu0 0.0
    %65 = vmatpush.msra.mxu0 0.0
    %66 = vmatpush.msra.mxu0 0.0
    %67 = vmatpush.msra.mxu0 0.0
    %68 = vmatpush.msra.mxu0 0.0
    %69 = vmatpush.msra.mxu0 0.0
    %70 = vmatpush.msra.mxu0 0.0
    %71 = vmatpush.msra.mxu0 0.0
    %72 = vmatpush.msra.mxu0 0.0
    %73 = vmatpush.msra.mxu0 0.0
    %74 = vmatpush.msra.mxu0 0.0
    %75 = vmatpush.msra.mxu0 0.0
    %76 = vmatpush.msra.mxu0 %v59
    %77 = vmatmul.f32.gmra.mxu0 %v55
    %v78 = vpop.f32.mrf.mxu0
    %v79 = vadd.f32 0.0, %v78
    %80 = vdwg.mxu0
    %v81 = vld [vmem:[%s3] sm:$0x1]
    %v83 = vperm.slane %v81, 0
    %v85 = vmul.f32 %v79, %v83
    %v86 = vld [vmem:[%s4] sm:$0x1]
    %v88 = vperm.slane %v86, 0
    %v90 = vadd.f32 %v85, %v88
    %v91 = vmax.f32 %v90, 0.0
    %v92 = vld [vmem:[%s5] sm:$0xff]
    %vm93 = vcmask 64512
    %v95 = vsel %vm93, %v91, 0
    %97 = vmatpush.msra.mxu0 0.0
    %98 = vmatpush.msra.mxu0 0.0
    %99 = vmatpush.msra.mxu0 0.0
    %100 = vmatpush.msra.mxu0 0.0
    %101 = vmatpush.msra.mxu0 0.0
    %102 = vmatpush.msra.mxu0 0.0
    %103 = vmatpush.msra.mxu0 0.0
    %104 = vmatpush.msra.mxu0 0.0
    %105 = vmatpush.msra.mxu0 0.0
    %106 = vmatpush.msra.mxu0 0.0
    %107 = vmatpush.msra.mxu0 0.0
    %108 = vmatpush.msra.mxu0 0.0
    %109 = vmatpush.msra.mxu0 0.0
    %110 = vmatpush.msra.mxu0 0.0
    %111 = vmatpush.msra.mxu0 0.0
    %112 = vmatpush.msra.mxu0 %v92
    %113 = vmatmul.f32.gmra.mxu0 %v95
    %v114 = vpop.f32.mrf.mxu0
    %v115 = vadd.f32 0.0, %v114
    %116 = vdwg.mxu0
    %v117 = vld [vmem:[%s6] sm:$0x1]
    %v119 = vperm.slane %v117, 0
    %v121 = vmul.f32 %v115, %v119
    %v122 = vld [vmem:[%s7] sm:$0x1]
    %v124 = vperm.slane %v122, 0
    %v126 = vadd.f32 %v121, %v124
    %v127 = vmax.f32 %v126, 0.0
    %v128 = vld [vmem:[%s8] sm:$0xff]
    %v129 = vld [vmem:[%s8 + $0x8] sm:$0xff]
    %v130 = vld [vmem:[%s8 + $0x10] sm:$0xff]
    %v131 = vld [vmem:[%s8 + $0x18] sm:$0xff]
    %v132 = vld [vmem:[%s8 + $0x20] sm:$0xff]
    %v133 = vld [vmem:[%s8 + $0x28] sm:$0xff]
    %v134 = vld [vmem:[%s8 + $0x30] sm:$0xff]
    %v135 = vld [vmem:[%s8 + $0x38] sm:$0xff]
    %v136 = vld [vmem:[%s8 + $0x40] sm:$0xff]
    %v137 = vld [vmem:[%s8 + $0x48] sm:$0xff]
    %v138 = vld [vmem:[%s8 + $0x50] sm:$0xff]
    %v139 = vld [vmem:[%s8 + $0x58] sm:$0xff]
    %v140 = vld [vmem:[%s8 + $0x60] sm:$0xff]
    %v141 = vld [vmem:[%s8 + $0x68] sm:$0xff]
    %v142 = vld [vmem:[%s8 + $0x70] sm:$0xff]
    %v143 = vld [vmem:[%s8 + $0x78] sm:$0xff]
    %v144 = vld [vmem:[%s8 + $0x80] sm:$0xff]
    %v145 = vld [vmem:[%s8 + $0x88] sm:$0xff]
    %v146 = vld [vmem:[%s8 + $0x90] sm:$0xff]
    %v147 = vld [vmem:[%s8 + $0x98] sm:$0xff]
    %v148 = vld [vmem:[%s8 + $0xa0] sm:$0xff]
    %v149 = vld [vmem:[%s8 + $0xa8] sm:$0xff]
    %v150 = vld [vmem:[%s8 + $0xb0] sm:$0xff]
    %v151 = vld [vmem:[%s8 + $0xb8] sm:$0xff]
    %v152 = vld [vmem:[%s8 + $0xc0] sm:$0xff]
    %v153 = vld [vmem:[%s8 + $0xc8] sm:$0xff]
    %v154 = vld [vmem:[%s8 + $0xd0] sm:$0xff]
    %v155 = vld [vmem:[%s8 + $0xd8] sm:$0xff]
    %v156 = vld [vmem:[%s8 + $0xe0] sm:$0xff]
    %v157 = vld [vmem:[%s8 + $0xe8] sm:$0xff]
    %v158 = vld [vmem:[%s8 + $0xf0] sm:$0xff]
    %v159 = vld [vmem:[%s8 + $0xf8] sm:$0xff]
    %v160 = vld [vmem:[%s8 + $0x100] sm:$0xff]
    %v161 = vld [vmem:[%s8 + $0x108] sm:$0xff]
    %v162 = vld [vmem:[%s8 + $0x110] sm:$0xff]
    %v163 = vld [vmem:[%s8 + $0x118] sm:$0xff]
    %v164 = vld [vmem:[%s8 + $0x120] sm:$0xff]
    %v165 = vld [vmem:[%s8 + $0x128] sm:$0xff]
    %v166 = vld [vmem:[%s8 + $0x130] sm:$0xff]
    %v167 = vld [vmem:[%s8 + $0x138] sm:$0xff]
    %v168 = vld [vmem:[%s8 + $0x140] sm:$0xff]
    %v169 = vld [vmem:[%s8 + $0x148] sm:$0xff]
    %v170 = vld [vmem:[%s8 + $0x150] sm:$0xff]
    %v171 = vld [vmem:[%s8 + $0x158] sm:$0xff]
    %v172 = vld [vmem:[%s8 + $0x160] sm:$0xff]
    %v173 = vld [vmem:[%s8 + $0x168] sm:$0xff]
    %v174 = vld [vmem:[%s8 + $0x170] sm:$0xff]
    %v175 = vld [vmem:[%s8 + $0x178] sm:$0xff]
    %v176 = vld [vmem:[%s8 + $0x180] sm:$0xff]
    %v177 = vld [vmem:[%s8 + $0x188] sm:$0xff]
    %v178 = vld [vmem:[%s8 + $0x190] sm:$0xff]
    %v179 = vld [vmem:[%s8 + $0x198] sm:$0xff]
    %v180 = vld [vmem:[%s8 + $0x1a0] sm:$0xff]
    %v181 = vld [vmem:[%s8 + $0x1a8] sm:$0xff]
    %v182 = vld [vmem:[%s8 + $0x1b0] sm:$0xff]
    %v183 = vld [vmem:[%s8 + $0x1b8] sm:$0xff]
    %v184 = vld [vmem:[%s8 + $0x1c0] sm:$0xff]
    %v185 = vld [vmem:[%s8 + $0x1c8] sm:$0xff]
    %v186 = vld [vmem:[%s8 + $0x1d0] sm:$0xff]
    %v187 = vld [vmem:[%s8 + $0x1d8] sm:$0xff]
    %v188 = vld [vmem:[%s8 + $0x1e0] sm:$0xff]
    %v189 = vld [vmem:[%s8 + $0x1e8] sm:$0xff]
    %v190 = vld [vmem:[%s8 + $0x1f0] sm:$0xff]
    %v191 = vld [vmem:[%s8 + $0x1f8] sm:$0xff]
    %v192 = vld [vmem:[%s9] sm:$0xff]
    %v193 = vld [vmem:[%s9 + $0x8] sm:$0xff]
    %196 = vst [vmem:[#allocation1] ss:$2 sm:$0xff] %v192
    %s197 = scalar_lea.vmem [#allocation1], 16
    %198 = vst [vmem:[%s197] ss:$2 sm:$0xff] %v193
    %v199 = vld.sshfl [vmem:[#allocation1] sm:$0xff pattern:$0x75316420]
    %v200 = vld.sshfl [vmem:[#allocation1 + $0x8] sm:$0xff pattern:$0x75316420]
    %v201 = vld.sshfl [vmem:[#allocation1 + $0x10] sm:$0xff pattern:$0x75316420]
    %v202 = vld.sshfl [vmem:[#allocation1 + $0x18] sm:$0xff pattern:$0x75316420]
    %v204 = vsel %vm53, %v127, 0
    %v206 = vsel %vm57, %v199, 0
    %v208 = vsel %vm57, %v200, 0
    %v210 = vsel %vm57, %v201, 0
    %v212 = vsel %vm57, %v202, 0
    %214 = vmatpush.msra.mxu0 0.0
    %215 = vmatpush.msra.mxu0 0.0
    %216 = vmatpush.msra.mxu0 0.0
    %217 = vmatpush.msra.mxu0 0.0
    %218 = vmatpush.msra.mxu0 0.0
    %219 = vmatpush.msra.mxu0 0.0
    %220 = vmatpush.msra.mxu0 0.0
    %221 = vmatpush.msra.mxu0 0.0
    %222 = vmatpush.msra.mxu0 0.0
    %223 = vmatpush.msra.mxu0 0.0
    %224 = vmatpush.msra.mxu0 0.0
    %225 = vmatpush.msra.mxu0 0.0
    %226 = vmatpush.msra.mxu0 0.0
    %227 = vmatpush.msra.mxu0 0.0
    %228 = vmatpush.msra.mxu0 0.0
    %229 = vmatpush.msra.mxu0 %v206
    %230 = vmatmul.f32.gmra.mxu0 %v204
    %v231 = vpop.f32.mrf.mxu0
    %v232 = vadd.f32 0.0, %v231
    %233 = vdwg.mxu0
    %234 = vmatpush.msra.mxu0 0.0
    %235 = vmatpush.msra.mxu0 0.0
    %236 = vmatpush.msra.mxu0 0.0
    %237 = vmatpush.msra.mxu0 0.0
    %238 = vmatpush.msra.mxu0 0.0
    %239 = vmatpush.msra.mxu0 0.0
    %240 = vmatpush.msra.mxu0 0.0
    %241 = vmatpush.msra.mxu0 0.0
    %242 = vmatpush.msra.mxu0 0.0
    %243 = vmatpush.msra.mxu0 0.0
    %244 = vmatpush.msra.mxu0 0.0
    %245 = vmatpush.msra.mxu0 0.0
    %246 = vmatpush.msra.mxu0 0.0
    %247 = vmatpush.msra.mxu0 0.0
    %248 = vmatpush.msra.mxu0 0.0
    %249 = vmatpush.msra.mxu0 %v208
    %250 = vmatmul.f32.gmra.mxu0 %v204
    %v251 = vpop.f32.mrf.mxu0
    %v252 = vadd.f32 0.0, %v251
    %253 = vdwg.mxu0
    %254 = vmatpush.msra.mxu0 0.0
    %255 = vmatpush.msra.mxu0 0.0
    %256 = vmatpush.msra.mxu0 0.0
    %257 = vmatpush.msra.mxu0 0.0
    %258 = vmatpush.msra.mxu0 0.0
    %259 = vmatpush.msra.mxu0 0.0
    %260 = vmatpush.msra.mxu0 0.0
    %261 = vmatpush.msra.mxu0 0.0
    %262 = vmatpush.msra.mxu0 0.0
    %263 = vmatpush.msra.mxu0 0.0
    %264 = vmatpush.msra.mxu0 0.0
    %265 = vmatpush.msra.mxu0 0.0
    %266 = vmatpush.msra.mxu0 0.0
    %267 = vmatpush.msra.mxu0 0.0
    %268 = vmatpush.msra.mxu0 0.0
    %269 = vmatpush.msra.mxu0 %v210
    %270 = vmatmul.f32.gmra.mxu0 %v204
    %v271 = vpop.f32.mrf.mxu0
    %v272 = vadd.f32 0.0, %v271
    %273 = vdwg.mxu0
    %274 = vmatpush.msra.mxu0 0.0
    %275 = vmatpush.msra.mxu0 0.0
    %276 = vmatpush.msra.mxu0 0.0
    %277 = vmatpush.msra.mxu0 0.0
    %278 = vmatpush.msra.mxu0 0.0
    %279 = vmatpush.msra.mxu0 0.0
    %280 = vmatpush.msra.mxu0 0.0
    %281 = vmatpush.msra.mxu0 0.0
    %282 = vmatpush.msra.mxu0 0.0
    %283 = vmatpush.msra.mxu0 0.0
    %284 = vmatpush.msra.mxu0 0.0
    %285 = vmatpush.msra.mxu0 0.0
    %286 = vmatpush.msra.mxu0 0.0
    %287 = vmatpush.msra.mxu0 0.0
    %288 = vmatpush.msra.mxu0 0.0
    %289 = vmatpush.msra.mxu0 %v212
    %290 = vmatmul.f32.gmra.mxu0 %v204
    %v291 = vpop.f32.mrf.mxu0
    %v292 = vadd.f32 0.0, %v291
    %293 = vdwg.mxu0
    %v296 = vperm.slane %v49, 0
    %v297 = vperm.slane %v50, 0
    %vm298 = vcmask 1041409
    %v299 = vsel %vm298, %v297, %v296
    %301 = vmatpush.msra.mxu0 %v188
    %302 = vmatpush.msra.mxu0 %v184
    %303 = vmatpush.msra.mxu0 %v180
    %304 = vmatpush.msra.mxu0 %v176
    %305 = vmatpush.msra.mxu0 %v172
    %306 = vmatpush.msra.mxu0 %v168
    %307 = vmatpush.msra.mxu0 %v164
    %308 = vmatpush.msra.mxu0 %v160
    %309 = vmatpush.msra.mxu0 %v156
    %310 = vmatpush.msra.mxu0 %v152
    %311 = vmatpush.msra.mxu0 %v148
    %312 = vmatpush.msra.mxu0 %v144
    %313 = vmatpush.msra.mxu0 %v140
    %314 = vmatpush.msra.mxu0 %v136
    %315 = vmatpush.msra.mxu0 %v132
    %316 = vmatpush.msra.mxu0 %v128
    %317 = vmatmul.f32.gmra.mxu0 %v299
    %v318 = vpop.f32.mrf.mxu0
    %v319 = vadd.f32 %v232, %v318
    %320 = vdwg.mxu0
    %321 = vmatpush.msra.mxu0 %v189
    %322 = vmatpush.msra.mxu0 %v185
    %323 = vmatpush.msra.mxu0 %v181
    %324 = vmatpush.msra.mxu0 %v177
    %325 = vmatpush.msra.mxu0 %v173
    %326 = vmatpush.msra.mxu0 %v169
    %327 = vmatpush.msra.mxu0 %v165
    %328 = vmatpush.msra.mxu0 %v161
    %329 = vmatpush.msra.mxu0 %v157
    %330 = vmatpush.msra.mxu0 %v153
    %331 = vmatpush.msra.mxu0 %v149
    %332 = vmatpush.msra.mxu0 %v145
    %333 = vmatpush.msra.mxu0 %v141
    %334 = vmatpush.msra.mxu0 %v137
    %335 = vmatpush.msra.mxu0 %v133
    %336 = vmatpush.msra.mxu0 %v129
    %337 = vmatmul.f32.gmra.mxu0 %v299
    %v338 = vpop.f32.mrf.mxu0
    %v339 = vadd.f32 %v252, %v338
    %340 = vdwg.mxu0
    %341 = vmatpush.msra.mxu0 %v190
    %342 = vmatpush.msra.mxu0 %v186
    %343 = vmatpush.msra.mxu0 %v182
    %344 = vmatpush.msra.mxu0 %v178
    %345 = vmatpush.msra.mxu0 %v174
    %346 = vmatpush.msra.mxu0 %v170
    %347 = vmatpush.msra.mxu0 %v166
    %348 = vmatpush.msra.mxu0 %v162
    %349 = vmatpush.msra.mxu0 %v158
    %350 = vmatpush.msra.mxu0 %v154
    %351 = vmatpush.msra.mxu0 %v150
    %352 = vmatpush.msra.mxu0 %v146
    %353 = vmatpush.msra.mxu0 %v142
    %354 = vmatpush.msra.mxu0 %v138
    %355 = vmatpush.msra.mxu0 %v134
    %356 = vmatpush.msra.mxu0 %v130
    %357 = vmatmul.f32.gmra.mxu0 %v299
    %v358 = vpop.f32.mrf.mxu0
    %v359 = vadd.f32 %v272, %v358
    %360 = vdwg.mxu0
    %361 = vmatpush.msra.mxu0 %v191
    %362 = vmatpush.msra.mxu0 %v187
    %363 = vmatpush.msra.mxu0 %v183
    %364 = vmatpush.msra.mxu0 %v179
    %365 = vmatpush.msra.mxu0 %v175
    %366 = vmatpush.msra.mxu0 %v171
    %367 = vmatpush.msra.mxu0 %v167
    %368 = vmatpush.msra.mxu0 %v163
    %369 = vmatpush.msra.mxu0 %v159
    %370 = vmatpush.msra.mxu0 %v155
    %371 = vmatpush.msra.mxu0 %v151
    %372 = vmatpush.msra.mxu0 %v147
    %373 = vmatpush.msra.mxu0 %v143
    %374 = vmatpush.msra.mxu0 %v139
    %375 = vmatpush.msra.mxu0 %v135
    %376 = vmatpush.msra.mxu0 %v131
    %377 = vmatmul.f32.gmra.mxu0 %v299
    %v378 = vpop.f32.mrf.mxu0
    %v379 = vadd.f32 %v292, %v378
    %380 = vdwg.mxu0
    %v381 = vld [vmem:[%s10] sm:$0xf]
    %v383 = vperm.slane %v381, 0
    %v384 = vperm.slane %v381, 1
    %v385 = vperm.slane %v381, 2
    %v386 = vperm.slane %v381, 3
    %v391 = vadd.f32 %v319, %v383
    %v392 = vadd.f32 %v339, %v384
    %v393 = vadd.f32 %v359, %v385
    %v394 = vadd.f32 %v379, %v386
    %v395 = vld [vmem:[%s11] sm:$0xff]
    %v396 = vld [vmem:[%s11 + $0x8] sm:$0xff]
    %v397 = vld [vmem:[%s11 + $0x10] sm:$0xff]
    %v398 = vld [vmem:[%s11 + $0x18] sm:$0xff]
    %v399 = vld [vmem:[%s11 + $0x20] sm:$0xff]
    %v400 = vld [vmem:[%s11 + $0x28] sm:$0xff]
    %v401 = vld [vmem:[%s11 + $0x30] sm:$0xff]
    %v402 = vld [vmem:[%s11 + $0x38] sm:$0xff]
    %v403 = vld [vmem:[%s11 + $0x40] sm:$0xff]
    %v404 = vld [vmem:[%s11 + $0x48] sm:$0xff]
    %v405 = vld [vmem:[%s11 + $0x50] sm:$0xff]
    %v406 = vld [vmem:[%s11 + $0x58] sm:$0xff]
    %v407 = vld [vmem:[%s11 + $0x60] sm:$0xff]
    %v408 = vld [vmem:[%s11 + $0x68] sm:$0xff]
    %v409 = vld [vmem:[%s11 + $0x70] sm:$0xff]
    %v410 = vld [vmem:[%s11 + $0x78] sm:$0xff]
    %v411 = vld [vmem:[%s11 + $0x80] sm:$0xff]
    %v412 = vld [vmem:[%s11 + $0x88] sm:$0xff]
    %v413 = vld [vmem:[%s11 + $0x90] sm:$0xff]
    %v414 = vld [vmem:[%s11 + $0x98] sm:$0xff]
    %v415 = vld [vmem:[%s11 + $0xa0] sm:$0xff]
    %v416 = vld [vmem:[%s11 + $0xa8] sm:$0xff]
    %v417 = vld [vmem:[%s11 + $0xb0] sm:$0xff]
    %v418 = vld [vmem:[%s11 + $0xb8] sm:$0xff]
    %v419 = vld [vmem:[%s11 + $0xc0] sm:$0xff]
    %v420 = vld [vmem:[%s11 + $0xc8] sm:$0xff]
    %v421 = vld [vmem:[%s11 + $0xd0] sm:$0xff]
    %v422 = vld [vmem:[%s11 + $0xd8] sm:$0xff]
    %v423 = vld [vmem:[%s11 + $0xe0] sm:$0xff]
    %v424 = vld [vmem:[%s11 + $0xe8] sm:$0xff]
    %v425 = vld [vmem:[%s11 + $0xf0] sm:$0xff]
    %v426 = vld [vmem:[%s11 + $0xf8] sm:$0xff]
    %v427 = vld [vmem:[%s11 + $0x100] sm:$0xff]
    %v428 = vld [vmem:[%s11 + $0x108] sm:$0xff]
    %v429 = vld [vmem:[%s11 + $0x110] sm:$0xff]
    %v430 = vld [vmem:[%s11 + $0x118] sm:$0xff]
    %v431 = vld [vmem:[%s11 + $0x120] sm:$0xff]
    %v432 = vld [vmem:[%s11 + $0x128] sm:$0xff]
    %v433 = vld [vmem:[%s11 + $0x130] sm:$0xff]
    %v434 = vld [vmem:[%s11 + $0x138] sm:$0xff]
    %v435 = vld [vmem:[%s11 + $0x140] sm:$0xff]
    %v436 = vld [vmem:[%s11 + $0x148] sm:$0xff]
    %v437 = vld [vmem:[%s11 + $0x150] sm:$0xff]
    %v438 = vld [vmem:[%s11 + $0x158] sm:$0xff]
    %v439 = vld [vmem:[%s11 + $0x160] sm:$0xff]
    %v440 = vld [vmem:[%s11 + $0x168] sm:$0xff]
    %v441 = vld [vmem:[%s11 + $0x170] sm:$0xff]
    %v442 = vld [vmem:[%s11 + $0x178] sm:$0xff]
    %v443 = vld [vmem:[%s11 + $0x180] sm:$0xff]
    %v444 = vld [vmem:[%s11 + $0x188] sm:$0xff]
    %v445 = vld [vmem:[%s11 + $0x190] sm:$0xff]
    %v446 = vld [vmem:[%s11 + $0x198] sm:$0xff]
    %v447 = vld [vmem:[%s11 + $0x1a0] sm:$0xff]
    %v448 = vld [vmem:[%s11 + $0x1a8] sm:$0xff]
    %v449 = vld [vmem:[%s11 + $0x1b0] sm:$0xff]
    %v450 = vld [vmem:[%s11 + $0x1b8] sm:$0xff]
    %v451 = vld [vmem:[%s11 + $0x1c0] sm:$0xff]
    %v452 = vld [vmem:[%s11 + $0x1c8] sm:$0xff]
    %v453 = vld [vmem:[%s11 + $0x1d0] sm:$0xff]
    %v454 = vld [vmem:[%s11 + $0x1d8] sm:$0xff]
    %v455 = vld [vmem:[%s11 + $0x1e0] sm:$0xff]
    %v456 = vld [vmem:[%s11 + $0x1e8] sm:$0xff]
    %v457 = vld [vmem:[%s11 + $0x1f0] sm:$0xff]
    %v458 = vld [vmem:[%s11 + $0x1f8] sm:$0xff]
    %v459 = vld [vmem:[%s12] sm:$0x1]
    %v461 = vperm.slane %v459, 0
    %463 = vmatpush.msra.mxu0 %v410
    %464 = vmatpush.msra.mxu0 %v409
    %465 = vmatpush.msra.mxu0 %v408
    %466 = vmatpush.msra.mxu0 %v407
    %467 = vmatpush.msra.mxu0 %v406
    %468 = vmatpush.msra.mxu0 %v405
    %469 = vmatpush.msra.mxu0 %v404
    %470 = vmatpush.msra.mxu0 %v403
    %471 = vmatpush.msra.mxu0 %v402
    %472 = vmatpush.msra.mxu0 %v401
    %473 = vmatpush.msra.mxu0 %v400
    %474 = vmatpush.msra.mxu0 %v399
    %475 = vmatpush.msra.mxu0 %v398
    %476 = vmatpush.msra.mxu0 %v397
    %477 = vmatpush.msra.mxu0 %v396
    %478 = vmatpush.msra.mxu0 %v395
    %479 = vmatmul.f32.gmra.mxu0 %v391
    %v480 = vpop.f32.mrf.mxu0
    %v481 = vadd.f32 %v461, %v480
    %482 = vdwg.mxu0
    %483 = vmatpush.msra.mxu0 %v426
    %484 = vmatpush.msra.mxu0 %v425
    %485 = vmatpush.msra.mxu0 %v424
    %486 = vmatpush.msra.mxu0 %v423
    %487 = vmatpush.msra.mxu0 %v422
    %488 = vmatpush.msra.mxu0 %v421
    %489 = vmatpush.msra.mxu0 %v420
    %490 = vmatpush.msra.mxu0 %v419
    %491 = vmatpush.msra.mxu0 %v418
    %492 = vmatpush.msra.mxu0 %v417
    %493 = vmatpush.msra.mxu0 %v416
    %494 = vmatpush.msra.mxu0 %v415
    %495 = vmatpush.msra.mxu0 %v414
    %496 = vmatpush.msra.mxu0 %v413
    %497 = vmatpush.msra.mxu0 %v412
    %498 = vmatpush.msra.mxu0 %v411
    %499 = vmatmul.f32.gmra.mxu0 %v392
    %v500 = vpop.f32.mrf.mxu0
    %v501 = vadd.f32 %v481, %v500
    %502 = vdwg.mxu0
    %503 = vmatpush.msra.mxu0 %v442
    %504 = vmatpush.msra.mxu0 %v441
    %505 = vmatpush.msra.mxu0 %v440
    %506 = vmatpush.msra.mxu0 %v439
    %507 = vmatpush.msra.mxu0 %v438
    %508 = vmatpush.msra.mxu0 %v437
    %509 = vmatpush.msra.mxu0 %v436
    %510 = vmatpush.msra.mxu0 %v435
    %511 = vmatpush.msra.mxu0 %v434
    %512 = vmatpush.msra.mxu0 %v433
    %513 = vmatpush.msra.mxu0 %v432
    %514 = vmatpush.msra.mxu0 %v431
    %515 = vmatpush.msra.mxu0 %v430
    %516 = vmatpush.msra.mxu0 %v429
    %517 = vmatpush.msra.mxu0 %v428
    %518 = vmatpush.msra.mxu0 %v427
    %519 = vmatmul.f32.gmra.mxu0 %v393
    %v520 = vpop.f32.mrf.mxu0
    %v521 = vadd.f32 %v501, %v520
    %522 = vdwg.mxu0
    %523 = vmatpush.msra.mxu0 %v458
    %524 = vmatpush.msra.mxu0 %v457
    %525 = vmatpush.msra.mxu0 %v456
    %526 = vmatpush.msra.mxu0 %v455
    %527 = vmatpush.msra.mxu0 %v454
    %528 = vmatpush.msra.mxu0 %v453
    %529 = vmatpush.msra.mxu0 %v452
    %530 = vmatpush.msra.mxu0 %v451
    %531 = vmatpush.msra.mxu0 %v450
    %532 = vmatpush.msra.mxu0 %v449
    %533 = vmatpush.msra.mxu0 %v448
    %534 = vmatpush.msra.mxu0 %v447
    %535 = vmatpush.msra.mxu0 %v446
    %536 = vmatpush.msra.mxu0 %v445
    %537 = vmatpush.msra.mxu0 %v444
    %538 = vmatpush.msra.mxu0 %v443
    %539 = vmatmul.f32.gmra.mxu0 %v394
    %v540 = vpop.f32.mrf.mxu0
    %v541 = vadd.f32 %v521, %v540
    %542 = vdwg.mxu0
    %vm543 = vcmask 9216
    %544 = vst.msk [vmem:[#allocation2] sm:$0x3] %vm543, %v541
    // Predicated region
    $region54: #{forward.27} parent=1 // pred_check
      _
    $region55: #{forward.27} parent=1 // pred_check_branch
      %546 = sbr.rel (0) target = $region57
    $region56: #{forward.27} parent=1 // pred_region
      %548 = vsyncadd [#allocation3], 0
      %s550 = sshll.u32 [#allocation2], 4
      %s551 = int_to_ptr.vmem [resolvable:$true] %s550
      %s552 = sshll.u32 %s13, 4
      %s553 = int_to_ptr.hbm [resolvable:$true] %s552
      %555 = dma.vmem_to_hbm [thread:$0]  %s551, 32, %s553, [#allocation3]
    $region57: #{forward.27} parent=1 // pred_fallthru
      _
    // Predicated region
    $region58: #{forward.27} parent=1 // pred_check
      _
    $region59: #{forward.27} parent=1 // pred_check_branch
      %557 = sbr.rel (0) target = $region61
    $region60: #{forward.27} parent=1 // pred_region
      %559 = dma.done [#allocation3], 32
    $region61: #{forward.27} parent=1 // pred_fallthru
      _
    %560 = vsyncpa [#allocation3], 1

</llo_original>
